<compile_context>
chip_gen: v5e
topology: v5e:2x2
jax: 0.10.0
libtpu: 0.0.40
codegen_flags: <defaults>
</compile_context>

<pallas_src>
import functools

import jax
import jax.numpy as jnp
from jax import lax
from jax.experimental import pallas as pl
from jax.experimental.pallas import tpu as pltpu

# ---------------- EEGNet constants ----------------
H = 2              # EEG electrode rows (conv "height")
T = 750            # time samples
K1 = 51            # firstconv kernel width (pad 25)
P1PAD = 25
C1 = 16            # firstconv out channels
C2 = 32            # depthwise / separable out channels
K3 = 15            # separableConv kernel width (pad 7)
P3PAD = 7
T1 = T // 4        # 187 after AvgPool2d((1,4))
T2 = T1 // 8       # 23  after AvgPool2d((1,8))
NFEAT = C2 * T2    # 736 == Linear in_features
NCLS = 2
EPS = 1e-5
TPAD = 768         # 750 padded to 6*128 so per-example lane slices are 128-aligned
TPAD1 = T1 + 2 * P3PAD   # 201 (pool-4 output with separable-conv padding folded in)


def _elu(v):
    # torch.nn.ELU(alpha=1.0), exact: x if x>0 else exp(x)-1
    return jnp.where(v > 0, v, jnp.exp(jnp.minimum(v, 0.0)) - 1.0)


def eegnet_kernel(xc_ref, a_ref, b2_ref, p1m_ref, w3_ref, b3_ref,
                  wfc_ref, bfc_ref, out_ref, *, bb):
    """One grid step == `bb` examples.  All BatchNorms / pools / pads pre-folded."""
    xc = xc_ref[0]                                            # (102, bb*768) bf16

    # ---- firstconv + BN1 + depthwiseConv + BN2 : one MXU matmul (batch on lanes) ----
    z2 = jnp.dot(a_ref[...], xc, preferred_element_type=jnp.float32) + b2_ref[...]
    a2 = _elu(z2)                                             # (32, bb*768) f32
    # (columns >= 748 of each example chunk are junk; the pool matrix zeroes them)

    # ---- restack batch into sublanes: 128-aligned lane slices, cheap copies ----
    a2s = jnp.concatenate(
        [a2[:, b * TPAD:(b + 1) * TPAD] for b in range(bb)], axis=0)   # (bb*32, 768)

    # ---- AvgPool2d((1,4)) with separableConv zero-pad folded into the matrix ----
    p1p = jnp.dot(a2s, p1m_ref[...], preferred_element_type=jnp.float32)   # (bb*32, 201)

    w3 = w3_ref[...]                                          # (32, 480)
    b3 = b3_ref[...]                                          # (32, 1)
    wfc = wfc_ref[...]                                        # (2, 32, 187)

    cols = []
    for b in range(bb):
        pb = p1p[b * C2:(b + 1) * C2, :]                                      # (32, 201)
        # separableConv as a single stacked-K matmul (15 taps stacked on K)
        pcol = jnp.concatenate([pb[:, k:k + T1] for k in range(K3)], axis=0)  # (480, 187)
        z3 = jnp.dot(w3, pcol, preferred_element_type=jnp.float32) + b3       # (32, 187)
        a3 = _elu(z3)
        # Linear(736, 2) with AvgPool2d((1,8)) folded into its weights
        q = jnp.sum(wfc * a3[None, :, :], axis=2)                             # (2, 32)
        cols.append(jnp.sum(q, axis=1, keepdims=True))                        # (2, 1)

    out_ref[0] = jnp.concatenate(cols, axis=1) + bfc_ref[...]                 # (2, bb)


def _pick_bb(batch):
    """BB=8 fills the 256-wide v6e/v7x MXU (BB*32=256); 4 fills v5e's 128-wide MXU."""
    bb = 8
    try:
        kind = jax.devices()[0].device_kind.lower()
        if ("v5 lite" in kind) or ("v5e" in kind):
            bb = 4
    except Exception:
        pass
    # keep at least 2 grid steps when possible (v7x has 2 TensorCores)
    bb = max(1, min(bb, -(-batch // 2)))
    return bb


@functools.partial(jax.jit, static_argnums=2)
def _eegnet_forward_impl(x, params, bb):
    (w1, g1, be1, m1, v1,
     w2, g2, be2, m2, v2,
     w3, g3, be3, m3, v3,
     wfc, bfc) = params
    B = x.shape[0]
    nb = -(-B // bb)
    Bp = nb * bb

    # ---------- host-side parameter folding (glue, plain JAX) ----------
    s1 = g1 / jnp.sqrt(v1 + EPS)
    b1 = be1 - m1 * s1
    s2 = g2 / jnp.sqrt(v2 + EPS)
    b2 = be2 - m2 * s2
    w1s = w1[:, 0, 0, :] * s1[:, None]                        # (16, 51)
    dw = w2[:, 0, :, 0] * s2[:, None]                         # (32, 2)
    grp = jnp.arange(C2) // 2
    # A[j, h*51+k] = s2[j]*w2[j,0,h]*s1[j//2]*w1[j//2,0,0,k]  -> firstconv+depthwise fused
    amat = (dw[:, :, None] * w1s[grp][:, None, :]).reshape(C2, H * K1)    # (32, 102)
    b2e = (dw.sum(axis=1) * b1[grp] + b2)[:, None]                        # (32, 1)

    s3 = g3 / jnp.sqrt(v3 + EPS)
    b3e = (be3 - m3 * s3)[:, None]                                        # (32, 1)
    # pool-4 matrix with the 7-column separableConv zero-pad offset folded in
    tt = jnp.arange(TPAD)[:, None]
    uu = jnp.arange(TPAD1)[None, :]
    p1m = jnp.where(((uu - P3PAD) == (tt // 4)) & (tt < 4 * T1),
                    0.25, 0.0).astype(jnp.float32)                        # (768, 201)

    # separableConv weights (BN3 scale folded) stacked along K: [o, k*32 + c]
    w3s = s3[:, None, None] * w3[:, :, 0, :]                              # (32, 32, 15)
    w3stk = jnp.transpose(w3s, (0, 2, 1)).reshape(C2, K3 * C2)            # (32, 480)

    # pool-8 folded into the FC weights (both linear -> exact)
    uu2 = jnp.arange(T1)[:, None]
    p2m = jnp.where((jnp.arange(T2)[None, :] == (uu2 // 8)) & (uu2 < 8 * T2),
                    0.125, 0.0).astype(jnp.float32)                       # (187, 23)
    wfc3 = wfc.reshape(NCLS, C2, T2)                                      # channel-major view(-1,736)
    wfcf = jnp.einsum('nct,ut->ncu', wfc3, p2m)                           # (2, 32, 187)
    bfcc = bfc.reshape(NCLS, 1)

    # ---------- host-side im2col, batch-padded and lane-concatenated per block ----------
    xsq = x[:, 0]                                                          # (B, 2, 750)
    xp = jnp.pad(xsq, ((0, Bp - B), (0, 0), (P1PAD, P1PAD + TPAD - T)))    # (Bp, 2, 818)
    t_idx = jnp.arange(K1)[:, None] + jnp.arange(TPAD)[None, :]            # (51, 768)
    colsx = xp[:, :, t_idx].reshape(Bp, H * K1, TPAD)                      # (Bp, 102, 768)
    xc = (colsx.reshape(nb, bb, H * K1, TPAD)
               .transpose(0, 2, 1, 3)
               .reshape(nb, H * K1, bb * TPAD))                            # (nb, 102, bb*768)
    xc = xc.astype(jnp.bfloat16)                                           # halve DMA bytes
    amat_bf = amat.astype(jnp.bfloat16)

    kern = functools.partial(eegnet_kernel, bb=bb)
    out = pl.pallas_call(
        kern,
        out_shape=jax.ShapeDtypeStruct((nb, NCLS, bb), jnp.float32),
        grid_spec=pltpu.PrefetchScalarGridSpec(
            num_scalar_prefetch=0,
            grid=(nb,),
            in_specs=[
                pl.BlockSpec((1, H * K1, bb * TPAD), lambda g: (g, 0, 0)),   # im2col block
                pl.BlockSpec((C2, H * K1), lambda g: (0, 0)),                # fused conv1+dw weight
                pl.BlockSpec((C2, 1), lambda g: (0, 0)),                     # fused bias
                pl.BlockSpec((TPAD, TPAD1), lambda g: (0, 0)),               # pool-4 (+pad) matrix
                pl.BlockSpec((C2, K3 * C2), lambda g: (0, 0)),               # stacked sep-conv weight
                pl.BlockSpec((C2, 1), lambda g: (0, 0)),                     # sep-conv bias
                pl.BlockSpec((NCLS, C2, T1), lambda g: (0, 0, 0)),           # FC weight (pool-8 folded)
                pl.BlockSpec((NCLS, 1), lambda g: (0, 0)),                   # FC bias
            ],
            out_specs=pl.BlockSpec((1, NCLS, bb), lambda g: (g, 0, 0)),      # batch on lanes
        ),
        compiler_params=pltpu.CompilerParams(dimension_semantics=("parallel",)),
    )(xc, amat_bf, b2e, p1m, w3stk, b3e, wfcf, bfcc)

    return jnp.transpose(out, (0, 2, 1)).reshape(Bp, NCLS)[:B]             # (B, 2)


def eegnet_forward(x, params, bb=None):
    """x: (B, 1, 2, 750) float32 (PyTorch NCHW). Returns (B, 2) logits."""
    if bb is None:
        bb = _pick_bb(x.shape[0])
    return _eegnet_forward_impl(x, params, bb)


# ---------------- pure-JAX reference (mirrors the PyTorch module, eval mode) ----------------
def _bn_eval(x, g, b, m, v):
    return ((x - m[None, :, None, None]) / jnp.sqrt(v[None, :, None, None] + EPS)
            * g[None, :, None, None] + b[None, :, None, None])


def _avgpool_w(x, k):
    B, C, Hh, W = x.shape
    n = (W - k) // k + 1
    return x[..., :n * k].reshape(B, C, Hh, n, k).mean(axis=-1)


def eegnet_reference(x, params):
    (w1, g1, be1, m1, v1, w2, g2, be2, m2, v2, w3, g3, be3, m3, v3, wfc, bfc) = params
    dn = ('NCHW', 'OIHW', 'NCHW')
    y = lax.conv_general_dilated(x, w1, (1, 1), ((0, 0), (P1PAD, P1PAD)), dimension_numbers=dn)
    y = _bn_eval(y, g1, be1, m1, v1)
    y = lax.conv_general_dilated(y, w2, (1, 1), ((0, 0), (0, 0)),
                                 dimension_numbers=dn, feature_group_count=16)
    y = _bn_eval(y, g2, be2, m2, v2)
    y = _elu(y)
    y = _avgpool_w(y, 4)
    y = lax.conv_general_dilated(y, w3, (1, 1), ((0, 0), (P3PAD, P3PAD)), dimension_numbers=dn)
    y = _bn_eval(y, g3, be3, m3, v3)
    y = _elu(y)
    y = _avgpool_w(y, 8)
    y = y.reshape(x.shape[0], -1)
    return y @ wfc.T + bfc


def init_params(key):
    f32 = jnp.float32
    ks = jax.random.split(key, 17)
    w1 = 0.1 * jax.random.normal(ks[0], (C1, 1, 1, K1), f32)
    g1 = 1.0 + 0.1 * jax.random.normal(ks[1], (C1,), f32)
    be1 = 0.1 * jax.random.normal(ks[2], (C1,), f32)
    m1 = 0.1 * jax.random.normal(ks[3], (C1,), f32)
    v1 = jax.random.uniform(ks[4], (C1,), f32, 0.5, 1.5)
    w2 = 0.3 * jax.random.normal(ks[5], (C2, 1, 2, 1), f32)
    g2 = 1.0 + 0.1 * jax.random.normal(ks[6], (C2,), f32)
    be2 = 0.1 * jax.random.normal(ks[7], (C2,), f32)
    m2 = 0.1 * jax.random.normal(ks[8], (C2,), f32)
    v2 = jax.random.uniform(ks[9], (C2,), f32, 0.5, 1.5)
    w3 = 0.05 * jax.random.normal(ks[10], (C2, C2, 1, K3), f32)
    g3 = 1.0 + 0.1 * jax.random.normal(ks[11], (C2,), f32)
    be3 = 0.1 * jax.random.normal(ks[12], (C2,), f32)
    m3 = 0.1 * jax.random.normal(ks[13], (C2,), f32)
    v3 = jax.random.uniform(ks[14], (C2,), f32, 0.5, 1.5)
    wfc = 0.05 * jax.random.normal(ks[15], (NCLS, NFEAT), f32)
    bfc = 0.1 * jax.random.normal(ks[16], (NCLS,), f32)
    return (w1, g1, be1, m1, v1, w2, g2, be2, m2, v2,
            w3, g3, be3, m3, v3, wfc, bfc)


if __name__ == "__main__":
    key = jax.random.PRNGKey(0)
    pkey, xkey = jax.random.split(key)
    params = init_params(pkey)
    # Spatial shape (2, 750) is dictated by Linear(736, 2); small batch of 16
    # exercises the batch-blocked grid (2 steps of BB=8 on v6e/v7x, 4 of 4 on v5e).
    B = 16
    x = jax.random.normal(xkey, (B, 1, H, T), jnp.float32)    # NCHW

    out = eegnet_forward(x, params)
    out = jax.block_until_ready(out)

    ref = eegnet_reference(x, params)
    err = float(jnp.max(jnp.abs(out - ref)))
    assert out.shape == (B, NCLS), out.shape
    assert err < 5e-2, f"kernel/reference mismatch, max abs err = {err}"
    print("KERNEL_OK")
</pallas_src>

<mosaic_0001>
module attributes {stable_mosaic.version = 11 : i64} {
  func.func @eegnet_kernel(%arg0: i32, %arg1: memref<1x102x6144xbf16, #tpu.memory_space<vmem>>, %arg2: memref<32x102xbf16, #tpu.memory_space<vmem>>, %arg3: memref<32x1xf32, #tpu.memory_space<vmem>>, %arg4: memref<768x201xf32, #tpu.memory_space<vmem>>, %arg5: memref<32x480xf32, #tpu.memory_space<vmem>>, %arg6: memref<32x1xf32, #tpu.memory_space<vmem>>, %arg7: memref<2x32x187xf32, #tpu.memory_space<vmem>>, %arg8: memref<2x1xf32, #tpu.memory_space<vmem>>, %arg9: memref<1x2x8xf32, #tpu.memory_space<vmem>>) attributes {dimension_semantics = [#tpu.dimension_semantics<parallel>], iteration_bounds = array<i64: 2>, scalar_prefetch = 0 : i64, scratch_operands = 0 : i64, tpu.core_type = #tpu.core_type<tc>, window_params = [{transform_indices = @transform_0, window_bounds = array<i64: 1, 102, 6144>}, {pipeline_mode = #tpu.pipeline_mode<synchronous>, transform_indices = @transform_1, window_bounds = array<i64: 32, 102>}, {pipeline_mode = #tpu.pipeline_mode<synchronous>, transform_indices = @transform_2, window_bounds = array<i64: 32, 1>}, {pipeline_mode = #tpu.pipeline_mode<synchronous>, transform_indices = @transform_3, window_bounds = array<i64: 768, 201>}, {pipeline_mode = #tpu.pipeline_mode<synchronous>, transform_indices = @transform_4, window_bounds = array<i64: 32, 480>}, {pipeline_mode = #tpu.pipeline_mode<synchronous>, transform_indices = @transform_5, window_bounds = array<i64: 32, 1>}, {pipeline_mode = #tpu.pipeline_mode<synchronous>, transform_indices = @transform_6, window_bounds = array<i64: 2, 32, 187>}, {pipeline_mode = #tpu.pipeline_mode<synchronous>, transform_indices = @transform_7, window_bounds = array<i64: 2, 1>}, {transform_indices = @transform_8, window_bounds = array<i64: 1, 2, 8>}]} {
    %c0 = arith.constant 0 : index
    %c0_0 = arith.constant 0 : index
    %c0_1 = arith.constant 0 : index
    %0 = vector.load %arg1[%c0, %c0_0, %c0_1] : memref<1x102x6144xbf16, #tpu.memory_space<vmem>>, vector<1x102x6144xbf16>
    %1 = vector.shape_cast %0 : vector<1x102x6144xbf16> to vector<102x6144xbf16>
    %c0_2 = arith.constant 0 : index
    %c0_3 = arith.constant 0 : index
    %2 = vector.load %arg2[%c0_2, %c0_3] : memref<32x102xbf16, #tpu.memory_space<vmem>>, vector<32x102xbf16>
    %cst = arith.constant dense<0.000000e+00> : vector<32x6144xf32>
    %3 = tpu.matmul %2, %1, %cst {dimension_numbers = #tpu.dot_dimension_numbers<[1], [0], [0], [1], [0, 0, 1, 1], [], []>} : vector<32x102xbf16>, vector<102x6144xbf16>, vector<32x6144xf32> -> vector<32x6144xf32>
    %c0_4 = arith.constant 0 : index
    %c0_5 = arith.constant 0 : index
    %4 = vector.load %arg3[%c0_4, %c0_5] : memref<32x1xf32, #tpu.memory_space<vmem>>, vector<32x1xf32>
    %5 = vector.broadcast %4 : vector<32x1xf32> to vector<32x6144xf32>
    %6 = arith.addf %3, %5 : vector<32x6144xf32>
    %cst_6 = arith.constant 0.000000e+00 : f32
    %7 = vector.broadcast %cst_6 : f32 to vector<32x6144xf32>
    %8 = arith.cmpf ogt, %6, %7 : vector<32x6144xf32>
    %cst_7 = arith.constant 0.000000e+00 : f32
    %9 = vector.broadcast %cst_7 : f32 to vector<32x6144xf32>
    %10 = arith.minimumf %6, %9 : vector<32x6144xf32>
    %11 = math.exp %10 : vector<32x6144xf32>
    %cst_8 = arith.constant 1.000000e+00 : f32
    %12 = vector.broadcast %cst_8 : f32 to vector<32x6144xf32>
    %13 = arith.subf %11, %12 : vector<32x6144xf32>
    %14 = arith.select %8, %6, %13 : vector<32x6144xi1>, vector<32x6144xf32>
    %15 = vector.extract_strided_slice %14 {offsets = [0, 0], sizes = [32, 768], strides = [1, 1]} : vector<32x6144xf32> to vector<32x768xf32>
    %16 = vector.extract_strided_slice %14 {offsets = [0, 768], sizes = [32, 768], strides = [1, 1]} : vector<32x6144xf32> to vector<32x768xf32>
    %17 = vector.extract_strided_slice %14 {offsets = [0, 1536], sizes = [32, 768], strides = [1, 1]} : vector<32x6144xf32> to vector<32x768xf32>
    %18 = vector.extract_strided_slice %14 {offsets = [0, 2304], sizes = [32, 768], strides = [1, 1]} : vector<32x6144xf32> to vector<32x768xf32>
    %19 = vector.extract_strided_slice %14 {offsets = [0, 3072], sizes = [32, 768], strides = [1, 1]} : vector<32x6144xf32> to vector<32x768xf32>
    %20 = vector.extract_strided_slice %14 {offsets = [0, 3840], sizes = [32, 768], strides = [1, 1]} : vector<32x6144xf32> to vector<32x768xf32>
    %21 = vector.extract_strided_slice %14 {offsets = [0, 4608], sizes = [32, 768], strides = [1, 1]} : vector<32x6144xf32> to vector<32x768xf32>
    %22 = vector.extract_strided_slice %14 {offsets = [0, 5376], sizes = [32, 768], strides = [1, 1]} : vector<32x6144xf32> to vector<32x768xf32>
    %23 = tpu.concatenate %15, %16, %17, %18, %19, %20, %21, %22 in 0 : vector<32x768xf32>, vector<32x768xf32>, vector<32x768xf32>, vector<32x768xf32>, vector<32x768xf32>, vector<32x768xf32>, vector<32x768xf32>, vector<32x768xf32> -> vector<256x768xf32>
    %c0_9 = arith.constant 0 : index
    %c0_10 = arith.constant 0 : index
    %24 = vector.load %arg4[%c0_9, %c0_10] : memref<768x201xf32, #tpu.memory_space<vmem>>, vector<768x201xf32>
    %cst_11 = arith.constant dense<0.000000e+00> : vector<256x201xf32>
    %25 = tpu.matmul %23, %24, %cst_11 {dimension_numbers = #tpu.dot_dimension_numbers<[1], [0], [0], [1], [0, 0, 1, 1], [], []>} : vector<256x768xf32>, vector<768x201xf32>, vector<256x201xf32> -> vector<256x201xf32>
    %c0_12 = arith.constant 0 : index
    %c0_13 = arith.constant 0 : index
    %26 = vector.load %arg5[%c0_12, %c0_13] : memref<32x480xf32, #tpu.memory_space<vmem>>, vector<32x480xf32>
    %c0_14 = arith.constant 0 : index
    %c0_15 = arith.constant 0 : index
    %27 = vector.load %arg6[%c0_14, %c0_15] : memref<32x1xf32, #tpu.memory_space<vmem>>, vector<32x1xf32>
    %c0_16 = arith.constant 0 : index
    %c0_17 = arith.constant 0 : index
    %c0_18 = arith.constant 0 : index
    %28 = vector.load %arg7[%c0_16, %c0_17, %c0_18] : memref<2x32x187xf32, #tpu.memory_space<vmem>>, vector<2x32x187xf32>
    %29 = vector.extract_strided_slice %25 {offsets = [0, 0], sizes = [32, 201], strides = [1, 1]} : vector<256x201xf32> to vector<32x201xf32>
    %30 = vector.extract_strided_slice %29 {offsets = [0, 0], sizes = [32, 187], strides = [1, 1]} : vector<32x201xf32> to vector<32x187xf32>
    %31 = vector.extract_strided_slice %29 {offsets = [0, 1], sizes = [32, 187], strides = [1, 1]} : vector<32x201xf32> to vector<32x187xf32>
    %32 = vector.extract_strided_slice %29 {offsets = [0, 2], sizes = [32, 187], strides = [1, 1]} : vector<32x201xf32> to vector<32x187xf32>
    %33 = vector.extract_strided_slice %29 {offsets = [0, 3], sizes = [32, 187], strides = [1, 1]} : vector<32x201xf32> to vector<32x187xf32>
    %34 = vector.extract_strided_slice %29 {offsets = [0, 4], sizes = [32, 187], strides = [1, 1]} : vector<32x201xf32> to vector<32x187xf32>
    %35 = vector.extract_strided_slice %29 {offsets = [0, 5], sizes = [32, 187], strides = [1, 1]} : vector<32x201xf32> to vector<32x187xf32>
    %36 = vector.extract_strided_slice %29 {offsets = [0, 6], sizes = [32, 187], strides = [1, 1]} : vector<32x201xf32> to vector<32x187xf32>
    %37 = vector.extract_strided_slice %29 {offsets = [0, 7], sizes = [32, 187], strides = [1, 1]} : vector<32x201xf32> to vector<32x187xf32>
    %38 = vector.extract_strided_slice %29 {offsets = [0, 8], sizes = [32, 187], strides = [1, 1]} : vector<32x201xf32> to vector<32x187xf32>
    %39 = vector.extract_strided_slice %29 {offsets = [0, 9], sizes = [32, 187], strides = [1, 1]} : vector<32x201xf32> to vector<32x187xf32>
    %40 = vector.extract_strided_slice %29 {offsets = [0, 10], sizes = [32, 187], strides = [1, 1]} : vector<32x201xf32> to vector<32x187xf32>
    %41 = vector.extract_strided_slice %29 {offsets = [0, 11], sizes = [32, 187], strides = [1, 1]} : vector<32x201xf32> to vector<32x187xf32>
    %42 = vector.extract_strided_slice %29 {offsets = [0, 12], sizes = [32, 187], strides = [1, 1]} : vector<32x201xf32> to vector<32x187xf32>
    %43 = vector.extract_strided_slice %29 {offsets = [0, 13], sizes = [32, 187], strides = [1, 1]} : vector<32x201xf32> to vector<32x187xf32>
    %44 = vector.extract_strided_slice %29 {offsets = [0, 14], sizes = [32, 187], strides = [1, 1]} : vector<32x201xf32> to vector<32x187xf32>
    %45 = tpu.concatenate %30, %31, %32, %33, %34, %35, %36, %37, %38, %39, %40, %41, %42, %43, %44 in 0 : vector<32x187xf32>, vector<32x187xf32>, vector<32x187xf32>, vector<32x187xf32>, vector<32x187xf32>, vector<32x187xf32>, vector<32x187xf32>, vector<32x187xf32>, vector<32x187xf32>, vector<32x187xf32>, vector<32x187xf32>, vector<32x187xf32>, vector<32x187xf32>, vector<32x187xf32>, vector<32x187xf32> -> vector<480x187xf32>
    %cst_19 = arith.constant dense<0.000000e+00> : vector<32x187xf32>
    %46 = tpu.matmul %26, %45, %cst_19 {dimension_numbers = #tpu.dot_dimension_numbers<[1], [0], [0], [1], [0, 0, 1, 1], [], []>} : vector<32x480xf32>, vector<480x187xf32>, vector<32x187xf32> -> vector<32x187xf32>
    %47 = vector.broadcast %27 : vector<32x1xf32> to vector<32x187xf32>
    %48 = arith.addf %46, %47 : vector<32x187xf32>
    %cst_20 = arith.constant 0.000000e+00 : f32
    %49 = vector.broadcast %cst_20 : f32 to vector<32x187xf32>
    %50 = arith.cmpf ogt, %48, %49 : vector<32x187xf32>
    %cst_21 = arith.constant 0.000000e+00 : f32
    %51 = vector.broadcast %cst_21 : f32 to vector<32x187xf32>
    %52 = arith.minimumf %48, %51 : vector<32x187xf32>
    %53 = math.exp %52 : vector<32x187xf32>
    %cst_22 = arith.constant 1.000000e+00 : f32
    %54 = vector.broadcast %cst_22 : f32 to vector<32x187xf32>
    %55 = arith.subf %53, %54 : vector<32x187xf32>
    %56 = arith.select %50, %48, %55 : vector<32x187xi1>, vector<32x187xf32>
    %57 = vector.shape_cast %56 : vector<32x187xf32> to vector<1x32x187xf32>
    %58 = vector.broadcast %57 : vector<1x32x187xf32> to vector<2x32x187xf32>
    %59 = arith.mulf %28, %58 : vector<2x32x187xf32>
    %cst_23 = arith.constant dense<0.000000e+00> : vector<2x32xf32>
    %60 = vector.multi_reduction <add>, %59, %cst_23 [2] : vector<2x32x187xf32> to vector<2x32xf32>
    %cst_24 = arith.constant dense<0.000000e+00> : vector<2xf32>
    %61 = vector.multi_reduction <add>, %60, %cst_24 [1] : vector<2x32xf32> to vector<2xf32>
    %62 = vector.shape_cast %61 : vector<2xf32> to vector<2x1xf32>
    %63 = vector.extract_strided_slice %25 {offsets = [32, 0], sizes = [32, 201], strides = [1, 1]} : vector<256x201xf32> to vector<32x201xf32>
    %64 = vector.extract_strided_slice %63 {offsets = [0, 0], sizes = [32, 187], strides = [1, 1]} : vector<32x201xf32> to vector<32x187xf32>
    %65 = vector.extract_strided_slice %63 {offsets = [0, 1], sizes = [32, 187], strides = [1, 1]} : vector<32x201xf32> to vector<32x187xf32>
    %66 = vector.extract_strided_slice %63 {offsets = [0, 2], sizes = [32, 187], strides = [1, 1]} : vector<32x201xf32> to vector<32x187xf32>
    %67 = vector.extract_strided_slice %63 {offsets = [0, 3], sizes = [32, 187], strides = [1, 1]} : vector<32x201xf32> to vector<32x187xf32>
    %68 = vector.extract_strided_slice %63 {offsets = [0, 4], sizes = [32, 187], strides = [1, 1]} : vector<32x201xf32> to vector<32x187xf32>
    %69 = vector.extract_strided_slice %63 {offsets = [0, 5], sizes = [32, 187], strides = [1, 1]} : vector<32x201xf32> to vector<32x187xf32>
    %70 = vector.extract_strided_slice %63 {offsets = [0, 6], sizes = [32, 187], strides = [1, 1]} : vector<32x201xf32> to vector<32x187xf32>
    %71 = vector.extract_strided_slice %63 {offsets = [0, 7], sizes = [32, 187], strides = [1, 1]} : vector<32x201xf32> to vector<32x187xf32>
    %72 = vector.extract_strided_slice %63 {offsets = [0, 8], sizes = [32, 187], strides = [1, 1]} : vector<32x201xf32> to vector<32x187xf32>
    %73 = vector.extract_strided_slice %63 {offsets = [0, 9], sizes = [32, 187], strides = [1, 1]} : vector<32x201xf32> to vector<32x187xf32>
    %74 = vector.extract_strided_slice %63 {offsets = [0, 10], sizes = [32, 187], strides = [1, 1]} : vector<32x201xf32> to vector<32x187xf32>
    %75 = vector.extract_strided_slice %63 {offsets = [0, 11], sizes = [32, 187], strides = [1, 1]} : vector<32x201xf32> to vector<32x187xf32>
    %76 = vector.extract_strided_slice %63 {offsets = [0, 12], sizes = [32, 187], strides = [1, 1]} : vector<32x201xf32> to vector<32x187xf32>
    %77 = vector.extract_strided_slice %63 {offsets = [0, 13], sizes = [32, 187], strides = [1, 1]} : vector<32x201xf32> to vector<32x187xf32>
    %78 = vector.extract_strided_slice %63 {offsets = [0, 14], sizes = [32, 187], strides = [1, 1]} : vector<32x201xf32> to vector<32x187xf32>
    %79 = tpu.concatenate %64, %65, %66, %67, %68, %69, %70, %71, %72, %73, %74, %75, %76, %77, %78 in 0 : vector<32x187xf32>, vector<32x187xf32>, vector<32x187xf32>, vector<32x187xf32>, vector<32x187xf32>, vector<32x187xf32>, vector<32x187xf32>, vector<32x187xf32>, vector<32x187xf32>, vector<32x187xf32>, vector<32x187xf32>, vector<32x187xf32>, vector<32x187xf32>, vector<32x187xf32>, vector<32x187xf32> -> vector<480x187xf32>
    %cst_25 = arith.constant dense<0.000000e+00> : vector<32x187xf32>
    %80 = tpu.matmul %26, %79, %cst_25 {dimension_numbers = #tpu.dot_dimension_numbers<[1], [0], [0], [1], [0, 0, 1, 1], [], []>} : vector<32x480xf32>, vector<480x187xf32>, vector<32x187xf32> -> vector<32x187xf32>
    %81 = vector.broadcast %27 : vector<32x1xf32> to vector<32x187xf32>
    %82 = arith.addf %80, %81 : vector<32x187xf32>
    %cst_26 = arith.constant 0.000000e+00 : f32
    %83 = vector.broadcast %cst_26 : f32 to vector<32x187xf32>
    %84 = arith.cmpf ogt, %82, %83 : vector<32x187xf32>
    %cst_27 = arith.constant 0.000000e+00 : f32
    %85 = vector.broadcast %cst_27 : f32 to vector<32x187xf32>
    %86 = arith.minimumf %82, %85 : vector<32x187xf32>
    %87 = math.exp %86 : vector<32x187xf32>
    %cst_28 = arith.constant 1.000000e+00 : f32
    %88 = vector.broadcast %cst_28 : f32 to vector<32x187xf32>
    %89 = arith.subf %87, %88 : vector<32x187xf32>
    %90 = arith.select %84, %82, %89 : vector<32x187xi1>, vector<32x187xf32>
    %91 = vector.shape_cast %90 : vector<32x187xf32> to vector<1x32x187xf32>
    %92 = vector.broadcast %91 : vector<1x32x187xf32> to vector<2x32x187xf32>
    %93 = arith.mulf %28, %92 : vector<2x32x187xf32>
    %cst_29 = arith.constant dense<0.000000e+00> : vector<2x32xf32>
    %94 = vector.multi_reduction <add>, %93, %cst_29 [2] : vector<2x32x187xf32> to vector<2x32xf32>
    %cst_30 = arith.constant dense<0.000000e+00> : vector<2xf32>
    %95 = vector.multi_reduction <add>, %94, %cst_30 [1] : vector<2x32xf32> to vector<2xf32>
    %96 = vector.shape_cast %95 : vector<2xf32> to vector<2x1xf32>
    %97 = vector.extract_strided_slice %25 {offsets = [64, 0], sizes = [32, 201], strides = [1, 1]} : vector<256x201xf32> to vector<32x201xf32>
    %98 = vector.extract_strided_slice %97 {offsets = [0, 0], sizes = [32, 187], strides = [1, 1]} : vector<32x201xf32> to vector<32x187xf32>
    %99 = vector.extract_strided_slice %97 {offsets = [0, 1], sizes = [32, 187], strides = [1, 1]} : vector<32x201xf32> to vector<32x187xf32>
    %100 = vector.extract_strided_slice %97 {offsets = [0, 2], sizes = [32, 187], strides = [1, 1]} : vector<32x201xf32> to vector<32x187xf32>
    %101 = vector.extract_strided_slice %97 {offsets = [0, 3], sizes = [32, 187], strides = [1, 1]} : vector<32x201xf32> to vector<32x187xf32>
    %102 = vector.extract_strided_slice %97 {offsets = [0, 4], sizes = [32, 187], strides = [1, 1]} : vector<32x201xf32> to vector<32x187xf32>
    %103 = vector.extract_strided_slice %97 {offsets = [0, 5], sizes = [32, 187], strides = [1, 1]} : vector<32x201xf32> to vector<32x187xf32>
    %104 = vector.extract_strided_slice %97 {offsets = [0, 6], sizes = [32, 187], strides = [1, 1]} : vector<32x201xf32> to vector<32x187xf32>
    %105 = vector.extract_strided_slice %97 {offsets = [0, 7], sizes = [32, 187], strides = [1, 1]} : vector<32x201xf32> to vector<32x187xf32>
    %106 = vector.extract_strided_slice %97 {offsets = [0, 8], sizes = [32, 187], strides = [1, 1]} : vector<32x201xf32> to vector<32x187xf32>
    %107 = vector.extract_strided_slice %97 {offsets = [0, 9], sizes = [32, 187], strides = [1, 1]} : vector<32x201xf32> to vector<32x187xf32>
    %108 = vector.extract_strided_slice %97 {offsets = [0, 10], sizes = [32, 187], strides = [1, 1]} : vector<32x201xf32> to vector<32x187xf32>
    %109 = vector.extract_strided_slice %97 {offsets = [0, 11], sizes = [32, 187], strides = [1, 1]} : vector<32x201xf32> to vector<32x187xf32>
    %110 = vector.extract_strided_slice %97 {offsets = [0, 12], sizes = [32, 187], strides = [1, 1]} : vector<32x201xf32> to vector<32x187xf32>
    %111 = vector.extract_strided_slice %97 {offsets = [0, 13], sizes = [32, 187], strides = [1, 1]} : vector<32x201xf32> to vector<32x187xf32>
    %112 = vector.extract_strided_slice %97 {offsets = [0, 14], sizes = [32, 187], strides = [1, 1]} : vector<32x201xf32> to vector<32x187xf32>
    %113 = tpu.concatenate %98, %99, %100, %101, %102, %103, %104, %105, %106, %107, %108, %109, %110, %111, %112 in 0 : vector<32x187xf32>, vector<32x187xf32>, vector<32x187xf32>, vector<32x187xf32>, vector<32x187xf32>, vector<32x187xf32>, vector<32x187xf32>, vector<32x187xf32>, vector<32x187xf32>, vector<32x187xf32>, vector<32x187xf32>, vector<32x187xf32>, vector<32x187xf32>, vector<32x187xf32>, vector<32x187xf32> -> vector<480x187xf32>
    %cst_31 = arith.constant dense<0.000000e+00> : vector<32x187xf32>
    %114 = tpu.matmul %26, %113, %cst_31 {dimension_numbers = #tpu.dot_dimension_numbers<[1], [0], [0], [1], [0, 0, 1, 1], [], []>} : vector<32x480xf32>, vector<480x187xf32>, vector<32x187xf32> -> vector<32x187xf32>
    %115 = vector.broadcast %27 : vector<32x1xf32> to vector<32x187xf32>
    %116 = arith.addf %114, %115 : vector<32x187xf32>
    %cst_32 = arith.constant 0.000000e+00 : f32
    %117 = vector.broadcast %cst_32 : f32 to vector<32x187xf32>
    %118 = arith.cmpf ogt, %116, %117 : vector<32x187xf32>
    %cst_33 = arith.constant 0.000000e+00 : f32
    %119 = vector.broadcast %cst_33 : f32 to vector<32x187xf32>
    %120 = arith.minimumf %116, %119 : vector<32x187xf32>
    %121 = math.exp %120 : vector<32x187xf32>
    %cst_34 = arith.constant 1.000000e+00 : f32
    %122 = vector.broadcast %cst_34 : f32 to vector<32x187xf32>
    %123 = arith.subf %121, %122 : vector<32x187xf32>
    %124 = arith.select %118, %116, %123 : vector<32x187xi1>, vector<32x187xf32>
    %125 = vector.shape_cast %124 : vector<32x187xf32> to vector<1x32x187xf32>
    %126 = vector.broadcast %125 : vector<1x32x187xf32> to vector<2x32x187xf32>
    %127 = arith.mulf %28, %126 : vector<2x32x187xf32>
    %cst_35 = arith.constant dense<0.000000e+00> : vector<2x32xf32>
    %128 = vector.multi_reduction <add>, %127, %cst_35 [2] : vector<2x32x187xf32> to vector<2x32xf32>
    %cst_36 = arith.constant dense<0.000000e+00> : vector<2xf32>
    %129 = vector.multi_reduction <add>, %128, %cst_36 [1] : vector<2x32xf32> to vector<2xf32>
    %130 = vector.shape_cast %129 : vector<2xf32> to vector<2x1xf32>
    %131 = vector.extract_strided_slice %25 {offsets = [96, 0], sizes = [32, 201], strides = [1, 1]} : vector<256x201xf32> to vector<32x201xf32>
    %132 = vector.extract_strided_slice %131 {offsets = [0, 0], sizes = [32, 187], strides = [1, 1]} : vector<32x201xf32> to vector<32x187xf32>
    %133 = vector.extract_strided_slice %131 {offsets = [0, 1], sizes = [32, 187], strides = [1, 1]} : vector<32x201xf32> to vector<32x187xf32>
    %134 = vector.extract_strided_slice %131 {offsets = [0, 2], sizes = [32, 187], strides = [1, 1]} : vector<32x201xf32> to vector<32x187xf32>
    %135 = vector.extract_strided_slice %131 {offsets = [0, 3], sizes = [32, 187], strides = [1, 1]} : vector<32x201xf32> to vector<32x187xf32>
    %136 = vector.extract_strided_slice %131 {offsets = [0, 4], sizes = [32, 187], strides = [1, 1]} : vector<32x201xf32> to vector<32x187xf32>
    %137 = vector.extract_strided_slice %131 {offsets = [0, 5], sizes = [32, 187], strides = [1, 1]} : vector<32x201xf32> to vector<32x187xf32>
    %138 = vector.extract_strided_slice %131 {offsets = [0, 6], sizes = [32, 187], strides = [1, 1]} : vector<32x201xf32> to vector<32x187xf32>
    %139 = vector.extract_strided_slice %131 {offsets = [0, 7], sizes = [32, 187], strides = [1, 1]} : vector<32x201xf32> to vector<32x187xf32>
    %140 = vector.extract_strided_slice %131 {offsets = [0, 8], sizes = [32, 187], strides = [1, 1]} : vector<32x201xf32> to vector<32x187xf32>
    %141 = vector.extract_strided_slice %131 {offsets = [0, 9], sizes = [32, 187], strides = [1, 1]} : vector<32x201xf32> to vector<32x187xf32>
    %142 = vector.extract_strided_slice %131 {offsets = [0, 10], sizes = [32, 187], strides = [1, 1]} : vector<32x201xf32> to vector<32x187xf32>
    %143 = vector.extract_strided_slice %131 {offsets = [0, 11], sizes = [32, 187], strides = [1, 1]} : vector<32x201xf32> to vector<32x187xf32>
    %144 = vector.extract_strided_slice %131 {offsets = [0, 12], sizes = [32, 187], strides = [1, 1]} : vector<32x201xf32> to vector<32x187xf32>
    %145 = vector.extract_strided_slice %131 {offsets = [0, 13], sizes = [32, 187], strides = [1, 1]} : vector<32x201xf32> to vector<32x187xf32>
    %146 = vector.extract_strided_slice %131 {offsets = [0, 14], sizes = [32, 187], strides = [1, 1]} : vector<32x201xf32> to vector<32x187xf32>
    %147 = tpu.concatenate %132, %133, %134, %135, %136, %137, %138, %139, %140, %141, %142, %143, %144, %145, %146 in 0 : vector<32x187xf32>, vector<32x187xf32>, vector<32x187xf32>, vector<32x187xf32>, vector<32x187xf32>, vector<32x187xf32>, vector<32x187xf32>, vector<32x187xf32>, vector<32x187xf32>, vector<32x187xf32>, vector<32x187xf32>, vector<32x187xf32>, vector<32x187xf32>, vector<32x187xf32>, vector<32x187xf32> -> vector<480x187xf32>
    %cst_37 = arith.constant dense<0.000000e+00> : vector<32x187xf32>
    %148 = tpu.matmul %26, %147, %cst_37 {dimension_numbers = #tpu.dot_dimension_numbers<[1], [0], [0], [1], [0, 0, 1, 1], [], []>} : vector<32x480xf32>, vector<480x187xf32>, vector<32x187xf32> -> vector<32x187xf32>
    %149 = vector.broadcast %27 : vector<32x1xf32> to vector<32x187xf32>
    %150 = arith.addf %148, %149 : vector<32x187xf32>
    %cst_38 = arith.constant 0.000000e+00 : f32
    %151 = vector.broadcast %cst_38 : f32 to vector<32x187xf32>
    %152 = arith.cmpf ogt, %150, %151 : vector<32x187xf32>
    %cst_39 = arith.constant 0.000000e+00 : f32
    %153 = vector.broadcast %cst_39 : f32 to vector<32x187xf32>
    %154 = arith.minimumf %150, %153 : vector<32x187xf32>
    %155 = math.exp %154 : vector<32x187xf32>
    %cst_40 = arith.constant 1.000000e+00 : f32
    %156 = vector.broadcast %cst_40 : f32 to vector<32x187xf32>
    %157 = arith.subf %155, %156 : vector<32x187xf32>
    %158 = arith.select %152, %150, %157 : vector<32x187xi1>, vector<32x187xf32>
    %159 = vector.shape_cast %158 : vector<32x187xf32> to vector<1x32x187xf32>
    %160 = vector.broadcast %159 : vector<1x32x187xf32> to vector<2x32x187xf32>
    %161 = arith.mulf %28, %160 : vector<2x32x187xf32>
    %cst_41 = arith.constant dense<0.000000e+00> : vector<2x32xf32>
    %162 = vector.multi_reduction <add>, %161, %cst_41 [2] : vector<2x32x187xf32> to vector<2x32xf32>
    %cst_42 = arith.constant dense<0.000000e+00> : vector<2xf32>
    %163 = vector.multi_reduction <add>, %162, %cst_42 [1] : vector<2x32xf32> to vector<2xf32>
    %164 = vector.shape_cast %163 : vector<2xf32> to vector<2x1xf32>
    %165 = vector.extract_strided_slice %25 {offsets = [128, 0], sizes = [32, 201], strides = [1, 1]} : vector<256x201xf32> to vector<32x201xf32>
    %166 = vector.extract_strided_slice %165 {offsets = [0, 0], sizes = [32, 187], strides = [1, 1]} : vector<32x201xf32> to vector<32x187xf32>
    %167 = vector.extract_strided_slice %165 {offsets = [0, 1], sizes = [32, 187], strides = [1, 1]} : vector<32x201xf32> to vector<32x187xf32>
    %168 = vector.extract_strided_slice %165 {offsets = [0, 2], sizes = [32, 187], strides = [1, 1]} : vector<32x201xf32> to vector<32x187xf32>
    %169 = vector.extract_strided_slice %165 {offsets = [0, 3], sizes = [32, 187], strides = [1, 1]} : vector<32x201xf32> to vector<32x187xf32>
    %170 = vector.extract_strided_slice %165 {offsets = [0, 4], sizes = [32, 187], strides = [1, 1]} : vector<32x201xf32> to vector<32x187xf32>
    %171 = vector.extract_strided_slice %165 {offsets = [0, 5], sizes = [32, 187], strides = [1, 1]} : vector<32x201xf32> to vector<32x187xf32>
    %172 = vector.extract_strided_slice %165 {offsets = [0, 6], sizes = [32, 187], strides = [1, 1]} : vector<32x201xf32> to vector<32x187xf32>
    %173 = vector.extract_strided_slice %165 {offsets = [0, 7], sizes = [32, 187], strides = [1, 1]} : vector<32x201xf32> to vector<32x187xf32>
    %174 = vector.extract_strided_slice %165 {offsets = [0, 8], sizes = [32, 187], strides = [1, 1]} : vector<32x201xf32> to vector<32x187xf32>
    %175 = vector.extract_strided_slice %165 {offsets = [0, 9], sizes = [32, 187], strides = [1, 1]} : vector<32x201xf32> to vector<32x187xf32>
    %176 = vector.extract_strided_slice %165 {offsets = [0, 10], sizes = [32, 187], strides = [1, 1]} : vector<32x201xf32> to vector<32x187xf32>
    %177 = vector.extract_strided_slice %165 {offsets = [0, 11], sizes = [32, 187], strides = [1, 1]} : vector<32x201xf32> to vector<32x187xf32>
    %178 = vector.extract_strided_slice %165 {offsets = [0, 12], sizes = [32, 187], strides = [1, 1]} : vector<32x201xf32> to vector<32x187xf32>
    %179 = vector.extract_strided_slice %165 {offsets = [0, 13], sizes = [32, 187], strides = [1, 1]} : vector<32x201xf32> to vector<32x187xf32>
    %180 = vector.extract_strided_slice %165 {offsets = [0, 14], sizes = [32, 187], strides = [1, 1]} : vector<32x201xf32> to vector<32x187xf32>
    %181 = tpu.concatenate %166, %167, %168, %169, %170, %171, %172, %173, %174, %175, %176, %177, %178, %179, %180 in 0 : vector<32x187xf32>, vector<32x187xf32>, vector<32x187xf32>, vector<32x187xf32>, vector<32x187xf32>, vector<32x187xf32>, vector<32x187xf32>, vector<32x187xf32>, vector<32x187xf32>, vector<32x187xf32>, vector<32x187xf32>, vector<32x187xf32>, vector<32x187xf32>, vector<32x187xf32>, vector<32x187xf32> -> vector<480x187xf32>
    %cst_43 = arith.constant dense<0.000000e+00> : vector<32x187xf32>
    %182 = tpu.matmul %26, %181, %cst_43 {dimension_numbers = #tpu.dot_dimension_numbers<[1], [0], [0], [1], [0, 0, 1, 1], [], []>} : vector<32x480xf32>, vector<480x187xf32>, vector<32x187xf32> -> vector<32x187xf32>
    %183 = vector.broadcast %27 : vector<32x1xf32> to vector<32x187xf32>
    %184 = arith.addf %182, %183 : vector<32x187xf32>
    %cst_44 = arith.constant 0.000000e+00 : f32
    %185 = vector.broadcast %cst_44 : f32 to vector<32x187xf32>
    %186 = arith.cmpf ogt, %184, %185 : vector<32x187xf32>
    %cst_45 = arith.constant 0.000000e+00 : f32
    %187 = vector.broadcast %cst_45 : f32 to vector<32x187xf32>
    %188 = arith.minimumf %184, %187 : vector<32x187xf32>
    %189 = math.exp %188 : vector<32x187xf32>
    %cst_46 = arith.constant 1.000000e+00 : f32
    %190 = vector.broadcast %cst_46 : f32 to vector<32x187xf32>
    %191 = arith.subf %189, %190 : vector<32x187xf32>
    %192 = arith.select %186, %184, %191 : vector<32x187xi1>, vector<32x187xf32>
    %193 = vector.shape_cast %192 : vector<32x187xf32> to vector<1x32x187xf32>
    %194 = vector.broadcast %193 : vector<1x32x187xf32> to vector<2x32x187xf32>
    %195 = arith.mulf %28, %194 : vector<2x32x187xf32>
    %cst_47 = arith.constant dense<0.000000e+00> : vector<2x32xf32>
    %196 = vector.multi_reduction <add>, %195, %cst_47 [2] : vector<2x32x187xf32> to vector<2x32xf32>
    %cst_48 = arith.constant dense<0.000000e+00> : vector<2xf32>
    %197 = vector.multi_reduction <add>, %196, %cst_48 [1] : vector<2x32xf32> to vector<2xf32>
    %198 = vector.shape_cast %197 : vector<2xf32> to vector<2x1xf32>
    %199 = vector.extract_strided_slice %25 {offsets = [160, 0], sizes = [32, 201], strides = [1, 1]} : vector<256x201xf32> to vector<32x201xf32>
    %200 = vector.extract_strided_slice %199 {offsets = [0, 0], sizes = [32, 187], strides = [1, 1]} : vector<32x201xf32> to vector<32x187xf32>
    %201 = vector.extract_strided_slice %199 {offsets = [0, 1], sizes = [32, 187], strides = [1, 1]} : vector<32x201xf32> to vector<32x187xf32>
    %202 = vector.extract_strided_slice %199 {offsets = [0, 2], sizes = [32, 187], strides = [1, 1]} : vector<32x201xf32> to vector<32x187xf32>
    %203 = vector.extract_strided_slice %199 {offsets = [0, 3], sizes = [32, 187], strides = [1, 1]} : vector<32x201xf32> to vector<32x187xf32>
    %204 = vector.extract_strided_slice %199 {offsets = [0, 4], sizes = [32, 187], strides = [1, 1]} : vector<32x201xf32> to vector<32x187xf32>
    %205 = vector.extract_strided_slice %199 {offsets = [0, 5], sizes = [32, 187], strides = [1, 1]} : vector<32x201xf32> to vector<32x187xf32>
    %206 = vector.extract_strided_slice %199 {offsets = [0, 6], sizes = [32, 187], strides = [1, 1]} : vector<32x201xf32> to vector<32x187xf32>
    %207 = vector.extract_strided_slice %199 {offsets = [0, 7], sizes = [32, 187], strides = [1, 1]} : vector<32x201xf32> to vector<32x187xf32>
    %208 = vector.extract_strided_slice %199 {offsets = [0, 8], sizes = [32, 187], strides = [1, 1]} : vector<32x201xf32> to vector<32x187xf32>
    %209 = vector.extract_strided_slice %199 {offsets = [0, 9], sizes = [32, 187], strides = [1, 1]} : vector<32x201xf32> to vector<32x187xf32>
    %210 = vector.extract_strided_slice %199 {offsets = [0, 10], sizes = [32, 187], strides = [1, 1]} : vector<32x201xf32> to vector<32x187xf32>
    %211 = vector.extract_strided_slice %199 {offsets = [0, 11], sizes = [32, 187], strides = [1, 1]} : vector<32x201xf32> to vector<32x187xf32>
    %212 = vector.extract_strided_slice %199 {offsets = [0, 12], sizes = [32, 187], strides = [1, 1]} : vector<32x201xf32> to vector<32x187xf32>
    %213 = vector.extract_strided_slice %199 {offsets = [0, 13], sizes = [32, 187], strides = [1, 1]} : vector<32x201xf32> to vector<32x187xf32>
    %214 = vector.extract_strided_slice %199 {offsets = [0, 14], sizes = [32, 187], strides = [1, 1]} : vector<32x201xf32> to vector<32x187xf32>
    %215 = tpu.concatenate %200, %201, %202, %203, %204, %205, %206, %207, %208, %209, %210, %211, %212, %213, %214 in 0 : vector<32x187xf32>, vector<32x187xf32>, vector<32x187xf32>, vector<32x187xf32>, vector<32x187xf32>, vector<32x187xf32>, vector<32x187xf32>, vector<32x187xf32>, vector<32x187xf32>, vector<32x187xf32>, vector<32x187xf32>, vector<32x187xf32>, vector<32x187xf32>, vector<32x187xf32>, vector<32x187xf32> -> vector<480x187xf32>
    %cst_49 = arith.constant dense<0.000000e+00> : vector<32x187xf32>
    %216 = tpu.matmul %26, %215, %cst_49 {dimension_numbers = #tpu.dot_dimension_numbers<[1], [0], [0], [1], [0, 0, 1, 1], [], []>} : vector<32x480xf32>, vector<480x187xf32>, vector<32x187xf32> -> vector<32x187xf32>
    %217 = vector.broadcast %27 : vector<32x1xf32> to vector<32x187xf32>
    %218 = arith.addf %216, %217 : vector<32x187xf32>
    %cst_50 = arith.constant 0.000000e+00 : f32
    %219 = vector.broadcast %cst_50 : f32 to vector<32x187xf32>
    %220 = arith.cmpf ogt, %218, %219 : vector<32x187xf32>
    %cst_51 = arith.constant 0.000000e+00 : f32
    %221 = vector.broadcast %cst_51 : f32 to vector<32x187xf32>
    %222 = arith.minimumf %218, %221 : vector<32x187xf32>
    %223 = math.exp %222 : vector<32x187xf32>
    %cst_52 = arith.constant 1.000000e+00 : f32
    %224 = vector.broadcast %cst_52 : f32 to vector<32x187xf32>
    %225 = arith.subf %223, %224 : vector<32x187xf32>
    %226 = arith.select %220, %218, %225 : vector<32x187xi1>, vector<32x187xf32>
    %227 = vector.shape_cast %226 : vector<32x187xf32> to vector<1x32x187xf32>
    %228 = vector.broadcast %227 : vector<1x32x187xf32> to vector<2x32x187xf32>
    %229 = arith.mulf %28, %228 : vector<2x32x187xf32>
    %cst_53 = arith.constant dense<0.000000e+00> : vector<2x32xf32>
    %230 = vector.multi_reduction <add>, %229, %cst_53 [2] : vector<2x32x187xf32> to vector<2x32xf32>
    %cst_54 = arith.constant dense<0.000000e+00> : vector<2xf32>
    %231 = vector.multi_reduction <add>, %230, %cst_54 [1] : vector<2x32xf32> to vector<2xf32>
    %232 = vector.shape_cast %231 : vector<2xf32> to vector<2x1xf32>
    %233 = vector.extract_strided_slice %25 {offsets = [192, 0], sizes = [32, 201], strides = [1, 1]} : vector<256x201xf32> to vector<32x201xf32>
    %234 = vector.extract_strided_slice %233 {offsets = [0, 0], sizes = [32, 187], strides = [1, 1]} : vector<32x201xf32> to vector<32x187xf32>
    %235 = vector.extract_strided_slice %233 {offsets = [0, 1], sizes = [32, 187], strides = [1, 1]} : vector<32x201xf32> to vector<32x187xf32>
    %236 = vector.extract_strided_slice %233 {offsets = [0, 2], sizes = [32, 187], strides = [1, 1]} : vector<32x201xf32> to vector<32x187xf32>
    %237 = vector.extract_strided_slice %233 {offsets = [0, 3], sizes = [32, 187], strides = [1, 1]} : vector<32x201xf32> to vector<32x187xf32>
    %238 = vector.extract_strided_slice %233 {offsets = [0, 4], sizes = [32, 187], strides = [1, 1]} : vector<32x201xf32> to vector<32x187xf32>
    %239 = vector.extract_strided_slice %233 {offsets = [0, 5], sizes = [32, 187], strides = [1, 1]} : vector<32x201xf32> to vector<32x187xf32>
    %240 = vector.extract_strided_slice %233 {offsets = [0, 6], sizes = [32, 187], strides = [1, 1]} : vector<32x201xf32> to vector<32x187xf32>
    %241 = vector.extract_strided_slice %233 {offsets = [0, 7], sizes = [32, 187], strides = [1, 1]} : vector<32x201xf32> to vector<32x187xf32>
    %242 = vector.extract_strided_slice %233 {offsets = [0, 8], sizes = [32, 187], strides = [1, 1]} : vector<32x201xf32> to vector<32x187xf32>
    %243 = vector.extract_strided_slice %233 {offsets = [0, 9], sizes = [32, 187], strides = [1, 1]} : vector<32x201xf32> to vector<32x187xf32>
    %244 = vector.extract_strided_slice %233 {offsets = [0, 10], sizes = [32, 187], strides = [1, 1]} : vector<32x201xf32> to vector<32x187xf32>
    %245 = vector.extract_strided_slice %233 {offsets = [0, 11], sizes = [32, 187], strides = [1, 1]} : vector<32x201xf32> to vector<32x187xf32>
    %246 = vector.extract_strided_slice %233 {offsets = [0, 12], sizes = [32, 187], strides = [1, 1]} : vector<32x201xf32> to vector<32x187xf32>
    %247 = vector.extract_strided_slice %233 {offsets = [0, 13], sizes = [32, 187], strides = [1, 1]} : vector<32x201xf32> to vector<32x187xf32>
    %248 = vector.extract_strided_slice %233 {offsets = [0, 14], sizes = [32, 187], strides = [1, 1]} : vector<32x201xf32> to vector<32x187xf32>
    %249 = tpu.concatenate %234, %235, %236, %237, %238, %239, %240, %241, %242, %243, %244, %245, %246, %247, %248 in 0 : vector<32x187xf32>, vector<32x187xf32>, vector<32x187xf32>, vector<32x187xf32>, vector<32x187xf32>, vector<32x187xf32>, vector<32x187xf32>, vector<32x187xf32>, vector<32x187xf32>, vector<32x187xf32>, vector<32x187xf32>, vector<32x187xf32>, vector<32x187xf32>, vector<32x187xf32>, vector<32x187xf32> -> vector<480x187xf32>
    %cst_55 = arith.constant dense<0.000000e+00> : vector<32x187xf32>
    %250 = tpu.matmul %26, %249, %cst_55 {dimension_numbers = #tpu.dot_dimension_numbers<[1], [0], [0], [1], [0, 0, 1, 1], [], []>} : vector<32x480xf32>, vector<480x187xf32>, vector<32x187xf32> -> vector<32x187xf32>
    %251 = vector.broadcast %27 : vector<32x1xf32> to vector<32x187xf32>
    %252 = arith.addf %250, %251 : vector<32x187xf32>
    %cst_56 = arith.constant 0.000000e+00 : f32
    %253 = vector.broadcast %cst_56 : f32 to vector<32x187xf32>
    %254 = arith.cmpf ogt, %252, %253 : vector<32x187xf32>
    %cst_57 = arith.constant 0.000000e+00 : f32
    %255 = vector.broadcast %cst_57 : f32 to vector<32x187xf32>
    %256 = arith.minimumf %252, %255 : vector<32x187xf32>
    %257 = math.exp %256 : vector<32x187xf32>
    %cst_58 = arith.constant 1.000000e+00 : f32
    %258 = vector.broadcast %cst_58 : f32 to vector<32x187xf32>
    %259 = arith.subf %257, %258 : vector<32x187xf32>
    %260 = arith.select %254, %252, %259 : vector<32x187xi1>, vector<32x187xf32>
    %261 = vector.shape_cast %260 : vector<32x187xf32> to vector<1x32x187xf32>
    %262 = vector.broadcast %261 : vector<1x32x187xf32> to vector<2x32x187xf32>
    %263 = arith.mulf %28, %262 : vector<2x32x187xf32>
    %cst_59 = arith.constant dense<0.000000e+00> : vector<2x32xf32>
    %264 = vector.multi_reduction <add>, %263, %cst_59 [2] : vector<2x32x187xf32> to vector<2x32xf32>
    %cst_60 = arith.constant dense<0.000000e+00> : vector<2xf32>
    %265 = vector.multi_reduction <add>, %264, %cst_60 [1] : vector<2x32xf32> to vector<2xf32>
    %266 = vector.shape_cast %265 : vector<2xf32> to vector<2x1xf32>
    %267 = vector.extract_strided_slice %25 {offsets = [224, 0], sizes = [32, 201], strides = [1, 1]} : vector<256x201xf32> to vector<32x201xf32>
    %268 = vector.extract_strided_slice %267 {offsets = [0, 0], sizes = [32, 187], strides = [1, 1]} : vector<32x201xf32> to vector<32x187xf32>
    %269 = vector.extract_strided_slice %267 {offsets = [0, 1], sizes = [32, 187], strides = [1, 1]} : vector<32x201xf32> to vector<32x187xf32>
    %270 = vector.extract_strided_slice %267 {offsets = [0, 2], sizes = [32, 187], strides = [1, 1]} : vector<32x201xf32> to vector<32x187xf32>
    %271 = vector.extract_strided_slice %267 {offsets = [0, 3], sizes = [32, 187], strides = [1, 1]} : vector<32x201xf32> to vector<32x187xf32>
    %272 = vector.extract_strided_slice %267 {offsets = [0, 4], sizes = [32, 187], strides = [1, 1]} : vector<32x201xf32> to vector<32x187xf32>
    %273 = vector.extract_strided_slice %267 {offsets = [0, 5], sizes = [32, 187], strides = [1, 1]} : vector<32x201xf32> to vector<32x187xf32>
    %274 = vector.extract_strided_slice %267 {offsets = [0, 6], sizes = [32, 187], strides = [1, 1]} : vector<32x201xf32> to vector<32x187xf32>
    %275 = vector.extract_strided_slice %267 {offsets = [0, 7], sizes = [32, 187], strides = [1, 1]} : vector<32x201xf32> to vector<32x187xf32>
    %276 = vector.extract_strided_slice %267 {offsets = [0, 8], sizes = [32, 187], strides = [1, 1]} : vector<32x201xf32> to vector<32x187xf32>
    %277 = vector.extract_strided_slice %267 {offsets = [0, 9], sizes = [32, 187], strides = [1, 1]} : vector<32x201xf32> to vector<32x187xf32>
    %278 = vector.extract_strided_slice %267 {offsets = [0, 10], sizes = [32, 187], strides = [1, 1]} : vector<32x201xf32> to vector<32x187xf32>
    %279 = vector.extract_strided_slice %267 {offsets = [0, 11], sizes = [32, 187], strides = [1, 1]} : vector<32x201xf32> to vector<32x187xf32>
    %280 = vector.extract_strided_slice %267 {offsets = [0, 12], sizes = [32, 187], strides = [1, 1]} : vector<32x201xf32> to vector<32x187xf32>
    %281 = vector.extract_strided_slice %267 {offsets = [0, 13], sizes = [32, 187], strides = [1, 1]} : vector<32x201xf32> to vector<32x187xf32>
    %282 = vector.extract_strided_slice %267 {offsets = [0, 14], sizes = [32, 187], strides = [1, 1]} : vector<32x201xf32> to vector<32x187xf32>
    %283 = tpu.concatenate %268, %269, %270, %271, %272, %273, %274, %275, %276, %277, %278, %279, %280, %281, %282 in 0 : vector<32x187xf32>, vector<32x187xf32>, vector<32x187xf32>, vector<32x187xf32>, vector<32x187xf32>, vector<32x187xf32>, vector<32x187xf32>, vector<32x187xf32>, vector<32x187xf32>, vector<32x187xf32>, vector<32x187xf32>, vector<32x187xf32>, vector<32x187xf32>, vector<32x187xf32>, vector<32x187xf32> -> vector<480x187xf32>
    %cst_61 = arith.constant dense<0.000000e+00> : vector<32x187xf32>
    %284 = tpu.matmul %26, %283, %cst_61 {dimension_numbers = #tpu.dot_dimension_numbers<[1], [0], [0], [1], [0, 0, 1, 1], [], []>} : vector<32x480xf32>, vector<480x187xf32>, vector<32x187xf32> -> vector<32x187xf32>
    %285 = vector.broadcast %27 : vector<32x1xf32> to vector<32x187xf32>
    %286 = arith.addf %284, %285 : vector<32x187xf32>
    %cst_62 = arith.constant 0.000000e+00 : f32
    %287 = vector.broadcast %cst_62 : f32 to vector<32x187xf32>
    %288 = arith.cmpf ogt, %286, %287 : vector<32x187xf32>
    %cst_63 = arith.constant 0.000000e+00 : f32
    %289 = vector.broadcast %cst_63 : f32 to vector<32x187xf32>
    %290 = arith.minimumf %286, %289 : vector<32x187xf32>
    %291 = math.exp %290 : vector<32x187xf32>
    %cst_64 = arith.constant 1.000000e+00 : f32
    %292 = vector.broadcast %cst_64 : f32 to vector<32x187xf32>
    %293 = arith.subf %291, %292 : vector<32x187xf32>
    %294 = arith.select %288, %286, %293 : vector<32x187xi1>, vector<32x187xf32>
    %295 = vector.shape_cast %294 : vector<32x187xf32> to vector<1x32x187xf32>
    %296 = vector.broadcast %295 : vector<1x32x187xf32> to vector<2x32x187xf32>
    %297 = arith.mulf %28, %296 : vector<2x32x187xf32>
    %cst_65 = arith.constant dense<0.000000e+00> : vector<2x32xf32>
    %298 = vector.multi_reduction <add>, %297, %cst_65 [2] : vector<2x32x187xf32> to vector<2x32xf32>
    %cst_66 = arith.constant dense<0.000000e+00> : vector<2xf32>
    %299 = vector.multi_reduction <add>, %298, %cst_66 [1] : vector<2x32xf32> to vector<2xf32>
    %300 = vector.shape_cast %299 : vector<2xf32> to vector<2x1xf32>
    %301 = tpu.concatenate %62, %96, %130, %164, %198, %232, %266, %300 in 1 : vector<2x1xf32>, vector<2x1xf32>, vector<2x1xf32>, vector<2x1xf32>, vector<2x1xf32>, vector<2x1xf32>, vector<2x1xf32>, vector<2x1xf32> -> vector<2x8xf32>
    %c0_67 = arith.constant 0 : index
    %c0_68 = arith.constant 0 : index
    %302 = vector.load %arg8[%c0_67, %c0_68] : memref<2x1xf32, #tpu.memory_space<vmem>>, vector<2x1xf32>
    %303 = vector.broadcast %302 : vector<2x1xf32> to vector<2x8xf32>
    %304 = arith.addf %301, %303 : vector<2x8xf32>
    %c0_69 = arith.constant 0 : index
    %c0_70 = arith.constant 0 : index
    %c0_71 = arith.constant 0 : index
    %305 = vector.load %arg9[%c0_69, %c0_70, %c0_71] : memref<1x2x8xf32, #tpu.memory_space<vmem>>, vector<1x2x8xf32>
    %306 = vector.shape_cast %305 : vector<1x2x8xf32> to vector<2x8xf32>
    %307 = vector.shape_cast %304 : vector<2x8xf32> to vector<1x2x8xf32>
    tpu.vector_store %arg9[%c0_69, %c0_70, %c0_71], %307 {strides = array<i32>} : memref<1x2x8xf32, #tpu.memory_space<vmem>>, vector<1x2x8xf32>,
    return
  }
  func.func @transform_0(%arg0: i32) -> (i32, i32, i32) {
    %c0_i32 = arith.constant 0 : i32
    %c0_i32_0 = arith.constant 0 : i32
    %c0_i32_1 = arith.constant 0 : i32
    return %arg0, %c0_i32, %c0_i32_0 : i32, i32, i32
  }
  func.func @transform_1(%arg0: i32) -> (i32, i32) {
    %c0_i32 = arith.constant 0 : i32
    %c0_i32_0 = arith.constant 0 : i32
    %c0_i32_1 = arith.constant 0 : i32
    return %c0_i32, %c0_i32_0 : i32, i32
  }
  func.func @transform_2(%arg0: i32) -> (i32, i32) {
    %c0_i32 = arith.constant 0 : i32
    %c0_i32_0 = arith.constant 0 : i32
    %c0_i32_1 = arith.constant 0 : i32
    return %c0_i32, %c0_i32_0 : i32, i32
  }
  func.func @transform_3(%arg0: i32) -> (i32, i32) {
    %c0_i32 = arith.constant 0 : i32
    %c0_i32_0 = arith.constant 0 : i32
    %c0_i32_1 = arith.constant 0 : i32
    return %c0_i32, %c0_i32_0 : i32, i32
  }
  func.func @transform_4(%arg0: i32) -> (i32, i32) {
    %c0_i32 = arith.constant 0 : i32
    %c0_i32_0 = arith.constant 0 : i32
    %c0_i32_1 = arith.constant 0 : i32
    return %c0_i32, %c0_i32_0 : i32, i32
  }
  func.func @transform_5(%arg0: i32) -> (i32, i32) {
    %c0_i32 = arith.constant 0 : i32
    %c0_i32_0 = arith.constant 0 : i32
    %c0_i32_1 = arith.constant 0 : i32
    return %c0_i32, %c0_i32_0 : i32, i32
  }
  func.func @transform_6(%arg0: i32) -> (i32, i32, i32) {
    %c0_i32 = arith.constant 0 : i32
    %c0_i32_0 = arith.constant 0 : i32
    %c0_i32_1 = arith.constant 0 : i32
    %c0_i32_2 = arith.constant 0 : i32
    return %c0_i32, %c0_i32_0, %c0_i32_1 : i32, i32, i32
  }
  func.func @transform_7(%arg0: i32) -> (i32, i32) {
    %c0_i32 = arith.constant 0 : i32
    %c0_i32_0 = arith.constant 0 : i32
    %c0_i32_1 = arith.constant 0 : i32
    return %c0_i32, %c0_i32_0 : i32, i32
  }
  func.func @transform_8(%arg0: i32) -> (i32, i32, i32) {
    %c0_i32 = arith.constant 0 : i32
    %c0_i32_0 = arith.constant 0 : i32
    %c0_i32_1 = arith.constant 0 : i32
    return %arg0, %c0_i32, %c0_i32_0 : i32, i32, i32
  }
}

</mosaic_0001>

<llo_original>
// kernel: _eegnet_forward_impl.1
$region0: #{_eegnet_forward_impl.1}
  #allocation0 [shape = 'u32[]', space=smem, size = 0x4, offset = 0x4, fixed_abs, tag = 'smem constant byte address 0x4 - core index']
  #allocation1 [shape = 'u32[72,128]{1,0:T(1,128)}', space=vmem, size = 0x9000, scoped, tag = 'internal scratch']
  %s0 = inlined_call_operand.vmem [shape: bf16[2,102,6144], index: 0, kind: input, shape index: {}]
  %s1 = inlined_call_operand.vmem [shape: bf16[32,102], index: 1, kind: input, shape index: {}]
  %s2 = inlined_call_operand.vmem [shape: f32[32,1], index: 2, kind: input, shape index: {}]
  %s3 = inlined_call_operand.vmem [shape: f32[768,201], index: 3, kind: input, shape index: {}]
  %s4 = inlined_call_operand.vmem [shape: f32[32,480], index: 4, kind: input, shape index: {}]
  %s5 = inlined_call_operand.vmem [shape: f32[32,1], index: 5, kind: input, shape index: {}]
  %s6 = inlined_call_operand.vmem [shape: f32[2,32,187], index: 6, kind: input, shape index: {}]
  %s7 = inlined_call_operand.vmem [shape: f32[2,1], index: 7, kind: input, shape index: {}]
  %s8 = inlined_call_operand.vmem [shape: f32[2,2,8], index: 8, kind: output, shape index: {}]
  %s9 = sld [smem:[#allocation0]]
  $region65: #{_eegnet_forward_impl.1} parent=0
    _
  %s11 = ssub.s32 1, %s9
  %s12 = scalar_select 0, %s11, %s9
  loop: start=0, step=1, limit=4
  $region2: #{_eegnet_forward_impl.1} parent=0 // loop_pre_header
    _
  $region3: #{_eegnet_forward_impl.1} parent=0 // loop_header
    %s14 = sphi 0, %s18
    %p15 = scmp.ge.s32.totalorder %s14, 4
    %s24 = sphi 0, %s26
    %s27 = sphi 0, %s24
    %s28 = sphi 0, %s27
    %s44 = sphi 0, %s28
    %s48 = sphi 0, %s48
    %s50 = sphi 0, %s48
    %s51 = sphi 0, %s50
    %s65 = sphi 0, %s51
    %s69 = sphi 0, %s69
    %s71 = sphi 0, %s69
    %s72 = sphi 0, %s71
    %s86 = sphi 0, %s72
    %s90 = sphi 0, %s90
    %s92 = sphi 0, %s90
    %s93 = sphi 0, %s92
    %s107 = sphi 0, %s93
    %s111 = sphi 0, %s111
    %s113 = sphi 0, %s111
    %s114 = sphi 0, %s113
    %s128 = sphi 0, %s114
    %s132 = sphi 0, %s132
    %s134 = sphi 0, %s132
    %s135 = sphi 0, %s134
    %s149 = sphi 0, %s135
    %s153 = sphi 0, %s153
    %s155 = sphi 0, %s153
    %s156 = sphi 0, %s155
    %s170 = sphi 0, %s156
    %s174 = sphi 0, %s174
    %s176 = sphi 0, %s174
    %s177 = sphi 0, %s176
    %s191 = sphi 0, %s177
    %s197 = sphi 0, %s199
    %s200 = sphi 0, %s197
    %s201 = sphi 0, %s200
    %s217 = sphi 0, %s201
  $region4: #{_eegnet_forward_impl.1} parent=0 // loop_header_branch
    %17 = sbr.rel (%p15) target = $region8
  $region5: #{_eegnet_forward_impl.1} parent=0 // loop_body
    %s19 = ssub.s32 %s14, 1
    %s20 = ssub.s32 %s14, 2
    %s21 = sadd.s32 %s14, 1
    %s22 = ssub.s32 %s14, %s21
    %p23 = scmp.eq.s32.totalorder %s22, 0
    %s25 = sadd.s32 %s24, 1
    %s26 = scalar_select %p23, %s24, %s25
    %p29 = pneg %p23
    %p30 = scmp.eq.s32.totalorder %s14, 1
    %p31 = por %p29, %p30
    %p32 = scmp.ne.s32.totalorder %s24, %s27
    %p33 = scmp.eq.s32.totalorder %s14, 0
    %p34 = por %p32, %p33
    %p35 = scmp.ne.s32.totalorder %s24, %s27
    %p36 = scmp.eq.s32.totalorder %s19, 1
    %p37 = por %p35, %p36
    %p38 = scmp.ne.s32.totalorder %s27, %s28
    %p39 = scmp.eq.s32.totalorder %s19, 0
    %p40 = por %p38, %p39
    %p41 = scmp.ne.s32.totalorder %s27, %s28
    %p42 = scmp.eq.s32.totalorder %s20, 1
    %p43 = por %p41, %p42
    %p45 = scmp.ne.s32.totalorder %s28, %s44
    %p46 = scmp.eq.s32.totalorder %s20, 0
    %p47 = por %p45, %p46
    %s49 = sadd.s32 %s48, 1
    %p52 = scmp.eq.s32.totalorder %s14, 1
    %p53 = scmp.ne.s32.totalorder %s48, %s50
    %p54 = scmp.eq.s32.totalorder %s14, 0
    %p55 = por %p53, %p54
    %p56 = scmp.ne.s32.totalorder %s48, %s50
    %p57 = scmp.eq.s32.totalorder %s19, 1
    %p58 = por %p56, %p57
    %p59 = scmp.ne.s32.totalorder %s50, %s51
    %p60 = scmp.eq.s32.totalorder %s19, 0
    %p61 = por %p59, %p60
    %p62 = scmp.ne.s32.totalorder %s50, %s51
    %p63 = scmp.eq.s32.totalorder %s20, 1
    %p64 = por %p62, %p63
    %p66 = scmp.ne.s32.totalorder %s51, %s65
    %p67 = scmp.eq.s32.totalorder %s20, 0
    %p68 = por %p66, %p67
    %s70 = sadd.s32 %s69, 1
    %p73 = scmp.eq.s32.totalorder %s14, 1
    %p74 = scmp.ne.s32.totalorder %s69, %s71
    %p75 = scmp.eq.s32.totalorder %s14, 0
    %p76 = por %p74, %p75
    %p77 = scmp.ne.s32.totalorder %s69, %s71
    %p78 = scmp.eq.s32.totalorder %s19, 1
    %p79 = por %p77, %p78
    %p80 = scmp.ne.s32.totalorder %s71, %s72
    %p81 = scmp.eq.s32.totalorder %s19, 0
    %p82 = por %p80, %p81
    %p83 = scmp.ne.s32.totalorder %s71, %s72
    %p84 = scmp.eq.s32.totalorder %s20, 1
    %p85 = por %p83, %p84
    %p87 = scmp.ne.s32.totalorder %s72, %s86
    %p88 = scmp.eq.s32.totalorder %s20, 0
    %p89 = por %p87, %p88
    %s91 = sadd.s32 %s90, 1
    %p94 = scmp.eq.s32.totalorder %s14, 1
    %p95 = scmp.ne.s32.totalorder %s90, %s92
    %p96 = scmp.eq.s32.totalorder %s14, 0
    %p97 = por %p95, %p96
    %p98 = scmp.ne.s32.totalorder %s90, %s92
    %p99 = scmp.eq.s32.totalorder %s19, 1
    %p100 = por %p98, %p99
    %p101 = scmp.ne.s32.totalorder %s92, %s93
    %p102 = scmp.eq.s32.totalorder %s19, 0
    %p103 = por %p101, %p102
    %p104 = scmp.ne.s32.totalorder %s92, %s93
    %p105 = scmp.eq.s32.totalorder %s20, 1
    %p106 = por %p104, %p105
    %p108 = scmp.ne.s32.totalorder %s93, %s107
    %p109 = scmp.eq.s32.totalorder %s20, 0
    %p110 = por %p108, %p109
    %s112 = sadd.s32 %s111, 1
    %p115 = scmp.eq.s32.totalorder %s14, 1
    %p116 = scmp.ne.s32.totalorder %s111, %s113
    %p117 = scmp.eq.s32.totalorder %s14, 0
    %p118 = por %p116, %p117
    %p119 = scmp.ne.s32.totalorder %s111, %s113
    %p120 = scmp.eq.s32.totalorder %s19, 1
    %p121 = por %p119, %p120
    %p122 = scmp.ne.s32.totalorder %s113, %s114
    %p123 = scmp.eq.s32.totalorder %s19, 0
    %p124 = por %p122, %p123
    %p125 = scmp.ne.s32.totalorder %s113, %s114
    %p126 = scmp.eq.s32.totalorder %s20, 1
    %p127 = por %p125, %p126
    %p129 = scmp.ne.s32.totalorder %s114, %s128
    %p130 = scmp.eq.s32.totalorder %s20, 0
    %p131 = por %p129, %p130
    %s133 = sadd.s32 %s132, 1
    %p136 = scmp.eq.s32.totalorder %s14, 1
    %p137 = scmp.ne.s32.totalorder %s132, %s134
    %p138 = scmp.eq.s32.totalorder %s14, 0
    %p139 = por %p137, %p138
    %p140 = scmp.ne.s32.totalorder %s132, %s134
    %p141 = scmp.eq.s32.totalorder %s19, 1
    %p142 = por %p140, %p141
    %p143 = scmp.ne.s32.totalorder %s134, %s135
    %p144 = scmp.eq.s32.totalorder %s19, 0
    %p145 = por %p143, %p144
    %p146 = scmp.ne.s32.totalorder %s134, %s135
    %p147 = scmp.eq.s32.totalorder %s20, 1
    %p148 = por %p146, %p147
    %p150 = scmp.ne.s32.totalorder %s135, %s149
    %p151 = scmp.eq.s32.totalorder %s20, 0
    %p152 = por %p150, %p151
    %s154 = sadd.s32 %s153, 1
    %p157 = scmp.eq.s32.totalorder %s14, 1
    %p158 = scmp.ne.s32.totalorder %s153, %s155
    %p159 = scmp.eq.s32.totalorder %s14, 0
    %p160 = por %p158, %p159
    %p161 = scmp.ne.s32.totalorder %s153, %s155
    %p162 = scmp.eq.s32.totalorder %s19, 1
    %p163 = por %p161, %p162
    %p164 = scmp.ne.s32.totalorder %s155, %s156
    %p165 = scmp.eq.s32.totalorder %s19, 0
    %p166 = por %p164, %p165
    %p167 = scmp.ne.s32.totalorder %s155, %s156
    %p168 = scmp.eq.s32.totalorder %s20, 1
    %p169 = por %p167, %p168
    %p171 = scmp.ne.s32.totalorder %s156, %s170
    %p172 = scmp.eq.s32.totalorder %s20, 0
    %p173 = por %p171, %p172
    %s175 = sadd.s32 %s174, 1
    %p178 = scmp.eq.s32.totalorder %s14, 1
    %p179 = scmp.ne.s32.totalorder %s174, %s176
    %p180 = scmp.eq.s32.totalorder %s14, 0
    %p181 = por %p179, %p180
    %p182 = scmp.ne.s32.totalorder %s174, %s176
    %p183 = scmp.eq.s32.totalorder %s19, 1
    %p184 = por %p182, %p183
    %p185 = scmp.ne.s32.totalorder %s176, %s177
    %p186 = scmp.eq.s32.totalorder %s19, 0
    %p187 = por %p185, %p186
    %p188 = scmp.ne.s32.totalorder %s176, %s177
    %p189 = scmp.eq.s32.totalorder %s20, 1
    %p190 = por %p188, %p189
    %p192 = scmp.ne.s32.totalorder %s177, %s191
    %p193 = scmp.eq.s32.totalorder %s20, 0
    %p194 = por %p192, %p193
    %s195 = ssub.s32 %s14, %s21
    %p196 = scmp.eq.s32.totalorder %s195, 0
    %s198 = sadd.s32 %s197, 1
    %s199 = scalar_select %p196, %s197, %s198
    %p202 = pneg %p196
    %p203 = scmp.eq.s32.totalorder %s14, 1
    %p204 = por %p202, %p203
    %p205 = scmp.ne.s32.totalorder %s197, %s200
    %p206 = scmp.eq.s32.totalorder %s14, 0
    %p207 = por %p205, %p206
    %p208 = scmp.ne.s32.totalorder %s197, %s200
    %p209 = scmp.eq.s32.totalorder %s19, 1
    %p210 = por %p208, %p209
    %p211 = scmp.ne.s32.totalorder %s200, %s201
    %p212 = scmp.eq.s32.totalorder %s19, 0
    %p213 = por %p211, %p212
    %p214 = scmp.ne.s32.totalorder %s200, %s201
    %p215 = scmp.eq.s32.totalorder %s20, 1
    %p216 = por %p214, %p215
    %p218 = scmp.ne.s32.totalorder %s201, %s217
    %p219 = scmp.eq.s32.totalorder %s20, 0
    %p220 = por %p218, %p219
    %p221 = scmp.le.s32.totalorder 1, %s14
    %p222 = scmp.lt.s32.totalorder %s14, 3
    %p223 = pnand %p221, %p222
    %p224 = pneg %p223
    // Predicated region
    $region9: #{_eegnet_forward_impl.1} parent=5 // pred_check
      _
    $region10: #{_eegnet_forward_impl.1} parent=5 // pred_check_branch
      %226 = sbr.rel (%p223) target = $region12
    $region11: #{_eegnet_forward_impl.1} parent=5 // pred_region
      %s227 = ssub.s32 %s14, 1
      // Predicated region
      $region13: #{_eegnet_forward_impl.1} parent=11 // pred_check
        %p228 = pneg %p61
      $region14: #{_eegnet_forward_impl.1} parent=11 // pred_check_branch
        %230 = sbr.rel (%p228) target = $region16
      $region15: #{_eegnet_forward_impl.1} parent=11 // pred_region
        _
      $region16: #{_eegnet_forward_impl.1} parent=11 // pred_fallthru
        _
      // Predicated region
      $region17: #{_eegnet_forward_impl.1} parent=11 // pred_check
        %p231 = pneg %p82
      $region18: #{_eegnet_forward_impl.1} parent=11 // pred_check_branch
        %233 = sbr.rel (%p231) target = $region20
      $region19: #{_eegnet_forward_impl.1} parent=11 // pred_region
        _
      $region20: #{_eegnet_forward_impl.1} parent=11 // pred_fallthru
        _
      // Predicated region
      $region21: #{_eegnet_forward_impl.1} parent=11 // pred_check
        %p234 = pneg %p103
      $region22: #{_eegnet_forward_impl.1} parent=11 // pred_check_branch
        %236 = sbr.rel (%p234) target = $region24
      $region23: #{_eegnet_forward_impl.1} parent=11 // pred_region
        _
      $region24: #{_eegnet_forward_impl.1} parent=11 // pred_fallthru
        _
      // Predicated region
      $region25: #{_eegnet_forward_impl.1} parent=11 // pred_check
        %p237 = pneg %p124
      $region26: #{_eegnet_forward_impl.1} parent=11 // pred_check_branch
        %239 = sbr.rel (%p237) target = $region28
      $region27: #{_eegnet_forward_impl.1} parent=11 // pred_region
        _
      $region28: #{_eegnet_forward_impl.1} parent=11 // pred_fallthru
        _
      // Predicated region
      $region29: #{_eegnet_forward_impl.1} parent=11 // pred_check
        %p240 = pneg %p145
      $region30: #{_eegnet_forward_impl.1} parent=11 // pred_check_branch
        %242 = sbr.rel (%p240) target = $region32
      $region31: #{_eegnet_forward_impl.1} parent=11 // pred_region
        _
      $region32: #{_eegnet_forward_impl.1} parent=11 // pred_fallthru
        _
      // Predicated region
      $region33: #{_eegnet_forward_impl.1} parent=11 // pred_check
        %p243 = pneg %p166
      $region34: #{_eegnet_forward_impl.1} parent=11 // pred_check_branch
        %245 = sbr.rel (%p243) target = $region36
      $region35: #{_eegnet_forward_impl.1} parent=11 // pred_region
        _
      $region36: #{_eegnet_forward_impl.1} parent=11 // pred_fallthru
        _
      // Predicated region
      $region37: #{_eegnet_forward_impl.1} parent=11 // pred_check
        %p246 = pneg %p187
      $region38: #{_eegnet_forward_impl.1} parent=11 // pred_check_branch
        %248 = sbr.rel (%p246) target = $region40
      $region39: #{_eegnet_forward_impl.1} parent=11 // pred_region
        _
      $region40: #{_eegnet_forward_impl.1} parent=11 // pred_fallthru
        _
    $region12: #{_eegnet_forward_impl.1} parent=5 // pred_fallthru
      _
    %p249 = scmp.lt.s32.totalorder %s14, 2
    // Predicated region
    $region41: #{_eegnet_forward_impl.1} parent=5 // pred_check
      %p250 = pneg %p249
    $region42: #{_eegnet_forward_impl.1} parent=5 // pred_check_branch
      %252 = sbr.rel (%p250) target = $region44
    $region43: #{_eegnet_forward_impl.1} parent=5 // pred_region
      // Predicated region
      $region45: #{_eegnet_forward_impl.1} parent=43 // pred_check
        %p253 = pneg %p34
      $region46: #{_eegnet_forward_impl.1} parent=43 // pred_check_branch
        %255 = sbr.rel (%p253) target = $region48
      $region47: #{_eegnet_forward_impl.1} parent=43 // pred_region
        %p256 = scmp.lt.s32.totalorder %s14, 1
        %s257 = scalar_select %p256, %s14, 1
        %s258 = smul.addr %s257, 624
        %s259 = smul.addr %s258, 4
        %s260 = scalar_lea.vmem %s0, %s259
      $region48: #{_eegnet_forward_impl.1} parent=43 // pred_fallthru
        _
    $region44: #{_eegnet_forward_impl.1} parent=5 // pred_fallthru
      _
    %p261 = scmp.le.s32.totalorder 1, %s14
    %p262 = scmp.lt.s32.totalorder %s14, 3
    %p263 = pnand %p261, %p262
    %p264 = pneg %p263
    // Predicated region
    $region49: #{_eegnet_forward_impl.1} parent=5 // pred_check
      _
    $region50: #{_eegnet_forward_impl.1} parent=5 // pred_check_branch
      %266 = sbr.rel (%p263) target = $region52
    $region51: #{_eegnet_forward_impl.1} parent=5 // pred_region
      %s267 = ssub.s32 %s14, 1
      %p268 = scmp.lt.s32.totalorder %s19, 1
      %s269 = scalar_select %p268, %s19, 1
      %s270 = smul.addr %s269, 624
      %s271 = smul.addr %s270, 4
      %s272 = scalar_lea.vmem %s0, %s271
      %p273 = pneg %p40
      %p274 = pneg %p37
      %p275 = pneg %p61
      %p276 = pneg %p58
      %p277 = pneg %p82
      %p278 = pneg %p79
      %p279 = pneg %p103
      %p280 = pneg %p100
      %p281 = pneg %p124
      %p282 = pneg %p121
      %p283 = pneg %p145
      %p284 = pneg %p142
      %p285 = pneg %p166
      %p286 = pneg %p163
      %p287 = pneg %p187
      %p288 = pneg %p184
      %p289 = pneg %p213
      %p290 = pneg %p210
      %p291 = scmp.lt.s32.totalorder %s19, 1
      %s292 = scalar_select %p291, %s19, 1
      %s293 = smul.addr %s292, 2
      %s294 = scalar_lea.vmem %s8, %s293
      %p295 = scmp.lt.s32.totalorder %s19, 1
      %s296 = scalar_select %p295, %s19, 1
      %s297 = smul.addr %s296, 624
      %s298 = smul.addr %s297, 4
      %s299 = scalar_lea.vmem %s0, %s298
      %p300 = scmp.lt.s32.totalorder %s19, 1
      %s301 = scalar_select %p300, %s19, 1
      %s302 = smul.addr %s301, 2
      %s303 = scalar_lea.vmem %s8, %s302
      %v305 = vld [vmem:[%s299] sm:$0xff]
      %v306 = vld [vmem:[%s299 + $0x8] sm:$0xff]
      %v307 = vld [vmem:[%s299 + $0x10] sm:$0xff]
      %v308 = vld [vmem:[%s299 + $0x18] sm:$0xff]
      %v309 = vld [vmem:[%s299 + $0x20] sm:$0xff]
      %v310 = vld [vmem:[%s299 + $0x28] sm:$0xff]
      %v311 = vld [vmem:[%s299 + $0x30] sm:$0xff]
      %v312 = vld [vmem:[%s299 + $0x38] sm:$0xff]
      %v313 = vld [vmem:[%s299 + $0x40] sm:$0xff]
      %v314 = vld [vmem:[%s299 + $0x48] sm:$0xff]
      %v315 = vld [vmem:[%s299 + $0x50] sm:$0xff]
      %v316 = vld [vmem:[%s299 + $0x58] sm:$0xff]
      %v317 = vld [vmem:[%s299 + $0x60] sm:$0xff]
      %v318 = vld [vmem:[%s299 + $0x68] sm:$0xff]
      %v319 = vld [vmem:[%s299 + $0x70] sm:$0xff]
      %v320 = vld [vmem:[%s299 + $0x78] sm:$0xff]
      %v321 = vld [vmem:[%s299 + $0x80] sm:$0xff]
      %v322 = vld [vmem:[%s299 + $0x88] sm:$0xff]
      %v323 = vld [vmem:[%s299 + $0x90] sm:$0xff]
      %v324 = vld [vmem:[%s299 + $0x98] sm:$0xff]
      %v325 = vld [vmem:[%s299 + $0xa0] sm:$0xff]
      %v326 = vld [vmem:[%s299 + $0xa8] sm:$0xff]
      %v327 = vld [vmem:[%s299 + $0xb0] sm:$0xff]
      %v328 = vld [vmem:[%s299 + $0xb8] sm:$0xff]
      %v329 = vld [vmem:[%s299 + $0xc0] sm:$0xff]
      %v330 = vld [vmem:[%s299 + $0xc8] sm:$0xff]
      %v331 = vld [vmem:[%s299 + $0xd0] sm:$0xff]
      %v332 = vld [vmem:[%s299 + $0xd8] sm:$0xff]
      %v333 = vld [vmem:[%s299 + $0xe0] sm:$0xff]
      %v334 = vld [vmem:[%s299 + $0xe8] sm:$0xff]
      %v335 = vld [vmem:[%s299 + $0xf0] sm:$0xff]
      %v336 = vld [vmem:[%s299 + $0xf8] sm:$0xff]
      %v337 = vld [vmem:[%s299 + $0x100] sm:$0xff]
      %v338 = vld [vmem:[%s299 + $0x108] sm:$0xff]
      %v339 = vld [vmem:[%s299 + $0x110] sm:$0xff]
      %v340 = vld [vmem:[%s299 + $0x118] sm:$0xff]
      %v341 = vld [vmem:[%s299 + $0x120] sm:$0xff]
      %v342 = vld [vmem:[%s299 + $0x128] sm:$0xff]
      %v343 = vld [vmem:[%s299 + $0x130] sm:$0xff]
      %v344 = vld [vmem:[%s299 + $0x138] sm:$0xff]
      %v345 = vld [vmem:[%s299 + $0x140] sm:$0xff]
      %v346 = vld [vmem:[%s299 + $0x148] sm:$0xff]
      %v347 = vld [vmem:[%s299 + $0x150] sm:$0xff]
      %v348 = vld [vmem:[%s299 + $0x158] sm:$0xff]
      %v349 = vld [vmem:[%s299 + $0x160] sm:$0xff]
      %v350 = vld [vmem:[%s299 + $0x168] sm:$0xff]
      %v351 = vld [vmem:[%s299 + $0x170] sm:$0xff]
      %v352 = vld [vmem:[%s299 + $0x178] sm:$0xff]
      %v353 = vld [vmem:[%s299 + $0x180] sm:$0xff]
      %v354 = vld [vmem:[%s299 + $0x188] sm:$0xff]
      %v355 = vld [vmem:[%s299 + $0x190] sm:$0xff]
      %v356 = vld [vmem:[%s299 + $0x198] sm:$0xff]
      %v357 = vld [vmem:[%s299 + $0x1a0] sm:$0xff]
      %v358 = vld [vmem:[%s299 + $0x1a8] sm:$0xff]
      %v359 = vld [vmem:[%s299 + $0x1b0] sm:$0xff]
      %v360 = vld [vmem:[%s299 + $0x1b8] sm:$0xff]
      %v361 = vld [vmem:[%s299 + $0x1c0] sm:$0xff]
      %v362 = vld [vmem:[%s299 + $0x1c8] sm:$0xff]
      %v363 = vld [vmem:[%s299 + $0x1d0] sm:$0xff]
      %v364 = vld [vmem:[%s299 + $0x1d8] sm:$0xff]
      %v365 = vld [vmem:[%s299 + $0x1e0] sm:$0xff]
      %v366 = vld [vmem:[%s299 + $0x1e8] sm:$0xff]
      %v367 = vld [vmem:[%s299 + $0x1f0] sm:$0xff]
      %v368 = vld [vmem:[%s299 + $0x1f8] sm:$0xff]
      %v369 = vld [vmem:[%s299 + $0x200] sm:$0xff]
      %v370 = vld [vmem:[%s299 + $0x208] sm:$0xff]
      %v371 = vld [vmem:[%s299 + $0x210] sm:$0xff]
      %v372 = vld [vmem:[%s299 + $0x218] sm:$0xff]
      %v373 = vld [vmem:[%s299 + $0x220] sm:$0xff]
      %v374 = vld [vmem:[%s299 + $0x228] sm:$0xff]
      %v375 = vld [vmem:[%s299 + $0x230] sm:$0xff]
      %v376 = vld [vmem:[%s299 + $0x238] sm:$0xff]
      %v377 = vld [vmem:[%s299 + $0x240] sm:$0xff]
      %v378 = vld [vmem:[%s299 + $0x248] sm:$0xff]
      %v379 = vld [vmem:[%s299 + $0x250] sm:$0xff]
      %v380 = vld [vmem:[%s299 + $0x258] sm:$0xff]
      %v381 = vld [vmem:[%s299 + $0x260] sm:$0xff]
      %v382 = vld [vmem:[%s299 + $0x268] sm:$0xff]
      %v383 = vld [vmem:[%s299 + $0x270] sm:$0xff]
      %v384 = vld [vmem:[%s299 + $0x278] sm:$0xff]
      %v385 = vld [vmem:[%s299 + $0x280] sm:$0xff]
      %v386 = vld [vmem:[%s299 + $0x288] sm:$0xff]
      %v387 = vld [vmem:[%s299 + $0x290] sm:$0xff]
      %v388 = vld [vmem:[%s299 + $0x298] sm:$0xff]
      %v389 = vld [vmem:[%s299 + $0x2a0] sm:$0xff]
      %v390 = vld [vmem:[%s299 + $0x2a8] sm:$0xff]
      %v391 = vld [vmem:[%s299 + $0x2b0] sm:$0xff]
      %v392 = vld [vmem:[%s299 + $0x2b8] sm:$0xff]
      %v393 = vld [vmem:[%s299 + $0x2c0] sm:$0xff]
      %v394 = vld [vmem:[%s299 + $0x2c8] sm:$0xff]
      %v395 = vld [vmem:[%s299 + $0x2d0] sm:$0xff]
      %v396 = vld [vmem:[%s299 + $0x2d8] sm:$0xff]
      %v397 = vld [vmem:[%s299 + $0x2e0] sm:$0xff]
      %v398 = vld [vmem:[%s299 + $0x2e8] sm:$0xff]
      %v399 = vld [vmem:[%s299 + $0x2f0] sm:$0xff]
      %v400 = vld [vmem:[%s299 + $0x2f8] sm:$0xff]
      %v401 = vld [vmem:[%s299 + $0x300] sm:$0xff]
      %v402 = vld [vmem:[%s299 + $0x308] sm:$0xff]
      %v403 = vld [vmem:[%s299 + $0x310] sm:$0xff]
      %v404 = vld [vmem:[%s299 + $0x318] sm:$0xff]
      %v405 = vld [vmem:[%s299 + $0x320] sm:$0xff]
      %v406 = vld [vmem:[%s299 + $0x328] sm:$0xff]
      %v407 = vld [vmem:[%s299 + $0x330] sm:$0xff]
      %v408 = vld [vmem:[%s299 + $0x338] sm:$0xff]
      %v409 = vld [vmem:[%s299 + $0x340] sm:$0xff]
      %v410 = vld [vmem:[%s299 + $0x348] sm:$0xff]
      %v411 = vld [vmem:[%s299 + $0x350] sm:$0xff]
      %v412 = vld [vmem:[%s299 + $0x358] sm:$0xff]
      %v413 = vld [vmem:[%s299 + $0x360] sm:$0xff]
      %v414 = vld [vmem:[%s299 + $0x368] sm:$0xff]
      %v415 = vld [vmem:[%s299 + $0x370] sm:$0xff]
      %v416 = vld [vmem:[%s299 + $0x378] sm:$0xff]
      %v417 = vld [vmem:[%s299 + $0x380] sm:$0xff]
      %v418 = vld [vmem:[%s299 + $0x388] sm:$0xff]
      %v419 = vld [vmem:[%s299 + $0x390] sm:$0xff]
      %v420 = vld [vmem:[%s299 + $0x398] sm:$0xff]
      %v421 = vld [vmem:[%s299 + $0x3a0] sm:$0xff]
      %v422 = vld [vmem:[%s299 + $0x3a8] sm:$0xff]
      %v423 = vld [vmem:[%s299 + $0x3b0] sm:$0xff]
      %v424 = vld [vmem:[%s299 + $0x3b8] sm:$0xff]
      %v425 = vld [vmem:[%s299 + $0x3c0] sm:$0xff]
      %v426 = vld [vmem:[%s299 + $0x3c8] sm:$0xff]
      %v427 = vld [vmem:[%s299 + $0x3d0] sm:$0xff]
      %v428 = vld [vmem:[%s299 + $0x3d8] sm:$0xff]
      %v429 = vld [vmem:[%s299 + $0x3e0] sm:$0xff]
      %v430 = vld [vmem:[%s299 + $0x3e8] sm:$0xff]
      %v431 = vld [vmem:[%s299 + $0x3f0] sm:$0xff]
      %v432 = vld [vmem:[%s299 + $0x3f8] sm:$0xff]
      %v433 = vld [vmem:[%s299 + $0x400] sm:$0xff]
      %v434 = vld [vmem:[%s299 + $0x408] sm:$0xff]
      %v435 = vld [vmem:[%s299 + $0x410] sm:$0xff]
      %v436 = vld [vmem:[%s299 + $0x418] sm:$0xff]
      %v437 = vld [vmem:[%s299 + $0x420] sm:$0xff]
      %v438 = vld [vmem:[%s299 + $0x428] sm:$0xff]
      %v439 = vld [vmem:[%s299 + $0x430] sm:$0xff]
      %v440 = vld [vmem:[%s299 + $0x438] sm:$0xff]
      %v441 = vld [vmem:[%s299 + $0x440] sm:$0xff]
      %v442 = vld [vmem:[%s299 + $0x448] sm:$0xff]
      %v443 = vld [vmem:[%s299 + $0x450] sm:$0xff]
      %v444 = vld [vmem:[%s299 + $0x458] sm:$0xff]
      %v445 = vld [vmem:[%s299 + $0x460] sm:$0xff]
      %v446 = vld [vmem:[%s299 + $0x468] sm:$0xff]
      %v447 = vld [vmem:[%s299 + $0x470] sm:$0xff]
      %v448 = vld [vmem:[%s299 + $0x478] sm:$0xff]
      %v449 = vld [vmem:[%s299 + $0x480] sm:$0xff]
      %v450 = vld [vmem:[%s299 + $0x488] sm:$0xff]
      %v451 = vld [vmem:[%s299 + $0x490] sm:$0xff]
      %v452 = vld [vmem:[%s299 + $0x498] sm:$0xff]
      %v453 = vld [vmem:[%s299 + $0x4a0] sm:$0xff]
      %v454 = vld [vmem:[%s299 + $0x4a8] sm:$0xff]
      %v455 = vld [vmem:[%s299 + $0x4b0] sm:$0xff]
      %v456 = vld [vmem:[%s299 + $0x4b8] sm:$0xff]
      %v457 = vld [vmem:[%s299 + $0x4c0] sm:$0xff]
      %v458 = vld [vmem:[%s299 + $0x4c8] sm:$0xff]
      %v459 = vld [vmem:[%s299 + $0x4d0] sm:$0xff]
      %v460 = vld [vmem:[%s299 + $0x4d8] sm:$0xff]
      %v461 = vld [vmem:[%s299 + $0x4e0] sm:$0xff]
      %v462 = vld [vmem:[%s299 + $0x4e8] sm:$0xff]
      %v463 = vld [vmem:[%s299 + $0x4f0] sm:$0xff]
      %v464 = vld [vmem:[%s299 + $0x4f8] sm:$0xff]
      %v465 = vld [vmem:[%s299 + $0x500] sm:$0xff]
      %v466 = vld [vmem:[%s299 + $0x508] sm:$0xff]
      %v467 = vld [vmem:[%s299 + $0x510] sm:$0xff]
      %v468 = vld [vmem:[%s299 + $0x518] sm:$0xff]
      %v469 = vld [vmem:[%s299 + $0x520] sm:$0xff]
      %v470 = vld [vmem:[%s299 + $0x528] sm:$0xff]
      %v471 = vld [vmem:[%s299 + $0x530] sm:$0xff]
      %v472 = vld [vmem:[%s299 + $0x538] sm:$0xff]
      %v473 = vld [vmem:[%s299 + $0x540] sm:$0xff]
      %v474 = vld [vmem:[%s299 + $0x548] sm:$0xff]
      %v475 = vld [vmem:[%s299 + $0x550] sm:$0xff]
      %v476 = vld [vmem:[%s299 + $0x558] sm:$0xff]
      %v477 = vld [vmem:[%s299 + $0x560] sm:$0xff]
      %v478 = vld [vmem:[%s299 + $0x568] sm:$0xff]
      %v479 = vld [vmem:[%s299 + $0x570] sm:$0xff]
      %v480 = vld [vmem:[%s299 + $0x578] sm:$0xff]
      %v481 = vld [vmem:[%s299 + $0x580] sm:$0xff]
      %v482 = vld [vmem:[%s299 + $0x588] sm:$0xff]
      %v483 = vld [vmem:[%s299 + $0x590] sm:$0xff]
      %v484 = vld [vmem:[%s299 + $0x598] sm:$0xff]
      %v485 = vld [vmem:[%s299 + $0x5a0] sm:$0xff]
      %v486 = vld [vmem:[%s299 + $0x5a8] sm:$0xff]
      %v487 = vld [vmem:[%s299 + $0x5b0] sm:$0xff]
      %v488 = vld [vmem:[%s299 + $0x5b8] sm:$0xff]
      %v489 = vld [vmem:[%s299 + $0x5c0] sm:$0xff]
      %v490 = vld [vmem:[%s299 + $0x5c8] sm:$0xff]
      %v491 = vld [vmem:[%s299 + $0x5d0] sm:$0xff]
      %v492 = vld [vmem:[%s299 + $0x5d8] sm:$0xff]
      %v493 = vld [vmem:[%s299 + $0x5e0] sm:$0xff]
      %v494 = vld [vmem:[%s299 + $0x5e8] sm:$0xff]
      %v495 = vld [vmem:[%s299 + $0x5f0] sm:$0xff]
      %v496 = vld [vmem:[%s299 + $0x5f8] sm:$0xff]
      %v497 = vld [vmem:[%s299 + $0x600] sm:$0xff]
      %v498 = vld [vmem:[%s299 + $0x608] sm:$0xff]
      %v499 = vld [vmem:[%s299 + $0x610] sm:$0xff]
      %v500 = vld [vmem:[%s299 + $0x618] sm:$0xff]
      %v501 = vld [vmem:[%s299 + $0x620] sm:$0xff]
      %v502 = vld [vmem:[%s299 + $0x628] sm:$0xff]
      %v503 = vld [vmem:[%s299 + $0x630] sm:$0xff]
      %v504 = vld [vmem:[%s299 + $0x638] sm:$0xff]
      %v505 = vld [vmem:[%s299 + $0x640] sm:$0xff]
      %v506 = vld [vmem:[%s299 + $0x648] sm:$0xff]
      %v507 = vld [vmem:[%s299 + $0x650] sm:$0xff]
      %v508 = vld [vmem:[%s299 + $0x658] sm:$0xff]
      %v509 = vld [vmem:[%s299 + $0x660] sm:$0xff]
      %v510 = vld [vmem:[%s299 + $0x668] sm:$0xff]
      %v511 = vld [vmem:[%s299 + $0x670] sm:$0xff]
      %v512 = vld [vmem:[%s299 + $0x678] sm:$0xff]
      %v513 = vld [vmem:[%s299 + $0x680] sm:$0xff]
      %v514 = vld [vmem:[%s299 + $0x688] sm:$0xff]
      %v515 = vld [vmem:[%s299 + $0x690] sm:$0xff]
      %v516 = vld [vmem:[%s299 + $0x698] sm:$0xff]
      %v517 = vld [vmem:[%s299 + $0x6a0] sm:$0xff]
      %v518 = vld [vmem:[%s299 + $0x6a8] sm:$0xff]
      %v519 = vld [vmem:[%s299 + $0x6b0] sm:$0xff]
      %v520 = vld [vmem:[%s299 + $0x6b8] sm:$0xff]
      %v521 = vld [vmem:[%s299 + $0x6c0] sm:$0xff]
      %v522 = vld [vmem:[%s299 + $0x6c8] sm:$0xff]
      %v523 = vld [vmem:[%s299 + $0x6d0] sm:$0xff]
      %v524 = vld [vmem:[%s299 + $0x6d8] sm:$0xff]
      %v525 = vld [vmem:[%s299 + $0x6e0] sm:$0xff]
      %v526 = vld [vmem:[%s299 + $0x6e8] sm:$0xff]
      %v527 = vld [vmem:[%s299 + $0x6f0] sm:$0xff]
      %v528 = vld [vmem:[%s299 + $0x6f8] sm:$0xff]
      %v529 = vld [vmem:[%s299 + $0x700] sm:$0xff]
      %v530 = vld [vmem:[%s299 + $0x708] sm:$0xff]
      %v531 = vld [vmem:[%s299 + $0x710] sm:$0xff]
      %v532 = vld [vmem:[%s299 + $0x718] sm:$0xff]
      %v533 = vld [vmem:[%s299 + $0x720] sm:$0xff]
      %v534 = vld [vmem:[%s299 + $0x728] sm:$0xff]
      %v535 = vld [vmem:[%s299 + $0x730] sm:$0xff]
      %v536 = vld [vmem:[%s299 + $0x738] sm:$0xff]
      %v537 = vld [vmem:[%s299 + $0x740] sm:$0xff]
      %v538 = vld [vmem:[%s299 + $0x748] sm:$0xff]
      %v539 = vld [vmem:[%s299 + $0x750] sm:$0xff]
      %v540 = vld [vmem:[%s299 + $0x758] sm:$0xff]
      %v541 = vld [vmem:[%s299 + $0x760] sm:$0xff]
      %v542 = vld [vmem:[%s299 + $0x768] sm:$0xff]
      %v543 = vld [vmem:[%s299 + $0x770] sm:$0xff]
      %v544 = vld [vmem:[%s299 + $0x778] sm:$0xff]
      %v545 = vld [vmem:[%s299 + $0x780] sm:$0xff]
      %v546 = vld [vmem:[%s299 + $0x788] sm:$0xff]
      %v547 = vld [vmem:[%s299 + $0x790] sm:$0xff]
      %v548 = vld [vmem:[%s299 + $0x798] sm:$0xff]
      %v549 = vld [vmem:[%s299 + $0x7a0] sm:$0xff]
      %v550 = vld [vmem:[%s299 + $0x7a8] sm:$0xff]
      %v551 = vld [vmem:[%s299 + $0x7b0] sm:$0xff]
      %v552 = vld [vmem:[%s299 + $0x7b8] sm:$0xff]
      %v553 = vld [vmem:[%s299 + $0x7c0] sm:$0xff]
      %v554 = vld [vmem:[%s299 + $0x7c8] sm:$0xff]
      %v555 = vld [vmem:[%s299 + $0x7d0] sm:$0xff]
      %v556 = vld [vmem:[%s299 + $0x7d8] sm:$0xff]
      %v557 = vld [vmem:[%s299 + $0x7e0] sm:$0xff]
      %v558 = vld [vmem:[%s299 + $0x7e8] sm:$0xff]
      %v559 = vld [vmem:[%s299 + $0x7f0] sm:$0xff]
      %v560 = vld [vmem:[%s299 + $0x7f8] sm:$0xff]
      %v561 = vld [vmem:[%s299 + $0x800] sm:$0xff]
      %v562 = vld [vmem:[%s299 + $0x808] sm:$0xff]
      %v563 = vld [vmem:[%s299 + $0x810] sm:$0xff]
      %v564 = vld [vmem:[%s299 + $0x818] sm:$0xff]
      %v565 = vld [vmem:[%s299 + $0x820] sm:$0xff]
      %v566 = vld [vmem:[%s299 + $0x828] sm:$0xff]
      %v567 = vld [vmem:[%s299 + $0x830] sm:$0xff]
      %v568 = vld [vmem:[%s299 + $0x838] sm:$0xff]
      %v569 = vld [vmem:[%s299 + $0x840] sm:$0xff]
      %v570 = vld [vmem:[%s299 + $0x848] sm:$0xff]
      %v571 = vld [vmem:[%s299 + $0x850] sm:$0xff]
      %v572 = vld [vmem:[%s299 + $0x858] sm:$0xff]
      %v573 = vld [vmem:[%s299 + $0x860] sm:$0xff]
      %v574 = vld [vmem:[%s299 + $0x868] sm:$0xff]
      %v575 = vld [vmem:[%s299 + $0x870] sm:$0xff]
      %v576 = vld [vmem:[%s299 + $0x878] sm:$0xff]
      %v577 = vld [vmem:[%s299 + $0x880] sm:$0xff]
      %v578 = vld [vmem:[%s299 + $0x888] sm:$0xff]
      %v579 = vld [vmem:[%s299 + $0x890] sm:$0xff]
      %v580 = vld [vmem:[%s299 + $0x898] sm:$0xff]
      %v581 = vld [vmem:[%s299 + $0x8a0] sm:$0xff]
      %v582 = vld [vmem:[%s299 + $0x8a8] sm:$0xff]
      %v583 = vld [vmem:[%s299 + $0x8b0] sm:$0xff]
      %v584 = vld [vmem:[%s299 + $0x8b8] sm:$0xff]
      %v585 = vld [vmem:[%s299 + $0x8c0] sm:$0xff]
      %v586 = vld [vmem:[%s299 + $0x8c8] sm:$0xff]
      %v587 = vld [vmem:[%s299 + $0x8d0] sm:$0xff]
      %v588 = vld [vmem:[%s299 + $0x8d8] sm:$0xff]
      %v589 = vld [vmem:[%s299 + $0x8e0] sm:$0xff]
      %v590 = vld [vmem:[%s299 + $0x8e8] sm:$0xff]
      %v591 = vld [vmem:[%s299 + $0x8f0] sm:$0xff]
      %v592 = vld [vmem:[%s299 + $0x8f8] sm:$0xff]
      %v593 = vld [vmem:[%s299 + $0x900] sm:$0x77]
      %v594 = vld [vmem:[%s299 + $0x908] sm:$0x77]
      %v595 = vld [vmem:[%s299 + $0x910] sm:$0x77]
      %v596 = vld [vmem:[%s299 + $0x918] sm:$0x77]
      %v597 = vld [vmem:[%s299 + $0x920] sm:$0x77]
      %v598 = vld [vmem:[%s299 + $0x928] sm:$0x77]
      %v599 = vld [vmem:[%s299 + $0x930] sm:$0x77]
      %v600 = vld [vmem:[%s299 + $0x938] sm:$0x77]
      %v601 = vld [vmem:[%s299 + $0x940] sm:$0x77]
      %v602 = vld [vmem:[%s299 + $0x948] sm:$0x77]
      %v603 = vld [vmem:[%s299 + $0x950] sm:$0x77]
      %v604 = vld [vmem:[%s299 + $0x958] sm:$0x77]
      %v605 = vld [vmem:[%s299 + $0x960] sm:$0x77]
      %v606 = vld [vmem:[%s299 + $0x968] sm:$0x77]
      %v607 = vld [vmem:[%s299 + $0x970] sm:$0x77]
      %v608 = vld [vmem:[%s299 + $0x978] sm:$0x77]
      %v609 = vld [vmem:[%s299 + $0x980] sm:$0x77]
      %v610 = vld [vmem:[%s299 + $0x988] sm:$0x77]
      %v611 = vld [vmem:[%s299 + $0x990] sm:$0x77]
      %v612 = vld [vmem:[%s299 + $0x998] sm:$0x77]
      %v613 = vld [vmem:[%s299 + $0x9a0] sm:$0x77]
      %v614 = vld [vmem:[%s299 + $0x9a8] sm:$0x77]
      %v615 = vld [vmem:[%s299 + $0x9b0] sm:$0x77]
      %v616 = vld [vmem:[%s299 + $0x9b8] sm:$0x77]
      %v617 = vld [vmem:[%s1] sm:$0xf]
      %v618 = vld [vmem:[%s1 + $0x4] sm:$0xf]
      %v619 = vld [vmem:[%s1 + $0x8] sm:$0xf]
      %v620 = vld [vmem:[%s1 + $0xc] sm:$0xf]
      %v621 = vld [vmem:[%s2] sm:$0xff]
      %v622 = vld [vmem:[%s2 + $0x8] sm:$0xff]
      %v623 = vld [vmem:[%s2 + $0x10] sm:$0xff]
      %v624 = vld [vmem:[%s2 + $0x18] sm:$0xff]
      %626 = vset.pattern.permute.xlu0 0
      %627 = vperm.xlu0 %626, %v621
      %v628 = vpop.permute.xlu0 %627
      %631 = vset.pattern.permute.xlu0 0
      %632 = vperm.xlu0 %631, %v622
      %v633 = vpop.permute.xlu0 %632
      %636 = vset.pattern.permute.xlu0 0
      %637 = vperm.xlu0 %636, %v623
      %v638 = vpop.permute.xlu0 %637
      %641 = vset.pattern.permute.xlu0 0
      %642 = vperm.xlu0 %641, %v624
      %v643 = vpop.permute.xlu0 %642
      %v649 = vunpack.c.l.b16 %v617
      %v650 = vunpack.c.l.b16 %v618
      %v651 = vunpack.c.l.b16 %v619
      %v652 = vunpack.c.l.b16 %v620
      %v653 = vpack.c.b16 %v650, %v649
      %v654 = vpack.c.b16 %v652, %v651
      %v967 = vunpack.c.l.b16 %v305
      %v968 = vunpack.c.h.b16 %v305
      %v969 = vunpack.c.l.b16 %v306
      %v970 = vunpack.c.h.b16 %v306
      %v971 = vunpack.c.l.b16 %v307
      %v972 = vunpack.c.h.b16 %v307
      %v973 = vunpack.c.l.b16 %v308
      %v974 = vunpack.c.h.b16 %v308
      %v975 = vunpack.c.l.b16 %v309
      %v976 = vunpack.c.h.b16 %v309
      %v977 = vunpack.c.l.b16 %v310
      %v978 = vunpack.c.h.b16 %v310
      %v979 = vunpack.c.l.b16 %v311
      %v980 = vunpack.c.h.b16 %v311
      %v981 = vunpack.c.l.b16 %v312
      %v982 = vunpack.c.h.b16 %v312
      %v983 = vunpack.c.l.b16 %v313
      %v984 = vunpack.c.h.b16 %v313
      %v985 = vunpack.c.l.b16 %v314
      %v986 = vunpack.c.h.b16 %v314
      %v987 = vunpack.c.l.b16 %v315
      %v988 = vunpack.c.h.b16 %v315
      %v989 = vunpack.c.l.b16 %v316
      %v990 = vunpack.c.h.b16 %v316
      %v991 = vunpack.c.l.b16 %v317
      %v992 = vunpack.c.h.b16 %v317
      %v993 = vunpack.c.l.b16 %v318
      %v994 = vunpack.c.h.b16 %v318
      %v995 = vunpack.c.l.b16 %v319
      %v996 = vunpack.c.h.b16 %v319
      %v997 = vunpack.c.l.b16 %v320
      %v998 = vunpack.c.h.b16 %v320
      %v999 = vunpack.c.l.b16 %v321
      %v1000 = vunpack.c.h.b16 %v321
      %v1001 = vunpack.c.l.b16 %v322
      %v1002 = vunpack.c.h.b16 %v322
      %v1003 = vunpack.c.l.b16 %v323
      %v1004 = vunpack.c.h.b16 %v323
      %v1005 = vunpack.c.l.b16 %v324
      %v1006 = vunpack.c.h.b16 %v324
      %v1007 = vunpack.c.l.b16 %v325
      %v1008 = vunpack.c.h.b16 %v325
      %v1009 = vunpack.c.l.b16 %v326
      %v1010 = vunpack.c.h.b16 %v326
      %v1011 = vunpack.c.l.b16 %v327
      %v1012 = vunpack.c.h.b16 %v327
      %v1013 = vunpack.c.l.b16 %v328
      %v1014 = vunpack.c.h.b16 %v328
      %v1015 = vunpack.c.l.b16 %v329
      %v1016 = vunpack.c.h.b16 %v329
      %v1017 = vunpack.c.l.b16 %v330
      %v1018 = vunpack.c.h.b16 %v330
      %v1019 = vunpack.c.l.b16 %v331
      %v1020 = vunpack.c.h.b16 %v331
      %v1021 = vunpack.c.l.b16 %v332
      %v1022 = vunpack.c.h.b16 %v332
      %v1023 = vunpack.c.l.b16 %v333
      %v1024 = vunpack.c.h.b16 %v333
      %v1025 = vunpack.c.l.b16 %v334
      %v1026 = vunpack.c.h.b16 %v334
      %v1027 = vunpack.c.l.b16 %v335
      %v1028 = vunpack.c.h.b16 %v335
      %v1029 = vunpack.c.l.b16 %v336
      %v1030 = vunpack.c.h.b16 %v336
      %v1031 = vunpack.c.l.b16 %v337
      %v1032 = vunpack.c.h.b16 %v337
      %v1033 = vunpack.c.l.b16 %v338
      %v1034 = vunpack.c.h.b16 %v338
      %v1035 = vunpack.c.l.b16 %v339
      %v1036 = vunpack.c.h.b16 %v339
      %v1037 = vunpack.c.l.b16 %v340
      %v1038 = vunpack.c.h.b16 %v340
      %v1039 = vunpack.c.l.b16 %v341
      %v1040 = vunpack.c.h.b16 %v341
      %v1041 = vunpack.c.l.b16 %v342
      %v1042 = vunpack.c.h.b16 %v342
      %v1043 = vunpack.c.l.b16 %v343
      %v1044 = vunpack.c.h.b16 %v343
      %v1045 = vunpack.c.l.b16 %v344
      %v1046 = vunpack.c.h.b16 %v344
      %v1047 = vunpack.c.l.b16 %v345
      %v1048 = vunpack.c.h.b16 %v345
      %v1049 = vunpack.c.l.b16 %v346
      %v1050 = vunpack.c.h.b16 %v346
      %v1051 = vunpack.c.l.b16 %v347
      %v1052 = vunpack.c.h.b16 %v347
      %v1053 = vunpack.c.l.b16 %v348
      %v1054 = vunpack.c.h.b16 %v348
      %v1055 = vunpack.c.l.b16 %v349
      %v1056 = vunpack.c.h.b16 %v349
      %v1057 = vunpack.c.l.b16 %v350
      %v1058 = vunpack.c.h.b16 %v350
      %v1059 = vunpack.c.l.b16 %v351
      %v1060 = vunpack.c.h.b16 %v351
      %v1061 = vunpack.c.l.b16 %v352
      %v1062 = vunpack.c.h.b16 %v352
      %v1063 = vunpack.c.l.b16 %v353
      %v1064 = vunpack.c.h.b16 %v353
      %v1065 = vunpack.c.l.b16 %v354
      %v1066 = vunpack.c.h.b16 %v354
      %v1067 = vunpack.c.l.b16 %v355
      %v1068 = vunpack.c.h.b16 %v355
      %v1069 = vunpack.c.l.b16 %v356
      %v1070 = vunpack.c.h.b16 %v356
      %v1071 = vunpack.c.l.b16 %v357
      %v1072 = vunpack.c.h.b16 %v357
      %v1073 = vunpack.c.l.b16 %v358
      %v1074 = vunpack.c.h.b16 %v358
      %v1075 = vunpack.c.l.b16 %v359
      %v1076 = vunpack.c.h.b16 %v359
      %v1077 = vunpack.c.l.b16 %v360
      %v1078 = vunpack.c.h.b16 %v360
      %v1079 = vunpack.c.l.b16 %v361
      %v1080 = vunpack.c.h.b16 %v361
      %v1081 = vunpack.c.l.b16 %v362
      %v1082 = vunpack.c.h.b16 %v362
      %v1083 = vunpack.c.l.b16 %v363
      %v1084 = vunpack.c.h.b16 %v363
      %v1085 = vunpack.c.l.b16 %v364
      %v1086 = vunpack.c.h.b16 %v364
      %v1087 = vunpack.c.l.b16 %v365
      %v1088 = vunpack.c.h.b16 %v365
      %v1089 = vunpack.c.l.b16 %v366
      %v1090 = vunpack.c.h.b16 %v366
      %v1091 = vunpack.c.l.b16 %v367
      %v1092 = vunpack.c.h.b16 %v367
      %v1093 = vunpack.c.l.b16 %v368
      %v1094 = vunpack.c.h.b16 %v368
      %v1095 = vunpack.c.l.b16 %v369
      %v1096 = vunpack.c.h.b16 %v369
      %v1097 = vunpack.c.l.b16 %v370
      %v1098 = vunpack.c.h.b16 %v370
      %v1099 = vunpack.c.l.b16 %v371
      %v1100 = vunpack.c.h.b16 %v371
      %v1101 = vunpack.c.l.b16 %v372
      %v1102 = vunpack.c.h.b16 %v372
      %v1103 = vunpack.c.l.b16 %v373
      %v1104 = vunpack.c.h.b16 %v373
      %v1105 = vunpack.c.l.b16 %v374
      %v1106 = vunpack.c.h.b16 %v374
      %v1107 = vunpack.c.l.b16 %v375
      %v1108 = vunpack.c.h.b16 %v375
      %v1109 = vunpack.c.l.b16 %v376
      %v1110 = vunpack.c.h.b16 %v376
      %v1111 = vunpack.c.l.b16 %v377
      %v1112 = vunpack.c.h.b16 %v377
      %v1113 = vunpack.c.l.b16 %v378
      %v1114 = vunpack.c.h.b16 %v378
      %v1115 = vunpack.c.l.b16 %v379
      %v1116 = vunpack.c.h.b16 %v379
      %v1117 = vunpack.c.l.b16 %v380
      %v1118 = vunpack.c.h.b16 %v380
      %v1119 = vunpack.c.l.b16 %v381
      %v1120 = vunpack.c.h.b16 %v381
      %v1121 = vunpack.c.l.b16 %v382
      %v1122 = vunpack.c.h.b16 %v382
      %v1123 = vunpack.c.l.b16 %v383
      %v1124 = vunpack.c.h.b16 %v383
      %v1125 = vunpack.c.l.b16 %v384
      %v1126 = vunpack.c.h.b16 %v384
      %v1127 = vunpack.c.l.b16 %v385
      %v1128 = vunpack.c.h.b16 %v385
      %v1129 = vunpack.c.l.b16 %v386
      %v1130 = vunpack.c.h.b16 %v386
      %v1131 = vunpack.c.l.b16 %v387
      %v1132 = vunpack.c.h.b16 %v387
      %v1133 = vunpack.c.l.b16 %v388
      %v1134 = vunpack.c.h.b16 %v388
      %v1135 = vunpack.c.l.b16 %v389
      %v1136 = vunpack.c.h.b16 %v389
      %v1137 = vunpack.c.l.b16 %v390
      %v1138 = vunpack.c.h.b16 %v390
      %v1139 = vunpack.c.l.b16 %v391
      %v1140 = vunpack.c.h.b16 %v391
      %v1141 = vunpack.c.l.b16 %v392
      %v1142 = vunpack.c.h.b16 %v392
      %v1143 = vunpack.c.l.b16 %v393
      %v1144 = vunpack.c.h.b16 %v393
      %v1145 = vunpack.c.l.b16 %v394
      %v1146 = vunpack.c.h.b16 %v394
      %v1147 = vunpack.c.l.b16 %v395
      %v1148 = vunpack.c.h.b16 %v395
      %v1149 = vunpack.c.l.b16 %v396
      %v1150 = vunpack.c.h.b16 %v396
      %v1151 = vunpack.c.l.b16 %v397
      %v1152 = vunpack.c.h.b16 %v397
      %v1153 = vunpack.c.l.b16 %v398
      %v1154 = vunpack.c.h.b16 %v398
      %v1155 = vunpack.c.l.b16 %v399
      %v1156 = vunpack.c.h.b16 %v399
      %v1157 = vunpack.c.l.b16 %v400
      %v1158 = vunpack.c.h.b16 %v400
      %v1159 = vunpack.c.l.b16 %v401
      %v1160 = vunpack.c.h.b16 %v401
      %v1161 = vunpack.c.l.b16 %v402
      %v1162 = vunpack.c.h.b16 %v402
      %v1163 = vunpack.c.l.b16 %v403
      %v1164 = vunpack.c.h.b16 %v403
      %v1165 = vunpack.c.l.b16 %v404
      %v1166 = vunpack.c.h.b16 %v404
      %v1167 = vunpack.c.l.b16 %v405
      %v1168 = vunpack.c.h.b16 %v405
      %v1169 = vunpack.c.l.b16 %v406
      %v1170 = vunpack.c.h.b16 %v406
      %v1171 = vunpack.c.l.b16 %v407
      %v1172 = vunpack.c.h.b16 %v407
      %v1173 = vunpack.c.l.b16 %v408
      %v1174 = vunpack.c.h.b16 %v408
      %v1175 = vunpack.c.l.b16 %v409
      %v1176 = vunpack.c.h.b16 %v409
      %v1177 = vunpack.c.l.b16 %v410
      %v1178 = vunpack.c.h.b16 %v410
      %v1179 = vunpack.c.l.b16 %v411
      %v1180 = vunpack.c.h.b16 %v411
      %v1181 = vunpack.c.l.b16 %v412
      %v1182 = vunpack.c.h.b16 %v412
      %v1183 = vunpack.c.l.b16 %v413
      %v1184 = vunpack.c.h.b16 %v413
      %v1185 = vunpack.c.l.b16 %v414
      %v1186 = vunpack.c.h.b16 %v414
      %v1187 = vunpack.c.l.b16 %v415
      %v1188 = vunpack.c.h.b16 %v415
      %v1189 = vunpack.c.l.b16 %v416
      %v1190 = vunpack.c.h.b16 %v416
      %v1191 = vunpack.c.l.b16 %v417
      %v1192 = vunpack.c.h.b16 %v417
      %v1193 = vunpack.c.l.b16 %v418
      %v1194 = vunpack.c.h.b16 %v418
      %v1195 = vunpack.c.l.b16 %v419
      %v1196 = vunpack.c.h.b16 %v419
      %v1197 = vunpack.c.l.b16 %v420
      %v1198 = vunpack.c.h.b16 %v420
      %v1199 = vunpack.c.l.b16 %v421
      %v1200 = vunpack.c.h.b16 %v421
      %v1201 = vunpack.c.l.b16 %v422
      %v1202 = vunpack.c.h.b16 %v422
      %v1203 = vunpack.c.l.b16 %v423
      %v1204 = vunpack.c.h.b16 %v423
      %v1205 = vunpack.c.l.b16 %v424
      %v1206 = vunpack.c.h.b16 %v424
      %v1207 = vunpack.c.l.b16 %v425
      %v1208 = vunpack.c.h.b16 %v425
      %v1209 = vunpack.c.l.b16 %v426
      %v1210 = vunpack.c.h.b16 %v426
      %v1211 = vunpack.c.l.b16 %v427
      %v1212 = vunpack.c.h.b16 %v427
      %v1213 = vunpack.c.l.b16 %v428
      %v1214 = vunpack.c.h.b16 %v428
      %v1215 = vunpack.c.l.b16 %v429
      %v1216 = vunpack.c.h.b16 %v429
      %v1217 = vunpack.c.l.b16 %v430
      %v1218 = vunpack.c.h.b16 %v430
      %v1219 = vunpack.c.l.b16 %v431
      %v1220 = vunpack.c.h.b16 %v431
      %v1221 = vunpack.c.l.b16 %v432
      %v1222 = vunpack.c.h.b16 %v432
      %v1223 = vunpack.c.l.b16 %v433
      %v1224 = vunpack.c.h.b16 %v433
      %v1225 = vunpack.c.l.b16 %v434
      %v1226 = vunpack.c.h.b16 %v434
      %v1227 = vunpack.c.l.b16 %v435
      %v1228 = vunpack.c.h.b16 %v435
      %v1229 = vunpack.c.l.b16 %v436
      %v1230 = vunpack.c.h.b16 %v436
      %v1231 = vunpack.c.l.b16 %v437
      %v1232 = vunpack.c.h.b16 %v437
      %v1233 = vunpack.c.l.b16 %v438
      %v1234 = vunpack.c.h.b16 %v438
      %v1235 = vunpack.c.l.b16 %v439
      %v1236 = vunpack.c.h.b16 %v439
      %v1237 = vunpack.c.l.b16 %v440
      %v1238 = vunpack.c.h.b16 %v440
      %v1239 = vunpack.c.l.b16 %v441
      %v1240 = vunpack.c.h.b16 %v441
      %v1241 = vunpack.c.l.b16 %v442
      %v1242 = vunpack.c.h.b16 %v442
      %v1243 = vunpack.c.l.b16 %v443
      %v1244 = vunpack.c.h.b16 %v443
      %v1245 = vunpack.c.l.b16 %v444
      %v1246 = vunpack.c.h.b16 %v444
      %v1247 = vunpack.c.l.b16 %v445
      %v1248 = vunpack.c.h.b16 %v445
      %v1249 = vunpack.c.l.b16 %v446
      %v1250 = vunpack.c.h.b16 %v446
      %v1251 = vunpack.c.l.b16 %v447
      %v1252 = vunpack.c.h.b16 %v447
      %v1253 = vunpack.c.l.b16 %v448
      %v1254 = vunpack.c.h.b16 %v448
      %v1255 = vunpack.c.l.b16 %v449
      %v1256 = vunpack.c.h.b16 %v449
      %v1257 = vunpack.c.l.b16 %v450
      %v1258 = vunpack.c.h.b16 %v450
      %v1259 = vunpack.c.l.b16 %v451
      %v1260 = vunpack.c.h.b16 %v451
      %v1261 = vunpack.c.l.b16 %v452
      %v1262 = vunpack.c.h.b16 %v452
      %v1263 = vunpack.c.l.b16 %v453
      %v1264 = vunpack.c.h.b16 %v453
      %v1265 = vunpack.c.l.b16 %v454
      %v1266 = vunpack.c.h.b16 %v454
      %v1267 = vunpack.c.l.b16 %v455
      %v1268 = vunpack.c.h.b16 %v455
      %v1269 = vunpack.c.l.b16 %v456
      %v1270 = vunpack.c.h.b16 %v456
      %v1271 = vunpack.c.l.b16 %v457
      %v1272 = vunpack.c.h.b16 %v457
      %v1273 = vunpack.c.l.b16 %v458
      %v1274 = vunpack.c.h.b16 %v458
      %v1275 = vunpack.c.l.b16 %v459
      %v1276 = vunpack.c.h.b16 %v459
      %v1277 = vunpack.c.l.b16 %v460
      %v1278 = vunpack.c.h.b16 %v460
      %v1279 = vunpack.c.l.b16 %v461
      %v1280 = vunpack.c.h.b16 %v461
      %v1281 = vunpack.c.l.b16 %v462
      %v1282 = vunpack.c.h.b16 %v462
      %v1283 = vunpack.c.l.b16 %v463
      %v1284 = vunpack.c.h.b16 %v463
      %v1285 = vunpack.c.l.b16 %v464
      %v1286 = vunpack.c.h.b16 %v464
      %v1287 = vunpack.c.l.b16 %v465
      %v1288 = vunpack.c.h.b16 %v465
      %v1289 = vunpack.c.l.b16 %v466
      %v1290 = vunpack.c.h.b16 %v466
      %v1291 = vunpack.c.l.b16 %v467
      %v1292 = vunpack.c.h.b16 %v467
      %v1293 = vunpack.c.l.b16 %v468
      %v1294 = vunpack.c.h.b16 %v468
      %v1295 = vunpack.c.l.b16 %v469
      %v1296 = vunpack.c.h.b16 %v469
      %v1297 = vunpack.c.l.b16 %v470
      %v1298 = vunpack.c.h.b16 %v470
      %v1299 = vunpack.c.l.b16 %v471
      %v1300 = vunpack.c.h.b16 %v471
      %v1301 = vunpack.c.l.b16 %v472
      %v1302 = vunpack.c.h.b16 %v472
      %v1303 = vunpack.c.l.b16 %v473
      %v1304 = vunpack.c.h.b16 %v473
      %v1305 = vunpack.c.l.b16 %v474
      %v1306 = vunpack.c.h.b16 %v474
      %v1307 = vunpack.c.l.b16 %v475
      %v1308 = vunpack.c.h.b16 %v475
      %v1309 = vunpack.c.l.b16 %v476
      %v1310 = vunpack.c.h.b16 %v476
      %v1311 = vunpack.c.l.b16 %v477
      %v1312 = vunpack.c.h.b16 %v477
      %v1313 = vunpack.c.l.b16 %v478
      %v1314 = vunpack.c.h.b16 %v478
      %v1315 = vunpack.c.l.b16 %v479
      %v1316 = vunpack.c.h.b16 %v479
      %v1317 = vunpack.c.l.b16 %v480
      %v1318 = vunpack.c.h.b16 %v480
      %v1319 = vunpack.c.l.b16 %v481
      %v1320 = vunpack.c.h.b16 %v481
      %v1321 = vunpack.c.l.b16 %v482
      %v1322 = vunpack.c.h.b16 %v482
      %v1323 = vunpack.c.l.b16 %v483
      %v1324 = vunpack.c.h.b16 %v483
      %v1325 = vunpack.c.l.b16 %v484
      %v1326 = vunpack.c.h.b16 %v484
      %v1327 = vunpack.c.l.b16 %v485
      %v1328 = vunpack.c.h.b16 %v485
      %v1329 = vunpack.c.l.b16 %v486
      %v1330 = vunpack.c.h.b16 %v486
      %v1331 = vunpack.c.l.b16 %v487
      %v1332 = vunpack.c.h.b16 %v487
      %v1333 = vunpack.c.l.b16 %v488
      %v1334 = vunpack.c.h.b16 %v488
      %v1335 = vunpack.c.l.b16 %v489
      %v1336 = vunpack.c.h.b16 %v489
      %v1337 = vunpack.c.l.b16 %v490
      %v1338 = vunpack.c.h.b16 %v490
      %v1339 = vunpack.c.l.b16 %v491
      %v1340 = vunpack.c.h.b16 %v491
      %v1341 = vunpack.c.l.b16 %v492
      %v1342 = vunpack.c.h.b16 %v492
      %v1343 = vunpack.c.l.b16 %v493
      %v1344 = vunpack.c.h.b16 %v493
      %v1345 = vunpack.c.l.b16 %v494
      %v1346 = vunpack.c.h.b16 %v494
      %v1347 = vunpack.c.l.b16 %v495
      %v1348 = vunpack.c.h.b16 %v495
      %v1349 = vunpack.c.l.b16 %v496
      %v1350 = vunpack.c.h.b16 %v496
      %v1351 = vunpack.c.l.b16 %v497
      %v1352 = vunpack.c.h.b16 %v497
      %v1353 = vunpack.c.l.b16 %v498
      %v1354 = vunpack.c.h.b16 %v498
      %v1355 = vunpack.c.l.b16 %v499
      %v1356 = vunpack.c.h.b16 %v499
      %v1357 = vunpack.c.l.b16 %v500
      %v1358 = vunpack.c.h.b16 %v500
      %v1359 = vunpack.c.l.b16 %v501
      %v1360 = vunpack.c.h.b16 %v501
      %v1361 = vunpack.c.l.b16 %v502
      %v1362 = vunpack.c.h.b16 %v502
      %v1363 = vunpack.c.l.b16 %v503
      %v1364 = vunpack.c.h.b16 %v503
      %v1365 = vunpack.c.l.b16 %v504
      %v1366 = vunpack.c.h.b16 %v504
      %v1367 = vunpack.c.l.b16 %v505
      %v1368 = vunpack.c.h.b16 %v505
      %v1369 = vunpack.c.l.b16 %v506
      %v1370 = vunpack.c.h.b16 %v506
      %v1371 = vunpack.c.l.b16 %v507
      %v1372 = vunpack.c.h.b16 %v507
      %v1373 = vunpack.c.l.b16 %v508
      %v1374 = vunpack.c.h.b16 %v508
      %v1375 = vunpack.c.l.b16 %v509
      %v1376 = vunpack.c.h.b16 %v509
      %v1377 = vunpack.c.l.b16 %v510
      %v1378 = vunpack.c.h.b16 %v510
      %v1379 = vunpack.c.l.b16 %v511
      %v1380 = vunpack.c.h.b16 %v511
      %v1381 = vunpack.c.l.b16 %v512
      %v1382 = vunpack.c.h.b16 %v512
      %v1383 = vunpack.c.l.b16 %v513
      %v1384 = vunpack.c.h.b16 %v513
      %v1385 = vunpack.c.l.b16 %v514
      %v1386 = vunpack.c.h.b16 %v514
      %v1387 = vunpack.c.l.b16 %v515
      %v1388 = vunpack.c.h.b16 %v515
      %v1389 = vunpack.c.l.b16 %v516
      %v1390 = vunpack.c.h.b16 %v516
      %v1391 = vunpack.c.l.b16 %v517
      %v1392 = vunpack.c.h.b16 %v517
      %v1393 = vunpack.c.l.b16 %v518
      %v1394 = vunpack.c.h.b16 %v518
      %v1395 = vunpack.c.l.b16 %v519
      %v1396 = vunpack.c.h.b16 %v519
      %v1397 = vunpack.c.l.b16 %v520
      %v1398 = vunpack.c.h.b16 %v520
      %v1399 = vunpack.c.l.b16 %v521
      %v1400 = vunpack.c.h.b16 %v521
      %v1401 = vunpack.c.l.b16 %v522
      %v1402 = vunpack.c.h.b16 %v522
      %v1403 = vunpack.c.l.b16 %v523
      %v1404 = vunpack.c.h.b16 %v523
      %v1405 = vunpack.c.l.b16 %v524
      %v1406 = vunpack.c.h.b16 %v524
      %v1407 = vunpack.c.l.b16 %v525
      %v1408 = vunpack.c.h.b16 %v525
      %v1409 = vunpack.c.l.b16 %v526
      %v1410 = vunpack.c.h.b16 %v526
      %v1411 = vunpack.c.l.b16 %v527
      %v1412 = vunpack.c.h.b16 %v527
      %v1413 = vunpack.c.l.b16 %v528
      %v1414 = vunpack.c.h.b16 %v528
      %v1415 = vunpack.c.l.b16 %v529
      %v1416 = vunpack.c.h.b16 %v529
      %v1417 = vunpack.c.l.b16 %v530
      %v1418 = vunpack.c.h.b16 %v530
      %v1419 = vunpack.c.l.b16 %v531
      %v1420 = vunpack.c.h.b16 %v531
      %v1421 = vunpack.c.l.b16 %v532
      %v1422 = vunpack.c.h.b16 %v532
      %v1423 = vunpack.c.l.b16 %v533
      %v1424 = vunpack.c.h.b16 %v533
      %v1425 = vunpack.c.l.b16 %v534
      %v1426 = vunpack.c.h.b16 %v534
      %v1427 = vunpack.c.l.b16 %v535
      %v1428 = vunpack.c.h.b16 %v535
      %v1429 = vunpack.c.l.b16 %v536
      %v1430 = vunpack.c.h.b16 %v536
      %v1431 = vunpack.c.l.b16 %v537
      %v1432 = vunpack.c.h.b16 %v537
      %v1433 = vunpack.c.l.b16 %v538
      %v1434 = vunpack.c.h.b16 %v538
      %v1435 = vunpack.c.l.b16 %v539
      %v1436 = vunpack.c.h.b16 %v539
      %v1437 = vunpack.c.l.b16 %v540
      %v1438 = vunpack.c.h.b16 %v540
      %v1439 = vunpack.c.l.b16 %v541
      %v1440 = vunpack.c.h.b16 %v541
      %v1441 = vunpack.c.l.b16 %v542
      %v1442 = vunpack.c.h.b16 %v542
      %v1443 = vunpack.c.l.b16 %v543
      %v1444 = vunpack.c.h.b16 %v543
      %v1445 = vunpack.c.l.b16 %v544
      %v1446 = vunpack.c.h.b16 %v544
      %v1447 = vunpack.c.l.b16 %v545
      %v1448 = vunpack.c.h.b16 %v545
      %v1449 = vunpack.c.l.b16 %v546
      %v1450 = vunpack.c.h.b16 %v546
      %v1451 = vunpack.c.l.b16 %v547
      %v1452 = vunpack.c.h.b16 %v547
      %v1453 = vunpack.c.l.b16 %v548
      %v1454 = vunpack.c.h.b16 %v548
      %v1455 = vunpack.c.l.b16 %v549
      %v1456 = vunpack.c.h.b16 %v549
      %v1457 = vunpack.c.l.b16 %v550
      %v1458 = vunpack.c.h.b16 %v550
      %v1459 = vunpack.c.l.b16 %v551
      %v1460 = vunpack.c.h.b16 %v551
      %v1461 = vunpack.c.l.b16 %v552
      %v1462 = vunpack.c.h.b16 %v552
      %v1463 = vunpack.c.l.b16 %v553
      %v1464 = vunpack.c.h.b16 %v553
      %v1465 = vunpack.c.l.b16 %v554
      %v1466 = vunpack.c.h.b16 %v554
      %v1467 = vunpack.c.l.b16 %v555
      %v1468 = vunpack.c.h.b16 %v555
      %v1469 = vunpack.c.l.b16 %v556
      %v1470 = vunpack.c.h.b16 %v556
      %v1471 = vunpack.c.l.b16 %v557
      %v1472 = vunpack.c.h.b16 %v557
      %v1473 = vunpack.c.l.b16 %v558
      %v1474 = vunpack.c.h.b16 %v558
      %v1475 = vunpack.c.l.b16 %v559
      %v1476 = vunpack.c.h.b16 %v559
      %v1477 = vunpack.c.l.b16 %v560
      %v1478 = vunpack.c.h.b16 %v560
      %v1479 = vunpack.c.l.b16 %v561
      %v1480 = vunpack.c.h.b16 %v561
      %v1481 = vunpack.c.l.b16 %v562
      %v1482 = vunpack.c.h.b16 %v562
      %v1483 = vunpack.c.l.b16 %v563
      %v1484 = vunpack.c.h.b16 %v563
      %v1485 = vunpack.c.l.b16 %v564
      %v1486 = vunpack.c.h.b16 %v564
      %v1487 = vunpack.c.l.b16 %v565
      %v1488 = vunpack.c.h.b16 %v565
      %v1489 = vunpack.c.l.b16 %v566
      %v1490 = vunpack.c.h.b16 %v566
      %v1491 = vunpack.c.l.b16 %v567
      %v1492 = vunpack.c.h.b16 %v567
      %v1493 = vunpack.c.l.b16 %v568
      %v1494 = vunpack.c.h.b16 %v568
      %v1495 = vunpack.c.l.b16 %v569
      %v1496 = vunpack.c.h.b16 %v569
      %v1497 = vunpack.c.l.b16 %v570
      %v1498 = vunpack.c.h.b16 %v570
      %v1499 = vunpack.c.l.b16 %v571
      %v1500 = vunpack.c.h.b16 %v571
      %v1501 = vunpack.c.l.b16 %v572
      %v1502 = vunpack.c.h.b16 %v572
      %v1503 = vunpack.c.l.b16 %v573
      %v1504 = vunpack.c.h.b16 %v573
      %v1505 = vunpack.c.l.b16 %v574
      %v1506 = vunpack.c.h.b16 %v574
      %v1507 = vunpack.c.l.b16 %v575
      %v1508 = vunpack.c.h.b16 %v575
      %v1509 = vunpack.c.l.b16 %v576
      %v1510 = vunpack.c.h.b16 %v576
      %v1511 = vunpack.c.l.b16 %v577
      %v1512 = vunpack.c.h.b16 %v577
      %v1513 = vunpack.c.l.b16 %v578
      %v1514 = vunpack.c.h.b16 %v578
      %v1515 = vunpack.c.l.b16 %v579
      %v1516 = vunpack.c.h.b16 %v579
      %v1517 = vunpack.c.l.b16 %v580
      %v1518 = vunpack.c.h.b16 %v580
      %v1519 = vunpack.c.l.b16 %v581
      %v1520 = vunpack.c.h.b16 %v581
      %v1521 = vunpack.c.l.b16 %v582
      %v1522 = vunpack.c.h.b16 %v582
      %v1523 = vunpack.c.l.b16 %v583
      %v1524 = vunpack.c.h.b16 %v583
      %v1525 = vunpack.c.l.b16 %v584
      %v1526 = vunpack.c.h.b16 %v584
      %v1527 = vunpack.c.l.b16 %v585
      %v1528 = vunpack.c.h.b16 %v585
      %v1529 = vunpack.c.l.b16 %v586
      %v1530 = vunpack.c.h.b16 %v586
      %v1531 = vunpack.c.l.b16 %v587
      %v1532 = vunpack.c.h.b16 %v587
      %v1533 = vunpack.c.l.b16 %v588
      %v1534 = vunpack.c.h.b16 %v588
      %v1535 = vunpack.c.l.b16 %v589
      %v1536 = vunpack.c.h.b16 %v589
      %v1537 = vunpack.c.l.b16 %v590
      %v1538 = vunpack.c.h.b16 %v590
      %v1539 = vunpack.c.l.b16 %v591
      %v1540 = vunpack.c.h.b16 %v591
      %v1541 = vunpack.c.l.b16 %v592
      %v1542 = vunpack.c.h.b16 %v592
      %v1543 = vunpack.c.l.b16 %v593
      %v1544 = vunpack.c.h.b16 %v593
      %v1545 = vunpack.c.l.b16 %v594
      %v1546 = vunpack.c.h.b16 %v594
      %v1547 = vunpack.c.l.b16 %v595
      %v1548 = vunpack.c.h.b16 %v595
      %v1549 = vunpack.c.l.b16 %v596
      %v1550 = vunpack.c.h.b16 %v596
      %v1551 = vunpack.c.l.b16 %v597
      %v1552 = vunpack.c.h.b16 %v597
      %v1553 = vunpack.c.l.b16 %v598
      %v1554 = vunpack.c.h.b16 %v598
      %v1555 = vunpack.c.l.b16 %v599
      %v1556 = vunpack.c.h.b16 %v599
      %v1557 = vunpack.c.l.b16 %v600
      %v1558 = vunpack.c.h.b16 %v600
      %v1559 = vunpack.c.l.b16 %v601
      %v1560 = vunpack.c.h.b16 %v601
      %v1561 = vunpack.c.l.b16 %v602
      %v1562 = vunpack.c.h.b16 %v602
      %v1563 = vunpack.c.l.b16 %v603
      %v1564 = vunpack.c.h.b16 %v603
      %v1565 = vunpack.c.l.b16 %v604
      %v1566 = vunpack.c.h.b16 %v604
      %v1567 = vunpack.c.l.b16 %v605
      %v1568 = vunpack.c.h.b16 %v605
      %v1569 = vunpack.c.l.b16 %v606
      %v1570 = vunpack.c.h.b16 %v606
      %v1571 = vunpack.c.l.b16 %v607
      %v1572 = vunpack.c.h.b16 %v607
      %v1573 = vunpack.c.l.b16 %v608
      %v1574 = vunpack.c.h.b16 %v608
      %v1575 = vunpack.c.l.b16 %v609
      %v1576 = vunpack.c.h.b16 %v609
      %v1577 = vunpack.c.l.b16 %v610
      %v1578 = vunpack.c.h.b16 %v610
      %v1579 = vunpack.c.l.b16 %v611
      %v1580 = vunpack.c.h.b16 %v611
      %v1581 = vunpack.c.l.b16 %v612
      %v1582 = vunpack.c.h.b16 %v612
      %v1583 = vunpack.c.l.b16 %v613
      %v1584 = vunpack.c.h.b16 %v613
      %v1585 = vunpack.c.l.b16 %v614
      %v1586 = vunpack.c.h.b16 %v614
      %v1587 = vunpack.c.l.b16 %v615
      %v1588 = vunpack.c.h.b16 %v615
      %v1589 = vunpack.c.l.b16 %v616
      %v1590 = vunpack.c.h.b16 %v616
      %v1591 = vpack.c.b16 %v1015, %v967
      %v1592 = vpack.c.b16 %v1016, %v968
      %v1593 = vpack.c.b16 %v1017, %v969
      %v1594 = vpack.c.b16 %v1018, %v970
      %v1595 = vpack.c.b16 %v1019, %v971
      %v1596 = vpack.c.b16 %v1020, %v972
      %v1597 = vpack.c.b16 %v1021, %v973
      %v1598 = vpack.c.b16 %v1022, %v974
      %v1599 = vpack.c.b16 %v1023, %v975
      %v1600 = vpack.c.b16 %v1024, %v976
      %v1601 = vpack.c.b16 %v1025, %v977
      %v1602 = vpack.c.b16 %v1026, %v978
      %v1603 = vpack.c.b16 %v1027, %v979
      %v1604 = vpack.c.b16 %v1028, %v980
      %v1605 = vpack.c.b16 %v1029, %v981
      %v1606 = vpack.c.b16 %v1030, %v982
      %v1607 = vpack.c.b16 %v1031, %v983
      %v1608 = vpack.c.b16 %v1032, %v984
      %v1609 = vpack.c.b16 %v1033, %v985
      %v1610 = vpack.c.b16 %v1034, %v986
      %v1611 = vpack.c.b16 %v1035, %v987
      %v1612 = vpack.c.b16 %v1036, %v988
      %v1613 = vpack.c.b16 %v1037, %v989
      %v1614 = vpack.c.b16 %v1038, %v990
      %v1615 = vpack.c.b16 %v1039, %v991
      %v1616 = vpack.c.b16 %v1040, %v992
      %v1617 = vpack.c.b16 %v1041, %v993
      %v1618 = vpack.c.b16 %v1042, %v994
      %v1619 = vpack.c.b16 %v1043, %v995
      %v1620 = vpack.c.b16 %v1044, %v996
      %v1621 = vpack.c.b16 %v1045, %v997
      %v1622 = vpack.c.b16 %v1046, %v998
      %v1623 = vpack.c.b16 %v1047, %v999
      %v1624 = vpack.c.b16 %v1048, %v1000
      %v1625 = vpack.c.b16 %v1049, %v1001
      %v1626 = vpack.c.b16 %v1050, %v1002
      %v1627 = vpack.c.b16 %v1051, %v1003
      %v1628 = vpack.c.b16 %v1052, %v1004
      %v1629 = vpack.c.b16 %v1053, %v1005
      %v1630 = vpack.c.b16 %v1054, %v1006
      %v1631 = vpack.c.b16 %v1055, %v1007
      %v1632 = vpack.c.b16 %v1056, %v1008
      %v1633 = vpack.c.b16 %v1057, %v1009
      %v1634 = vpack.c.b16 %v1058, %v1010
      %v1635 = vpack.c.b16 %v1059, %v1011
      %v1636 = vpack.c.b16 %v1060, %v1012
      %v1637 = vpack.c.b16 %v1061, %v1013
      %v1638 = vpack.c.b16 %v1062, %v1014
      %v1639 = vpack.c.b16 %v1111, %v1063
      %v1640 = vpack.c.b16 %v1112, %v1064
      %v1641 = vpack.c.b16 %v1113, %v1065
      %v1642 = vpack.c.b16 %v1114, %v1066
      %v1643 = vpack.c.b16 %v1115, %v1067
      %v1644 = vpack.c.b16 %v1116, %v1068
      %v1645 = vpack.c.b16 %v1117, %v1069
      %v1646 = vpack.c.b16 %v1118, %v1070
      %v1647 = vpack.c.b16 %v1119, %v1071
      %v1648 = vpack.c.b16 %v1120, %v1072
      %v1649 = vpack.c.b16 %v1121, %v1073
      %v1650 = vpack.c.b16 %v1122, %v1074
      %v1651 = vpack.c.b16 %v1123, %v1075
      %v1652 = vpack.c.b16 %v1124, %v1076
      %v1653 = vpack.c.b16 %v1125, %v1077
      %v1654 = vpack.c.b16 %v1126, %v1078
      %v1655 = vpack.c.b16 %v1127, %v1079
      %v1656 = vpack.c.b16 %v1128, %v1080
      %v1657 = vpack.c.b16 %v1129, %v1081
      %v1658 = vpack.c.b16 %v1130, %v1082
      %v1659 = vpack.c.b16 %v1131, %v1083
      %v1660 = vpack.c.b16 %v1132, %v1084
      %v1661 = vpack.c.b16 %v1133, %v1085
      %v1662 = vpack.c.b16 %v1134, %v1086
      %v1663 = vpack.c.b16 %v1135, %v1087
      %v1664 = vpack.c.b16 %v1136, %v1088
      %v1665 = vpack.c.b16 %v1137, %v1089
      %v1666 = vpack.c.b16 %v1138, %v1090
      %v1667 = vpack.c.b16 %v1139, %v1091
      %v1668 = vpack.c.b16 %v1140, %v1092
      %v1669 = vpack.c.b16 %v1141, %v1093
      %v1670 = vpack.c.b16 %v1142, %v1094
      %v1671 = vpack.c.b16 %v1143, %v1095
      %v1672 = vpack.c.b16 %v1144, %v1096
      %v1673 = vpack.c.b16 %v1145, %v1097
      %v1674 = vpack.c.b16 %v1146, %v1098
      %v1675 = vpack.c.b16 %v1147, %v1099
      %v1676 = vpack.c.b16 %v1148, %v1100
      %v1677 = vpack.c.b16 %v1149, %v1101
      %v1678 = vpack.c.b16 %v1150, %v1102
      %v1679 = vpack.c.b16 %v1151, %v1103
      %v1680 = vpack.c.b16 %v1152, %v1104
      %v1681 = vpack.c.b16 %v1153, %v1105
      %v1682 = vpack.c.b16 %v1154, %v1106
      %v1683 = vpack.c.b16 %v1155, %v1107
      %v1684 = vpack.c.b16 %v1156, %v1108
      %v1685 = vpack.c.b16 %v1157, %v1109
      %v1686 = vpack.c.b16 %v1158, %v1110
      %v1687 = vpack.c.b16 %v1207, %v1159
      %v1688 = vpack.c.b16 %v1208, %v1160
      %v1689 = vpack.c.b16 %v1209, %v1161
      %v1690 = vpack.c.b16 %v1210, %v1162
      %v1691 = vpack.c.b16 %v1211, %v1163
      %v1692 = vpack.c.b16 %v1212, %v1164
      %v1693 = vpack.c.b16 %v1213, %v1165
      %v1694 = vpack.c.b16 %v1214, %v1166
      %v1695 = vpack.c.b16 %v1215, %v1167
      %v1696 = vpack.c.b16 %v1216, %v1168
      %v1697 = vpack.c.b16 %v1217, %v1169
      %v1698 = vpack.c.b16 %v1218, %v1170
      %v1699 = vpack.c.b16 %v1219, %v1171
      %v1700 = vpack.c.b16 %v1220, %v1172
      %v1701 = vpack.c.b16 %v1221, %v1173
      %v1702 = vpack.c.b16 %v1222, %v1174
      %v1703 = vpack.c.b16 %v1223, %v1175
      %v1704 = vpack.c.b16 %v1224, %v1176
      %v1705 = vpack.c.b16 %v1225, %v1177
      %v1706 = vpack.c.b16 %v1226, %v1178
      %v1707 = vpack.c.b16 %v1227, %v1179
      %v1708 = vpack.c.b16 %v1228, %v1180
      %v1709 = vpack.c.b16 %v1229, %v1181
      %v1710 = vpack.c.b16 %v1230, %v1182
      %v1711 = vpack.c.b16 %v1231, %v1183
      %v1712 = vpack.c.b16 %v1232, %v1184
      %v1713 = vpack.c.b16 %v1233, %v1185
      %v1714 = vpack.c.b16 %v1234, %v1186
      %v1715 = vpack.c.b16 %v1235, %v1187
      %v1716 = vpack.c.b16 %v1236, %v1188
      %v1717 = vpack.c.b16 %v1237, %v1189
      %v1718 = vpack.c.b16 %v1238, %v1190
      %v1719 = vpack.c.b16 %v1239, %v1191
      %v1720 = vpack.c.b16 %v1240, %v1192
      %v1721 = vpack.c.b16 %v1241, %v1193
      %v1722 = vpack.c.b16 %v1242, %v1194
      %v1723 = vpack.c.b16 %v1243, %v1195
      %v1724 = vpack.c.b16 %v1244, %v1196
      %v1725 = vpack.c.b16 %v1245, %v1197
      %v1726 = vpack.c.b16 %v1246, %v1198
      %v1727 = vpack.c.b16 %v1247, %v1199
      %v1728 = vpack.c.b16 %v1248, %v1200
      %v1729 = vpack.c.b16 %v1249, %v1201
      %v1730 = vpack.c.b16 %v1250, %v1202
      %v1731 = vpack.c.b16 %v1251, %v1203
      %v1732 = vpack.c.b16 %v1252, %v1204
      %v1733 = vpack.c.b16 %v1253, %v1205
      %v1734 = vpack.c.b16 %v1254, %v1206
      %v1735 = vpack.c.b16 %v1303, %v1255
      %v1736 = vpack.c.b16 %v1304, %v1256
      %v1737 = vpack.c.b16 %v1305, %v1257
      %v1738 = vpack.c.b16 %v1306, %v1258
      %v1739 = vpack.c.b16 %v1307, %v1259
      %v1740 = vpack.c.b16 %v1308, %v1260
      %v1741 = vpack.c.b16 %v1309, %v1261
      %v1742 = vpack.c.b16 %v1310, %v1262
      %v1743 = vpack.c.b16 %v1311, %v1263
      %v1744 = vpack.c.b16 %v1312, %v1264
      %v1745 = vpack.c.b16 %v1313, %v1265
      %v1746 = vpack.c.b16 %v1314, %v1266
      %v1747 = vpack.c.b16 %v1315, %v1267
      %v1748 = vpack.c.b16 %v1316, %v1268
      %v1749 = vpack.c.b16 %v1317, %v1269
      %v1750 = vpack.c.b16 %v1318, %v1270
      %v1751 = vpack.c.b16 %v1319, %v1271
      %v1752 = vpack.c.b16 %v1320, %v1272
      %v1753 = vpack.c.b16 %v1321, %v1273
      %v1754 = vpack.c.b16 %v1322, %v1274
      %v1755 = vpack.c.b16 %v1323, %v1275
      %v1756 = vpack.c.b16 %v1324, %v1276
      %v1757 = vpack.c.b16 %v1325, %v1277
      %v1758 = vpack.c.b16 %v1326, %v1278
      %v1759 = vpack.c.b16 %v1327, %v1279
      %v1760 = vpack.c.b16 %v1328, %v1280
      %v1761 = vpack.c.b16 %v1329, %v1281
      %v1762 = vpack.c.b16 %v1330, %v1282
      %v1763 = vpack.c.b16 %v1331, %v1283
      %v1764 = vpack.c.b16 %v1332, %v1284
      %v1765 = vpack.c.b16 %v1333, %v1285
      %v1766 = vpack.c.b16 %v1334, %v1286
      %v1767 = vpack.c.b16 %v1335, %v1287
      %v1768 = vpack.c.b16 %v1336, %v1288
      %v1769 = vpack.c.b16 %v1337, %v1289
      %v1770 = vpack.c.b16 %v1338, %v1290
      %v1771 = vpack.c.b16 %v1339, %v1291
      %v1772 = vpack.c.b16 %v1340, %v1292
      %v1773 = vpack.c.b16 %v1341, %v1293
      %v1774 = vpack.c.b16 %v1342, %v1294
      %v1775 = vpack.c.b16 %v1343, %v1295
      %v1776 = vpack.c.b16 %v1344, %v1296
      %v1777 = vpack.c.b16 %v1345, %v1297
      %v1778 = vpack.c.b16 %v1346, %v1298
      %v1779 = vpack.c.b16 %v1347, %v1299
      %v1780 = vpack.c.b16 %v1348, %v1300
      %v1781 = vpack.c.b16 %v1349, %v1301
      %v1782 = vpack.c.b16 %v1350, %v1302
      %v1783 = vpack.c.b16 %v1399, %v1351
      %v1784 = vpack.c.b16 %v1400, %v1352
      %v1785 = vpack.c.b16 %v1401, %v1353
      %v1786 = vpack.c.b16 %v1402, %v1354
      %v1787 = vpack.c.b16 %v1403, %v1355
      %v1788 = vpack.c.b16 %v1404, %v1356
      %v1789 = vpack.c.b16 %v1405, %v1357
      %v1790 = vpack.c.b16 %v1406, %v1358
      %v1791 = vpack.c.b16 %v1407, %v1359
      %v1792 = vpack.c.b16 %v1408, %v1360
      %v1793 = vpack.c.b16 %v1409, %v1361
      %v1794 = vpack.c.b16 %v1410, %v1362
      %v1795 = vpack.c.b16 %v1411, %v1363
      %v1796 = vpack.c.b16 %v1412, %v1364
      %v1797 = vpack.c.b16 %v1413, %v1365
      %v1798 = vpack.c.b16 %v1414, %v1366
      %v1799 = vpack.c.b16 %v1415, %v1367
      %v1800 = vpack.c.b16 %v1416, %v1368
      %v1801 = vpack.c.b16 %v1417, %v1369
      %v1802 = vpack.c.b16 %v1418, %v1370
      %v1803 = vpack.c.b16 %v1419, %v1371
      %v1804 = vpack.c.b16 %v1420, %v1372
      %v1805 = vpack.c.b16 %v1421, %v1373
      %v1806 = vpack.c.b16 %v1422, %v1374
      %v1807 = vpack.c.b16 %v1423, %v1375
      %v1808 = vpack.c.b16 %v1424, %v1376
      %v1809 = vpack.c.b16 %v1425, %v1377
      %v1810 = vpack.c.b16 %v1426, %v1378
      %v1811 = vpack.c.b16 %v1427, %v1379
      %v1812 = vpack.c.b16 %v1428, %v1380
      %v1813 = vpack.c.b16 %v1429, %v1381
      %v1814 = vpack.c.b16 %v1430, %v1382
      %v1815 = vpack.c.b16 %v1431, %v1383
      %v1816 = vpack.c.b16 %v1432, %v1384
      %v1817 = vpack.c.b16 %v1433, %v1385
      %v1818 = vpack.c.b16 %v1434, %v1386
      %v1819 = vpack.c.b16 %v1435, %v1387
      %v1820 = vpack.c.b16 %v1436, %v1388
      %v1821 = vpack.c.b16 %v1437, %v1389
      %v1822 = vpack.c.b16 %v1438, %v1390
      %v1823 = vpack.c.b16 %v1439, %v1391
      %v1824 = vpack.c.b16 %v1440, %v1392
      %v1825 = vpack.c.b16 %v1441, %v1393
      %v1826 = vpack.c.b16 %v1442, %v1394
      %v1827 = vpack.c.b16 %v1443, %v1395
      %v1828 = vpack.c.b16 %v1444, %v1396
      %v1829 = vpack.c.b16 %v1445, %v1397
      %v1830 = vpack.c.b16 %v1446, %v1398
      %v1831 = vpack.c.b16 %v1495, %v1447
      %v1832 = vpack.c.b16 %v1496, %v1448
      %v1833 = vpack.c.b16 %v1497, %v1449
      %v1834 = vpack.c.b16 %v1498, %v1450
      %v1835 = vpack.c.b16 %v1499, %v1451
      %v1836 = vpack.c.b16 %v1500, %v1452
      %v1837 = vpack.c.b16 %v1501, %v1453
      %v1838 = vpack.c.b16 %v1502, %v1454
      %v1839 = vpack.c.b16 %v1503, %v1455
      %v1840 = vpack.c.b16 %v1504, %v1456
      %v1841 = vpack.c.b16 %v1505, %v1457
      %v1842 = vpack.c.b16 %v1506, %v1458
      %v1843 = vpack.c.b16 %v1507, %v1459
      %v1844 = vpack.c.b16 %v1508, %v1460
      %v1845 = vpack.c.b16 %v1509, %v1461
      %v1846 = vpack.c.b16 %v1510, %v1462
      %v1847 = vpack.c.b16 %v1511, %v1463
      %v1848 = vpack.c.b16 %v1512, %v1464
      %v1849 = vpack.c.b16 %v1513, %v1465
      %v1850 = vpack.c.b16 %v1514, %v1466
      %v1851 = vpack.c.b16 %v1515, %v1467
      %v1852 = vpack.c.b16 %v1516, %v1468
      %v1853 = vpack.c.b16 %v1517, %v1469
      %v1854 = vpack.c.b16 %v1518, %v1470
      %v1855 = vpack.c.b16 %v1519, %v1471
      %v1856 = vpack.c.b16 %v1520, %v1472
      %v1857 = vpack.c.b16 %v1521, %v1473
      %v1858 = vpack.c.b16 %v1522, %v1474
      %v1859 = vpack.c.b16 %v1523, %v1475
      %v1860 = vpack.c.b16 %v1524, %v1476
      %v1861 = vpack.c.b16 %v1525, %v1477
      %v1862 = vpack.c.b16 %v1526, %v1478
      %v1863 = vpack.c.b16 %v1527, %v1479
      %v1864 = vpack.c.b16 %v1528, %v1480
      %v1865 = vpack.c.b16 %v1529, %v1481
      %v1866 = vpack.c.b16 %v1530, %v1482
      %v1867 = vpack.c.b16 %v1531, %v1483
      %v1868 = vpack.c.b16 %v1532, %v1484
      %v1869 = vpack.c.b16 %v1533, %v1485
      %v1870 = vpack.c.b16 %v1534, %v1486
      %v1871 = vpack.c.b16 %v1535, %v1487
      %v1872 = vpack.c.b16 %v1536, %v1488
      %v1873 = vpack.c.b16 %v1537, %v1489
      %v1874 = vpack.c.b16 %v1538, %v1490
      %v1875 = vpack.c.b16 %v1539, %v1491
      %v1876 = vpack.c.b16 %v1540, %v1492
      %v1877 = vpack.c.b16 %v1541, %v1493
      %v1878 = vpack.c.b16 %v1542, %v1494
      %v1879 = vpack.c.b16 %v1543, %v1543
      %v1880 = vpack.c.b16 %v1544, %v1544
      %v1881 = vpack.c.b16 %v1545, %v1545
      %v1882 = vpack.c.b16 %v1546, %v1546
      %v1883 = vpack.c.b16 %v1547, %v1547
      %v1884 = vpack.c.b16 %v1548, %v1548
      %v1885 = vpack.c.b16 %v1549, %v1549
      %v1886 = vpack.c.b16 %v1550, %v1550
      %v1887 = vpack.c.b16 %v1551, %v1551
      %v1888 = vpack.c.b16 %v1552, %v1552
      %v1889 = vpack.c.b16 %v1553, %v1553
      %v1890 = vpack.c.b16 %v1554, %v1554
      %v1891 = vpack.c.b16 %v1555, %v1555
      %v1892 = vpack.c.b16 %v1556, %v1556
      %v1893 = vpack.c.b16 %v1557, %v1557
      %v1894 = vpack.c.b16 %v1558, %v1558
      %v1895 = vpack.c.b16 %v1559, %v1559
      %v1896 = vpack.c.b16 %v1560, %v1560
      %v1897 = vpack.c.b16 %v1561, %v1561
      %v1898 = vpack.c.b16 %v1562, %v1562
      %v1899 = vpack.c.b16 %v1563, %v1563
      %v1900 = vpack.c.b16 %v1564, %v1564
      %v1901 = vpack.c.b16 %v1565, %v1565
      %v1902 = vpack.c.b16 %v1566, %v1566
      %v1903 = vpack.c.b16 %v1567, %v1567
      %v1904 = vpack.c.b16 %v1568, %v1568
      %v1905 = vpack.c.b16 %v1569, %v1569
      %v1906 = vpack.c.b16 %v1570, %v1570
      %v1907 = vpack.c.b16 %v1571, %v1571
      %v1908 = vpack.c.b16 %v1572, %v1572
      %v1909 = vpack.c.b16 %v1573, %v1573
      %v1910 = vpack.c.b16 %v1574, %v1574
      %v1911 = vpack.c.b16 %v1575, %v1575
      %v1912 = vpack.c.b16 %v1576, %v1576
      %v1913 = vpack.c.b16 %v1577, %v1577
      %v1914 = vpack.c.b16 %v1578, %v1578
      %v1915 = vpack.c.b16 %v1579, %v1579
      %v1916 = vpack.c.b16 %v1580, %v1580
      %v1917 = vpack.c.b16 %v1581, %v1581
      %v1918 = vpack.c.b16 %v1582, %v1582
      %v1919 = vpack.c.b16 %v1583, %v1583
      %v1920 = vpack.c.b16 %v1584, %v1584
      %v1921 = vpack.c.b16 %v1585, %v1585
      %v1922 = vpack.c.b16 %v1586, %v1586
      %v1923 = vpack.c.b16 %v1587, %v1587
      %v1924 = vpack.c.b16 %v1588, %v1588
      %v1925 = vpack.c.b16 %v1589, %v1589
      %v1926 = vpack.c.b16 %v1590, %v1590
      %vm2215 = vcmask 834560
      %v2217 = vsel %vm2215, %v653, 0
      %v2220 = vsel %vm2215, %v654, 0
      %vm2222 = vcmask 1042432
      %v2224 = vsel %vm2222, %v1879, 0
      %v2227 = vsel %vm2222, %v1880, 0
      %v2230 = vsel %vm2222, %v1881, 0
      %v2233 = vsel %vm2222, %v1882, 0
      %v2236 = vsel %vm2222, %v1883, 0
      %v2239 = vsel %vm2222, %v1884, 0
      %v2242 = vsel %vm2222, %v1885, 0
      %v2245 = vsel %vm2222, %v1886, 0
      %v2248 = vsel %vm2222, %v1887, 0
      %v2251 = vsel %vm2222, %v1888, 0
      %v2254 = vsel %vm2222, %v1889, 0
      %v2257 = vsel %vm2222, %v1890, 0
      %v2260 = vsel %vm2222, %v1891, 0
      %v2263 = vsel %vm2222, %v1892, 0
      %v2266 = vsel %vm2222, %v1893, 0
      %v2269 = vsel %vm2222, %v1894, 0
      %v2272 = vsel %vm2222, %v1895, 0
      %v2275 = vsel %vm2222, %v1896, 0
      %v2278 = vsel %vm2222, %v1897, 0
      %v2281 = vsel %vm2222, %v1898, 0
      %v2284 = vsel %vm2222, %v1899, 0
      %v2287 = vsel %vm2222, %v1900, 0
      %v2290 = vsel %vm2222, %v1901, 0
      %v2293 = vsel %vm2222, %v1902, 0
      %v2296 = vsel %vm2222, %v1903, 0
      %v2299 = vsel %vm2222, %v1904, 0
      %v2302 = vsel %vm2222, %v1905, 0
      %v2305 = vsel %vm2222, %v1906, 0
      %v2308 = vsel %vm2222, %v1907, 0
      %v2311 = vsel %vm2222, %v1908, 0
      %v2314 = vsel %vm2222, %v1909, 0
      %v2317 = vsel %vm2222, %v1910, 0
      %v2320 = vsel %vm2222, %v1911, 0
      %v2323 = vsel %vm2222, %v1912, 0
      %v2326 = vsel %vm2222, %v1913, 0
      %v2329 = vsel %vm2222, %v1914, 0
      %v2332 = vsel %vm2222, %v1915, 0
      %v2335 = vsel %vm2222, %v1916, 0
      %v2338 = vsel %vm2222, %v1917, 0
      %v2341 = vsel %vm2222, %v1918, 0
      %v2344 = vsel %vm2222, %v1919, 0
      %v2347 = vsel %vm2222, %v1920, 0
      %v2350 = vsel %vm2222, %v1921, 0
      %v2353 = vsel %vm2222, %v1922, 0
      %v2356 = vsel %vm2222, %v1923, 0
      %v2359 = vsel %vm2222, %v1924, 0
      %v2362 = vsel %vm2222, %v1925, 0
      %v2365 = vsel %vm2222, %v1926, 0
      %2367 = vmatpush.bf16.msra.mxu0 0
      %2368 = vmatpush.bf16.msra.mxu0 %v2224
      %2369 = vmatpush.bf16.msra.mxu0 %v1831
      %2370 = vmatpush.bf16.msra.mxu0 %v1783
      %2371 = vmatpush.bf16.msra.mxu0 %v1735
      %2372 = vmatpush.bf16.msra.mxu0 %v1687
      %2373 = vmatpush.bf16.msra.mxu0 %v1639
      %2374 = vmatpush.bf16.msra.mxu0 %v1591
      %2375 = vmatmul.bf16.gmra.mxu0 %v2217
      %v2376 = vpop.f32.mrf.mxu0
      %v2377 = vadd.f32 %v628, %v2376
      %v2378 = vpop.f32.mrf.mxu0
      %v2379 = vadd.f32 %v633, %v2378
      %2380 = vmatmul.bf16.gmra.mxu0 %v2220
      %v2381 = vpop.f32.mrf.mxu0
      %v2382 = vadd.f32 %v638, %v2381
      %v2383 = vpop.f32.mrf.mxu0
      %v2384 = vadd.f32 %v643, %v2383
      %2385 = vdwg.mxu0
      %2386 = vmatpush.bf16.msra.mxu0 0
      %2387 = vmatpush.bf16.msra.mxu0 %v2227
      %2388 = vmatpush.bf16.msra.mxu0 %v1832
      %2389 = vmatpush.bf16.msra.mxu0 %v1784
      %2390 = vmatpush.bf16.msra.mxu0 %v1736
      %2391 = vmatpush.bf16.msra.mxu0 %v1688
      %2392 = vmatpush.bf16.msra.mxu0 %v1640
      %2393 = vmatpush.bf16.msra.mxu0 %v1592
      %2394 = vmatmul.bf16.gmra.mxu0 %v2217
      %v2395 = vpop.f32.mrf.mxu0
      %v2396 = vadd.f32 %v628, %v2395
      %v2397 = vpop.f32.mrf.mxu0
      %v2398 = vadd.f32 %v633, %v2397
      %2399 = vmatmul.bf16.gmra.mxu0 %v2220
      %v2400 = vpop.f32.mrf.mxu0
      %v2401 = vadd.f32 %v638, %v2400
      %v2402 = vpop.f32.mrf.mxu0
      %v2403 = vadd.f32 %v643, %v2402
      %2404 = vdwg.mxu0
      %2405 = vmatpush.bf16.msra.mxu0 0
      %2406 = vmatpush.bf16.msra.mxu0 %v2230
      %2407 = vmatpush.bf16.msra.mxu0 %v1833
      %2408 = vmatpush.bf16.msra.mxu0 %v1785
      %2409 = vmatpush.bf16.msra.mxu0 %v1737
      %2410 = vmatpush.bf16.msra.mxu0 %v1689
      %2411 = vmatpush.bf16.msra.mxu0 %v1641
      %2412 = vmatpush.bf16.msra.mxu0 %v1593
      %2413 = vmatmul.bf16.gmra.mxu0 %v2217
      %v2414 = vpop.f32.mrf.mxu0
      %v2415 = vadd.f32 %v628, %v2414
      %v2416 = vpop.f32.mrf.mxu0
      %v2417 = vadd.f32 %v633, %v2416
      %2418 = vmatmul.bf16.gmra.mxu0 %v2220
      %v2419 = vpop.f32.mrf.mxu0
      %v2420 = vadd.f32 %v638, %v2419
      %v2421 = vpop.f32.mrf.mxu0
      %v2422 = vadd.f32 %v643, %v2421
      %2423 = vdwg.mxu0
      %2424 = vmatpush.bf16.msra.mxu0 0
      %2425 = vmatpush.bf16.msra.mxu0 %v2233
      %2426 = vmatpush.bf16.msra.mxu0 %v1834
      %2427 = vmatpush.bf16.msra.mxu0 %v1786
      %2428 = vmatpush.bf16.msra.mxu0 %v1738
      %2429 = vmatpush.bf16.msra.mxu0 %v1690
      %2430 = vmatpush.bf16.msra.mxu0 %v1642
      %2431 = vmatpush.bf16.msra.mxu0 %v1594
      %2432 = vmatmul.bf16.gmra.mxu0 %v2217
      %v2433 = vpop.f32.mrf.mxu0
      %v2434 = vadd.f32 %v628, %v2433
      %v2435 = vpop.f32.mrf.mxu0
      %v2436 = vadd.f32 %v633, %v2435
      %2437 = vmatmul.bf16.gmra.mxu0 %v2220
      %v2438 = vpop.f32.mrf.mxu0
      %v2439 = vadd.f32 %v638, %v2438
      %v2440 = vpop.f32.mrf.mxu0
      %v2441 = vadd.f32 %v643, %v2440
      %2442 = vdwg.mxu0
      %2443 = vmatpush.bf16.msra.mxu0 0
      %2444 = vmatpush.bf16.msra.mxu0 %v2236
      %2445 = vmatpush.bf16.msra.mxu0 %v1835
      %2446 = vmatpush.bf16.msra.mxu0 %v1787
      %2447 = vmatpush.bf16.msra.mxu0 %v1739
      %2448 = vmatpush.bf16.msra.mxu0 %v1691
      %2449 = vmatpush.bf16.msra.mxu0 %v1643
      %2450 = vmatpush.bf16.msra.mxu0 %v1595
      %2451 = vmatmul.bf16.gmra.mxu0 %v2217
      %v2452 = vpop.f32.mrf.mxu0
      %v2453 = vadd.f32 %v628, %v2452
      %v2454 = vpop.f32.mrf.mxu0
      %v2455 = vadd.f32 %v633, %v2454
      %2456 = vmatmul.bf16.gmra.mxu0 %v2220
      %v2457 = vpop.f32.mrf.mxu0
      %v2458 = vadd.f32 %v638, %v2457
      %v2459 = vpop.f32.mrf.mxu0
      %v2460 = vadd.f32 %v643, %v2459
      %2461 = vdwg.mxu0
      %2462 = vmatpush.bf16.msra.mxu0 0
      %2463 = vmatpush.bf16.msra.mxu0 %v2239
      %2464 = vmatpush.bf16.msra.mxu0 %v1836
      %2465 = vmatpush.bf16.msra.mxu0 %v1788
      %2466 = vmatpush.bf16.msra.mxu0 %v1740
      %2467 = vmatpush.bf16.msra.mxu0 %v1692
      %2468 = vmatpush.bf16.msra.mxu0 %v1644
      %2469 = vmatpush.bf16.msra.mxu0 %v1596
      %2470 = vmatmul.bf16.gmra.mxu0 %v2217
      %v2471 = vpop.f32.mrf.mxu0
      %v2472 = vadd.f32 %v628, %v2471
      %v2473 = vpop.f32.mrf.mxu0
      %v2474 = vadd.f32 %v633, %v2473
      %2475 = vmatmul.bf16.gmra.mxu0 %v2220
      %v2476 = vpop.f32.mrf.mxu0
      %v2477 = vadd.f32 %v638, %v2476
      %v2478 = vpop.f32.mrf.mxu0
      %v2479 = vadd.f32 %v643, %v2478
      %2480 = vdwg.mxu0
      %2481 = vmatpush.bf16.msra.mxu0 0
      %2482 = vmatpush.bf16.msra.mxu0 %v2242
      %2483 = vmatpush.bf16.msra.mxu0 %v1837
      %2484 = vmatpush.bf16.msra.mxu0 %v1789
      %2485 = vmatpush.bf16.msra.mxu0 %v1741
      %2486 = vmatpush.bf16.msra.mxu0 %v1693
      %2487 = vmatpush.bf16.msra.mxu0 %v1645
      %2488 = vmatpush.bf16.msra.mxu0 %v1597
      %2489 = vmatmul.bf16.gmra.mxu0 %v2217
      %v2490 = vpop.f32.mrf.mxu0
      %v2491 = vadd.f32 %v628, %v2490
      %v2492 = vpop.f32.mrf.mxu0
      %v2493 = vadd.f32 %v633, %v2492
      %2494 = vmatmul.bf16.gmra.mxu0 %v2220
      %v2495 = vpop.f32.mrf.mxu0
      %v2496 = vadd.f32 %v638, %v2495
      %v2497 = vpop.f32.mrf.mxu0
      %v2498 = vadd.f32 %v643, %v2497
      %2499 = vdwg.mxu0
      %2500 = vmatpush.bf16.msra.mxu0 0
      %2501 = vmatpush.bf16.msra.mxu0 %v2245
      %2502 = vmatpush.bf16.msra.mxu0 %v1838
      %2503 = vmatpush.bf16.msra.mxu0 %v1790
      %2504 = vmatpush.bf16.msra.mxu0 %v1742
      %2505 = vmatpush.bf16.msra.mxu0 %v1694
      %2506 = vmatpush.bf16.msra.mxu0 %v1646
      %2507 = vmatpush.bf16.msra.mxu0 %v1598
      %2508 = vmatmul.bf16.gmra.mxu0 %v2217
      %v2509 = vpop.f32.mrf.mxu0
      %v2510 = vadd.f32 %v628, %v2509
      %v2511 = vpop.f32.mrf.mxu0
      %v2512 = vadd.f32 %v633, %v2511
      %2513 = vmatmul.bf16.gmra.mxu0 %v2220
      %v2514 = vpop.f32.mrf.mxu0
      %v2515 = vadd.f32 %v638, %v2514
      %v2516 = vpop.f32.mrf.mxu0
      %v2517 = vadd.f32 %v643, %v2516
      %2518 = vdwg.mxu0
      %2519 = vmatpush.bf16.msra.mxu0 0
      %2520 = vmatpush.bf16.msra.mxu0 %v2248
      %2521 = vmatpush.bf16.msra.mxu0 %v1839
      %2522 = vmatpush.bf16.msra.mxu0 %v1791
      %2523 = vmatpush.bf16.msra.mxu0 %v1743
      %2524 = vmatpush.bf16.msra.mxu0 %v1695
      %2525 = vmatpush.bf16.msra.mxu0 %v1647
      %2526 = vmatpush.bf16.msra.mxu0 %v1599
      %2527 = vmatmul.bf16.gmra.mxu0 %v2217
      %v2528 = vpop.f32.mrf.mxu0
      %v2529 = vadd.f32 %v628, %v2528
      %v2530 = vpop.f32.mrf.mxu0
      %v2531 = vadd.f32 %v633, %v2530
      %2532 = vmatmul.bf16.gmra.mxu0 %v2220
      %v2533 = vpop.f32.mrf.mxu0
      %v2534 = vadd.f32 %v638, %v2533
      %v2535 = vpop.f32.mrf.mxu0
      %v2536 = vadd.f32 %v643, %v2535
      %2537 = vdwg.mxu0
      %2538 = vmatpush.bf16.msra.mxu0 0
      %2539 = vmatpush.bf16.msra.mxu0 %v2251
      %2540 = vmatpush.bf16.msra.mxu0 %v1840
      %2541 = vmatpush.bf16.msra.mxu0 %v1792
      %2542 = vmatpush.bf16.msra.mxu0 %v1744
      %2543 = vmatpush.bf16.msra.mxu0 %v1696
      %2544 = vmatpush.bf16.msra.mxu0 %v1648
      %2545 = vmatpush.bf16.msra.mxu0 %v1600
      %2546 = vmatmul.bf16.gmra.mxu0 %v2217
      %v2547 = vpop.f32.mrf.mxu0
      %v2548 = vadd.f32 %v628, %v2547
      %v2549 = vpop.f32.mrf.mxu0
      %v2550 = vadd.f32 %v633, %v2549
      %2551 = vmatmul.bf16.gmra.mxu0 %v2220
      %v2552 = vpop.f32.mrf.mxu0
      %v2553 = vadd.f32 %v638, %v2552
      %v2554 = vpop.f32.mrf.mxu0
      %v2555 = vadd.f32 %v643, %v2554
      %2556 = vdwg.mxu0
      %2557 = vmatpush.bf16.msra.mxu0 0
      %2558 = vmatpush.bf16.msra.mxu0 %v2254
      %2559 = vmatpush.bf16.msra.mxu0 %v1841
      %2560 = vmatpush.bf16.msra.mxu0 %v1793
      %2561 = vmatpush.bf16.msra.mxu0 %v1745
      %2562 = vmatpush.bf16.msra.mxu0 %v1697
      %2563 = vmatpush.bf16.msra.mxu0 %v1649
      %2564 = vmatpush.bf16.msra.mxu0 %v1601
      %2565 = vmatmul.bf16.gmra.mxu0 %v2217
      %v2566 = vpop.f32.mrf.mxu0
      %v2567 = vadd.f32 %v628, %v2566
      %v2568 = vpop.f32.mrf.mxu0
      %v2569 = vadd.f32 %v633, %v2568
      %2570 = vmatmul.bf16.gmra.mxu0 %v2220
      %v2571 = vpop.f32.mrf.mxu0
      %v2572 = vadd.f32 %v638, %v2571
      %v2573 = vpop.f32.mrf.mxu0
      %v2574 = vadd.f32 %v643, %v2573
      %2575 = vdwg.mxu0
      %2576 = vmatpush.bf16.msra.mxu0 0
      %2577 = vmatpush.bf16.msra.mxu0 %v2257
      %2578 = vmatpush.bf16.msra.mxu0 %v1842
      %2579 = vmatpush.bf16.msra.mxu0 %v1794
      %2580 = vmatpush.bf16.msra.mxu0 %v1746
      %2581 = vmatpush.bf16.msra.mxu0 %v1698
      %2582 = vmatpush.bf16.msra.mxu0 %v1650
      %2583 = vmatpush.bf16.msra.mxu0 %v1602
      %2584 = vmatmul.bf16.gmra.mxu0 %v2217
      %v2585 = vpop.f32.mrf.mxu0
      %v2586 = vadd.f32 %v628, %v2585
      %v2587 = vpop.f32.mrf.mxu0
      %v2588 = vadd.f32 %v633, %v2587
      %2589 = vmatmul.bf16.gmra.mxu0 %v2220
      %v2590 = vpop.f32.mrf.mxu0
      %v2591 = vadd.f32 %v638, %v2590
      %v2592 = vpop.f32.mrf.mxu0
      %v2593 = vadd.f32 %v643, %v2592
      %2594 = vdwg.mxu0
      %2595 = vmatpush.bf16.msra.mxu0 0
      %2596 = vmatpush.bf16.msra.mxu0 %v2260
      %2597 = vmatpush.bf16.msra.mxu0 %v1843
      %2598 = vmatpush.bf16.msra.mxu0 %v1795
      %2599 = vmatpush.bf16.msra.mxu0 %v1747
      %2600 = vmatpush.bf16.msra.mxu0 %v1699
      %2601 = vmatpush.bf16.msra.mxu0 %v1651
      %2602 = vmatpush.bf16.msra.mxu0 %v1603
      %2603 = vmatmul.bf16.gmra.mxu0 %v2217
      %v2604 = vpop.f32.mrf.mxu0
      %v2605 = vadd.f32 %v628, %v2604
      %v2606 = vpop.f32.mrf.mxu0
      %v2607 = vadd.f32 %v633, %v2606
      %2608 = vmatmul.bf16.gmra.mxu0 %v2220
      %v2609 = vpop.f32.mrf.mxu0
      %v2610 = vadd.f32 %v638, %v2609
      %v2611 = vpop.f32.mrf.mxu0
      %v2612 = vadd.f32 %v643, %v2611
      %2613 = vdwg.mxu0
      %2614 = vmatpush.bf16.msra.mxu0 0
      %2615 = vmatpush.bf16.msra.mxu0 %v2263
      %2616 = vmatpush.bf16.msra.mxu0 %v1844
      %2617 = vmatpush.bf16.msra.mxu0 %v1796
      %2618 = vmatpush.bf16.msra.mxu0 %v1748
      %2619 = vmatpush.bf16.msra.mxu0 %v1700
      %2620 = vmatpush.bf16.msra.mxu0 %v1652
      %2621 = vmatpush.bf16.msra.mxu0 %v1604
      %2622 = vmatmul.bf16.gmra.mxu0 %v2217
      %v2623 = vpop.f32.mrf.mxu0
      %v2624 = vadd.f32 %v628, %v2623
      %v2625 = vpop.f32.mrf.mxu0
      %v2626 = vadd.f32 %v633, %v2625
      %2627 = vmatmul.bf16.gmra.mxu0 %v2220
      %v2628 = vpop.f32.mrf.mxu0
      %v2629 = vadd.f32 %v638, %v2628
      %v2630 = vpop.f32.mrf.mxu0
      %v2631 = vadd.f32 %v643, %v2630
      %2632 = vdwg.mxu0
      %2633 = vmatpush.bf16.msra.mxu0 0
      %2634 = vmatpush.bf16.msra.mxu0 %v2266
      %2635 = vmatpush.bf16.msra.mxu0 %v1845
      %2636 = vmatpush.bf16.msra.mxu0 %v1797
      %2637 = vmatpush.bf16.msra.mxu0 %v1749
      %2638 = vmatpush.bf16.msra.mxu0 %v1701
      %2639 = vmatpush.bf16.msra.mxu0 %v1653
      %2640 = vmatpush.bf16.msra.mxu0 %v1605
      %2641 = vmatmul.bf16.gmra.mxu0 %v2217
      %v2642 = vpop.f32.mrf.mxu0
      %v2643 = vadd.f32 %v628, %v2642
      %v2644 = vpop.f32.mrf.mxu0
      %v2645 = vadd.f32 %v633, %v2644
      %2646 = vmatmul.bf16.gmra.mxu0 %v2220
      %v2647 = vpop.f32.mrf.mxu0
      %v2648 = vadd.f32 %v638, %v2647
      %v2649 = vpop.f32.mrf.mxu0
      %v2650 = vadd.f32 %v643, %v2649
      %2651 = vdwg.mxu0
      %2652 = vmatpush.bf16.msra.mxu0 0
      %2653 = vmatpush.bf16.msra.mxu0 %v2269
      %2654 = vmatpush.bf16.msra.mxu0 %v1846
      %2655 = vmatpush.bf16.msra.mxu0 %v1798
      %2656 = vmatpush.bf16.msra.mxu0 %v1750
      %2657 = vmatpush.bf16.msra.mxu0 %v1702
      %2658 = vmatpush.bf16.msra.mxu0 %v1654
      %2659 = vmatpush.bf16.msra.mxu0 %v1606
      %2660 = vmatmul.bf16.gmra.mxu0 %v2217
      %v2661 = vpop.f32.mrf.mxu0
      %v2662 = vadd.f32 %v628, %v2661
      %v2663 = vpop.f32.mrf.mxu0
      %v2664 = vadd.f32 %v633, %v2663
      %2665 = vmatmul.bf16.gmra.mxu0 %v2220
      %v2666 = vpop.f32.mrf.mxu0
      %v2667 = vadd.f32 %v638, %v2666
      %v2668 = vpop.f32.mrf.mxu0
      %v2669 = vadd.f32 %v643, %v2668
      %2670 = vdwg.mxu0
      %2671 = vmatpush.bf16.msra.mxu0 0
      %2672 = vmatpush.bf16.msra.mxu0 %v2272
      %2673 = vmatpush.bf16.msra.mxu0 %v1847
      %2674 = vmatpush.bf16.msra.mxu0 %v1799
      %2675 = vmatpush.bf16.msra.mxu0 %v1751
      %2676 = vmatpush.bf16.msra.mxu0 %v1703
      %2677 = vmatpush.bf16.msra.mxu0 %v1655
      %2678 = vmatpush.bf16.msra.mxu0 %v1607
      %2679 = vmatmul.bf16.gmra.mxu0 %v2217
      %v2680 = vpop.f32.mrf.mxu0
      %v2681 = vadd.f32 %v628, %v2680
      %v2682 = vpop.f32.mrf.mxu0
      %v2683 = vadd.f32 %v633, %v2682
      %2684 = vmatmul.bf16.gmra.mxu0 %v2220
      %v2685 = vpop.f32.mrf.mxu0
      %v2686 = vadd.f32 %v638, %v2685
      %v2687 = vpop.f32.mrf.mxu0
      %v2688 = vadd.f32 %v643, %v2687
      %2689 = vdwg.mxu0
      %2690 = vmatpush.bf16.msra.mxu0 0
      %2691 = vmatpush.bf16.msra.mxu0 %v2275
      %2692 = vmatpush.bf16.msra.mxu0 %v1848
      %2693 = vmatpush.bf16.msra.mxu0 %v1800
      %2694 = vmatpush.bf16.msra.mxu0 %v1752
      %2695 = vmatpush.bf16.msra.mxu0 %v1704
      %2696 = vmatpush.bf16.msra.mxu0 %v1656
      %2697 = vmatpush.bf16.msra.mxu0 %v1608
      %2698 = vmatmul.bf16.gmra.mxu0 %v2217
      %v2699 = vpop.f32.mrf.mxu0
      %v2700 = vadd.f32 %v628, %v2699
      %v2701 = vpop.f32.mrf.mxu0
      %v2702 = vadd.f32 %v633, %v2701
      %2703 = vmatmul.bf16.gmra.mxu0 %v2220
      %v2704 = vpop.f32.mrf.mxu0
      %v2705 = vadd.f32 %v638, %v2704
      %v2706 = vpop.f32.mrf.mxu0
      %v2707 = vadd.f32 %v643, %v2706
      %2708 = vdwg.mxu0
      %2709 = vmatpush.bf16.msra.mxu0 0
      %2710 = vmatpush.bf16.msra.mxu0 %v2278
      %2711 = vmatpush.bf16.msra.mxu0 %v1849
      %2712 = vmatpush.bf16.msra.mxu0 %v1801
      %2713 = vmatpush.bf16.msra.mxu0 %v1753
      %2714 = vmatpush.bf16.msra.mxu0 %v1705
      %2715 = vmatpush.bf16.msra.mxu0 %v1657
      %2716 = vmatpush.bf16.msra.mxu0 %v1609
      %2717 = vmatmul.bf16.gmra.mxu0 %v2217
      %v2718 = vpop.f32.mrf.mxu0
      %v2719 = vadd.f32 %v628, %v2718
      %v2720 = vpop.f32.mrf.mxu0
      %v2721 = vadd.f32 %v633, %v2720
      %2722 = vmatmul.bf16.gmra.mxu0 %v2220
      %v2723 = vpop.f32.mrf.mxu0
      %v2724 = vadd.f32 %v638, %v2723
      %v2725 = vpop.f32.mrf.mxu0
      %v2726 = vadd.f32 %v643, %v2725
      %2727 = vdwg.mxu0
      %2728 = vmatpush.bf16.msra.mxu0 0
      %2729 = vmatpush.bf16.msra.mxu0 %v2281
      %2730 = vmatpush.bf16.msra.mxu0 %v1850
      %2731 = vmatpush.bf16.msra.mxu0 %v1802
      %2732 = vmatpush.bf16.msra.mxu0 %v1754
      %2733 = vmatpush.bf16.msra.mxu0 %v1706
      %2734 = vmatpush.bf16.msra.mxu0 %v1658
      %2735 = vmatpush.bf16.msra.mxu0 %v1610
      %2736 = vmatmul.bf16.gmra.mxu0 %v2217
      %v2737 = vpop.f32.mrf.mxu0
      %v2738 = vadd.f32 %v628, %v2737
      %v2739 = vpop.f32.mrf.mxu0
      %v2740 = vadd.f32 %v633, %v2739
      %2741 = vmatmul.bf16.gmra.mxu0 %v2220
      %v2742 = vpop.f32.mrf.mxu0
      %v2743 = vadd.f32 %v638, %v2742
      %v2744 = vpop.f32.mrf.mxu0
      %v2745 = vadd.f32 %v643, %v2744
      %2746 = vdwg.mxu0
      %2747 = vmatpush.bf16.msra.mxu0 0
      %2748 = vmatpush.bf16.msra.mxu0 %v2284
      %2749 = vmatpush.bf16.msra.mxu0 %v1851
      %2750 = vmatpush.bf16.msra.mxu0 %v1803
      %2751 = vmatpush.bf16.msra.mxu0 %v1755
      %2752 = vmatpush.bf16.msra.mxu0 %v1707
      %2753 = vmatpush.bf16.msra.mxu0 %v1659
      %2754 = vmatpush.bf16.msra.mxu0 %v1611
      %2755 = vmatmul.bf16.gmra.mxu0 %v2217
      %v2756 = vpop.f32.mrf.mxu0
      %v2757 = vadd.f32 %v628, %v2756
      %v2758 = vpop.f32.mrf.mxu0
      %v2759 = vadd.f32 %v633, %v2758
      %2760 = vmatmul.bf16.gmra.mxu0 %v2220
      %v2761 = vpop.f32.mrf.mxu0
      %v2762 = vadd.f32 %v638, %v2761
      %v2763 = vpop.f32.mrf.mxu0
      %v2764 = vadd.f32 %v643, %v2763
      %2765 = vdwg.mxu0
      %2766 = vmatpush.bf16.msra.mxu0 0
      %2767 = vmatpush.bf16.msra.mxu0 %v2287
      %2768 = vmatpush.bf16.msra.mxu0 %v1852
      %2769 = vmatpush.bf16.msra.mxu0 %v1804
      %2770 = vmatpush.bf16.msra.mxu0 %v1756
      %2771 = vmatpush.bf16.msra.mxu0 %v1708
      %2772 = vmatpush.bf16.msra.mxu0 %v1660
      %2773 = vmatpush.bf16.msra.mxu0 %v1612
      %2774 = vmatmul.bf16.gmra.mxu0 %v2217
      %v2775 = vpop.f32.mrf.mxu0
      %v2776 = vadd.f32 %v628, %v2775
      %v2777 = vpop.f32.mrf.mxu0
      %v2778 = vadd.f32 %v633, %v2777
      %2779 = vmatmul.bf16.gmra.mxu0 %v2220
      %v2780 = vpop.f32.mrf.mxu0
      %v2781 = vadd.f32 %v638, %v2780
      %v2782 = vpop.f32.mrf.mxu0
      %v2783 = vadd.f32 %v643, %v2782
      %2784 = vdwg.mxu0
      %2785 = vmatpush.bf16.msra.mxu0 0
      %2786 = vmatpush.bf16.msra.mxu0 %v2290
      %2787 = vmatpush.bf16.msra.mxu0 %v1853
      %2788 = vmatpush.bf16.msra.mxu0 %v1805
      %2789 = vmatpush.bf16.msra.mxu0 %v1757
      %2790 = vmatpush.bf16.msra.mxu0 %v1709
      %2791 = vmatpush.bf16.msra.mxu0 %v1661
      %2792 = vmatpush.bf16.msra.mxu0 %v1613
      %2793 = vmatmul.bf16.gmra.mxu0 %v2217
      %v2794 = vpop.f32.mrf.mxu0
      %v2795 = vadd.f32 %v628, %v2794
      %v2796 = vpop.f32.mrf.mxu0
      %v2797 = vadd.f32 %v633, %v2796
      %2798 = vmatmul.bf16.gmra.mxu0 %v2220
      %v2799 = vpop.f32.mrf.mxu0
      %v2800 = vadd.f32 %v638, %v2799
      %v2801 = vpop.f32.mrf.mxu0
      %v2802 = vadd.f32 %v643, %v2801
      %2803 = vdwg.mxu0
      %2804 = vmatpush.bf16.msra.mxu0 0
      %2805 = vmatpush.bf16.msra.mxu0 %v2293
      %2806 = vmatpush.bf16.msra.mxu0 %v1854
      %2807 = vmatpush.bf16.msra.mxu0 %v1806
      %2808 = vmatpush.bf16.msra.mxu0 %v1758
      %2809 = vmatpush.bf16.msra.mxu0 %v1710
      %2810 = vmatpush.bf16.msra.mxu0 %v1662
      %2811 = vmatpush.bf16.msra.mxu0 %v1614
      %2812 = vmatmul.bf16.gmra.mxu0 %v2217
      %v2813 = vpop.f32.mrf.mxu0
      %v2814 = vadd.f32 %v628, %v2813
      %v2815 = vpop.f32.mrf.mxu0
      %v2816 = vadd.f32 %v633, %v2815
      %2817 = vmatmul.bf16.gmra.mxu0 %v2220
      %v2818 = vpop.f32.mrf.mxu0
      %v2819 = vadd.f32 %v638, %v2818
      %v2820 = vpop.f32.mrf.mxu0
      %v2821 = vadd.f32 %v643, %v2820
      %2822 = vdwg.mxu0
      %2823 = vmatpush.bf16.msra.mxu0 0
      %2824 = vmatpush.bf16.msra.mxu0 %v2296
      %2825 = vmatpush.bf16.msra.mxu0 %v1855
      %2826 = vmatpush.bf16.msra.mxu0 %v1807
      %2827 = vmatpush.bf16.msra.mxu0 %v1759
      %2828 = vmatpush.bf16.msra.mxu0 %v1711
      %2829 = vmatpush.bf16.msra.mxu0 %v1663
      %2830 = vmatpush.bf16.msra.mxu0 %v1615
      %2831 = vmatmul.bf16.gmra.mxu0 %v2217
      %v2832 = vpop.f32.mrf.mxu0
      %v2833 = vadd.f32 %v628, %v2832
      %v2834 = vpop.f32.mrf.mxu0
      %v2835 = vadd.f32 %v633, %v2834
      %2836 = vmatmul.bf16.gmra.mxu0 %v2220
      %v2837 = vpop.f32.mrf.mxu0
      %v2838 = vadd.f32 %v638, %v2837
      %v2839 = vpop.f32.mrf.mxu0
      %v2840 = vadd.f32 %v643, %v2839
      %2841 = vdwg.mxu0
      %2842 = vmatpush.bf16.msra.mxu0 0
      %2843 = vmatpush.bf16.msra.mxu0 %v2299
      %2844 = vmatpush.bf16.msra.mxu0 %v1856
      %2845 = vmatpush.bf16.msra.mxu0 %v1808
      %2846 = vmatpush.bf16.msra.mxu0 %v1760
      %2847 = vmatpush.bf16.msra.mxu0 %v1712
      %2848 = vmatpush.bf16.msra.mxu0 %v1664
      %2849 = vmatpush.bf16.msra.mxu0 %v1616
      %2850 = vmatmul.bf16.gmra.mxu0 %v2217
      %v2851 = vpop.f32.mrf.mxu0
      %v2852 = vadd.f32 %v628, %v2851
      %v2853 = vpop.f32.mrf.mxu0
      %v2854 = vadd.f32 %v633, %v2853
      %2855 = vmatmul.bf16.gmra.mxu0 %v2220
      %v2856 = vpop.f32.mrf.mxu0
      %v2857 = vadd.f32 %v638, %v2856
      %v2858 = vpop.f32.mrf.mxu0
      %v2859 = vadd.f32 %v643, %v2858
      %2860 = vdwg.mxu0
      %2861 = vmatpush.bf16.msra.mxu0 0
      %2862 = vmatpush.bf16.msra.mxu0 %v2302
      %2863 = vmatpush.bf16.msra.mxu0 %v1857
      %2864 = vmatpush.bf16.msra.mxu0 %v1809
      %2865 = vmatpush.bf16.msra.mxu0 %v1761
      %2866 = vmatpush.bf16.msra.mxu0 %v1713
      %2867 = vmatpush.bf16.msra.mxu0 %v1665
      %2868 = vmatpush.bf16.msra.mxu0 %v1617
      %2869 = vmatmul.bf16.gmra.mxu0 %v2217
      %v2870 = vpop.f32.mrf.mxu0
      %v2871 = vadd.f32 %v628, %v2870
      %v2872 = vpop.f32.mrf.mxu0
      %v2873 = vadd.f32 %v633, %v2872
      %2874 = vmatmul.bf16.gmra.mxu0 %v2220
      %v2875 = vpop.f32.mrf.mxu0
      %v2876 = vadd.f32 %v638, %v2875
      %v2877 = vpop.f32.mrf.mxu0
      %v2878 = vadd.f32 %v643, %v2877
      %2879 = vdwg.mxu0
      %2880 = vmatpush.bf16.msra.mxu0 0
      %2881 = vmatpush.bf16.msra.mxu0 %v2305
      %2882 = vmatpush.bf16.msra.mxu0 %v1858
      %2883 = vmatpush.bf16.msra.mxu0 %v1810
      %2884 = vmatpush.bf16.msra.mxu0 %v1762
      %2885 = vmatpush.bf16.msra.mxu0 %v1714
      %2886 = vmatpush.bf16.msra.mxu0 %v1666
      %2887 = vmatpush.bf16.msra.mxu0 %v1618
      %2888 = vmatmul.bf16.gmra.mxu0 %v2217
      %v2889 = vpop.f32.mrf.mxu0
      %v2890 = vadd.f32 %v628, %v2889
      %v2891 = vpop.f32.mrf.mxu0
      %v2892 = vadd.f32 %v633, %v2891
      %2893 = vmatmul.bf16.gmra.mxu0 %v2220
      %v2894 = vpop.f32.mrf.mxu0
      %v2895 = vadd.f32 %v638, %v2894
      %v2896 = vpop.f32.mrf.mxu0
      %v2897 = vadd.f32 %v643, %v2896
      %2898 = vdwg.mxu0
      %2899 = vmatpush.bf16.msra.mxu0 0
      %2900 = vmatpush.bf16.msra.mxu0 %v2308
      %2901 = vmatpush.bf16.msra.mxu0 %v1859
      %2902 = vmatpush.bf16.msra.mxu0 %v1811
      %2903 = vmatpush.bf16.msra.mxu0 %v1763
      %2904 = vmatpush.bf16.msra.mxu0 %v1715
      %2905 = vmatpush.bf16.msra.mxu0 %v1667
      %2906 = vmatpush.bf16.msra.mxu0 %v1619
      %2907 = vmatmul.bf16.gmra.mxu0 %v2217
      %v2908 = vpop.f32.mrf.mxu0
      %v2909 = vadd.f32 %v628, %v2908
      %v2910 = vpop.f32.mrf.mxu0
      %v2911 = vadd.f32 %v633, %v2910
      %2912 = vmatmul.bf16.gmra.mxu0 %v2220
      %v2913 = vpop.f32.mrf.mxu0
      %v2914 = vadd.f32 %v638, %v2913
      %v2915 = vpop.f32.mrf.mxu0
      %v2916 = vadd.f32 %v643, %v2915
      %2917 = vdwg.mxu0
      %2918 = vmatpush.bf16.msra.mxu0 0
      %2919 = vmatpush.bf16.msra.mxu0 %v2311
      %2920 = vmatpush.bf16.msra.mxu0 %v1860
      %2921 = vmatpush.bf16.msra.mxu0 %v1812
      %2922 = vmatpush.bf16.msra.mxu0 %v1764
      %2923 = vmatpush.bf16.msra.mxu0 %v1716
      %2924 = vmatpush.bf16.msra.mxu0 %v1668
      %2925 = vmatpush.bf16.msra.mxu0 %v1620
      %2926 = vmatmul.bf16.gmra.mxu0 %v2217
      %v2927 = vpop.f32.mrf.mxu0
      %v2928 = vadd.f32 %v628, %v2927
      %v2929 = vpop.f32.mrf.mxu0
      %v2930 = vadd.f32 %v633, %v2929
      %2931 = vmatmul.bf16.gmra.mxu0 %v2220
      %v2932 = vpop.f32.mrf.mxu0
      %v2933 = vadd.f32 %v638, %v2932
      %v2934 = vpop.f32.mrf.mxu0
      %v2935 = vadd.f32 %v643, %v2934
      %2936 = vdwg.mxu0
      %2937 = vmatpush.bf16.msra.mxu0 0
      %2938 = vmatpush.bf16.msra.mxu0 %v2314
      %2939 = vmatpush.bf16.msra.mxu0 %v1861
      %2940 = vmatpush.bf16.msra.mxu0 %v1813
      %2941 = vmatpush.bf16.msra.mxu0 %v1765
      %2942 = vmatpush.bf16.msra.mxu0 %v1717
      %2943 = vmatpush.bf16.msra.mxu0 %v1669
      %2944 = vmatpush.bf16.msra.mxu0 %v1621
      %2945 = vmatmul.bf16.gmra.mxu0 %v2217
      %v2946 = vpop.f32.mrf.mxu0
      %v2947 = vadd.f32 %v628, %v2946
      %v2948 = vpop.f32.mrf.mxu0
      %v2949 = vadd.f32 %v633, %v2948
      %2950 = vmatmul.bf16.gmra.mxu0 %v2220
      %v2951 = vpop.f32.mrf.mxu0
      %v2952 = vadd.f32 %v638, %v2951
      %v2953 = vpop.f32.mrf.mxu0
      %v2954 = vadd.f32 %v643, %v2953
      %2955 = vdwg.mxu0
      %2956 = vmatpush.bf16.msra.mxu0 0
      %2957 = vmatpush.bf16.msra.mxu0 %v2317
      %2958 = vmatpush.bf16.msra.mxu0 %v1862
      %2959 = vmatpush.bf16.msra.mxu0 %v1814
      %2960 = vmatpush.bf16.msra.mxu0 %v1766
      %2961 = vmatpush.bf16.msra.mxu0 %v1718
      %2962 = vmatpush.bf16.msra.mxu0 %v1670
      %2963 = vmatpush.bf16.msra.mxu0 %v1622
      %2964 = vmatmul.bf16.gmra.mxu0 %v2217
      %v2965 = vpop.f32.mrf.mxu0
      %v2966 = vadd.f32 %v628, %v2965
      %v2967 = vpop.f32.mrf.mxu0
      %v2968 = vadd.f32 %v633, %v2967
      %2969 = vmatmul.bf16.gmra.mxu0 %v2220
      %v2970 = vpop.f32.mrf.mxu0
      %v2971 = vadd.f32 %v638, %v2970
      %v2972 = vpop.f32.mrf.mxu0
      %v2973 = vadd.f32 %v643, %v2972
      %2974 = vdwg.mxu0
      %2975 = vmatpush.bf16.msra.mxu0 0
      %2976 = vmatpush.bf16.msra.mxu0 %v2320
      %2977 = vmatpush.bf16.msra.mxu0 %v1863
      %2978 = vmatpush.bf16.msra.mxu0 %v1815
      %2979 = vmatpush.bf16.msra.mxu0 %v1767
      %2980 = vmatpush.bf16.msra.mxu0 %v1719
      %2981 = vmatpush.bf16.msra.mxu0 %v1671
      %2982 = vmatpush.bf16.msra.mxu0 %v1623
      %2983 = vmatmul.bf16.gmra.mxu0 %v2217
      %v2984 = vpop.f32.mrf.mxu0
      %v2985 = vadd.f32 %v628, %v2984
      %v2986 = vpop.f32.mrf.mxu0
      %v2987 = vadd.f32 %v633, %v2986
      %2988 = vmatmul.bf16.gmra.mxu0 %v2220
      %v2989 = vpop.f32.mrf.mxu0
      %v2990 = vadd.f32 %v638, %v2989
      %v2991 = vpop.f32.mrf.mxu0
      %v2992 = vadd.f32 %v643, %v2991
      %2993 = vdwg.mxu0
      %2994 = vmatpush.bf16.msra.mxu0 0
      %2995 = vmatpush.bf16.msra.mxu0 %v2323
      %2996 = vmatpush.bf16.msra.mxu0 %v1864
      %2997 = vmatpush.bf16.msra.mxu0 %v1816
      %2998 = vmatpush.bf16.msra.mxu0 %v1768
      %2999 = vmatpush.bf16.msra.mxu0 %v1720
      %3000 = vmatpush.bf16.msra.mxu0 %v1672
      %3001 = vmatpush.bf16.msra.mxu0 %v1624
      %3002 = vmatmul.bf16.gmra.mxu0 %v2217
      %v3003 = vpop.f32.mrf.mxu0
      %v3004 = vadd.f32 %v628, %v3003
      %v3005 = vpop.f32.mrf.mxu0
      %v3006 = vadd.f32 %v633, %v3005
      %3007 = vmatmul.bf16.gmra.mxu0 %v2220
      %v3008 = vpop.f32.mrf.mxu0
      %v3009 = vadd.f32 %v638, %v3008
      %v3010 = vpop.f32.mrf.mxu0
      %v3011 = vadd.f32 %v643, %v3010
      %3012 = vdwg.mxu0
      %3013 = vmatpush.bf16.msra.mxu0 0
      %3014 = vmatpush.bf16.msra.mxu0 %v2326
      %3015 = vmatpush.bf16.msra.mxu0 %v1865
      %3016 = vmatpush.bf16.msra.mxu0 %v1817
      %3017 = vmatpush.bf16.msra.mxu0 %v1769
      %3018 = vmatpush.bf16.msra.mxu0 %v1721
      %3019 = vmatpush.bf16.msra.mxu0 %v1673
      %3020 = vmatpush.bf16.msra.mxu0 %v1625
      %3021 = vmatmul.bf16.gmra.mxu0 %v2217
      %v3022 = vpop.f32.mrf.mxu0
      %v3023 = vadd.f32 %v628, %v3022
      %v3024 = vpop.f32.mrf.mxu0
      %v3025 = vadd.f32 %v633, %v3024
      %3026 = vmatmul.bf16.gmra.mxu0 %v2220
      %v3027 = vpop.f32.mrf.mxu0
      %v3028 = vadd.f32 %v638, %v3027
      %v3029 = vpop.f32.mrf.mxu0
      %v3030 = vadd.f32 %v643, %v3029
      %3031 = vdwg.mxu0
      %3032 = vmatpush.bf16.msra.mxu0 0
      %3033 = vmatpush.bf16.msra.mxu0 %v2329
      %3034 = vmatpush.bf16.msra.mxu0 %v1866
      %3035 = vmatpush.bf16.msra.mxu0 %v1818
      %3036 = vmatpush.bf16.msra.mxu0 %v1770
      %3037 = vmatpush.bf16.msra.mxu0 %v1722
      %3038 = vmatpush.bf16.msra.mxu0 %v1674
      %3039 = vmatpush.bf16.msra.mxu0 %v1626
      %3040 = vmatmul.bf16.gmra.mxu0 %v2217
      %v3041 = vpop.f32.mrf.mxu0
      %v3042 = vadd.f32 %v628, %v3041
      %v3043 = vpop.f32.mrf.mxu0
      %v3044 = vadd.f32 %v633, %v3043
      %3045 = vmatmul.bf16.gmra.mxu0 %v2220
      %v3046 = vpop.f32.mrf.mxu0
      %v3047 = vadd.f32 %v638, %v3046
      %v3048 = vpop.f32.mrf.mxu0
      %v3049 = vadd.f32 %v643, %v3048
      %3050 = vdwg.mxu0
      %3051 = vmatpush.bf16.msra.mxu0 0
      %3052 = vmatpush.bf16.msra.mxu0 %v2332
      %3053 = vmatpush.bf16.msra.mxu0 %v1867
      %3054 = vmatpush.bf16.msra.mxu0 %v1819
      %3055 = vmatpush.bf16.msra.mxu0 %v1771
      %3056 = vmatpush.bf16.msra.mxu0 %v1723
      %3057 = vmatpush.bf16.msra.mxu0 %v1675
      %3058 = vmatpush.bf16.msra.mxu0 %v1627
      %3059 = vmatmul.bf16.gmra.mxu0 %v2217
      %v3060 = vpop.f32.mrf.mxu0
      %v3061 = vadd.f32 %v628, %v3060
      %v3062 = vpop.f32.mrf.mxu0
      %v3063 = vadd.f32 %v633, %v3062
      %3064 = vmatmul.bf16.gmra.mxu0 %v2220
      %v3065 = vpop.f32.mrf.mxu0
      %v3066 = vadd.f32 %v638, %v3065
      %v3067 = vpop.f32.mrf.mxu0
      %v3068 = vadd.f32 %v643, %v3067
      %3069 = vdwg.mxu0
      %3070 = vmatpush.bf16.msra.mxu0 0
      %3071 = vmatpush.bf16.msra.mxu0 %v2335
      %3072 = vmatpush.bf16.msra.mxu0 %v1868
      %3073 = vmatpush.bf16.msra.mxu0 %v1820
      %3074 = vmatpush.bf16.msra.mxu0 %v1772
      %3075 = vmatpush.bf16.msra.mxu0 %v1724
      %3076 = vmatpush.bf16.msra.mxu0 %v1676
      %3077 = vmatpush.bf16.msra.mxu0 %v1628
      %3078 = vmatmul.bf16.gmra.mxu0 %v2217
      %v3079 = vpop.f32.mrf.mxu0
      %v3080 = vadd.f32 %v628, %v3079
      %v3081 = vpop.f32.mrf.mxu0
      %v3082 = vadd.f32 %v633, %v3081
      %3083 = vmatmul.bf16.gmra.mxu0 %v2220
      %v3084 = vpop.f32.mrf.mxu0
      %v3085 = vadd.f32 %v638, %v3084
      %v3086 = vpop.f32.mrf.mxu0
      %v3087 = vadd.f32 %v643, %v3086
      %3088 = vdwg.mxu0
      %3089 = vmatpush.bf16.msra.mxu0 0
      %3090 = vmatpush.bf16.msra.mxu0 %v2338
      %3091 = vmatpush.bf16.msra.mxu0 %v1869
      %3092 = vmatpush.bf16.msra.mxu0 %v1821
      %3093 = vmatpush.bf16.msra.mxu0 %v1773
      %3094 = vmatpush.bf16.msra.mxu0 %v1725
      %3095 = vmatpush.bf16.msra.mxu0 %v1677
      %3096 = vmatpush.bf16.msra.mxu0 %v1629
      %3097 = vmatmul.bf16.gmra.mxu0 %v2217
      %v3098 = vpop.f32.mrf.mxu0
      %v3099 = vadd.f32 %v628, %v3098
      %v3100 = vpop.f32.mrf.mxu0
      %v3101 = vadd.f32 %v633, %v3100
      %3102 = vmatmul.bf16.gmra.mxu0 %v2220
      %v3103 = vpop.f32.mrf.mxu0
      %v3104 = vadd.f32 %v638, %v3103
      %v3105 = vpop.f32.mrf.mxu0
      %v3106 = vadd.f32 %v643, %v3105
      %3107 = vdwg.mxu0
      %3108 = vmatpush.bf16.msra.mxu0 0
      %3109 = vmatpush.bf16.msra.mxu0 %v2341
      %3110 = vmatpush.bf16.msra.mxu0 %v1870
      %3111 = vmatpush.bf16.msra.mxu0 %v1822
      %3112 = vmatpush.bf16.msra.mxu0 %v1774
      %3113 = vmatpush.bf16.msra.mxu0 %v1726
      %3114 = vmatpush.bf16.msra.mxu0 %v1678
      %3115 = vmatpush.bf16.msra.mxu0 %v1630
      %3116 = vmatmul.bf16.gmra.mxu0 %v2217
      %v3117 = vpop.f32.mrf.mxu0
      %v3118 = vadd.f32 %v628, %v3117
      %v3119 = vpop.f32.mrf.mxu0
      %v3120 = vadd.f32 %v633, %v3119
      %3121 = vmatmul.bf16.gmra.mxu0 %v2220
      %v3122 = vpop.f32.mrf.mxu0
      %v3123 = vadd.f32 %v638, %v3122
      %v3124 = vpop.f32.mrf.mxu0
      %v3125 = vadd.f32 %v643, %v3124
      %3126 = vdwg.mxu0
      %3127 = vmatpush.bf16.msra.mxu0 0
      %3128 = vmatpush.bf16.msra.mxu0 %v2344
      %3129 = vmatpush.bf16.msra.mxu0 %v1871
      %3130 = vmatpush.bf16.msra.mxu0 %v1823
      %3131 = vmatpush.bf16.msra.mxu0 %v1775
      %3132 = vmatpush.bf16.msra.mxu0 %v1727
      %3133 = vmatpush.bf16.msra.mxu0 %v1679
      %3134 = vmatpush.bf16.msra.mxu0 %v1631
      %3135 = vmatmul.bf16.gmra.mxu0 %v2217
      %v3136 = vpop.f32.mrf.mxu0
      %v3137 = vadd.f32 %v628, %v3136
      %v3138 = vpop.f32.mrf.mxu0
      %v3139 = vadd.f32 %v633, %v3138
      %3140 = vmatmul.bf16.gmra.mxu0 %v2220
      %v3141 = vpop.f32.mrf.mxu0
      %v3142 = vadd.f32 %v638, %v3141
      %v3143 = vpop.f32.mrf.mxu0
      %v3144 = vadd.f32 %v643, %v3143
      %3145 = vdwg.mxu0
      %3146 = vmatpush.bf16.msra.mxu0 0
      %3147 = vmatpush.bf16.msra.mxu0 %v2347
      %3148 = vmatpush.bf16.msra.mxu0 %v1872
      %3149 = vmatpush.bf16.msra.mxu0 %v1824
      %3150 = vmatpush.bf16.msra.mxu0 %v1776
      %3151 = vmatpush.bf16.msra.mxu0 %v1728
      %3152 = vmatpush.bf16.msra.mxu0 %v1680
      %3153 = vmatpush.bf16.msra.mxu0 %v1632
      %3154 = vmatmul.bf16.gmra.mxu0 %v2217
      %v3155 = vpop.f32.mrf.mxu0
      %v3156 = vadd.f32 %v628, %v3155
      %v3157 = vpop.f32.mrf.mxu0
      %v3158 = vadd.f32 %v633, %v3157
      %3159 = vmatmul.bf16.gmra.mxu0 %v2220
      %v3160 = vpop.f32.mrf.mxu0
      %v3161 = vadd.f32 %v638, %v3160
      %v3162 = vpop.f32.mrf.mxu0
      %v3163 = vadd.f32 %v643, %v3162
      %3164 = vdwg.mxu0
      %3165 = vmatpush.bf16.msra.mxu0 0
      %3166 = vmatpush.bf16.msra.mxu0 %v2350
      %3167 = vmatpush.bf16.msra.mxu0 %v1873
      %3168 = vmatpush.bf16.msra.mxu0 %v1825
      %3169 = vmatpush.bf16.msra.mxu0 %v1777
      %3170 = vmatpush.bf16.msra.mxu0 %v1729
      %3171 = vmatpush.bf16.msra.mxu0 %v1681
      %3172 = vmatpush.bf16.msra.mxu0 %v1633
      %3173 = vmatmul.bf16.gmra.mxu0 %v2217
      %v3174 = vpop.f32.mrf.mxu0
      %v3175 = vadd.f32 %v628, %v3174
      %v3176 = vpop.f32.mrf.mxu0
      %v3177 = vadd.f32 %v633, %v3176
      %3178 = vmatmul.bf16.gmra.mxu0 %v2220
      %v3179 = vpop.f32.mrf.mxu0
      %v3180 = vadd.f32 %v638, %v3179
      %v3181 = vpop.f32.mrf.mxu0
      %v3182 = vadd.f32 %v643, %v3181
      %3183 = vdwg.mxu0
      %3184 = vmatpush.bf16.msra.mxu0 0
      %3185 = vmatpush.bf16.msra.mxu0 %v2353
      %3186 = vmatpush.bf16.msra.mxu0 %v1874
      %3187 = vmatpush.bf16.msra.mxu0 %v1826
      %3188 = vmatpush.bf16.msra.mxu0 %v1778
      %3189 = vmatpush.bf16.msra.mxu0 %v1730
      %3190 = vmatpush.bf16.msra.mxu0 %v1682
      %3191 = vmatpush.bf16.msra.mxu0 %v1634
      %3192 = vmatmul.bf16.gmra.mxu0 %v2217
      %v3193 = vpop.f32.mrf.mxu0
      %v3194 = vadd.f32 %v628, %v3193
      %v3195 = vpop.f32.mrf.mxu0
      %v3196 = vadd.f32 %v633, %v3195
      %3197 = vmatmul.bf16.gmra.mxu0 %v2220
      %v3198 = vpop.f32.mrf.mxu0
      %v3199 = vadd.f32 %v638, %v3198
      %v3200 = vpop.f32.mrf.mxu0
      %v3201 = vadd.f32 %v643, %v3200
      %3202 = vdwg.mxu0
      %3203 = vmatpush.bf16.msra.mxu0 0
      %3204 = vmatpush.bf16.msra.mxu0 %v2356
      %3205 = vmatpush.bf16.msra.mxu0 %v1875
      %3206 = vmatpush.bf16.msra.mxu0 %v1827
      %3207 = vmatpush.bf16.msra.mxu0 %v1779
      %3208 = vmatpush.bf16.msra.mxu0 %v1731
      %3209 = vmatpush.bf16.msra.mxu0 %v1683
      %3210 = vmatpush.bf16.msra.mxu0 %v1635
      %3211 = vmatmul.bf16.gmra.mxu0 %v2217
      %v3212 = vpop.f32.mrf.mxu0
      %v3213 = vadd.f32 %v628, %v3212
      %v3214 = vpop.f32.mrf.mxu0
      %v3215 = vadd.f32 %v633, %v3214
      %3216 = vmatmul.bf16.gmra.mxu0 %v2220
      %v3217 = vpop.f32.mrf.mxu0
      %v3218 = vadd.f32 %v638, %v3217
      %v3219 = vpop.f32.mrf.mxu0
      %v3220 = vadd.f32 %v643, %v3219
      %3221 = vdwg.mxu0
      %3222 = vmatpush.bf16.msra.mxu0 0
      %3223 = vmatpush.bf16.msra.mxu0 %v2359
      %3224 = vmatpush.bf16.msra.mxu0 %v1876
      %3225 = vmatpush.bf16.msra.mxu0 %v1828
      %3226 = vmatpush.bf16.msra.mxu0 %v1780
      %3227 = vmatpush.bf16.msra.mxu0 %v1732
      %3228 = vmatpush.bf16.msra.mxu0 %v1684
      %3229 = vmatpush.bf16.msra.mxu0 %v1636
      %3230 = vmatmul.bf16.gmra.mxu0 %v2217
      %v3231 = vpop.f32.mrf.mxu0
      %v3232 = vadd.f32 %v628, %v3231
      %v3233 = vpop.f32.mrf.mxu0
      %v3234 = vadd.f32 %v633, %v3233
      %3235 = vmatmul.bf16.gmra.mxu0 %v2220
      %v3236 = vpop.f32.mrf.mxu0
      %v3237 = vadd.f32 %v638, %v3236
      %v3238 = vpop.f32.mrf.mxu0
      %v3239 = vadd.f32 %v643, %v3238
      %3240 = vdwg.mxu0
      %3241 = vmatpush.bf16.msra.mxu0 0
      %3242 = vmatpush.bf16.msra.mxu0 %v2362
      %3243 = vmatpush.bf16.msra.mxu0 %v1877
      %3244 = vmatpush.bf16.msra.mxu0 %v1829
      %3245 = vmatpush.bf16.msra.mxu0 %v1781
      %3246 = vmatpush.bf16.msra.mxu0 %v1733
      %3247 = vmatpush.bf16.msra.mxu0 %v1685
      %3248 = vmatpush.bf16.msra.mxu0 %v1637
      %3249 = vmatmul.bf16.gmra.mxu0 %v2217
      %v3250 = vpop.f32.mrf.mxu0
      %v3251 = vadd.f32 %v628, %v3250
      %v3252 = vpop.f32.mrf.mxu0
      %v3253 = vadd.f32 %v633, %v3252
      %3254 = vmatmul.bf16.gmra.mxu0 %v2220
      %v3255 = vpop.f32.mrf.mxu0
      %v3256 = vadd.f32 %v638, %v3255
      %v3257 = vpop.f32.mrf.mxu0
      %v3258 = vadd.f32 %v643, %v3257
      %3259 = vdwg.mxu0
      %3260 = vmatpush.bf16.msra.mxu0 0
      %3261 = vmatpush.bf16.msra.mxu0 %v2365
      %3262 = vmatpush.bf16.msra.mxu0 %v1878
      %3263 = vmatpush.bf16.msra.mxu0 %v1830
      %3264 = vmatpush.bf16.msra.mxu0 %v1782
      %3265 = vmatpush.bf16.msra.mxu0 %v1734
      %3266 = vmatpush.bf16.msra.mxu0 %v1686
      %3267 = vmatpush.bf16.msra.mxu0 %v1638
      %3268 = vmatmul.bf16.gmra.mxu0 %v2217
      %v3269 = vpop.f32.mrf.mxu0
      %v3270 = vadd.f32 %v628, %v3269
      %v3271 = vpop.f32.mrf.mxu0
      %v3272 = vadd.f32 %v633, %v3271
      %3273 = vmatmul.bf16.gmra.mxu0 %v2220
      %v3274 = vpop.f32.mrf.mxu0
      %v3275 = vadd.f32 %v638, %v3274
      %v3276 = vpop.f32.mrf.mxu0
      %v3277 = vadd.f32 %v643, %v3276
      %3278 = vdwg.mxu0
      %vm3279 = vcmp.gt.f32.partialorder %v2377, 0.0
      %vm3280 = vcmp.gt.f32.partialorder %v2396, 0.0
      %vm3281 = vcmp.gt.f32.partialorder %v2415, 0.0
      %vm3282 = vcmp.gt.f32.partialorder %v2434, 0.0
      %vm3283 = vcmp.gt.f32.partialorder %v2453, 0.0
      %vm3284 = vcmp.gt.f32.partialorder %v2472, 0.0
      %vm3285 = vcmp.gt.f32.partialorder %v2491, 0.0
      %vm3286 = vcmp.gt.f32.partialorder %v2510, 0.0
      %vm3287 = vcmp.gt.f32.partialorder %v2529, 0.0
      %vm3288 = vcmp.gt.f32.partialorder %v2548, 0.0
      %vm3289 = vcmp.gt.f32.partialorder %v2567, 0.0
      %vm3290 = vcmp.gt.f32.partialorder %v2586, 0.0
      %vm3291 = vcmp.gt.f32.partialorder %v2605, 0.0
      %vm3292 = vcmp.gt.f32.partialorder %v2624, 0.0
      %vm3293 = vcmp.gt.f32.partialorder %v2643, 0.0
      %vm3294 = vcmp.gt.f32.partialorder %v2662, 0.0
      %vm3295 = vcmp.gt.f32.partialorder %v2681, 0.0
      %vm3296 = vcmp.gt.f32.partialorder %v2700, 0.0
      %vm3297 = vcmp.gt.f32.partialorder %v2719, 0.0
      %vm3298 = vcmp.gt.f32.partialorder %v2738, 0.0
      %vm3299 = vcmp.gt.f32.partialorder %v2757, 0.0
      %vm3300 = vcmp.gt.f32.partialorder %v2776, 0.0
      %vm3301 = vcmp.gt.f32.partialorder %v2795, 0.0
      %vm3302 = vcmp.gt.f32.partialorder %v2814, 0.0
      %vm3303 = vcmp.gt.f32.partialorder %v2833, 0.0
      %vm3304 = vcmp.gt.f32.partialorder %v2852, 0.0
      %vm3305 = vcmp.gt.f32.partialorder %v2871, 0.0
      %vm3306 = vcmp.gt.f32.partialorder %v2890, 0.0
      %vm3307 = vcmp.gt.f32.partialorder %v2909, 0.0
      %vm3308 = vcmp.gt.f32.partialorder %v2928, 0.0
      %vm3309 = vcmp.gt.f32.partialorder %v2947, 0.0
      %vm3310 = vcmp.gt.f32.partialorder %v2966, 0.0
      %vm3311 = vcmp.gt.f32.partialorder %v2985, 0.0
      %vm3312 = vcmp.gt.f32.partialorder %v3004, 0.0
      %vm3313 = vcmp.gt.f32.partialorder %v3023, 0.0
      %vm3314 = vcmp.gt.f32.partialorder %v3042, 0.0
      %vm3315 = vcmp.gt.f32.partialorder %v3061, 0.0
      %vm3316 = vcmp.gt.f32.partialorder %v3080, 0.0
      %vm3317 = vcmp.gt.f32.partialorder %v3099, 0.0
      %vm3318 = vcmp.gt.f32.partialorder %v3118, 0.0
      %vm3319 = vcmp.gt.f32.partialorder %v3137, 0.0
      %vm3320 = vcmp.gt.f32.partialorder %v3156, 0.0
      %vm3321 = vcmp.gt.f32.partialorder %v3175, 0.0
      %vm3322 = vcmp.gt.f32.partialorder %v3194, 0.0
      %vm3323 = vcmp.gt.f32.partialorder %v3213, 0.0
      %vm3324 = vcmp.gt.f32.partialorder %v3232, 0.0
      %vm3325 = vcmp.gt.f32.partialorder %v3251, 0.0
      %vm3326 = vcmp.gt.f32.partialorder %v3270, 0.0
      %vm3327 = vcmp.gt.f32.partialorder %v2379, 0.0
      %vm3328 = vcmp.gt.f32.partialorder %v2398, 0.0
      %vm3329 = vcmp.gt.f32.partialorder %v2417, 0.0
      %vm3330 = vcmp.gt.f32.partialorder %v2436, 0.0
      %vm3331 = vcmp.gt.f32.partialorder %v2455, 0.0
      %vm3332 = vcmp.gt.f32.partialorder %v2474, 0.0
      %vm3333 = vcmp.gt.f32.partialorder %v2493, 0.0
      %vm3334 = vcmp.gt.f32.partialorder %v2512, 0.0
      %vm3335 = vcmp.gt.f32.partialorder %v2531, 0.0
      %vm3336 = vcmp.gt.f32.partialorder %v2550, 0.0
      %vm3337 = vcmp.gt.f32.partialorder %v2569, 0.0
      %vm3338 = vcmp.gt.f32.partialorder %v2588, 0.0
      %vm3339 = vcmp.gt.f32.partialorder %v2607, 0.0
      %vm3340 = vcmp.gt.f32.partialorder %v2626, 0.0
      %vm3341 = vcmp.gt.f32.partialorder %v2645, 0.0
      %vm3342 = vcmp.gt.f32.partialorder %v2664, 0.0
      %vm3343 = vcmp.gt.f32.partialorder %v2683, 0.0
      %vm3344 = vcmp.gt.f32.partialorder %v2702, 0.0
      %vm3345 = vcmp.gt.f32.partialorder %v2721, 0.0
      %vm3346 = vcmp.gt.f32.partialorder %v2740, 0.0
      %vm3347 = vcmp.gt.f32.partialorder %v2759, 0.0
      %vm3348 = vcmp.gt.f32.partialorder %v2778, 0.0
      %vm3349 = vcmp.gt.f32.partialorder %v2797, 0.0
      %vm3350 = vcmp.gt.f32.partialorder %v2816, 0.0
      %vm3351 = vcmp.gt.f32.partialorder %v2835, 0.0
      %vm3352 = vcmp.gt.f32.partialorder %v2854, 0.0
      %vm3353 = vcmp.gt.f32.partialorder %v2873, 0.0
      %vm3354 = vcmp.gt.f32.partialorder %v2892, 0.0
      %vm3355 = vcmp.gt.f32.partialorder %v2911, 0.0
      %vm3356 = vcmp.gt.f32.partialorder %v2930, 0.0
      %vm3357 = vcmp.gt.f32.partialorder %v2949, 0.0
      %vm3358 = vcmp.gt.f32.partialorder %v2968, 0.0
      %vm3359 = vcmp.gt.f32.partialorder %v2987, 0.0
      %vm3360 = vcmp.gt.f32.partialorder %v3006, 0.0
      %vm3361 = vcmp.gt.f32.partialorder %v3025, 0.0
      %vm3362 = vcmp.gt.f32.partialorder %v3044, 0.0
      %vm3363 = vcmp.gt.f32.partialorder %v3063, 0.0
      %vm3364 = vcmp.gt.f32.partialorder %v3082, 0.0
      %vm3365 = vcmp.gt.f32.partialorder %v3101, 0.0
      %vm3366 = vcmp.gt.f32.partialorder %v3120, 0.0
      %vm3367 = vcmp.gt.f32.partialorder %v3139, 0.0
      %vm3368 = vcmp.gt.f32.partialorder %v3158, 0.0
      %vm3369 = vcmp.gt.f32.partialorder %v3177, 0.0
      %vm3370 = vcmp.gt.f32.partialorder %v3196, 0.0
      %vm3371 = vcmp.gt.f32.partialorder %v3215, 0.0
      %vm3372 = vcmp.gt.f32.partialorder %v3234, 0.0
      %vm3373 = vcmp.gt.f32.partialorder %v3253, 0.0
      %vm3374 = vcmp.gt.f32.partialorder %v3272, 0.0
      %vm3375 = vcmp.gt.f32.partialorder %v2382, 0.0
      %vm3376 = vcmp.gt.f32.partialorder %v2401, 0.0
      %vm3377 = vcmp.gt.f32.partialorder %v2420, 0.0
      %vm3378 = vcmp.gt.f32.partialorder %v2439, 0.0
      %vm3379 = vcmp.gt.f32.partialorder %v2458, 0.0
      %vm3380 = vcmp.gt.f32.partialorder %v2477, 0.0
      %vm3381 = vcmp.gt.f32.partialorder %v2496, 0.0
      %vm3382 = vcmp.gt.f32.partialorder %v2515, 0.0
      %vm3383 = vcmp.gt.f32.partialorder %v2534, 0.0
      %vm3384 = vcmp.gt.f32.partialorder %v2553, 0.0
      %vm3385 = vcmp.gt.f32.partialorder %v2572, 0.0
      %vm3386 = vcmp.gt.f32.partialorder %v2591, 0.0
      %vm3387 = vcmp.gt.f32.partialorder %v2610, 0.0
      %vm3388 = vcmp.gt.f32.partialorder %v2629, 0.0
      %vm3389 = vcmp.gt.f32.partialorder %v2648, 0.0
      %vm3390 = vcmp.gt.f32.partialorder %v2667, 0.0
      %vm3391 = vcmp.gt.f32.partialorder %v2686, 0.0
      %vm3392 = vcmp.gt.f32.partialorder %v2705, 0.0
      %vm3393 = vcmp.gt.f32.partialorder %v2724, 0.0
      %vm3394 = vcmp.gt.f32.partialorder %v2743, 0.0
      %vm3395 = vcmp.gt.f32.partialorder %v2762, 0.0
      %vm3396 = vcmp.gt.f32.partialorder %v2781, 0.0
      %vm3397 = vcmp.gt.f32.partialorder %v2800, 0.0
      %vm3398 = vcmp.gt.f32.partialorder %v2819, 0.0
      %vm3399 = vcmp.gt.f32.partialorder %v2838, 0.0
      %vm3400 = vcmp.gt.f32.partialorder %v2857, 0.0
      %vm3401 = vcmp.gt.f32.partialorder %v2876, 0.0
      %vm3402 = vcmp.gt.f32.partialorder %v2895, 0.0
      %vm3403 = vcmp.gt.f32.partialorder %v2914, 0.0
      %vm3404 = vcmp.gt.f32.partialorder %v2933, 0.0
      %vm3405 = vcmp.gt.f32.partialorder %v2952, 0.0
      %vm3406 = vcmp.gt.f32.partialorder %v2971, 0.0
      %vm3407 = vcmp.gt.f32.partialorder %v2990, 0.0
      %vm3408 = vcmp.gt.f32.partialorder %v3009, 0.0
      %vm3409 = vcmp.gt.f32.partialorder %v3028, 0.0
      %vm3410 = vcmp.gt.f32.partialorder %v3047, 0.0
      %vm3411 = vcmp.gt.f32.partialorder %v3066, 0.0
      %vm3412 = vcmp.gt.f32.partialorder %v3085, 0.0
      %vm3413 = vcmp.gt.f32.partialorder %v3104, 0.0
      %vm3414 = vcmp.gt.f32.partialorder %v3123, 0.0
      %vm3415 = vcmp.gt.f32.partialorder %v3142, 0.0
      %vm3416 = vcmp.gt.f32.partialorder %v3161, 0.0
      %vm3417 = vcmp.gt.f32.partialorder %v3180, 0.0
      %vm3418 = vcmp.gt.f32.partialorder %v3199, 0.0
      %vm3419 = vcmp.gt.f32.partialorder %v3218, 0.0
      %vm3420 = vcmp.gt.f32.partialorder %v3237, 0.0
      %vm3421 = vcmp.gt.f32.partialorder %v3256, 0.0
      %vm3422 = vcmp.gt.f32.partialorder %v3275, 0.0
      %vm3423 = vcmp.gt.f32.partialorder %v2384, 0.0
      %vm3424 = vcmp.gt.f32.partialorder %v2403, 0.0
      %vm3425 = vcmp.gt.f32.partialorder %v2422, 0.0
      %vm3426 = vcmp.gt.f32.partialorder %v2441, 0.0
      %vm3427 = vcmp.gt.f32.partialorder %v2460, 0.0
      %vm3428 = vcmp.gt.f32.partialorder %v2479, 0.0
      %vm3429 = vcmp.gt.f32.partialorder %v2498, 0.0
      %vm3430 = vcmp.gt.f32.partialorder %v2517, 0.0
      %vm3431 = vcmp.gt.f32.partialorder %v2536, 0.0
      %vm3432 = vcmp.gt.f32.partialorder %v2555, 0.0
      %vm3433 = vcmp.gt.f32.partialorder %v2574, 0.0
      %vm3434 = vcmp.gt.f32.partialorder %v2593, 0.0
      %vm3435 = vcmp.gt.f32.partialorder %v2612, 0.0
      %vm3436 = vcmp.gt.f32.partialorder %v2631, 0.0
      %vm3437 = vcmp.gt.f32.partialorder %v2650, 0.0
      %vm3438 = vcmp.gt.f32.partialorder %v2669, 0.0
      %vm3439 = vcmp.gt.f32.partialorder %v2688, 0.0
      %vm3440 = vcmp.gt.f32.partialorder %v2707, 0.0
      %vm3441 = vcmp.gt.f32.partialorder %v2726, 0.0
      %vm3442 = vcmp.gt.f32.partialorder %v2745, 0.0
      %vm3443 = vcmp.gt.f32.partialorder %v2764, 0.0
      %vm3444 = vcmp.gt.f32.partialorder %v2783, 0.0
      %vm3445 = vcmp.gt.f32.partialorder %v2802, 0.0
      %vm3446 = vcmp.gt.f32.partialorder %v2821, 0.0
      %vm3447 = vcmp.gt.f32.partialorder %v2840, 0.0
      %vm3448 = vcmp.gt.f32.partialorder %v2859, 0.0
      %vm3449 = vcmp.gt.f32.partialorder %v2878, 0.0
      %vm3450 = vcmp.gt.f32.partialorder %v2897, 0.0
      %vm3451 = vcmp.gt.f32.partialorder %v2916, 0.0
      %vm3452 = vcmp.gt.f32.partialorder %v2935, 0.0
      %vm3453 = vcmp.gt.f32.partialorder %v2954, 0.0
      %vm3454 = vcmp.gt.f32.partialorder %v2973, 0.0
      %vm3455 = vcmp.gt.f32.partialorder %v2992, 0.0
      %vm3456 = vcmp.gt.f32.partialorder %v3011, 0.0
      %vm3457 = vcmp.gt.f32.partialorder %v3030, 0.0
      %vm3458 = vcmp.gt.f32.partialorder %v3049, 0.0
      %vm3459 = vcmp.gt.f32.partialorder %v3068, 0.0
      %vm3460 = vcmp.gt.f32.partialorder %v3087, 0.0
      %vm3461 = vcmp.gt.f32.partialorder %v3106, 0.0
      %vm3462 = vcmp.gt.f32.partialorder %v3125, 0.0
      %vm3463 = vcmp.gt.f32.partialorder %v3144, 0.0
      %vm3464 = vcmp.gt.f32.partialorder %v3163, 0.0
      %vm3465 = vcmp.gt.f32.partialorder %v3182, 0.0
      %vm3466 = vcmp.gt.f32.partialorder %v3201, 0.0
      %vm3467 = vcmp.gt.f32.partialorder %v3220, 0.0
      %vm3468 = vcmp.gt.f32.partialorder %v3239, 0.0
      %vm3469 = vcmp.gt.f32.partialorder %v3258, 0.0
      %vm3470 = vcmp.gt.f32.partialorder %v3277, 0.0
      %v3471 = vmin.f32 %v2377, 0.0
      %v3472 = vmin.f32 %v2396, 0.0
      %v3473 = vmin.f32 %v2415, 0.0
      %v3474 = vmin.f32 %v2434, 0.0
      %v3475 = vmin.f32 %v2453, 0.0
      %v3476 = vmin.f32 %v2472, 0.0
      %v3477 = vmin.f32 %v2491, 0.0
      %v3478 = vmin.f32 %v2510, 0.0
      %v3479 = vmin.f32 %v2529, 0.0
      %v3480 = vmin.f32 %v2548, 0.0
      %v3481 = vmin.f32 %v2567, 0.0
      %v3482 = vmin.f32 %v2586, 0.0
      %v3483 = vmin.f32 %v2605, 0.0
      %v3484 = vmin.f32 %v2624, 0.0
      %v3485 = vmin.f32 %v2643, 0.0
      %v3486 = vmin.f32 %v2662, 0.0
      %v3487 = vmin.f32 %v2681, 0.0
      %v3488 = vmin.f32 %v2700, 0.0
      %v3489 = vmin.f32 %v2719, 0.0
      %v3490 = vmin.f32 %v2738, 0.0
      %v3491 = vmin.f32 %v2757, 0.0
      %v3492 = vmin.f32 %v2776, 0.0
      %v3493 = vmin.f32 %v2795, 0.0
      %v3494 = vmin.f32 %v2814, 0.0
      %v3495 = vmin.f32 %v2833, 0.0
      %v3496 = vmin.f32 %v2852, 0.0
      %v3497 = vmin.f32 %v2871, 0.0
      %v3498 = vmin.f32 %v2890, 0.0
      %v3499 = vmin.f32 %v2909, 0.0
      %v3500 = vmin.f32 %v2928, 0.0
      %v3501 = vmin.f32 %v2947, 0.0
      %v3502 = vmin.f32 %v2966, 0.0
      %v3503 = vmin.f32 %v2985, 0.0
      %v3504 = vmin.f32 %v3004, 0.0
      %v3505 = vmin.f32 %v3023, 0.0
      %v3506 = vmin.f32 %v3042, 0.0
      %v3507 = vmin.f32 %v3061, 0.0
      %v3508 = vmin.f32 %v3080, 0.0
      %v3509 = vmin.f32 %v3099, 0.0
      %v3510 = vmin.f32 %v3118, 0.0
      %v3511 = vmin.f32 %v3137, 0.0
      %v3512 = vmin.f32 %v3156, 0.0
      %v3513 = vmin.f32 %v3175, 0.0
      %v3514 = vmin.f32 %v3194, 0.0
      %v3515 = vmin.f32 %v3213, 0.0
      %v3516 = vmin.f32 %v3232, 0.0
      %v3517 = vmin.f32 %v3251, 0.0
      %v3518 = vmin.f32 %v3270, 0.0
      %v3519 = vmin.f32 %v2379, 0.0
      %v3520 = vmin.f32 %v2398, 0.0
      %v3521 = vmin.f32 %v2417, 0.0
      %v3522 = vmin.f32 %v2436, 0.0
      %v3523 = vmin.f32 %v2455, 0.0
      %v3524 = vmin.f32 %v2474, 0.0
      %v3525 = vmin.f32 %v2493, 0.0
      %v3526 = vmin.f32 %v2512, 0.0
      %v3527 = vmin.f32 %v2531, 0.0
      %v3528 = vmin.f32 %v2550, 0.0
      %v3529 = vmin.f32 %v2569, 0.0
      %v3530 = vmin.f32 %v2588, 0.0
      %v3531 = vmin.f32 %v2607, 0.0
      %v3532 = vmin.f32 %v2626, 0.0
      %v3533 = vmin.f32 %v2645, 0.0
      %v3534 = vmin.f32 %v2664, 0.0
      %v3535 = vmin.f32 %v2683, 0.0
      %v3536 = vmin.f32 %v2702, 0.0
      %v3537 = vmin.f32 %v2721, 0.0
      %v3538 = vmin.f32 %v2740, 0.0
      %v3539 = vmin.f32 %v2759, 0.0
      %v3540 = vmin.f32 %v2778, 0.0
      %v3541 = vmin.f32 %v2797, 0.0
      %v3542 = vmin.f32 %v2816, 0.0
      %v3543 = vmin.f32 %v2835, 0.0
      %v3544 = vmin.f32 %v2854, 0.0
      %v3545 = vmin.f32 %v2873, 0.0
      %v3546 = vmin.f32 %v2892, 0.0
      %v3547 = vmin.f32 %v2911, 0.0
      %v3548 = vmin.f32 %v2930, 0.0
      %v3549 = vmin.f32 %v2949, 0.0
      %v3550 = vmin.f32 %v2968, 0.0
      %v3551 = vmin.f32 %v2987, 0.0
      %v3552 = vmin.f32 %v3006, 0.0
      %v3553 = vmin.f32 %v3025, 0.0
      %v3554 = vmin.f32 %v3044, 0.0
      %v3555 = vmin.f32 %v3063, 0.0
      %v3556 = vmin.f32 %v3082, 0.0
      %v3557 = vmin.f32 %v3101, 0.0
      %v3558 = vmin.f32 %v3120, 0.0
      %v3559 = vmin.f32 %v3139, 0.0
      %v3560 = vmin.f32 %v3158, 0.0
      %v3561 = vmin.f32 %v3177, 0.0
      %v3562 = vmin.f32 %v3196, 0.0
      %v3563 = vmin.f32 %v3215, 0.0
      %v3564 = vmin.f32 %v3234, 0.0
      %v3565 = vmin.f32 %v3253, 0.0
      %v3566 = vmin.f32 %v3272, 0.0
      %v3567 = vmin.f32 %v2382, 0.0
      %v3568 = vmin.f32 %v2401, 0.0
      %v3569 = vmin.f32 %v2420, 0.0
      %v3570 = vmin.f32 %v2439, 0.0
      %v3571 = vmin.f32 %v2458, 0.0
      %v3572 = vmin.f32 %v2477, 0.0
      %v3573 = vmin.f32 %v2496, 0.0
      %v3574 = vmin.f32 %v2515, 0.0
      %v3575 = vmin.f32 %v2534, 0.0
      %v3576 = vmin.f32 %v2553, 0.0
      %v3577 = vmin.f32 %v2572, 0.0
      %v3578 = vmin.f32 %v2591, 0.0
      %v3579 = vmin.f32 %v2610, 0.0
      %v3580 = vmin.f32 %v2629, 0.0
      %v3581 = vmin.f32 %v2648, 0.0
      %v3582 = vmin.f32 %v2667, 0.0
      %v3583 = vmin.f32 %v2686, 0.0
      %v3584 = vmin.f32 %v2705, 0.0
      %v3585 = vmin.f32 %v2724, 0.0
      %v3586 = vmin.f32 %v2743, 0.0
      %v3587 = vmin.f32 %v2762, 0.0
      %v3588 = vmin.f32 %v2781, 0.0
      %v3589 = vmin.f32 %v2800, 0.0
      %v3590 = vmin.f32 %v2819, 0.0
      %v3591 = vmin.f32 %v2838, 0.0
      %v3592 = vmin.f32 %v2857, 0.0
      %v3593 = vmin.f32 %v2876, 0.0
      %v3594 = vmin.f32 %v2895, 0.0
      %v3595 = vmin.f32 %v2914, 0.0
      %v3596 = vmin.f32 %v2933, 0.0
      %v3597 = vmin.f32 %v2952, 0.0
      %v3598 = vmin.f32 %v2971, 0.0
      %v3599 = vmin.f32 %v2990, 0.0
      %v3600 = vmin.f32 %v3009, 0.0
      %v3601 = vmin.f32 %v3028, 0.0
      %v3602 = vmin.f32 %v3047, 0.0
      %v3603 = vmin.f32 %v3066, 0.0
      %v3604 = vmin.f32 %v3085, 0.0
      %v3605 = vmin.f32 %v3104, 0.0
      %v3606 = vmin.f32 %v3123, 0.0
      %v3607 = vmin.f32 %v3142, 0.0
      %v3608 = vmin.f32 %v3161, 0.0
      %v3609 = vmin.f32 %v3180, 0.0
      %v3610 = vmin.f32 %v3199, 0.0
      %v3611 = vmin.f32 %v3218, 0.0
      %v3612 = vmin.f32 %v3237, 0.0
      %v3613 = vmin.f32 %v3256, 0.0
      %v3614 = vmin.f32 %v3275, 0.0
      %v3615 = vmin.f32 %v2384, 0.0
      %v3616 = vmin.f32 %v2403, 0.0
      %v3617 = vmin.f32 %v2422, 0.0
      %v3618 = vmin.f32 %v2441, 0.0
      %v3619 = vmin.f32 %v2460, 0.0
      %v3620 = vmin.f32 %v2479, 0.0
      %v3621 = vmin.f32 %v2498, 0.0
      %v3622 = vmin.f32 %v2517, 0.0
      %v3623 = vmin.f32 %v2536, 0.0
      %v3624 = vmin.f32 %v2555, 0.0
      %v3625 = vmin.f32 %v2574, 0.0
      %v3626 = vmin.f32 %v2593, 0.0
      %v3627 = vmin.f32 %v2612, 0.0
      %v3628 = vmin.f32 %v2631, 0.0
      %v3629 = vmin.f32 %v2650, 0.0
      %v3630 = vmin.f32 %v2669, 0.0
      %v3631 = vmin.f32 %v2688, 0.0
      %v3632 = vmin.f32 %v2707, 0.0
      %v3633 = vmin.f32 %v2726, 0.0
      %v3634 = vmin.f32 %v2745, 0.0
      %v3635 = vmin.f32 %v2764, 0.0
      %v3636 = vmin.f32 %v2783, 0.0
      %v3637 = vmin.f32 %v2802, 0.0
      %v3638 = vmin.f32 %v2821, 0.0
      %v3639 = vmin.f32 %v2840, 0.0
      %v3640 = vmin.f32 %v2859, 0.0
      %v3641 = vmin.f32 %v2878, 0.0
      %v3642 = vmin.f32 %v2897, 0.0
      %v3643 = vmin.f32 %v2916, 0.0
      %v3644 = vmin.f32 %v2935, 0.0
      %v3645 = vmin.f32 %v2954, 0.0
      %v3646 = vmin.f32 %v2973, 0.0
      %v3647 = vmin.f32 %v2992, 0.0
      %v3648 = vmin.f32 %v3011, 0.0
      %v3649 = vmin.f32 %v3030, 0.0
      %v3650 = vmin.f32 %v3049, 0.0
      %v3651 = vmin.f32 %v3068, 0.0
      %v3652 = vmin.f32 %v3087, 0.0
      %v3653 = vmin.f32 %v3106, 0.0
      %v3654 = vmin.f32 %v3125, 0.0
      %v3655 = vmin.f32 %v3144, 0.0
      %v3656 = vmin.f32 %v3163, 0.0
      %v3657 = vmin.f32 %v3182, 0.0
      %v3658 = vmin.f32 %v3201, 0.0
      %v3659 = vmin.f32 %v3220, 0.0
      %v3660 = vmin.f32 %v3239, 0.0
      %v3661 = vmin.f32 %v3258, 0.0
      %v3662 = vmin.f32 %v3277, 0.0
      %v3663 = vmul.f32 %v3471, 1.442695
      %v3664 = vpow.pop %v3663
      %v3665 = vmul.f32 %v3472, 1.442695
      %v3666 = vpow.pop %v3665
      %v3667 = vmul.f32 %v3473, 1.442695
      %v3668 = vpow.pop %v3667
      %v3669 = vmul.f32 %v3474, 1.442695
      %v3670 = vpow.pop %v3669
      %v3671 = vmul.f32 %v3475, 1.442695
      %v3672 = vpow.pop %v3671
      %v3673 = vmul.f32 %v3476, 1.442695
      %v3674 = vpow.pop %v3673
      %v3675 = vmul.f32 %v3477, 1.442695
      %v3676 = vpow.pop %v3675
      %v3677 = vmul.f32 %v3478, 1.442695
      %v3678 = vpow.pop %v3677
      %v3679 = vmul.f32 %v3479, 1.442695
      %v3680 = vpow.pop %v3679
      %v3681 = vmul.f32 %v3480, 1.442695
      %v3682 = vpow.pop %v3681
      %v3683 = vmul.f32 %v3481, 1.442695
      %v3684 = vpow.pop %v3683
      %v3685 = vmul.f32 %v3482, 1.442695
      %v3686 = vpow.pop %v3685
      %v3687 = vmul.f32 %v3483, 1.442695
      %v3688 = vpow.pop %v3687
      %v3689 = vmul.f32 %v3484, 1.442695
      %v3690 = vpow.pop %v3689
      %v3691 = vmul.f32 %v3485, 1.442695
      %v3692 = vpow.pop %v3691
      %v3693 = vmul.f32 %v3486, 1.442695
      %v3694 = vpow.pop %v3693
      %v3695 = vmul.f32 %v3487, 1.442695
      %v3696 = vpow.pop %v3695
      %v3697 = vmul.f32 %v3488, 1.442695
      %v3698 = vpow.pop %v3697
      %v3699 = vmul.f32 %v3489, 1.442695
      %v3700 = vpow.pop %v3699
      %v3701 = vmul.f32 %v3490, 1.442695
      %v3702 = vpow.pop %v3701
      %v3703 = vmul.f32 %v3491, 1.442695
      %v3704 = vpow.pop %v3703
      %v3705 = vmul.f32 %v3492, 1.442695
      %v3706 = vpow.pop %v3705
      %v3707 = vmul.f32 %v3493, 1.442695
      %v3708 = vpow.pop %v3707
      %v3709 = vmul.f32 %v3494, 1.442695
      %v3710 = vpow.pop %v3709
      %v3711 = vmul.f32 %v3495, 1.442695
      %v3712 = vpow.pop %v3711
      %v3713 = vmul.f32 %v3496, 1.442695
      %v3714 = vpow.pop %v3713
      %v3715 = vmul.f32 %v3497, 1.442695
      %v3716 = vpow.pop %v3715
      %v3717 = vmul.f32 %v3498, 1.442695
      %v3718 = vpow.pop %v3717
      %v3719 = vmul.f32 %v3499, 1.442695
      %v3720 = vpow.pop %v3719
      %v3721 = vmul.f32 %v3500, 1.442695
      %v3722 = vpow.pop %v3721
      %v3723 = vmul.f32 %v3501, 1.442695
      %v3724 = vpow.pop %v3723
      %v3725 = vmul.f32 %v3502, 1.442695
      %v3726 = vpow.pop %v3725
      %v3727 = vmul.f32 %v3503, 1.442695
      %v3728 = vpow.pop %v3727
      %v3729 = vmul.f32 %v3504, 1.442695
      %v3730 = vpow.pop %v3729
      %v3731 = vmul.f32 %v3505, 1.442695
      %v3732 = vpow.pop %v3731
      %v3733 = vmul.f32 %v3506, 1.442695
      %v3734 = vpow.pop %v3733
      %v3735 = vmul.f32 %v3507, 1.442695
      %v3736 = vpow.pop %v3735
      %v3737 = vmul.f32 %v3508, 1.442695
      %v3738 = vpow.pop %v3737
      %v3739 = vmul.f32 %v3509, 1.442695
      %v3740 = vpow.pop %v3739
      %v3741 = vmul.f32 %v3510, 1.442695
      %v3742 = vpow.pop %v3741
      %v3743 = vmul.f32 %v3511, 1.442695
      %v3744 = vpow.pop %v3743
      %v3745 = vmul.f32 %v3512, 1.442695
      %v3746 = vpow.pop %v3745
      %v3747 = vmul.f32 %v3513, 1.442695
      %v3748 = vpow.pop %v3747
      %v3749 = vmul.f32 %v3514, 1.442695
      %v3750 = vpow.pop %v3749
      %v3751 = vmul.f32 %v3515, 1.442695
      %v3752 = vpow.pop %v3751
      %v3753 = vmul.f32 %v3516, 1.442695
      %v3754 = vpow.pop %v3753
      %v3755 = vmul.f32 %v3517, 1.442695
      %v3756 = vpow.pop %v3755
      %v3757 = vmul.f32 %v3518, 1.442695
      %v3758 = vpow.pop %v3757
      %v3759 = vmul.f32 %v3519, 1.442695
      %v3760 = vpow.pop %v3759
      %v3761 = vmul.f32 %v3520, 1.442695
      %v3762 = vpow.pop %v3761
      %v3763 = vmul.f32 %v3521, 1.442695
      %v3764 = vpow.pop %v3763
      %v3765 = vmul.f32 %v3522, 1.442695
      %v3766 = vpow.pop %v3765
      %v3767 = vmul.f32 %v3523, 1.442695
      %v3768 = vpow.pop %v3767
      %v3769 = vmul.f32 %v3524, 1.442695
      %v3770 = vpow.pop %v3769
      %v3771 = vmul.f32 %v3525, 1.442695
      %v3772 = vpow.pop %v3771
      %v3773 = vmul.f32 %v3526, 1.442695
      %v3774 = vpow.pop %v3773
      %v3775 = vmul.f32 %v3527, 1.442695
      %v3776 = vpow.pop %v3775
      %v3777 = vmul.f32 %v3528, 1.442695
      %v3778 = vpow.pop %v3777
      %v3779 = vmul.f32 %v3529, 1.442695
      %v3780 = vpow.pop %v3779
      %v3781 = vmul.f32 %v3530, 1.442695
      %v3782 = vpow.pop %v3781
      %v3783 = vmul.f32 %v3531, 1.442695
      %v3784 = vpow.pop %v3783
      %v3785 = vmul.f32 %v3532, 1.442695
      %v3786 = vpow.pop %v3785
      %v3787 = vmul.f32 %v3533, 1.442695
      %v3788 = vpow.pop %v3787
      %v3789 = vmul.f32 %v3534, 1.442695
      %v3790 = vpow.pop %v3789
      %v3791 = vmul.f32 %v3535, 1.442695
      %v3792 = vpow.pop %v3791
      %v3793 = vmul.f32 %v3536, 1.442695
      %v3794 = vpow.pop %v3793
      %v3795 = vmul.f32 %v3537, 1.442695
      %v3796 = vpow.pop %v3795
      %v3797 = vmul.f32 %v3538, 1.442695
      %v3798 = vpow.pop %v3797
      %v3799 = vmul.f32 %v3539, 1.442695
      %v3800 = vpow.pop %v3799
      %v3801 = vmul.f32 %v3540, 1.442695
      %v3802 = vpow.pop %v3801
      %v3803 = vmul.f32 %v3541, 1.442695
      %v3804 = vpow.pop %v3803
      %v3805 = vmul.f32 %v3542, 1.442695
      %v3806 = vpow.pop %v3805
      %v3807 = vmul.f32 %v3543, 1.442695
      %v3808 = vpow.pop %v3807
      %v3809 = vmul.f32 %v3544, 1.442695
      %v3810 = vpow.pop %v3809
      %v3811 = vmul.f32 %v3545, 1.442695
      %v3812 = vpow.pop %v3811
      %v3813 = vmul.f32 %v3546, 1.442695
      %v3814 = vpow.pop %v3813
      %v3815 = vmul.f32 %v3547, 1.442695
      %v3816 = vpow.pop %v3815
      %v3817 = vmul.f32 %v3548, 1.442695
      %v3818 = vpow.pop %v3817
      %v3819 = vmul.f32 %v3549, 1.442695
      %v3820 = vpow.pop %v3819
      %v3821 = vmul.f32 %v3550, 1.442695
      %v3822 = vpow.pop %v3821
      %v3823 = vmul.f32 %v3551, 1.442695
      %v3824 = vpow.pop %v3823
      %v3825 = vmul.f32 %v3552, 1.442695
      %v3826 = vpow.pop %v3825
      %v3827 = vmul.f32 %v3553, 1.442695
      %v3828 = vpow.pop %v3827
      %v3829 = vmul.f32 %v3554, 1.442695
      %v3830 = vpow.pop %v3829
      %v3831 = vmul.f32 %v3555, 1.442695
      %v3832 = vpow.pop %v3831
      %v3833 = vmul.f32 %v3556, 1.442695
      %v3834 = vpow.pop %v3833
      %v3835 = vmul.f32 %v3557, 1.442695
      %v3836 = vpow.pop %v3835
      %v3837 = vmul.f32 %v3558, 1.442695
      %v3838 = vpow.pop %v3837
      %v3839 = vmul.f32 %v3559, 1.442695
      %v3840 = vpow.pop %v3839
      %v3841 = vmul.f32 %v3560, 1.442695
      %v3842 = vpow.pop %v3841
      %v3843 = vmul.f32 %v3561, 1.442695
      %v3844 = vpow.pop %v3843
      %v3845 = vmul.f32 %v3562, 1.442695
      %v3846 = vpow.pop %v3845
      %v3847 = vmul.f32 %v3563, 1.442695
      %v3848 = vpow.pop %v3847
      %v3849 = vmul.f32 %v3564, 1.442695
      %v3850 = vpow.pop %v3849
      %v3851 = vmul.f32 %v3565, 1.442695
      %v3852 = vpow.pop %v3851
      %v3853 = vmul.f32 %v3566, 1.442695
      %v3854 = vpow.pop %v3853
      %v3855 = vmul.f32 %v3567, 1.442695
      %v3856 = vpow.pop %v3855
      %v3857 = vmul.f32 %v3568, 1.442695
      %v3858 = vpow.pop %v3857
      %v3859 = vmul.f32 %v3569, 1.442695
      %v3860 = vpow.pop %v3859
      %v3861 = vmul.f32 %v3570, 1.442695
      %v3862 = vpow.pop %v3861
      %v3863 = vmul.f32 %v3571, 1.442695
      %v3864 = vpow.pop %v3863
      %v3865 = vmul.f32 %v3572, 1.442695
      %v3866 = vpow.pop %v3865
      %v3867 = vmul.f32 %v3573, 1.442695
      %v3868 = vpow.pop %v3867
      %v3869 = vmul.f32 %v3574, 1.442695
      %v3870 = vpow.pop %v3869
      %v3871 = vmul.f32 %v3575, 1.442695
      %v3872 = vpow.pop %v3871
      %v3873 = vmul.f32 %v3576, 1.442695
      %v3874 = vpow.pop %v3873
      %v3875 = vmul.f32 %v3577, 1.442695
      %v3876 = vpow.pop %v3875
      %v3877 = vmul.f32 %v3578, 1.442695
      %v3878 = vpow.pop %v3877
      %v3879 = vmul.f32 %v3579, 1.442695
      %v3880 = vpow.pop %v3879
      %v3881 = vmul.f32 %v3580, 1.442695
      %v3882 = vpow.pop %v3881
      %v3883 = vmul.f32 %v3581, 1.442695
      %v3884 = vpow.pop %v3883
      %v3885 = vmul.f32 %v3582, 1.442695
      %v3886 = vpow.pop %v3885
      %v3887 = vmul.f32 %v3583, 1.442695
      %v3888 = vpow.pop %v3887
      %v3889 = vmul.f32 %v3584, 1.442695
      %v3890 = vpow.pop %v3889
      %v3891 = vmul.f32 %v3585, 1.442695
      %v3892 = vpow.pop %v3891
      %v3893 = vmul.f32 %v3586, 1.442695
      %v3894 = vpow.pop %v3893
      %v3895 = vmul.f32 %v3587, 1.442695
      %v3896 = vpow.pop %v3895
      %v3897 = vmul.f32 %v3588, 1.442695
      %v3898 = vpow.pop %v3897
      %v3899 = vmul.f32 %v3589, 1.442695
      %v3900 = vpow.pop %v3899
      %v3901 = vmul.f32 %v3590, 1.442695
      %v3902 = vpow.pop %v3901
      %v3903 = vmul.f32 %v3591, 1.442695
      %v3904 = vpow.pop %v3903
      %v3905 = vmul.f32 %v3592, 1.442695
      %v3906 = vpow.pop %v3905
      %v3907 = vmul.f32 %v3593, 1.442695
      %v3908 = vpow.pop %v3907
      %v3909 = vmul.f32 %v3594, 1.442695
      %v3910 = vpow.pop %v3909
      %v3911 = vmul.f32 %v3595, 1.442695
      %v3912 = vpow.pop %v3911
      %v3913 = vmul.f32 %v3596, 1.442695
      %v3914 = vpow.pop %v3913
      %v3915 = vmul.f32 %v3597, 1.442695
      %v3916 = vpow.pop %v3915
      %v3917 = vmul.f32 %v3598, 1.442695
      %v3918 = vpow.pop %v3917
      %v3919 = vmul.f32 %v3599, 1.442695
      %v3920 = vpow.pop %v3919
      %v3921 = vmul.f32 %v3600, 1.442695
      %v3922 = vpow.pop %v3921
      %v3923 = vmul.f32 %v3601, 1.442695
      %v3924 = vpow.pop %v3923
      %v3925 = vmul.f32 %v3602, 1.442695
      %v3926 = vpow.pop %v3925
      %v3927 = vmul.f32 %v3603, 1.442695
      %v3928 = vpow.pop %v3927
      %v3929 = vmul.f32 %v3604, 1.442695
      %v3930 = vpow.pop %v3929
      %v3931 = vmul.f32 %v3605, 1.442695
      %v3932 = vpow.pop %v3931
      %v3933 = vmul.f32 %v3606, 1.442695
      %v3934 = vpow.pop %v3933
      %v3935 = vmul.f32 %v3607, 1.442695
      %v3936 = vpow.pop %v3935
      %v3937 = vmul.f32 %v3608, 1.442695
      %v3938 = vpow.pop %v3937
      %v3939 = vmul.f32 %v3609, 1.442695
      %v3940 = vpow.pop %v3939
      %v3941 = vmul.f32 %v3610, 1.442695
      %v3942 = vpow.pop %v3941
      %v3943 = vmul.f32 %v3611, 1.442695
      %v3944 = vpow.pop %v3943
      %v3945 = vmul.f32 %v3612, 1.442695
      %v3946 = vpow.pop %v3945
      %v3947 = vmul.f32 %v3613, 1.442695
      %v3948 = vpow.pop %v3947
      %v3949 = vmul.f32 %v3614, 1.442695
      %v3950 = vpow.pop %v3949
      %v3951 = vmul.f32 %v3615, 1.442695
      %v3952 = vpow.pop %v3951
      %v3953 = vmul.f32 %v3616, 1.442695
      %v3954 = vpow.pop %v3953
      %v3955 = vmul.f32 %v3617, 1.442695
      %v3956 = vpow.pop %v3955
      %v3957 = vmul.f32 %v3618, 1.442695
      %v3958 = vpow.pop %v3957
      %v3959 = vmul.f32 %v3619, 1.442695
      %v3960 = vpow.pop %v3959
      %v3961 = vmul.f32 %v3620, 1.442695
      %v3962 = vpow.pop %v3961
      %v3963 = vmul.f32 %v3621, 1.442695
      %v3964 = vpow.pop %v3963
      %v3965 = vmul.f32 %v3622, 1.442695
      %v3966 = vpow.pop %v3965
      %v3967 = vmul.f32 %v3623, 1.442695
      %v3968 = vpow.pop %v3967
      %v3969 = vmul.f32 %v3624, 1.442695
      %v3970 = vpow.pop %v3969
      %v3971 = vmul.f32 %v3625, 1.442695
      %v3972 = vpow.pop %v3971
      %v3973 = vmul.f32 %v3626, 1.442695
      %v3974 = vpow.pop %v3973
      %v3975 = vmul.f32 %v3627, 1.442695
      %v3976 = vpow.pop %v3975
      %v3977 = vmul.f32 %v3628, 1.442695
      %v3978 = vpow.pop %v3977
      %v3979 = vmul.f32 %v3629, 1.442695
      %v3980 = vpow.pop %v3979
      %v3981 = vmul.f32 %v3630, 1.442695
      %v3982 = vpow.pop %v3981
      %v3983 = vmul.f32 %v3631, 1.442695
      %v3984 = vpow.pop %v3983
      %v3985 = vmul.f32 %v3632, 1.442695
      %v3986 = vpow.pop %v3985
      %v3987 = vmul.f32 %v3633, 1.442695
      %v3988 = vpow.pop %v3987
      %v3989 = vmul.f32 %v3634, 1.442695
      %v3990 = vpow.pop %v3989
      %v3991 = vmul.f32 %v3635, 1.442695
      %v3992 = vpow.pop %v3991
      %v3993 = vmul.f32 %v3636, 1.442695
      %v3994 = vpow.pop %v3993
      %v3995 = vmul.f32 %v3637, 1.442695
      %v3996 = vpow.pop %v3995
      %v3997 = vmul.f32 %v3638, 1.442695
      %v3998 = vpow.pop %v3997
      %v3999 = vmul.f32 %v3639, 1.442695
      %v4000 = vpow.pop %v3999
      %v4001 = vmul.f32 %v3640, 1.442695
      %v4002 = vpow.pop %v4001
      %v4003 = vmul.f32 %v3641, 1.442695
      %v4004 = vpow.pop %v4003
      %v4005 = vmul.f32 %v3642, 1.442695
      %v4006 = vpow.pop %v4005
      %v4007 = vmul.f32 %v3643, 1.442695
      %v4008 = vpow.pop %v4007
      %v4009 = vmul.f32 %v3644, 1.442695
      %v4010 = vpow.pop %v4009
      %v4011 = vmul.f32 %v3645, 1.442695
      %v4012 = vpow.pop %v4011
      %v4013 = vmul.f32 %v3646, 1.442695
      %v4014 = vpow.pop %v4013
      %v4015 = vmul.f32 %v3647, 1.442695
      %v4016 = vpow.pop %v4015
      %v4017 = vmul.f32 %v3648, 1.442695
      %v4018 = vpow.pop %v4017
      %v4019 = vmul.f32 %v3649, 1.442695
      %v4020 = vpow.pop %v4019
      %v4021 = vmul.f32 %v3650, 1.442695
      %v4022 = vpow.pop %v4021
      %v4023 = vmul.f32 %v3651, 1.442695
      %v4024 = vpow.pop %v4023
      %v4025 = vmul.f32 %v3652, 1.442695
      %v4026 = vpow.pop %v4025
      %v4027 = vmul.f32 %v3653, 1.442695
      %v4028 = vpow.pop %v4027
      %v4029 = vmul.f32 %v3654, 1.442695
      %v4030 = vpow.pop %v4029
      %v4031 = vmul.f32 %v3655, 1.442695
      %v4032 = vpow.pop %v4031
      %v4033 = vmul.f32 %v3656, 1.442695
      %v4034 = vpow.pop %v4033
      %v4035 = vmul.f32 %v3657, 1.442695
      %v4036 = vpow.pop %v4035
      %v4037 = vmul.f32 %v3658, 1.442695
      %v4038 = vpow.pop %v4037
      %v4039 = vmul.f32 %v3659, 1.442695
      %v4040 = vpow.pop %v4039
      %v4041 = vmul.f32 %v3660, 1.442695
      %v4042 = vpow.pop %v4041
      %v4043 = vmul.f32 %v3661, 1.442695
      %v4044 = vpow.pop %v4043
      %v4045 = vmul.f32 %v3662, 1.442695
      %v4046 = vpow.pop %v4045
      %v4047 = vsub.f32 %v3664, 1.0
      %v4048 = vsub.f32 %v3666, 1.0
      %v4049 = vsub.f32 %v3668, 1.0
      %v4050 = vsub.f32 %v3670, 1.0
      %v4051 = vsub.f32 %v3672, 1.0
      %v4052 = vsub.f32 %v3674, 1.0
      %v4053 = vsub.f32 %v3676, 1.0
      %v4054 = vsub.f32 %v3678, 1.0
      %v4055 = vsub.f32 %v3680, 1.0
      %v4056 = vsub.f32 %v3682, 1.0
      %v4057 = vsub.f32 %v3684, 1.0
      %v4058 = vsub.f32 %v3686, 1.0
      %v4059 = vsub.f32 %v3688, 1.0
      %v4060 = vsub.f32 %v3690, 1.0
      %v4061 = vsub.f32 %v3692, 1.0
      %v4062 = vsub.f32 %v3694, 1.0
      %v4063 = vsub.f32 %v3696, 1.0
      %v4064 = vsub.f32 %v3698, 1.0
      %v4065 = vsub.f32 %v3700, 1.0
      %v4066 = vsub.f32 %v3702, 1.0
      %v4067 = vsub.f32 %v3704, 1.0
      %v4068 = vsub.f32 %v3706, 1.0
      %v4069 = vsub.f32 %v3708, 1.0
      %v4070 = vsub.f32 %v3710, 1.0
      %v4071 = vsub.f32 %v3712, 1.0
      %v4072 = vsub.f32 %v3714, 1.0
      %v4073 = vsub.f32 %v3716, 1.0
      %v4074 = vsub.f32 %v3718, 1.0
      %v4075 = vsub.f32 %v3720, 1.0
      %v4076 = vsub.f32 %v3722, 1.0
      %v4077 = vsub.f32 %v3724, 1.0
      %v4078 = vsub.f32 %v3726, 1.0
      %v4079 = vsub.f32 %v3728, 1.0
      %v4080 = vsub.f32 %v3730, 1.0
      %v4081 = vsub.f32 %v3732, 1.0
      %v4082 = vsub.f32 %v3734, 1.0
      %v4083 = vsub.f32 %v3736, 1.0
      %v4084 = vsub.f32 %v3738, 1.0
      %v4085 = vsub.f32 %v3740, 1.0
      %v4086 = vsub.f32 %v3742, 1.0
      %v4087 = vsub.f32 %v3744, 1.0
      %v4088 = vsub.f32 %v3746, 1.0
      %v4089 = vsub.f32 %v3748, 1.0
      %v4090 = vsub.f32 %v3750, 1.0
      %v4091 = vsub.f32 %v3752, 1.0
      %v4092 = vsub.f32 %v3754, 1.0
      %v4093 = vsub.f32 %v3756, 1.0
      %v4094 = vsub.f32 %v3758, 1.0
      %v4095 = vsub.f32 %v3760, 1.0
      %v4096 = vsub.f32 %v3762, 1.0
      %v4097 = vsub.f32 %v3764, 1.0
      %v4098 = vsub.f32 %v3766, 1.0
      %v4099 = vsub.f32 %v3768, 1.0
      %v4100 = vsub.f32 %v3770, 1.0
      %v4101 = vsub.f32 %v3772, 1.0
      %v4102 = vsub.f32 %v3774, 1.0
      %v4103 = vsub.f32 %v3776, 1.0
      %v4104 = vsub.f32 %v3778, 1.0
      %v4105 = vsub.f32 %v3780, 1.0
      %v4106 = vsub.f32 %v3782, 1.0
      %v4107 = vsub.f32 %v3784, 1.0
      %v4108 = vsub.f32 %v3786, 1.0
      %v4109 = vsub.f32 %v3788, 1.0
      %v4110 = vsub.f32 %v3790, 1.0
      %v4111 = vsub.f32 %v3792, 1.0
      %v4112 = vsub.f32 %v3794, 1.0
      %v4113 = vsub.f32 %v3796, 1.0
      %v4114 = vsub.f32 %v3798, 1.0
      %v4115 = vsub.f32 %v3800, 1.0
      %v4116 = vsub.f32 %v3802, 1.0
      %v4117 = vsub.f32 %v3804, 1.0
      %v4118 = vsub.f32 %v3806, 1.0
      %v4119 = vsub.f32 %v3808, 1.0
      %v4120 = vsub.f32 %v3810, 1.0
      %v4121 = vsub.f32 %v3812, 1.0
      %v4122 = vsub.f32 %v3814, 1.0
      %v4123 = vsub.f32 %v3816, 1.0
      %v4124 = vsub.f32 %v3818, 1.0
      %v4125 = vsub.f32 %v3820, 1.0
      %v4126 = vsub.f32 %v3822, 1.0
      %v4127 = vsub.f32 %v3824, 1.0
      %v4128 = vsub.f32 %v3826, 1.0
      %v4129 = vsub.f32 %v3828, 1.0
      %v4130 = vsub.f32 %v3830, 1.0
      %v4131 = vsub.f32 %v3832, 1.0
      %v4132 = vsub.f32 %v3834, 1.0
      %v4133 = vsub.f32 %v3836, 1.0
      %v4134 = vsub.f32 %v3838, 1.0
      %v4135 = vsub.f32 %v3840, 1.0
      %v4136 = vsub.f32 %v3842, 1.0
      %v4137 = vsub.f32 %v3844, 1.0
      %v4138 = vsub.f32 %v3846, 1.0
      %v4139 = vsub.f32 %v3848, 1.0
      %v4140 = vsub.f32 %v3850, 1.0
      %v4141 = vsub.f32 %v3852, 1.0
      %v4142 = vsub.f32 %v3854, 1.0
      %v4143 = vsub.f32 %v3856, 1.0
      %v4144 = vsub.f32 %v3858, 1.0
      %v4145 = vsub.f32 %v3860, 1.0
      %v4146 = vsub.f32 %v3862, 1.0
      %v4147 = vsub.f32 %v3864, 1.0
      %v4148 = vsub.f32 %v3866, 1.0
      %v4149 = vsub.f32 %v3868, 1.0
      %v4150 = vsub.f32 %v3870, 1.0
      %v4151 = vsub.f32 %v3872, 1.0
      %v4152 = vsub.f32 %v3874, 1.0
      %v4153 = vsub.f32 %v3876, 1.0
      %v4154 = vsub.f32 %v3878, 1.0
      %v4155 = vsub.f32 %v3880, 1.0
      %v4156 = vsub.f32 %v3882, 1.0
      %v4157 = vsub.f32 %v3884, 1.0
      %v4158 = vsub.f32 %v3886, 1.0
      %v4159 = vsub.f32 %v3888, 1.0
      %v4160 = vsub.f32 %v3890, 1.0
      %v4161 = vsub.f32 %v3892, 1.0
      %v4162 = vsub.f32 %v3894, 1.0
      %v4163 = vsub.f32 %v3896, 1.0
      %v4164 = vsub.f32 %v3898, 1.0
      %v4165 = vsub.f32 %v3900, 1.0
      %v4166 = vsub.f32 %v3902, 1.0
      %v4167 = vsub.f32 %v3904, 1.0
      %v4168 = vsub.f32 %v3906, 1.0
      %v4169 = vsub.f32 %v3908, 1.0
      %v4170 = vsub.f32 %v3910, 1.0
      %v4171 = vsub.f32 %v3912, 1.0
      %v4172 = vsub.f32 %v3914, 1.0
      %v4173 = vsub.f32 %v3916, 1.0
      %v4174 = vsub.f32 %v3918, 1.0
      %v4175 = vsub.f32 %v3920, 1.0
      %v4176 = vsub.f32 %v3922, 1.0
      %v4177 = vsub.f32 %v3924, 1.0
      %v4178 = vsub.f32 %v3926, 1.0
      %v4179 = vsub.f32 %v3928, 1.0
      %v4180 = vsub.f32 %v3930, 1.0
      %v4181 = vsub.f32 %v3932, 1.0
      %v4182 = vsub.f32 %v3934, 1.0
      %v4183 = vsub.f32 %v3936, 1.0
      %v4184 = vsub.f32 %v3938, 1.0
      %v4185 = vsub.f32 %v3940, 1.0
      %v4186 = vsub.f32 %v3942, 1.0
      %v4187 = vsub.f32 %v3944, 1.0
      %v4188 = vsub.f32 %v3946, 1.0
      %v4189 = vsub.f32 %v3948, 1.0
      %v4190 = vsub.f32 %v3950, 1.0
      %v4191 = vsub.f32 %v3952, 1.0
      %v4192 = vsub.f32 %v3954, 1.0
      %v4193 = vsub.f32 %v3956, 1.0
      %v4194 = vsub.f32 %v3958, 1.0
      %v4195 = vsub.f32 %v3960, 1.0
      %v4196 = vsub.f32 %v3962, 1.0
      %v4197 = vsub.f32 %v3964, 1.0
      %v4198 = vsub.f32 %v3966, 1.0
      %v4199 = vsub.f32 %v3968, 1.0
      %v4200 = vsub.f32 %v3970, 1.0
      %v4201 = vsub.f32 %v3972, 1.0
      %v4202 = vsub.f32 %v3974, 1.0
      %v4203 = vsub.f32 %v3976, 1.0
      %v4204 = vsub.f32 %v3978, 1.0
      %v4205 = vsub.f32 %v3980, 1.0
      %v4206 = vsub.f32 %v3982, 1.0
      %v4207 = vsub.f32 %v3984, 1.0
      %v4208 = vsub.f32 %v3986, 1.0
      %v4209 = vsub.f32 %v3988, 1.0
      %v4210 = vsub.f32 %v3990, 1.0
      %v4211 = vsub.f32 %v3992, 1.0
      %v4212 = vsub.f32 %v3994, 1.0
      %v4213 = vsub.f32 %v3996, 1.0
      %v4214 = vsub.f32 %v3998, 1.0
      %v4215 = vsub.f32 %v4000, 1.0
      %v4216 = vsub.f32 %v4002, 1.0
      %v4217 = vsub.f32 %v4004, 1.0
      %v4218 = vsub.f32 %v4006, 1.0
      %v4219 = vsub.f32 %v4008, 1.0
      %v4220 = vsub.f32 %v4010, 1.0
      %v4221 = vsub.f32 %v4012, 1.0
      %v4222 = vsub.f32 %v4014, 1.0
      %v4223 = vsub.f32 %v4016, 1.0
      %v4224 = vsub.f32 %v4018, 1.0
      %v4225 = vsub.f32 %v4020, 1.0
      %v4226 = vsub.f32 %v4022, 1.0
      %v4227 = vsub.f32 %v4024, 1.0
      %v4228 = vsub.f32 %v4026, 1.0
      %v4229 = vsub.f32 %v4028, 1.0
      %v4230 = vsub.f32 %v4030, 1.0
      %v4231 = vsub.f32 %v4032, 1.0
      %v4232 = vsub.f32 %v4034, 1.0
      %v4233 = vsub.f32 %v4036, 1.0
      %v4234 = vsub.f32 %v4038, 1.0
      %v4235 = vsub.f32 %v4040, 1.0
      %v4236 = vsub.f32 %v4042, 1.0
      %v4237 = vsub.f32 %v4044, 1.0
      %v4238 = vsub.f32 %v4046, 1.0
      %v4239 = vsel %vm3279, %v2377, %v4047
      %v4240 = vsel %vm3280, %v2396, %v4048
      %v4241 = vsel %vm3281, %v2415, %v4049
      %v4242 = vsel %vm3282, %v2434, %v4050
      %v4243 = vsel %vm3283, %v2453, %v4051
      %v4244 = vsel %vm3284, %v2472, %v4052
      %v4245 = vsel %vm3285, %v2491, %v4053
      %v4246 = vsel %vm3286, %v2510, %v4054
      %v4247 = vsel %vm3287, %v2529, %v4055
      %v4248 = vsel %vm3288, %v2548, %v4056
      %v4249 = vsel %vm3289, %v2567, %v4057
      %v4250 = vsel %vm3290, %v2586, %v4058
      %v4251 = vsel %vm3291, %v2605, %v4059
      %v4252 = vsel %vm3292, %v2624, %v4060
      %v4253 = vsel %vm3293, %v2643, %v4061
      %v4254 = vsel %vm3294, %v2662, %v4062
      %v4255 = vsel %vm3295, %v2681, %v4063
      %v4256 = vsel %vm3296, %v2700, %v4064
      %v4257 = vsel %vm3297, %v2719, %v4065
      %v4258 = vsel %vm3298, %v2738, %v4066
      %v4259 = vsel %vm3299, %v2757, %v4067
      %v4260 = vsel %vm3300, %v2776, %v4068
      %v4261 = vsel %vm3301, %v2795, %v4069
      %v4262 = vsel %vm3302, %v2814, %v4070
      %v4263 = vsel %vm3303, %v2833, %v4071
      %v4264 = vsel %vm3304, %v2852, %v4072
      %v4265 = vsel %vm3305, %v2871, %v4073
      %v4266 = vsel %vm3306, %v2890, %v4074
      %v4267 = vsel %vm3307, %v2909, %v4075
      %v4268 = vsel %vm3308, %v2928, %v4076
      %v4269 = vsel %vm3309, %v2947, %v4077
      %v4270 = vsel %vm3310, %v2966, %v4078
      %v4271 = vsel %vm3311, %v2985, %v4079
      %v4272 = vsel %vm3312, %v3004, %v4080
      %v4273 = vsel %vm3313, %v3023, %v4081
      %v4274 = vsel %vm3314, %v3042, %v4082
      %v4275 = vsel %vm3315, %v3061, %v4083
      %v4276 = vsel %vm3316, %v3080, %v4084
      %v4277 = vsel %vm3317, %v3099, %v4085
      %v4278 = vsel %vm3318, %v3118, %v4086
      %v4279 = vsel %vm3319, %v3137, %v4087
      %v4280 = vsel %vm3320, %v3156, %v4088
      %v4281 = vsel %vm3321, %v3175, %v4089
      %v4282 = vsel %vm3322, %v3194, %v4090
      %v4283 = vsel %vm3323, %v3213, %v4091
      %v4284 = vsel %vm3324, %v3232, %v4092
      %v4285 = vsel %vm3325, %v3251, %v4093
      %v4286 = vsel %vm3326, %v3270, %v4094
      %v4287 = vsel %vm3327, %v2379, %v4095
      %v4288 = vsel %vm3328, %v2398, %v4096
      %v4289 = vsel %vm3329, %v2417, %v4097
      %v4290 = vsel %vm3330, %v2436, %v4098
      %v4291 = vsel %vm3331, %v2455, %v4099
      %v4292 = vsel %vm3332, %v2474, %v4100
      %v4293 = vsel %vm3333, %v2493, %v4101
      %v4294 = vsel %vm3334, %v2512, %v4102
      %v4295 = vsel %vm3335, %v2531, %v4103
      %v4296 = vsel %vm3336, %v2550, %v4104
      %v4297 = vsel %vm3337, %v2569, %v4105
      %v4298 = vsel %vm3338, %v2588, %v4106
      %v4299 = vsel %vm3339, %v2607, %v4107
      %v4300 = vsel %vm3340, %v2626, %v4108
      %v4301 = vsel %vm3341, %v2645, %v4109
      %v4302 = vsel %vm3342, %v2664, %v4110
      %v4303 = vsel %vm3343, %v2683, %v4111
      %v4304 = vsel %vm3344, %v2702, %v4112
      %v4305 = vsel %vm3345, %v2721, %v4113
      %v4306 = vsel %vm3346, %v2740, %v4114
      %v4307 = vsel %vm3347, %v2759, %v4115
      %v4308 = vsel %vm3348, %v2778, %v4116
      %v4309 = vsel %vm3349, %v2797, %v4117
      %v4310 = vsel %vm3350, %v2816, %v4118
      %v4311 = vsel %vm3351, %v2835, %v4119
      %v4312 = vsel %vm3352, %v2854, %v4120
      %v4313 = vsel %vm3353, %v2873, %v4121
      %v4314 = vsel %vm3354, %v2892, %v4122
      %v4315 = vsel %vm3355, %v2911, %v4123
      %v4316 = vsel %vm3356, %v2930, %v4124
      %v4317 = vsel %vm3357, %v2949, %v4125
      %v4318 = vsel %vm3358, %v2968, %v4126
      %v4319 = vsel %vm3359, %v2987, %v4127
      %v4320 = vsel %vm3360, %v3006, %v4128
      %v4321 = vsel %vm3361, %v3025, %v4129
      %v4322 = vsel %vm3362, %v3044, %v4130
      %v4323 = vsel %vm3363, %v3063, %v4131
      %v4324 = vsel %vm3364, %v3082, %v4132
      %v4325 = vsel %vm3365, %v3101, %v4133
      %v4326 = vsel %vm3366, %v3120, %v4134
      %v4327 = vsel %vm3367, %v3139, %v4135
      %v4328 = vsel %vm3368, %v3158, %v4136
      %v4329 = vsel %vm3369, %v3177, %v4137
      %v4330 = vsel %vm3370, %v3196, %v4138
      %v4331 = vsel %vm3371, %v3215, %v4139
      %v4332 = vsel %vm3372, %v3234, %v4140
      %v4333 = vsel %vm3373, %v3253, %v4141
      %v4334 = vsel %vm3374, %v3272, %v4142
      %v4335 = vsel %vm3375, %v2382, %v4143
      %v4336 = vsel %vm3376, %v2401, %v4144
      %v4337 = vsel %vm3377, %v2420, %v4145
      %v4338 = vsel %vm3378, %v2439, %v4146
      %v4339 = vsel %vm3379, %v2458, %v4147
      %v4340 = vsel %vm3380, %v2477, %v4148
      %v4341 = vsel %vm3381, %v2496, %v4149
      %v4342 = vsel %vm3382, %v2515, %v4150
      %v4343 = vsel %vm3383, %v2534, %v4151
      %v4344 = vsel %vm3384, %v2553, %v4152
      %v4345 = vsel %vm3385, %v2572, %v4153
      %v4346 = vsel %vm3386, %v2591, %v4154
      %v4347 = vsel %vm3387, %v2610, %v4155
      %v4348 = vsel %vm3388, %v2629, %v4156
      %v4349 = vsel %vm3389, %v2648, %v4157
      %v4350 = vsel %vm3390, %v2667, %v4158
      %v4351 = vsel %vm3391, %v2686, %v4159
      %v4352 = vsel %vm3392, %v2705, %v4160
      %v4353 = vsel %vm3393, %v2724, %v4161
      %v4354 = vsel %vm3394, %v2743, %v4162
      %v4355 = vsel %vm3395, %v2762, %v4163
      %v4356 = vsel %vm3396, %v2781, %v4164
      %v4357 = vsel %vm3397, %v2800, %v4165
      %v4358 = vsel %vm3398, %v2819, %v4166
      %v4359 = vsel %vm3399, %v2838, %v4167
      %v4360 = vsel %vm3400, %v2857, %v4168
      %v4361 = vsel %vm3401, %v2876, %v4169
      %v4362 = vsel %vm3402, %v2895, %v4170
      %v4363 = vsel %vm3403, %v2914, %v4171
      %v4364 = vsel %vm3404, %v2933, %v4172
      %v4365 = vsel %vm3405, %v2952, %v4173
      %v4366 = vsel %vm3406, %v2971, %v4174
      %v4367 = vsel %vm3407, %v2990, %v4175
      %v4368 = vsel %vm3408, %v3009, %v4176
      %v4369 = vsel %vm3409, %v3028, %v4177
      %v4370 = vsel %vm3410, %v3047, %v4178
      %v4371 = vsel %vm3411, %v3066, %v4179
      %v4372 = vsel %vm3412, %v3085, %v4180
      %v4373 = vsel %vm3413, %v3104, %v4181
      %v4374 = vsel %vm3414, %v3123, %v4182
      %v4375 = vsel %vm3415, %v3142, %v4183
      %v4376 = vsel %vm3416, %v3161, %v4184
      %v4377 = vsel %vm3417, %v3180, %v4185
      %v4378 = vsel %vm3418, %v3199, %v4186
      %v4379 = vsel %vm3419, %v3218, %v4187
      %v4380 = vsel %vm3420, %v3237, %v4188
      %v4381 = vsel %vm3421, %v3256, %v4189
      %v4382 = vsel %vm3422, %v3275, %v4190
      %v4383 = vsel %vm3423, %v2384, %v4191
      %v4384 = vsel %vm3424, %v2403, %v4192
      %v4385 = vsel %vm3425, %v2422, %v4193
      %v4386 = vsel %vm3426, %v2441, %v4194
      %v4387 = vsel %vm3427, %v2460, %v4195
      %v4388 = vsel %vm3428, %v2479, %v4196
      %v4389 = vsel %vm3429, %v2498, %v4197
      %v4390 = vsel %vm3430, %v2517, %v4198
      %v4391 = vsel %vm3431, %v2536, %v4199
      %v4392 = vsel %vm3432, %v2555, %v4200
      %v4393 = vsel %vm3433, %v2574, %v4201
      %v4394 = vsel %vm3434, %v2593, %v4202
      %v4395 = vsel %vm3435, %v2612, %v4203
      %v4396 = vsel %vm3436, %v2631, %v4204
      %v4397 = vsel %vm3437, %v2650, %v4205
      %v4398 = vsel %vm3438, %v2669, %v4206
      %v4399 = vsel %vm3439, %v2688, %v4207
      %v4400 = vsel %vm3440, %v2707, %v4208
      %v4401 = vsel %vm3441, %v2726, %v4209
      %v4402 = vsel %vm3442, %v2745, %v4210
      %v4403 = vsel %vm3443, %v2764, %v4211
      %v4404 = vsel %vm3444, %v2783, %v4212
      %v4405 = vsel %vm3445, %v2802, %v4213
      %v4406 = vsel %vm3446, %v2821, %v4214
      %v4407 = vsel %vm3447, %v2840, %v4215
      %v4408 = vsel %vm3448, %v2859, %v4216
      %v4409 = vsel %vm3449, %v2878, %v4217
      %v4410 = vsel %vm3450, %v2897, %v4218
      %v4411 = vsel %vm3451, %v2916, %v4219
      %v4412 = vsel %vm3452, %v2935, %v4220
      %v4413 = vsel %vm3453, %v2954, %v4221
      %v4414 = vsel %vm3454, %v2973, %v4222
      %v4415 = vsel %vm3455, %v2992, %v4223
      %v4416 = vsel %vm3456, %v3011, %v4224
      %v4417 = vsel %vm3457, %v3030, %v4225
      %v4418 = vsel %vm3458, %v3049, %v4226
      %v4419 = vsel %vm3459, %v3068, %v4227
      %v4420 = vsel %vm3460, %v3087, %v4228
      %v4421 = vsel %vm3461, %v3106, %v4229
      %v4422 = vsel %vm3462, %v3125, %v4230
      %v4423 = vsel %vm3463, %v3144, %v4231
      %v4424 = vsel %vm3464, %v3163, %v4232
      %v4425 = vsel %vm3465, %v3182, %v4233
      %v4426 = vsel %vm3466, %v3201, %v4234
      %v4427 = vsel %vm3467, %v3220, %v4235
      %v4428 = vsel %vm3468, %v3239, %v4236
      %v4429 = vsel %vm3469, %v3258, %v4237
      %v4430 = vsel %vm3470, %v3277, %v4238
      %v4431 = vld [vmem:[%s3] sm:$0xff]
      %v4432 = vld [vmem:[%s3 + $0x8] sm:$0xff]
      %v4433 = vld [vmem:[%s3 + $0x10] sm:$0xff]
      %v4434 = vld [vmem:[%s3 + $0x18] sm:$0xff]
      %v4435 = vld [vmem:[%s3 + $0x20] sm:$0xff]
      %v4436 = vld [vmem:[%s3 + $0x28] sm:$0xff]
      %v4437 = vld [vmem:[%s3 + $0x30] sm:$0xff]
      %v4438 = vld [vmem:[%s3 + $0x38] sm:$0xff]
      %v4439 = vld [vmem:[%s3 + $0x40] sm:$0xff]
      %v4440 = vld [vmem:[%s3 + $0x48] sm:$0xff]
      %v4441 = vld [vmem:[%s3 + $0x50] sm:$0xff]
      %v4442 = vld [vmem:[%s3 + $0x58] sm:$0xff]
      %v4443 = vld [vmem:[%s3 + $0x60] sm:$0xff]
      %v4444 = vld [vmem:[%s3 + $0x68] sm:$0xff]
      %v4445 = vld [vmem:[%s3 + $0x70] sm:$0xff]
      %v4446 = vld [vmem:[%s3 + $0x78] sm:$0xff]
      %v4447 = vld [vmem:[%s3 + $0x80] sm:$0xff]
      %v4448 = vld [vmem:[%s3 + $0x88] sm:$0xff]
      %v4449 = vld [vmem:[%s3 + $0x90] sm:$0xff]
      %v4450 = vld [vmem:[%s3 + $0x98] sm:$0xff]
      %v4451 = vld [vmem:[%s3 + $0xa0] sm:$0xff]
      %v4452 = vld [vmem:[%s3 + $0xa8] sm:$0xff]
      %v4453 = vld [vmem:[%s3 + $0xb0] sm:$0xff]
      %v4454 = vld [vmem:[%s3 + $0xb8] sm:$0xff]
      %v4455 = vld [vmem:[%s3 + $0xc0] sm:$0xff]
      %v4456 = vld [vmem:[%s3 + $0xc8] sm:$0xff]
      %v4457 = vld [vmem:[%s3 + $0xd0] sm:$0xff]
      %v4458 = vld [vmem:[%s3 + $0xd8] sm:$0xff]
      %v4459 = vld [vmem:[%s3 + $0xe0] sm:$0xff]
      %v4460 = vld [vmem:[%s3 + $0xe8] sm:$0xff]
      %v4461 = vld [vmem:[%s3 + $0xf0] sm:$0xff]
      %v4462 = vld [vmem:[%s3 + $0xf8] sm:$0xff]
      %v4463 = vld [vmem:[%s3 + $0x100] sm:$0xff]
      %v4464 = vld [vmem:[%s3 + $0x108] sm:$0xff]
      %v4465 = vld [vmem:[%s3 + $0x110] sm:$0xff]
      %v4466 = vld [vmem:[%s3 + $0x118] sm:$0xff]
      %v4467 = vld [vmem:[%s3 + $0x120] sm:$0xff]
      %v4468 = vld [vmem:[%s3 + $0x128] sm:$0xff]
      %v4469 = vld [vmem:[%s3 + $0x130] sm:$0xff]
      %v4470 = vld [vmem:[%s3 + $0x138] sm:$0xff]
      %v4471 = vld [vmem:[%s3 + $0x140] sm:$0xff]
      %v4472 = vld [vmem:[%s3 + $0x148] sm:$0xff]
      %v4473 = vld [vmem:[%s3 + $0x150] sm:$0xff]
      %v4474 = vld [vmem:[%s3 + $0x158] sm:$0xff]
      %v4475 = vld [vmem:[%s3 + $0x160] sm:$0xff]
      %v4476 = vld [vmem:[%s3 + $0x168] sm:$0xff]
      %v4477 = vld [vmem:[%s3 + $0x170] sm:$0xff]
      %v4478 = vld [vmem:[%s3 + $0x178] sm:$0xff]
      %v4479 = vld [vmem:[%s3 + $0x180] sm:$0xff]
      %v4480 = vld [vmem:[%s3 + $0x188] sm:$0xff]
      %v4481 = vld [vmem:[%s3 + $0x190] sm:$0xff]
      %v4482 = vld [vmem:[%s3 + $0x198] sm:$0xff]
      %v4483 = vld [vmem:[%s3 + $0x1a0] sm:$0xff]
      %v4484 = vld [vmem:[%s3 + $0x1a8] sm:$0xff]
      %v4485 = vld [vmem:[%s3 + $0x1b0] sm:$0xff]
      %v4486 = vld [vmem:[%s3 + $0x1b8] sm:$0xff]
      %v4487 = vld [vmem:[%s3 + $0x1c0] sm:$0xff]
      %v4488 = vld [vmem:[%s3 + $0x1c8] sm:$0xff]
      %v4489 = vld [vmem:[%s3 + $0x1d0] sm:$0xff]
      %v4490 = vld [vmem:[%s3 + $0x1d8] sm:$0xff]
      %v4491 = vld [vmem:[%s3 + $0x1e0] sm:$0xff]
      %v4492 = vld [vmem:[%s3 + $0x1e8] sm:$0xff]
      %v4493 = vld [vmem:[%s3 + $0x1f0] sm:$0xff]
      %v4494 = vld [vmem:[%s3 + $0x1f8] sm:$0xff]
      %v4495 = vld [vmem:[%s3 + $0x200] sm:$0xff]
      %v4496 = vld [vmem:[%s3 + $0x208] sm:$0xff]
      %v4497 = vld [vmem:[%s3 + $0x210] sm:$0xff]
      %v4498 = vld [vmem:[%s3 + $0x218] sm:$0xff]
      %v4499 = vld [vmem:[%s3 + $0x220] sm:$0xff]
      %v4500 = vld [vmem:[%s3 + $0x228] sm:$0xff]
      %v4501 = vld [vmem:[%s3 + $0x230] sm:$0xff]
      %v4502 = vld [vmem:[%s3 + $0x238] sm:$0xff]
      %v4503 = vld [vmem:[%s3 + $0x240] sm:$0xff]
      %v4504 = vld [vmem:[%s3 + $0x248] sm:$0xff]
      %v4505 = vld [vmem:[%s3 + $0x250] sm:$0xff]
      %v4506 = vld [vmem:[%s3 + $0x258] sm:$0xff]
      %v4507 = vld [vmem:[%s3 + $0x260] sm:$0xff]
      %v4508 = vld [vmem:[%s3 + $0x268] sm:$0xff]
      %v4509 = vld [vmem:[%s3 + $0x270] sm:$0xff]
      %v4510 = vld [vmem:[%s3 + $0x278] sm:$0xff]
      %v4511 = vld [vmem:[%s3 + $0x280] sm:$0xff]
      %v4512 = vld [vmem:[%s3 + $0x288] sm:$0xff]
      %v4513 = vld [vmem:[%s3 + $0x290] sm:$0xff]
      %v4514 = vld [vmem:[%s3 + $0x298] sm:$0xff]
      %v4515 = vld [vmem:[%s3 + $0x2a0] sm:$0xff]
      %v4516 = vld [vmem:[%s3 + $0x2a8] sm:$0xff]
      %v4517 = vld [vmem:[%s3 + $0x2b0] sm:$0xff]
      %v4518 = vld [vmem:[%s3 + $0x2b8] sm:$0xff]
      %v4519 = vld [vmem:[%s3 + $0x2c0] sm:$0xff]
      %v4520 = vld [vmem:[%s3 + $0x2c8] sm:$0xff]
      %v4521 = vld [vmem:[%s3 + $0x2d0] sm:$0xff]
      %v4522 = vld [vmem:[%s3 + $0x2d8] sm:$0xff]
      %v4523 = vld [vmem:[%s3 + $0x2e0] sm:$0xff]
      %v4524 = vld [vmem:[%s3 + $0x2e8] sm:$0xff]
      %v4525 = vld [vmem:[%s3 + $0x2f0] sm:$0xff]
      %v4526 = vld [vmem:[%s3 + $0x2f8] sm:$0xff]
      %v4527 = vld [vmem:[%s3 + $0x300] sm:$0xff]
      %v4528 = vld [vmem:[%s3 + $0x308] sm:$0xff]
      %v4529 = vld [vmem:[%s3 + $0x310] sm:$0xff]
      %v4530 = vld [vmem:[%s3 + $0x318] sm:$0xff]
      %v4531 = vld [vmem:[%s3 + $0x320] sm:$0xff]
      %v4532 = vld [vmem:[%s3 + $0x328] sm:$0xff]
      %v4533 = vld [vmem:[%s3 + $0x330] sm:$0xff]
      %v4534 = vld [vmem:[%s3 + $0x338] sm:$0xff]
      %v4535 = vld [vmem:[%s3 + $0x340] sm:$0xff]
      %v4536 = vld [vmem:[%s3 + $0x348] sm:$0xff]
      %v4537 = vld [vmem:[%s3 + $0x350] sm:$0xff]
      %v4538 = vld [vmem:[%s3 + $0x358] sm:$0xff]
      %v4539 = vld [vmem:[%s3 + $0x360] sm:$0xff]
      %v4540 = vld [vmem:[%s3 + $0x368] sm:$0xff]
      %v4541 = vld [vmem:[%s3 + $0x370] sm:$0xff]
      %v4542 = vld [vmem:[%s3 + $0x378] sm:$0xff]
      %v4543 = vld [vmem:[%s3 + $0x380] sm:$0xff]
      %v4544 = vld [vmem:[%s3 + $0x388] sm:$0xff]
      %v4545 = vld [vmem:[%s3 + $0x390] sm:$0xff]
      %v4546 = vld [vmem:[%s3 + $0x398] sm:$0xff]
      %v4547 = vld [vmem:[%s3 + $0x3a0] sm:$0xff]
      %v4548 = vld [vmem:[%s3 + $0x3a8] sm:$0xff]
      %v4549 = vld [vmem:[%s3 + $0x3b0] sm:$0xff]
      %v4550 = vld [vmem:[%s3 + $0x3b8] sm:$0xff]
      %v4551 = vld [vmem:[%s3 + $0x3c0] sm:$0xff]
      %v4552 = vld [vmem:[%s3 + $0x3c8] sm:$0xff]
      %v4553 = vld [vmem:[%s3 + $0x3d0] sm:$0xff]
      %v4554 = vld [vmem:[%s3 + $0x3d8] sm:$0xff]
      %v4555 = vld [vmem:[%s3 + $0x3e0] sm:$0xff]
      %v4556 = vld [vmem:[%s3 + $0x3e8] sm:$0xff]
      %v4557 = vld [vmem:[%s3 + $0x3f0] sm:$0xff]
      %v4558 = vld [vmem:[%s3 + $0x3f8] sm:$0xff]
      %v4559 = vld [vmem:[%s3 + $0x400] sm:$0xff]
      %v4560 = vld [vmem:[%s3 + $0x408] sm:$0xff]
      %v4561 = vld [vmem:[%s3 + $0x410] sm:$0xff]
      %v4562 = vld [vmem:[%s3 + $0x418] sm:$0xff]
      %v4563 = vld [vmem:[%s3 + $0x420] sm:$0xff]
      %v4564 = vld [vmem:[%s3 + $0x428] sm:$0xff]
      %v4565 = vld [vmem:[%s3 + $0x430] sm:$0xff]
      %v4566 = vld [vmem:[%s3 + $0x438] sm:$0xff]
      %v4567 = vld [vmem:[%s3 + $0x440] sm:$0xff]
      %v4568 = vld [vmem:[%s3 + $0x448] sm:$0xff]
      %v4569 = vld [vmem:[%s3 + $0x450] sm:$0xff]
      %v4570 = vld [vmem:[%s3 + $0x458] sm:$0xff]
      %v4571 = vld [vmem:[%s3 + $0x460] sm:$0xff]
      %v4572 = vld [vmem:[%s3 + $0x468] sm:$0xff]
      %v4573 = vld [vmem:[%s3 + $0x470] sm:$0xff]
      %v4574 = vld [vmem:[%s3 + $0x478] sm:$0xff]
      %v4575 = vld [vmem:[%s3 + $0x480] sm:$0xff]
      %v4576 = vld [vmem:[%s3 + $0x488] sm:$0xff]
      %v4577 = vld [vmem:[%s3 + $0x490] sm:$0xff]
      %v4578 = vld [vmem:[%s3 + $0x498] sm:$0xff]
      %v4579 = vld [vmem:[%s3 + $0x4a0] sm:$0xff]
      %v4580 = vld [vmem:[%s3 + $0x4a8] sm:$0xff]
      %v4581 = vld [vmem:[%s3 + $0x4b0] sm:$0xff]
      %v4582 = vld [vmem:[%s3 + $0x4b8] sm:$0xff]
      %v4583 = vld [vmem:[%s3 + $0x4c0] sm:$0xff]
      %v4584 = vld [vmem:[%s3 + $0x4c8] sm:$0xff]
      %v4585 = vld [vmem:[%s3 + $0x4d0] sm:$0xff]
      %v4586 = vld [vmem:[%s3 + $0x4d8] sm:$0xff]
      %v4587 = vld [vmem:[%s3 + $0x4e0] sm:$0xff]
      %v4588 = vld [vmem:[%s3 + $0x4e8] sm:$0xff]
      %v4589 = vld [vmem:[%s3 + $0x4f0] sm:$0xff]
      %v4590 = vld [vmem:[%s3 + $0x4f8] sm:$0xff]
      %v4591 = vld [vmem:[%s3 + $0x500] sm:$0xff]
      %v4592 = vld [vmem:[%s3 + $0x508] sm:$0xff]
      %v4593 = vld [vmem:[%s3 + $0x510] sm:$0xff]
      %v4594 = vld [vmem:[%s3 + $0x518] sm:$0xff]
      %v4595 = vld [vmem:[%s3 + $0x520] sm:$0xff]
      %v4596 = vld [vmem:[%s3 + $0x528] sm:$0xff]
      %v4597 = vld [vmem:[%s3 + $0x530] sm:$0xff]
      %v4598 = vld [vmem:[%s3 + $0x538] sm:$0xff]
      %v4599 = vld [vmem:[%s3 + $0x540] sm:$0xff]
      %v4600 = vld [vmem:[%s3 + $0x548] sm:$0xff]
      %v4601 = vld [vmem:[%s3 + $0x550] sm:$0xff]
      %v4602 = vld [vmem:[%s3 + $0x558] sm:$0xff]
      %v4603 = vld [vmem:[%s3 + $0x560] sm:$0xff]
      %v4604 = vld [vmem:[%s3 + $0x568] sm:$0xff]
      %v4605 = vld [vmem:[%s3 + $0x570] sm:$0xff]
      %v4606 = vld [vmem:[%s3 + $0x578] sm:$0xff]
      %v4607 = vld [vmem:[%s3 + $0x580] sm:$0xff]
      %v4608 = vld [vmem:[%s3 + $0x588] sm:$0xff]
      %v4609 = vld [vmem:[%s3 + $0x590] sm:$0xff]
      %v4610 = vld [vmem:[%s3 + $0x598] sm:$0xff]
      %v4611 = vld [vmem:[%s3 + $0x5a0] sm:$0xff]
      %v4612 = vld [vmem:[%s3 + $0x5a8] sm:$0xff]
      %v4613 = vld [vmem:[%s3 + $0x5b0] sm:$0xff]
      %v4614 = vld [vmem:[%s3 + $0x5b8] sm:$0xff]
      %v4615 = vld [vmem:[%s3 + $0x5c0] sm:$0xff]
      %v4616 = vld [vmem:[%s3 + $0x5c8] sm:$0xff]
      %v4617 = vld [vmem:[%s3 + $0x5d0] sm:$0xff]
      %v4618 = vld [vmem:[%s3 + $0x5d8] sm:$0xff]
      %v4619 = vld [vmem:[%s3 + $0x5e0] sm:$0xff]
      %v4620 = vld [vmem:[%s3 + $0x5e8] sm:$0xff]
      %v4621 = vld [vmem:[%s3 + $0x5f0] sm:$0xff]
      %v4622 = vld [vmem:[%s3 + $0x5f8] sm:$0xff]
      %4623 = vmatpush.msra.mxu0 %v4461
      %4624 = vmatpush.msra.mxu0 %v4459
      %4625 = vmatpush.msra.mxu0 %v4457
      %4626 = vmatpush.msra.mxu0 %v4455
      %4627 = vmatpush.msra.mxu0 %v4453
      %4628 = vmatpush.msra.mxu0 %v4451
      %4629 = vmatpush.msra.mxu0 %v4449
      %4630 = vmatpush.msra.mxu0 %v4447
      %4631 = vmatpush.msra.mxu0 %v4445
      %4632 = vmatpush.msra.mxu0 %v4443
      %4633 = vmatpush.msra.mxu0 %v4441
      %4634 = vmatpush.msra.mxu0 %v4439
      %4635 = vmatpush.msra.mxu0 %v4437
      %4636 = vmatpush.msra.mxu0 %v4435
      %4637 = vmatpush.msra.mxu0 %v4433
      %4638 = vmatpush.msra.mxu0 %v4431
      %4639 = vmatmul.f32.gmra.mxu0 %v4239
      %v4640 = vpop.f32.mrf.mxu0
      %v4641 = vadd.f32 0.0, %v4640
      %4642 = vmatmul.f32.gmra.mxu0 %v4287
      %v4643 = vpop.f32.mrf.mxu0
      %v4644 = vadd.f32 0.0, %v4643
      %4645 = vmatmul.f32.gmra.mxu0 %v4335
      %v4646 = vpop.f32.mrf.mxu0
      %v4647 = vadd.f32 0.0, %v4646
      %4648 = vmatmul.f32.gmra.mxu0 %v4383
      %v4649 = vpop.f32.mrf.mxu0
      %v4650 = vadd.f32 0.0, %v4649
      %4651 = vmatmul.f32.gmra.mxu0 %v4245
      %v4652 = vpop.f32.mrf.mxu0
      %v4653 = vadd.f32 0.0, %v4652
      %4654 = vmatmul.f32.gmra.mxu0 %v4293
      %v4655 = vpop.f32.mrf.mxu0
      %v4656 = vadd.f32 0.0, %v4655
      %4657 = vmatmul.f32.gmra.mxu0 %v4341
      %v4658 = vpop.f32.mrf.mxu0
      %v4659 = vadd.f32 0.0, %v4658
      %4660 = vmatmul.f32.gmra.mxu0 %v4389
      %v4661 = vpop.f32.mrf.mxu0
      %v4662 = vadd.f32 0.0, %v4661
      %4663 = vmatmul.f32.gmra.mxu0 %v4251
      %v4664 = vpop.f32.mrf.mxu0
      %v4665 = vadd.f32 0.0, %v4664
      %4666 = vmatmul.f32.gmra.mxu0 %v4299
      %v4667 = vpop.f32.mrf.mxu0
      %v4668 = vadd.f32 0.0, %v4667
      %4669 = vmatmul.f32.gmra.mxu0 %v4347
      %v4670 = vpop.f32.mrf.mxu0
      %v4671 = vadd.f32 0.0, %v4670
      %4672 = vmatmul.f32.gmra.mxu0 %v4395
      %v4673 = vpop.f32.mrf.mxu0
      %v4674 = vadd.f32 0.0, %v4673
      %4675 = vmatmul.f32.gmra.mxu0 %v4257
      %v4676 = vpop.f32.mrf.mxu0
      %v4677 = vadd.f32 0.0, %v4676
      %4678 = vmatmul.f32.gmra.mxu0 %v4305
      %v4679 = vpop.f32.mrf.mxu0
      %v4680 = vadd.f32 0.0, %v4679
      %4681 = vmatmul.f32.gmra.mxu0 %v4353
      %v4682 = vpop.f32.mrf.mxu0
      %v4683 = vadd.f32 0.0, %v4682
      %4684 = vmatmul.f32.gmra.mxu0 %v4401
      %v4685 = vpop.f32.mrf.mxu0
      %v4686 = vadd.f32 0.0, %v4685
      %4687 = vmatmul.f32.gmra.mxu0 %v4263
      %v4688 = vpop.f32.mrf.mxu0
      %v4689 = vadd.f32 0.0, %v4688
      %4690 = vmatmul.f32.gmra.mxu0 %v4311
      %v4691 = vpop.f32.mrf.mxu0
      %v4692 = vadd.f32 0.0, %v4691
      %4693 = vmatmul.f32.gmra.mxu0 %v4359
      %v4694 = vpop.f32.mrf.mxu0
      %v4695 = vadd.f32 0.0, %v4694
      %4696 = vmatmul.f32.gmra.mxu0 %v4407
      %v4697 = vpop.f32.mrf.mxu0
      %v4698 = vadd.f32 0.0, %v4697
      %4699 = vmatmul.f32.gmra.mxu0 %v4269
      %v4700 = vpop.f32.mrf.mxu0
      %v4701 = vadd.f32 0.0, %v4700
      %4702 = vmatmul.f32.gmra.mxu0 %v4317
      %v4703 = vpop.f32.mrf.mxu0
      %v4704 = vadd.f32 0.0, %v4703
      %4705 = vmatmul.f32.gmra.mxu0 %v4365
      %v4706 = vpop.f32.mrf.mxu0
      %v4707 = vadd.f32 0.0, %v4706
      %4708 = vmatmul.f32.gmra.mxu0 %v4413
      %v4709 = vpop.f32.mrf.mxu0
      %v4710 = vadd.f32 0.0, %v4709
      %4711 = vmatmul.f32.gmra.mxu0 %v4275
      %v4712 = vpop.f32.mrf.mxu0
      %v4713 = vadd.f32 0.0, %v4712
      %4714 = vmatmul.f32.gmra.mxu0 %v4323
      %v4715 = vpop.f32.mrf.mxu0
      %v4716 = vadd.f32 0.0, %v4715
      %4717 = vmatmul.f32.gmra.mxu0 %v4371
      %v4718 = vpop.f32.mrf.mxu0
      %v4719 = vadd.f32 0.0, %v4718
      %4720 = vmatmul.f32.gmra.mxu0 %v4419
      %v4721 = vpop.f32.mrf.mxu0
      %v4722 = vadd.f32 0.0, %v4721
      %4723 = vmatmul.f32.gmra.mxu0 %v4281
      %v4724 = vpop.f32.mrf.mxu0
      %v4725 = vadd.f32 0.0, %v4724
      %4726 = vmatmul.f32.gmra.mxu0 %v4329
      %v4727 = vpop.f32.mrf.mxu0
      %v4728 = vadd.f32 0.0, %v4727
      %4729 = vmatmul.f32.gmra.mxu0 %v4377
      %v4730 = vpop.f32.mrf.mxu0
      %v4731 = vadd.f32 0.0, %v4730
      %4732 = vmatmul.f32.gmra.mxu0 %v4425
      %v4733 = vpop.f32.mrf.mxu0
      %v4734 = vadd.f32 0.0, %v4733
      %4735 = vdwg.mxu0
      %4736 = vmatpush.msra.mxu0 %v4493
      %4737 = vmatpush.msra.mxu0 %v4491
      %4738 = vmatpush.msra.mxu0 %v4489
      %4739 = vmatpush.msra.mxu0 %v4487
      %4740 = vmatpush.msra.mxu0 %v4485
      %4741 = vmatpush.msra.mxu0 %v4483
      %4742 = vmatpush.msra.mxu0 %v4481
      %4743 = vmatpush.msra.mxu0 %v4479
      %4744 = vmatpush.msra.mxu0 %v4477
      %4745 = vmatpush.msra.mxu0 %v4475
      %4746 = vmatpush.msra.mxu0 %v4473
      %4747 = vmatpush.msra.mxu0 %v4471
      %4748 = vmatpush.msra.mxu0 %v4469
      %4749 = vmatpush.msra.mxu0 %v4467
      %4750 = vmatpush.msra.mxu0 %v4465
      %4751 = vmatpush.msra.mxu0 %v4463
      %4752 = vmatmul.f32.gmra.mxu0 %v4240
      %v4753 = vpop.f32.mrf.mxu0
      %v4754 = vadd.f32 %v4641, %v4753
      %4755 = vmatmul.f32.gmra.mxu0 %v4288
      %v4756 = vpop.f32.mrf.mxu0
      %v4757 = vadd.f32 %v4644, %v4756
      %4758 = vmatmul.f32.gmra.mxu0 %v4336
      %v4759 = vpop.f32.mrf.mxu0
      %v4760 = vadd.f32 %v4647, %v4759
      %4761 = vmatmul.f32.gmra.mxu0 %v4384
      %v4762 = vpop.f32.mrf.mxu0
      %v4763 = vadd.f32 %v4650, %v4762
      %4764 = vmatmul.f32.gmra.mxu0 %v4246
      %v4765 = vpop.f32.mrf.mxu0
      %v4766 = vadd.f32 %v4653, %v4765
      %4767 = vmatmul.f32.gmra.mxu0 %v4294
      %v4768 = vpop.f32.mrf.mxu0
      %v4769 = vadd.f32 %v4656, %v4768
      %4770 = vmatmul.f32.gmra.mxu0 %v4342
      %v4771 = vpop.f32.mrf.mxu0
      %v4772 = vadd.f32 %v4659, %v4771
      %4773 = vmatmul.f32.gmra.mxu0 %v4390
      %v4774 = vpop.f32.mrf.mxu0
      %v4775 = vadd.f32 %v4662, %v4774
      %4776 = vmatmul.f32.gmra.mxu0 %v4252
      %v4777 = vpop.f32.mrf.mxu0
      %v4778 = vadd.f32 %v4665, %v4777
      %4779 = vmatmul.f32.gmra.mxu0 %v4300
      %v4780 = vpop.f32.mrf.mxu0
      %v4781 = vadd.f32 %v4668, %v4780
      %4782 = vmatmul.f32.gmra.mxu0 %v4348
      %v4783 = vpop.f32.mrf.mxu0
      %v4784 = vadd.f32 %v4671, %v4783
      %4785 = vmatmul.f32.gmra.mxu0 %v4396
      %v4786 = vpop.f32.mrf.mxu0
      %v4787 = vadd.f32 %v4674, %v4786
      %4788 = vmatmul.f32.gmra.mxu0 %v4258
      %v4789 = vpop.f32.mrf.mxu0
      %v4790 = vadd.f32 %v4677, %v4789
      %4791 = vmatmul.f32.gmra.mxu0 %v4306
      %v4792 = vpop.f32.mrf.mxu0
      %v4793 = vadd.f32 %v4680, %v4792
      %4794 = vmatmul.f32.gmra.mxu0 %v4354
      %v4795 = vpop.f32.mrf.mxu0
      %v4796 = vadd.f32 %v4683, %v4795
      %4797 = vmatmul.f32.gmra.mxu0 %v4402
      %v4798 = vpop.f32.mrf.mxu0
      %v4799 = vadd.f32 %v4686, %v4798
      %4800 = vmatmul.f32.gmra.mxu0 %v4264
      %v4801 = vpop.f32.mrf.mxu0
      %v4802 = vadd.f32 %v4689, %v4801
      %4803 = vmatmul.f32.gmra.mxu0 %v4312
      %v4804 = vpop.f32.mrf.mxu0
      %v4805 = vadd.f32 %v4692, %v4804
      %4806 = vmatmul.f32.gmra.mxu0 %v4360
      %v4807 = vpop.f32.mrf.mxu0
      %v4808 = vadd.f32 %v4695, %v4807
      %4809 = vmatmul.f32.gmra.mxu0 %v4408
      %v4810 = vpop.f32.mrf.mxu0
      %v4811 = vadd.f32 %v4698, %v4810
      %4812 = vmatmul.f32.gmra.mxu0 %v4270
      %v4813 = vpop.f32.mrf.mxu0
      %v4814 = vadd.f32 %v4701, %v4813
      %4815 = vmatmul.f32.gmra.mxu0 %v4318
      %v4816 = vpop.f32.mrf.mxu0
      %v4817 = vadd.f32 %v4704, %v4816
      %4818 = vmatmul.f32.gmra.mxu0 %v4366
      %v4819 = vpop.f32.mrf.mxu0
      %v4820 = vadd.f32 %v4707, %v4819
      %4821 = vmatmul.f32.gmra.mxu0 %v4414
      %v4822 = vpop.f32.mrf.mxu0
      %v4823 = vadd.f32 %v4710, %v4822
      %4824 = vmatmul.f32.gmra.mxu0 %v4276
      %v4825 = vpop.f32.mrf.mxu0
      %v4826 = vadd.f32 %v4713, %v4825
      %4827 = vmatmul.f32.gmra.mxu0 %v4324
      %v4828 = vpop.f32.mrf.mxu0
      %v4829 = vadd.f32 %v4716, %v4828
      %4830 = vmatmul.f32.gmra.mxu0 %v4372
      %v4831 = vpop.f32.mrf.mxu0
      %v4832 = vadd.f32 %v4719, %v4831
      %4833 = vmatmul.f32.gmra.mxu0 %v4420
      %v4834 = vpop.f32.mrf.mxu0
      %v4835 = vadd.f32 %v4722, %v4834
      %4836 = vmatmul.f32.gmra.mxu0 %v4282
      %v4837 = vpop.f32.mrf.mxu0
      %v4838 = vadd.f32 %v4725, %v4837
      %4839 = vmatmul.f32.gmra.mxu0 %v4330
      %v4840 = vpop.f32.mrf.mxu0
      %v4841 = vadd.f32 %v4728, %v4840
      %4842 = vmatmul.f32.gmra.mxu0 %v4378
      %v4843 = vpop.f32.mrf.mxu0
      %v4844 = vadd.f32 %v4731, %v4843
      %4845 = vmatmul.f32.gmra.mxu0 %v4426
      %v4846 = vpop.f32.mrf.mxu0
      %v4847 = vadd.f32 %v4734, %v4846
      %4848 = vdwg.mxu0
      %4849 = vmatpush.msra.mxu0 %v4525
      %4850 = vmatpush.msra.mxu0 %v4523
      %4851 = vmatpush.msra.mxu0 %v4521
      %4852 = vmatpush.msra.mxu0 %v4519
      %4853 = vmatpush.msra.mxu0 %v4517
      %4854 = vmatpush.msra.mxu0 %v4515
      %4855 = vmatpush.msra.mxu0 %v4513
      %4856 = vmatpush.msra.mxu0 %v4511
      %4857 = vmatpush.msra.mxu0 %v4509
      %4858 = vmatpush.msra.mxu0 %v4507
      %4859 = vmatpush.msra.mxu0 %v4505
      %4860 = vmatpush.msra.mxu0 %v4503
      %4861 = vmatpush.msra.mxu0 %v4501
      %4862 = vmatpush.msra.mxu0 %v4499
      %4863 = vmatpush.msra.mxu0 %v4497
      %4864 = vmatpush.msra.mxu0 %v4495
      %4865 = vmatmul.f32.gmra.mxu0 %v4241
      %v4866 = vpop.f32.mrf.mxu0
      %v4867 = vadd.f32 %v4754, %v4866
      %4868 = vmatmul.f32.gmra.mxu0 %v4289
      %v4869 = vpop.f32.mrf.mxu0
      %v4870 = vadd.f32 %v4757, %v4869
      %4871 = vmatmul.f32.gmra.mxu0 %v4337
      %v4872 = vpop.f32.mrf.mxu0
      %v4873 = vadd.f32 %v4760, %v4872
      %4874 = vmatmul.f32.gmra.mxu0 %v4385
      %v4875 = vpop.f32.mrf.mxu0
      %v4876 = vadd.f32 %v4763, %v4875
      %4877 = vmatmul.f32.gmra.mxu0 %v4247
      %v4878 = vpop.f32.mrf.mxu0
      %v4879 = vadd.f32 %v4766, %v4878
      %4880 = vmatmul.f32.gmra.mxu0 %v4295
      %v4881 = vpop.f32.mrf.mxu0
      %v4882 = vadd.f32 %v4769, %v4881
      %4883 = vmatmul.f32.gmra.mxu0 %v4343
      %v4884 = vpop.f32.mrf.mxu0
      %v4885 = vadd.f32 %v4772, %v4884
      %4886 = vmatmul.f32.gmra.mxu0 %v4391
      %v4887 = vpop.f32.mrf.mxu0
      %v4888 = vadd.f32 %v4775, %v4887
      %4889 = vmatmul.f32.gmra.mxu0 %v4253
      %v4890 = vpop.f32.mrf.mxu0
      %v4891 = vadd.f32 %v4778, %v4890
      %4892 = vmatmul.f32.gmra.mxu0 %v4301
      %v4893 = vpop.f32.mrf.mxu0
      %v4894 = vadd.f32 %v4781, %v4893
      %4895 = vmatmul.f32.gmra.mxu0 %v4349
      %v4896 = vpop.f32.mrf.mxu0
      %v4897 = vadd.f32 %v4784, %v4896
      %4898 = vmatmul.f32.gmra.mxu0 %v4397
      %v4899 = vpop.f32.mrf.mxu0
      %v4900 = vadd.f32 %v4787, %v4899
      %4901 = vmatmul.f32.gmra.mxu0 %v4259
      %v4902 = vpop.f32.mrf.mxu0
      %v4903 = vadd.f32 %v4790, %v4902
      %4904 = vmatmul.f32.gmra.mxu0 %v4307
      %v4905 = vpop.f32.mrf.mxu0
      %v4906 = vadd.f32 %v4793, %v4905
      %4907 = vmatmul.f32.gmra.mxu0 %v4355
      %v4908 = vpop.f32.mrf.mxu0
      %v4909 = vadd.f32 %v4796, %v4908
      %4910 = vmatmul.f32.gmra.mxu0 %v4403
      %v4911 = vpop.f32.mrf.mxu0
      %v4912 = vadd.f32 %v4799, %v4911
      %4913 = vmatmul.f32.gmra.mxu0 %v4265
      %v4914 = vpop.f32.mrf.mxu0
      %v4915 = vadd.f32 %v4802, %v4914
      %4916 = vmatmul.f32.gmra.mxu0 %v4313
      %v4917 = vpop.f32.mrf.mxu0
      %v4918 = vadd.f32 %v4805, %v4917
      %4919 = vmatmul.f32.gmra.mxu0 %v4361
      %v4920 = vpop.f32.mrf.mxu0
      %v4921 = vadd.f32 %v4808, %v4920
      %4922 = vmatmul.f32.gmra.mxu0 %v4409
      %v4923 = vpop.f32.mrf.mxu0
      %v4924 = vadd.f32 %v4811, %v4923
      %4925 = vmatmul.f32.gmra.mxu0 %v4271
      %v4926 = vpop.f32.mrf.mxu0
      %v4927 = vadd.f32 %v4814, %v4926
      %4928 = vmatmul.f32.gmra.mxu0 %v4319
      %v4929 = vpop.f32.mrf.mxu0
      %v4930 = vadd.f32 %v4817, %v4929
      %4931 = vmatmul.f32.gmra.mxu0 %v4367
      %v4932 = vpop.f32.mrf.mxu0
      %v4933 = vadd.f32 %v4820, %v4932
      %4934 = vmatmul.f32.gmra.mxu0 %v4415
      %v4935 = vpop.f32.mrf.mxu0
      %v4936 = vadd.f32 %v4823, %v4935
      %4937 = vmatmul.f32.gmra.mxu0 %v4277
      %v4938 = vpop.f32.mrf.mxu0
      %v4939 = vadd.f32 %v4826, %v4938
      %4940 = vmatmul.f32.gmra.mxu0 %v4325
      %v4941 = vpop.f32.mrf.mxu0
      %v4942 = vadd.f32 %v4829, %v4941
      %4943 = vmatmul.f32.gmra.mxu0 %v4373
      %v4944 = vpop.f32.mrf.mxu0
      %v4945 = vadd.f32 %v4832, %v4944
      %4946 = vmatmul.f32.gmra.mxu0 %v4421
      %v4947 = vpop.f32.mrf.mxu0
      %v4948 = vadd.f32 %v4835, %v4947
      %4949 = vmatmul.f32.gmra.mxu0 %v4283
      %v4950 = vpop.f32.mrf.mxu0
      %v4951 = vadd.f32 %v4838, %v4950
      %4952 = vmatmul.f32.gmra.mxu0 %v4331
      %v4953 = vpop.f32.mrf.mxu0
      %v4954 = vadd.f32 %v4841, %v4953
      %4955 = vmatmul.f32.gmra.mxu0 %v4379
      %v4956 = vpop.f32.mrf.mxu0
      %v4957 = vadd.f32 %v4844, %v4956
      %4958 = vmatmul.f32.gmra.mxu0 %v4427
      %v4959 = vpop.f32.mrf.mxu0
      %v4960 = vadd.f32 %v4847, %v4959
      %4961 = vdwg.mxu0
      %4962 = vmatpush.msra.mxu0 %v4557
      %4963 = vmatpush.msra.mxu0 %v4555
      %4964 = vmatpush.msra.mxu0 %v4553
      %4965 = vmatpush.msra.mxu0 %v4551
      %4966 = vmatpush.msra.mxu0 %v4549
      %4967 = vmatpush.msra.mxu0 %v4547
      %4968 = vmatpush.msra.mxu0 %v4545
      %4969 = vmatpush.msra.mxu0 %v4543
      %4970 = vmatpush.msra.mxu0 %v4541
      %4971 = vmatpush.msra.mxu0 %v4539
      %4972 = vmatpush.msra.mxu0 %v4537
      %4973 = vmatpush.msra.mxu0 %v4535
      %4974 = vmatpush.msra.mxu0 %v4533
      %4975 = vmatpush.msra.mxu0 %v4531
      %4976 = vmatpush.msra.mxu0 %v4529
      %4977 = vmatpush.msra.mxu0 %v4527
      %4978 = vmatmul.f32.gmra.mxu0 %v4242
      %v4979 = vpop.f32.mrf.mxu0
      %v4980 = vadd.f32 %v4867, %v4979
      %4981 = vmatmul.f32.gmra.mxu0 %v4290
      %v4982 = vpop.f32.mrf.mxu0
      %v4983 = vadd.f32 %v4870, %v4982
      %4984 = vmatmul.f32.gmra.mxu0 %v4338
      %v4985 = vpop.f32.mrf.mxu0
      %v4986 = vadd.f32 %v4873, %v4985
      %4987 = vmatmul.f32.gmra.mxu0 %v4386
      %v4988 = vpop.f32.mrf.mxu0
      %v4989 = vadd.f32 %v4876, %v4988
      %4990 = vmatmul.f32.gmra.mxu0 %v4248
      %v4991 = vpop.f32.mrf.mxu0
      %v4992 = vadd.f32 %v4879, %v4991
      %4993 = vmatmul.f32.gmra.mxu0 %v4296
      %v4994 = vpop.f32.mrf.mxu0
      %v4995 = vadd.f32 %v4882, %v4994
      %4996 = vmatmul.f32.gmra.mxu0 %v4344
      %v4997 = vpop.f32.mrf.mxu0
      %v4998 = vadd.f32 %v4885, %v4997
      %4999 = vmatmul.f32.gmra.mxu0 %v4392
      %v5000 = vpop.f32.mrf.mxu0
      %v5001 = vadd.f32 %v4888, %v5000
      %5002 = vmatmul.f32.gmra.mxu0 %v4254
      %v5003 = vpop.f32.mrf.mxu0
      %v5004 = vadd.f32 %v4891, %v5003
      %5005 = vmatmul.f32.gmra.mxu0 %v4302
      %v5006 = vpop.f32.mrf.mxu0
      %v5007 = vadd.f32 %v4894, %v5006
      %5008 = vmatmul.f32.gmra.mxu0 %v4350
      %v5009 = vpop.f32.mrf.mxu0
      %v5010 = vadd.f32 %v4897, %v5009
      %5011 = vmatmul.f32.gmra.mxu0 %v4398
      %v5012 = vpop.f32.mrf.mxu0
      %v5013 = vadd.f32 %v4900, %v5012
      %5014 = vmatmul.f32.gmra.mxu0 %v4260
      %v5015 = vpop.f32.mrf.mxu0
      %v5016 = vadd.f32 %v4903, %v5015
      %5017 = vmatmul.f32.gmra.mxu0 %v4308
      %v5018 = vpop.f32.mrf.mxu0
      %v5019 = vadd.f32 %v4906, %v5018
      %5020 = vmatmul.f32.gmra.mxu0 %v4356
      %v5021 = vpop.f32.mrf.mxu0
      %v5022 = vadd.f32 %v4909, %v5021
      %5023 = vmatmul.f32.gmra.mxu0 %v4404
      %v5024 = vpop.f32.mrf.mxu0
      %v5025 = vadd.f32 %v4912, %v5024
      %5026 = vmatmul.f32.gmra.mxu0 %v4266
      %v5027 = vpop.f32.mrf.mxu0
      %v5028 = vadd.f32 %v4915, %v5027
      %5029 = vmatmul.f32.gmra.mxu0 %v4314
      %v5030 = vpop.f32.mrf.mxu0
      %v5031 = vadd.f32 %v4918, %v5030
      %5032 = vmatmul.f32.gmra.mxu0 %v4362
      %v5033 = vpop.f32.mrf.mxu0
      %v5034 = vadd.f32 %v4921, %v5033
      %5035 = vmatmul.f32.gmra.mxu0 %v4410
      %v5036 = vpop.f32.mrf.mxu0
      %v5037 = vadd.f32 %v4924, %v5036
      %5038 = vmatmul.f32.gmra.mxu0 %v4272
      %v5039 = vpop.f32.mrf.mxu0
      %v5040 = vadd.f32 %v4927, %v5039
      %5041 = vmatmul.f32.gmra.mxu0 %v4320
      %v5042 = vpop.f32.mrf.mxu0
      %v5043 = vadd.f32 %v4930, %v5042
      %5044 = vmatmul.f32.gmra.mxu0 %v4368
      %v5045 = vpop.f32.mrf.mxu0
      %v5046 = vadd.f32 %v4933, %v5045
      %5047 = vmatmul.f32.gmra.mxu0 %v4416
      %v5048 = vpop.f32.mrf.mxu0
      %v5049 = vadd.f32 %v4936, %v5048
      %5050 = vmatmul.f32.gmra.mxu0 %v4278
      %v5051 = vpop.f32.mrf.mxu0
      %v5052 = vadd.f32 %v4939, %v5051
      %5053 = vmatmul.f32.gmra.mxu0 %v4326
      %v5054 = vpop.f32.mrf.mxu0
      %v5055 = vadd.f32 %v4942, %v5054
      %5056 = vmatmul.f32.gmra.mxu0 %v4374
      %v5057 = vpop.f32.mrf.mxu0
      %v5058 = vadd.f32 %v4945, %v5057
      %5059 = vmatmul.f32.gmra.mxu0 %v4422
      %v5060 = vpop.f32.mrf.mxu0
      %v5061 = vadd.f32 %v4948, %v5060
      %5062 = vmatmul.f32.gmra.mxu0 %v4284
      %v5063 = vpop.f32.mrf.mxu0
      %v5064 = vadd.f32 %v4951, %v5063
      %5065 = vmatmul.f32.gmra.mxu0 %v4332
      %v5066 = vpop.f32.mrf.mxu0
      %v5067 = vadd.f32 %v4954, %v5066
      %5068 = vmatmul.f32.gmra.mxu0 %v4380
      %v5069 = vpop.f32.mrf.mxu0
      %v5070 = vadd.f32 %v4957, %v5069
      %5071 = vmatmul.f32.gmra.mxu0 %v4428
      %v5072 = vpop.f32.mrf.mxu0
      %v5073 = vadd.f32 %v4960, %v5072
      %5074 = vdwg.mxu0
      %5075 = vmatpush.msra.mxu0 %v4589
      %5076 = vmatpush.msra.mxu0 %v4587
      %5077 = vmatpush.msra.mxu0 %v4585
      %5078 = vmatpush.msra.mxu0 %v4583
      %5079 = vmatpush.msra.mxu0 %v4581
      %5080 = vmatpush.msra.mxu0 %v4579
      %5081 = vmatpush.msra.mxu0 %v4577
      %5082 = vmatpush.msra.mxu0 %v4575
      %5083 = vmatpush.msra.mxu0 %v4573
      %5084 = vmatpush.msra.mxu0 %v4571
      %5085 = vmatpush.msra.mxu0 %v4569
      %5086 = vmatpush.msra.mxu0 %v4567
      %5087 = vmatpush.msra.mxu0 %v4565
      %5088 = vmatpush.msra.mxu0 %v4563
      %5089 = vmatpush.msra.mxu0 %v4561
      %5090 = vmatpush.msra.mxu0 %v4559
      %5091 = vmatmul.f32.gmra.mxu0 %v4243
      %v5092 = vpop.f32.mrf.mxu0
      %v5093 = vadd.f32 %v4980, %v5092
      %5094 = vmatmul.f32.gmra.mxu0 %v4291
      %v5095 = vpop.f32.mrf.mxu0
      %v5096 = vadd.f32 %v4983, %v5095
      %5097 = vmatmul.f32.gmra.mxu0 %v4339
      %v5098 = vpop.f32.mrf.mxu0
      %v5099 = vadd.f32 %v4986, %v5098
      %5100 = vmatmul.f32.gmra.mxu0 %v4387
      %v5101 = vpop.f32.mrf.mxu0
      %v5102 = vadd.f32 %v4989, %v5101
      %5103 = vmatmul.f32.gmra.mxu0 %v4249
      %v5104 = vpop.f32.mrf.mxu0
      %v5105 = vadd.f32 %v4992, %v5104
      %5106 = vmatmul.f32.gmra.mxu0 %v4297
      %v5107 = vpop.f32.mrf.mxu0
      %v5108 = vadd.f32 %v4995, %v5107
      %5109 = vmatmul.f32.gmra.mxu0 %v4345
      %v5110 = vpop.f32.mrf.mxu0
      %v5111 = vadd.f32 %v4998, %v5110
      %5112 = vmatmul.f32.gmra.mxu0 %v4393
      %v5113 = vpop.f32.mrf.mxu0
      %v5114 = vadd.f32 %v5001, %v5113
      %5115 = vmatmul.f32.gmra.mxu0 %v4255
      %v5116 = vpop.f32.mrf.mxu0
      %v5117 = vadd.f32 %v5004, %v5116
      %5118 = vmatmul.f32.gmra.mxu0 %v4303
      %v5119 = vpop.f32.mrf.mxu0
      %v5120 = vadd.f32 %v5007, %v5119
      %5121 = vmatmul.f32.gmra.mxu0 %v4351
      %v5122 = vpop.f32.mrf.mxu0
      %v5123 = vadd.f32 %v5010, %v5122
      %5124 = vmatmul.f32.gmra.mxu0 %v4399
      %v5125 = vpop.f32.mrf.mxu0
      %v5126 = vadd.f32 %v5013, %v5125
      %5127 = vmatmul.f32.gmra.mxu0 %v4261
      %v5128 = vpop.f32.mrf.mxu0
      %v5129 = vadd.f32 %v5016, %v5128
      %5130 = vmatmul.f32.gmra.mxu0 %v4309
      %v5131 = vpop.f32.mrf.mxu0
      %v5132 = vadd.f32 %v5019, %v5131
      %5133 = vmatmul.f32.gmra.mxu0 %v4357
      %v5134 = vpop.f32.mrf.mxu0
      %v5135 = vadd.f32 %v5022, %v5134
      %5136 = vmatmul.f32.gmra.mxu0 %v4405
      %v5137 = vpop.f32.mrf.mxu0
      %v5138 = vadd.f32 %v5025, %v5137
      %5139 = vmatmul.f32.gmra.mxu0 %v4267
      %v5140 = vpop.f32.mrf.mxu0
      %v5141 = vadd.f32 %v5028, %v5140
      %5142 = vmatmul.f32.gmra.mxu0 %v4315
      %v5143 = vpop.f32.mrf.mxu0
      %v5144 = vadd.f32 %v5031, %v5143
      %5145 = vmatmul.f32.gmra.mxu0 %v4363
      %v5146 = vpop.f32.mrf.mxu0
      %v5147 = vadd.f32 %v5034, %v5146
      %5148 = vmatmul.f32.gmra.mxu0 %v4411
      %v5149 = vpop.f32.mrf.mxu0
      %v5150 = vadd.f32 %v5037, %v5149
      %5151 = vmatmul.f32.gmra.mxu0 %v4273
      %v5152 = vpop.f32.mrf.mxu0
      %v5153 = vadd.f32 %v5040, %v5152
      %5154 = vmatmul.f32.gmra.mxu0 %v4321
      %v5155 = vpop.f32.mrf.mxu0
      %v5156 = vadd.f32 %v5043, %v5155
      %5157 = vmatmul.f32.gmra.mxu0 %v4369
      %v5158 = vpop.f32.mrf.mxu0
      %v5159 = vadd.f32 %v5046, %v5158
      %5160 = vmatmul.f32.gmra.mxu0 %v4417
      %v5161 = vpop.f32.mrf.mxu0
      %v5162 = vadd.f32 %v5049, %v5161
      %5163 = vmatmul.f32.gmra.mxu0 %v4279
      %v5164 = vpop.f32.mrf.mxu0
      %v5165 = vadd.f32 %v5052, %v5164
      %5166 = vmatmul.f32.gmra.mxu0 %v4327
      %v5167 = vpop.f32.mrf.mxu0
      %v5168 = vadd.f32 %v5055, %v5167
      %5169 = vmatmul.f32.gmra.mxu0 %v4375
      %v5170 = vpop.f32.mrf.mxu0
      %v5171 = vadd.f32 %v5058, %v5170
      %5172 = vmatmul.f32.gmra.mxu0 %v4423
      %v5173 = vpop.f32.mrf.mxu0
      %v5174 = vadd.f32 %v5061, %v5173
      %5175 = vmatmul.f32.gmra.mxu0 %v4285
      %v5176 = vpop.f32.mrf.mxu0
      %v5177 = vadd.f32 %v5064, %v5176
      %5178 = vmatmul.f32.gmra.mxu0 %v4333
      %v5179 = vpop.f32.mrf.mxu0
      %v5180 = vadd.f32 %v5067, %v5179
      %5181 = vmatmul.f32.gmra.mxu0 %v4381
      %v5182 = vpop.f32.mrf.mxu0
      %v5183 = vadd.f32 %v5070, %v5182
      %5184 = vmatmul.f32.gmra.mxu0 %v4429
      %v5185 = vpop.f32.mrf.mxu0
      %v5186 = vadd.f32 %v5073, %v5185
      %5187 = vdwg.mxu0
      %5188 = vmatpush.msra.mxu0 %v4621
      %5189 = vmatpush.msra.mxu0 %v4619
      %5190 = vmatpush.msra.mxu0 %v4617
      %5191 = vmatpush.msra.mxu0 %v4615
      %5192 = vmatpush.msra.mxu0 %v4613
      %5193 = vmatpush.msra.mxu0 %v4611
      %5194 = vmatpush.msra.mxu0 %v4609
      %5195 = vmatpush.msra.mxu0 %v4607
      %5196 = vmatpush.msra.mxu0 %v4605
      %5197 = vmatpush.msra.mxu0 %v4603
      %5198 = vmatpush.msra.mxu0 %v4601
      %5199 = vmatpush.msra.mxu0 %v4599
      %5200 = vmatpush.msra.mxu0 %v4597
      %5201 = vmatpush.msra.mxu0 %v4595
      %5202 = vmatpush.msra.mxu0 %v4593
      %5203 = vmatpush.msra.mxu0 %v4591
      %5204 = vmatmul.f32.gmra.mxu0 %v4244
      %v5205 = vpop.f32.mrf.mxu0
      %v5206 = vadd.f32 %v5093, %v5205
      %5207 = vmatmul.f32.gmra.mxu0 %v4292
      %v5208 = vpop.f32.mrf.mxu0
      %v5209 = vadd.f32 %v5096, %v5208
      %5210 = vmatmul.f32.gmra.mxu0 %v4340
      %v5211 = vpop.f32.mrf.mxu0
      %v5212 = vadd.f32 %v5099, %v5211
      %5213 = vmatmul.f32.gmra.mxu0 %v4388
      %v5214 = vpop.f32.mrf.mxu0
      %v5215 = vadd.f32 %v5102, %v5214
      %5216 = vmatmul.f32.gmra.mxu0 %v4250
      %v5217 = vpop.f32.mrf.mxu0
      %v5218 = vadd.f32 %v5105, %v5217
      %5219 = vmatmul.f32.gmra.mxu0 %v4298
      %v5220 = vpop.f32.mrf.mxu0
      %v5221 = vadd.f32 %v5108, %v5220
      %5222 = vmatmul.f32.gmra.mxu0 %v4346
      %v5223 = vpop.f32.mrf.mxu0
      %v5224 = vadd.f32 %v5111, %v5223
      %5225 = vmatmul.f32.gmra.mxu0 %v4394
      %v5226 = vpop.f32.mrf.mxu0
      %v5227 = vadd.f32 %v5114, %v5226
      %5228 = vmatmul.f32.gmra.mxu0 %v4256
      %v5229 = vpop.f32.mrf.mxu0
      %v5230 = vadd.f32 %v5117, %v5229
      %5231 = vmatmul.f32.gmra.mxu0 %v4304
      %v5232 = vpop.f32.mrf.mxu0
      %v5233 = vadd.f32 %v5120, %v5232
      %5234 = vmatmul.f32.gmra.mxu0 %v4352
      %v5235 = vpop.f32.mrf.mxu0
      %v5236 = vadd.f32 %v5123, %v5235
      %5237 = vmatmul.f32.gmra.mxu0 %v4400
      %v5238 = vpop.f32.mrf.mxu0
      %v5239 = vadd.f32 %v5126, %v5238
      %5240 = vmatmul.f32.gmra.mxu0 %v4262
      %v5241 = vpop.f32.mrf.mxu0
      %v5242 = vadd.f32 %v5129, %v5241
      %5243 = vmatmul.f32.gmra.mxu0 %v4310
      %v5244 = vpop.f32.mrf.mxu0
      %v5245 = vadd.f32 %v5132, %v5244
      %5246 = vmatmul.f32.gmra.mxu0 %v4358
      %v5247 = vpop.f32.mrf.mxu0
      %v5248 = vadd.f32 %v5135, %v5247
      %5249 = vmatmul.f32.gmra.mxu0 %v4406
      %v5250 = vpop.f32.mrf.mxu0
      %v5251 = vadd.f32 %v5138, %v5250
      %5252 = vmatmul.f32.gmra.mxu0 %v4268
      %v5253 = vpop.f32.mrf.mxu0
      %v5254 = vadd.f32 %v5141, %v5253
      %5255 = vmatmul.f32.gmra.mxu0 %v4316
      %v5256 = vpop.f32.mrf.mxu0
      %v5257 = vadd.f32 %v5144, %v5256
      %5258 = vmatmul.f32.gmra.mxu0 %v4364
      %v5259 = vpop.f32.mrf.mxu0
      %v5260 = vadd.f32 %v5147, %v5259
      %5261 = vmatmul.f32.gmra.mxu0 %v4412
      %v5262 = vpop.f32.mrf.mxu0
      %v5263 = vadd.f32 %v5150, %v5262
      %5264 = vmatmul.f32.gmra.mxu0 %v4274
      %v5265 = vpop.f32.mrf.mxu0
      %v5266 = vadd.f32 %v5153, %v5265
      %5267 = vmatmul.f32.gmra.mxu0 %v4322
      %v5268 = vpop.f32.mrf.mxu0
      %v5269 = vadd.f32 %v5156, %v5268
      %5270 = vmatmul.f32.gmra.mxu0 %v4370
      %v5271 = vpop.f32.mrf.mxu0
      %v5272 = vadd.f32 %v5159, %v5271
      %5273 = vmatmul.f32.gmra.mxu0 %v4418
      %v5274 = vpop.f32.mrf.mxu0
      %v5275 = vadd.f32 %v5162, %v5274
      %5276 = vmatmul.f32.gmra.mxu0 %v4280
      %v5277 = vpop.f32.mrf.mxu0
      %v5278 = vadd.f32 %v5165, %v5277
      %5279 = vmatmul.f32.gmra.mxu0 %v4328
      %v5280 = vpop.f32.mrf.mxu0
      %v5281 = vadd.f32 %v5168, %v5280
      %5282 = vmatmul.f32.gmra.mxu0 %v4376
      %v5283 = vpop.f32.mrf.mxu0
      %v5284 = vadd.f32 %v5171, %v5283
      %5285 = vmatmul.f32.gmra.mxu0 %v4424
      %v5286 = vpop.f32.mrf.mxu0
      %v5287 = vadd.f32 %v5174, %v5286
      %5288 = vmatmul.f32.gmra.mxu0 %v4286
      %v5289 = vpop.f32.mrf.mxu0
      %v5290 = vadd.f32 %v5177, %v5289
      %5291 = vmatmul.f32.gmra.mxu0 %v4334
      %v5292 = vpop.f32.mrf.mxu0
      %v5293 = vadd.f32 %v5180, %v5292
      %5294 = vmatmul.f32.gmra.mxu0 %v4382
      %v5295 = vpop.f32.mrf.mxu0
      %v5296 = vadd.f32 %v5183, %v5295
      %5297 = vmatmul.f32.gmra.mxu0 %v4430
      %v5298 = vpop.f32.mrf.mxu0
      %v5299 = vadd.f32 %v5186, %v5298
      %5300 = vdwg.mxu0
      %5301 = vmatpush.msra.mxu0 %v4462
      %5302 = vmatpush.msra.mxu0 %v4460
      %5303 = vmatpush.msra.mxu0 %v4458
      %5304 = vmatpush.msra.mxu0 %v4456
      %5305 = vmatpush.msra.mxu0 %v4454
      %5306 = vmatpush.msra.mxu0 %v4452
      %5307 = vmatpush.msra.mxu0 %v4450
      %5308 = vmatpush.msra.mxu0 %v4448
      %5309 = vmatpush.msra.mxu0 %v4446
      %5310 = vmatpush.msra.mxu0 %v4444
      %5311 = vmatpush.msra.mxu0 %v4442
      %5312 = vmatpush.msra.mxu0 %v4440
      %5313 = vmatpush.msra.mxu0 %v4438
      %5314 = vmatpush.msra.mxu0 %v4436
      %5315 = vmatpush.msra.mxu0 %v4434
      %5316 = vmatpush.msra.mxu0 %v4432
      %5317 = vmatmul.f32.gmra.mxu0 %v4239
      %v5318 = vpop.f32.mrf.mxu0
      %v5319 = vadd.f32 0.0, %v5318
      %5320 = vmatmul.f32.gmra.mxu0 %v4287
      %v5321 = vpop.f32.mrf.mxu0
      %v5322 = vadd.f32 0.0, %v5321
      %5323 = vmatmul.f32.gmra.mxu0 %v4335
      %v5324 = vpop.f32.mrf.mxu0
      %v5325 = vadd.f32 0.0, %v5324
      %5326 = vmatmul.f32.gmra.mxu0 %v4383
      %v5327 = vpop.f32.mrf.mxu0
      %v5328 = vadd.f32 0.0, %v5327
      %5329 = vmatmul.f32.gmra.mxu0 %v4245
      %v5330 = vpop.f32.mrf.mxu0
      %v5331 = vadd.f32 0.0, %v5330
      %5332 = vmatmul.f32.gmra.mxu0 %v4293
      %v5333 = vpop.f32.mrf.mxu0
      %v5334 = vadd.f32 0.0, %v5333
      %5335 = vmatmul.f32.gmra.mxu0 %v4341
      %v5336 = vpop.f32.mrf.mxu0
      %v5337 = vadd.f32 0.0, %v5336
      %5338 = vmatmul.f32.gmra.mxu0 %v4389
      %v5339 = vpop.f32.mrf.mxu0
      %v5340 = vadd.f32 0.0, %v5339
      %5341 = vmatmul.f32.gmra.mxu0 %v4251
      %v5342 = vpop.f32.mrf.mxu0
      %v5343 = vadd.f32 0.0, %v5342
      %5344 = vmatmul.f32.gmra.mxu0 %v4299
      %v5345 = vpop.f32.mrf.mxu0
      %v5346 = vadd.f32 0.0, %v5345
      %5347 = vmatmul.f32.gmra.mxu0 %v4347
      %v5348 = vpop.f32.mrf.mxu0
      %v5349 = vadd.f32 0.0, %v5348
      %5350 = vmatmul.f32.gmra.mxu0 %v4395
      %v5351 = vpop.f32.mrf.mxu0
      %v5352 = vadd.f32 0.0, %v5351
      %5353 = vmatmul.f32.gmra.mxu0 %v4257
      %v5354 = vpop.f32.mrf.mxu0
      %v5355 = vadd.f32 0.0, %v5354
      %5356 = vmatmul.f32.gmra.mxu0 %v4305
      %v5357 = vpop.f32.mrf.mxu0
      %v5358 = vadd.f32 0.0, %v5357
      %5359 = vmatmul.f32.gmra.mxu0 %v4353
      %v5360 = vpop.f32.mrf.mxu0
      %v5361 = vadd.f32 0.0, %v5360
      %5362 = vmatmul.f32.gmra.mxu0 %v4401
      %v5363 = vpop.f32.mrf.mxu0
      %v5364 = vadd.f32 0.0, %v5363
      %5365 = vmatmul.f32.gmra.mxu0 %v4263
      %v5366 = vpop.f32.mrf.mxu0
      %v5367 = vadd.f32 0.0, %v5366
      %5368 = vmatmul.f32.gmra.mxu0 %v4311
      %v5369 = vpop.f32.mrf.mxu0
      %v5370 = vadd.f32 0.0, %v5369
      %5371 = vmatmul.f32.gmra.mxu0 %v4359
      %v5372 = vpop.f32.mrf.mxu0
      %v5373 = vadd.f32 0.0, %v5372
      %5374 = vmatmul.f32.gmra.mxu0 %v4407
      %v5375 = vpop.f32.mrf.mxu0
      %v5376 = vadd.f32 0.0, %v5375
      %5377 = vmatmul.f32.gmra.mxu0 %v4269
      %v5378 = vpop.f32.mrf.mxu0
      %v5379 = vadd.f32 0.0, %v5378
      %5380 = vmatmul.f32.gmra.mxu0 %v4317
      %v5381 = vpop.f32.mrf.mxu0
      %v5382 = vadd.f32 0.0, %v5381
      %5383 = vmatmul.f32.gmra.mxu0 %v4365
      %v5384 = vpop.f32.mrf.mxu0
      %v5385 = vadd.f32 0.0, %v5384
      %5386 = vmatmul.f32.gmra.mxu0 %v4413
      %v5387 = vpop.f32.mrf.mxu0
      %v5388 = vadd.f32 0.0, %v5387
      %5389 = vmatmul.f32.gmra.mxu0 %v4275
      %v5390 = vpop.f32.mrf.mxu0
      %v5391 = vadd.f32 0.0, %v5390
      %5392 = vmatmul.f32.gmra.mxu0 %v4323
      %v5393 = vpop.f32.mrf.mxu0
      %v5394 = vadd.f32 0.0, %v5393
      %5395 = vmatmul.f32.gmra.mxu0 %v4371
      %v5396 = vpop.f32.mrf.mxu0
      %v5397 = vadd.f32 0.0, %v5396
      %5398 = vmatmul.f32.gmra.mxu0 %v4419
      %v5399 = vpop.f32.mrf.mxu0
      %v5400 = vadd.f32 0.0, %v5399
      %5401 = vmatmul.f32.gmra.mxu0 %v4281
      %v5402 = vpop.f32.mrf.mxu0
      %v5403 = vadd.f32 0.0, %v5402
      %5404 = vmatmul.f32.gmra.mxu0 %v4329
      %v5405 = vpop.f32.mrf.mxu0
      %v5406 = vadd.f32 0.0, %v5405
      %5407 = vmatmul.f32.gmra.mxu0 %v4377
      %v5408 = vpop.f32.mrf.mxu0
      %v5409 = vadd.f32 0.0, %v5408
      %5410 = vmatmul.f32.gmra.mxu0 %v4425
      %v5411 = vpop.f32.mrf.mxu0
      %v5412 = vadd.f32 0.0, %v5411
      %5413 = vdwg.mxu0
      %5414 = vmatpush.msra.mxu0 %v4494
      %5415 = vmatpush.msra.mxu0 %v4492
      %5416 = vmatpush.msra.mxu0 %v4490
      %5417 = vmatpush.msra.mxu0 %v4488
      %5418 = vmatpush.msra.mxu0 %v4486
      %5419 = vmatpush.msra.mxu0 %v4484
      %5420 = vmatpush.msra.mxu0 %v4482
      %5421 = vmatpush.msra.mxu0 %v4480
      %5422 = vmatpush.msra.mxu0 %v4478
      %5423 = vmatpush.msra.mxu0 %v4476
      %5424 = vmatpush.msra.mxu0 %v4474
      %5425 = vmatpush.msra.mxu0 %v4472
      %5426 = vmatpush.msra.mxu0 %v4470
      %5427 = vmatpush.msra.mxu0 %v4468
      %5428 = vmatpush.msra.mxu0 %v4466
      %5429 = vmatpush.msra.mxu0 %v4464
      %5430 = vmatmul.f32.gmra.mxu0 %v4240
      %v5431 = vpop.f32.mrf.mxu0
      %v5432 = vadd.f32 %v5319, %v5431
      %5433 = vmatmul.f32.gmra.mxu0 %v4288
      %v5434 = vpop.f32.mrf.mxu0
      %v5435 = vadd.f32 %v5322, %v5434
      %5436 = vmatmul.f32.gmra.mxu0 %v4336
      %v5437 = vpop.f32.mrf.mxu0
      %v5438 = vadd.f32 %v5325, %v5437
      %5439 = vmatmul.f32.gmra.mxu0 %v4384
      %v5440 = vpop.f32.mrf.mxu0
      %v5441 = vadd.f32 %v5328, %v5440
      %5442 = vmatmul.f32.gmra.mxu0 %v4246
      %v5443 = vpop.f32.mrf.mxu0
      %v5444 = vadd.f32 %v5331, %v5443
      %5445 = vmatmul.f32.gmra.mxu0 %v4294
      %v5446 = vpop.f32.mrf.mxu0
      %v5447 = vadd.f32 %v5334, %v5446
      %5448 = vmatmul.f32.gmra.mxu0 %v4342
      %v5449 = vpop.f32.mrf.mxu0
      %v5450 = vadd.f32 %v5337, %v5449
      %5451 = vmatmul.f32.gmra.mxu0 %v4390
      %v5452 = vpop.f32.mrf.mxu0
      %v5453 = vadd.f32 %v5340, %v5452
      %5454 = vmatmul.f32.gmra.mxu0 %v4252
      %v5455 = vpop.f32.mrf.mxu0
      %v5456 = vadd.f32 %v5343, %v5455
      %5457 = vmatmul.f32.gmra.mxu0 %v4300
      %v5458 = vpop.f32.mrf.mxu0
      %v5459 = vadd.f32 %v5346, %v5458
      %5460 = vmatmul.f32.gmra.mxu0 %v4348
      %v5461 = vpop.f32.mrf.mxu0
      %v5462 = vadd.f32 %v5349, %v5461
      %5463 = vmatmul.f32.gmra.mxu0 %v4396
      %v5464 = vpop.f32.mrf.mxu0
      %v5465 = vadd.f32 %v5352, %v5464
      %5466 = vmatmul.f32.gmra.mxu0 %v4258
      %v5467 = vpop.f32.mrf.mxu0
      %v5468 = vadd.f32 %v5355, %v5467
      %5469 = vmatmul.f32.gmra.mxu0 %v4306
      %v5470 = vpop.f32.mrf.mxu0
      %v5471 = vadd.f32 %v5358, %v5470
      %5472 = vmatmul.f32.gmra.mxu0 %v4354
      %v5473 = vpop.f32.mrf.mxu0
      %v5474 = vadd.f32 %v5361, %v5473
      %5475 = vmatmul.f32.gmra.mxu0 %v4402
      %v5476 = vpop.f32.mrf.mxu0
      %v5477 = vadd.f32 %v5364, %v5476
      %5478 = vmatmul.f32.gmra.mxu0 %v4264
      %v5479 = vpop.f32.mrf.mxu0
      %v5480 = vadd.f32 %v5367, %v5479
      %5481 = vmatmul.f32.gmra.mxu0 %v4312
      %v5482 = vpop.f32.mrf.mxu0
      %v5483 = vadd.f32 %v5370, %v5482
      %5484 = vmatmul.f32.gmra.mxu0 %v4360
      %v5485 = vpop.f32.mrf.mxu0
      %v5486 = vadd.f32 %v5373, %v5485
      %5487 = vmatmul.f32.gmra.mxu0 %v4408
      %v5488 = vpop.f32.mrf.mxu0
      %v5489 = vadd.f32 %v5376, %v5488
      %5490 = vmatmul.f32.gmra.mxu0 %v4270
      %v5491 = vpop.f32.mrf.mxu0
      %v5492 = vadd.f32 %v5379, %v5491
      %5493 = vmatmul.f32.gmra.mxu0 %v4318
      %v5494 = vpop.f32.mrf.mxu0
      %v5495 = vadd.f32 %v5382, %v5494
      %5496 = vmatmul.f32.gmra.mxu0 %v4366
      %v5497 = vpop.f32.mrf.mxu0
      %v5498 = vadd.f32 %v5385, %v5497
      %5499 = vmatmul.f32.gmra.mxu0 %v4414
      %v5500 = vpop.f32.mrf.mxu0
      %v5501 = vadd.f32 %v5388, %v5500
      %5502 = vmatmul.f32.gmra.mxu0 %v4276
      %v5503 = vpop.f32.mrf.mxu0
      %v5504 = vadd.f32 %v5391, %v5503
      %5505 = vmatmul.f32.gmra.mxu0 %v4324
      %v5506 = vpop.f32.mrf.mxu0
      %v5507 = vadd.f32 %v5394, %v5506
      %5508 = vmatmul.f32.gmra.mxu0 %v4372
      %v5509 = vpop.f32.mrf.mxu0
      %v5510 = vadd.f32 %v5397, %v5509
      %5511 = vmatmul.f32.gmra.mxu0 %v4420
      %v5512 = vpop.f32.mrf.mxu0
      %v5513 = vadd.f32 %v5400, %v5512
      %5514 = vmatmul.f32.gmra.mxu0 %v4282
      %v5515 = vpop.f32.mrf.mxu0
      %v5516 = vadd.f32 %v5403, %v5515
      %5517 = vmatmul.f32.gmra.mxu0 %v4330
      %v5518 = vpop.f32.mrf.mxu0
      %v5519 = vadd.f32 %v5406, %v5518
      %5520 = vmatmul.f32.gmra.mxu0 %v4378
      %v5521 = vpop.f32.mrf.mxu0
      %v5522 = vadd.f32 %v5409, %v5521
      %5523 = vmatmul.f32.gmra.mxu0 %v4426
      %v5524 = vpop.f32.mrf.mxu0
      %v5525 = vadd.f32 %v5412, %v5524
      %5526 = vdwg.mxu0
      %5527 = vmatpush.msra.mxu0 %v4526
      %5528 = vmatpush.msra.mxu0 %v4524
      %5529 = vmatpush.msra.mxu0 %v4522
      %5530 = vmatpush.msra.mxu0 %v4520
      %5531 = vmatpush.msra.mxu0 %v4518
      %5532 = vmatpush.msra.mxu0 %v4516
      %5533 = vmatpush.msra.mxu0 %v4514
      %5534 = vmatpush.msra.mxu0 %v4512
      %5535 = vmatpush.msra.mxu0 %v4510
      %5536 = vmatpush.msra.mxu0 %v4508
      %5537 = vmatpush.msra.mxu0 %v4506
      %5538 = vmatpush.msra.mxu0 %v4504
      %5539 = vmatpush.msra.mxu0 %v4502
      %5540 = vmatpush.msra.mxu0 %v4500
      %5541 = vmatpush.msra.mxu0 %v4498
      %5542 = vmatpush.msra.mxu0 %v4496
      %5543 = vmatmul.f32.gmra.mxu0 %v4241
      %v5544 = vpop.f32.mrf.mxu0
      %v5545 = vadd.f32 %v5432, %v5544
      %5546 = vmatmul.f32.gmra.mxu0 %v4289
      %v5547 = vpop.f32.mrf.mxu0
      %v5548 = vadd.f32 %v5435, %v5547
      %5549 = vmatmul.f32.gmra.mxu0 %v4337
      %v5550 = vpop.f32.mrf.mxu0
      %v5551 = vadd.f32 %v5438, %v5550
      %5552 = vmatmul.f32.gmra.mxu0 %v4385
      %v5553 = vpop.f32.mrf.mxu0
      %v5554 = vadd.f32 %v5441, %v5553
      %5555 = vmatmul.f32.gmra.mxu0 %v4247
      %v5556 = vpop.f32.mrf.mxu0
      %v5557 = vadd.f32 %v5444, %v5556
      %5558 = vmatmul.f32.gmra.mxu0 %v4295
      %v5559 = vpop.f32.mrf.mxu0
      %v5560 = vadd.f32 %v5447, %v5559
      %5561 = vmatmul.f32.gmra.mxu0 %v4343
      %v5562 = vpop.f32.mrf.mxu0
      %v5563 = vadd.f32 %v5450, %v5562
      %5564 = vmatmul.f32.gmra.mxu0 %v4391
      %v5565 = vpop.f32.mrf.mxu0
      %v5566 = vadd.f32 %v5453, %v5565
      %5567 = vmatmul.f32.gmra.mxu0 %v4253
      %v5568 = vpop.f32.mrf.mxu0
      %v5569 = vadd.f32 %v5456, %v5568
      %5570 = vmatmul.f32.gmra.mxu0 %v4301
      %v5571 = vpop.f32.mrf.mxu0
      %v5572 = vadd.f32 %v5459, %v5571
      %5573 = vmatmul.f32.gmra.mxu0 %v4349
      %v5574 = vpop.f32.mrf.mxu0
      %v5575 = vadd.f32 %v5462, %v5574
      %5576 = vmatmul.f32.gmra.mxu0 %v4397
      %v5577 = vpop.f32.mrf.mxu0
      %v5578 = vadd.f32 %v5465, %v5577
      %5579 = vmatmul.f32.gmra.mxu0 %v4259
      %v5580 = vpop.f32.mrf.mxu0
      %v5581 = vadd.f32 %v5468, %v5580
      %5582 = vmatmul.f32.gmra.mxu0 %v4307
      %v5583 = vpop.f32.mrf.mxu0
      %v5584 = vadd.f32 %v5471, %v5583
      %5585 = vmatmul.f32.gmra.mxu0 %v4355
      %v5586 = vpop.f32.mrf.mxu0
      %v5587 = vadd.f32 %v5474, %v5586
      %5588 = vmatmul.f32.gmra.mxu0 %v4403
      %v5589 = vpop.f32.mrf.mxu0
      %v5590 = vadd.f32 %v5477, %v5589
      %5591 = vmatmul.f32.gmra.mxu0 %v4265
      %v5592 = vpop.f32.mrf.mxu0
      %v5593 = vadd.f32 %v5480, %v5592
      %5594 = vmatmul.f32.gmra.mxu0 %v4313
      %v5595 = vpop.f32.mrf.mxu0
      %v5596 = vadd.f32 %v5483, %v5595
      %5597 = vmatmul.f32.gmra.mxu0 %v4361
      %v5598 = vpop.f32.mrf.mxu0
      %v5599 = vadd.f32 %v5486, %v5598
      %5600 = vmatmul.f32.gmra.mxu0 %v4409
      %v5601 = vpop.f32.mrf.mxu0
      %v5602 = vadd.f32 %v5489, %v5601
      %5603 = vmatmul.f32.gmra.mxu0 %v4271
      %v5604 = vpop.f32.mrf.mxu0
      %v5605 = vadd.f32 %v5492, %v5604
      %5606 = vmatmul.f32.gmra.mxu0 %v4319
      %v5607 = vpop.f32.mrf.mxu0
      %v5608 = vadd.f32 %v5495, %v5607
      %5609 = vmatmul.f32.gmra.mxu0 %v4367
      %v5610 = vpop.f32.mrf.mxu0
      %v5611 = vadd.f32 %v5498, %v5610
      %5612 = vmatmul.f32.gmra.mxu0 %v4415
      %v5613 = vpop.f32.mrf.mxu0
      %v5614 = vadd.f32 %v5501, %v5613
      %5615 = vmatmul.f32.gmra.mxu0 %v4277
      %v5616 = vpop.f32.mrf.mxu0
      %v5617 = vadd.f32 %v5504, %v5616
      %5618 = vmatmul.f32.gmra.mxu0 %v4325
      %v5619 = vpop.f32.mrf.mxu0
      %v5620 = vadd.f32 %v5507, %v5619
      %5621 = vmatmul.f32.gmra.mxu0 %v4373
      %v5622 = vpop.f32.mrf.mxu0
      %v5623 = vadd.f32 %v5510, %v5622
      %5624 = vmatmul.f32.gmra.mxu0 %v4421
      %v5625 = vpop.f32.mrf.mxu0
      %v5626 = vadd.f32 %v5513, %v5625
      %5627 = vmatmul.f32.gmra.mxu0 %v4283
      %v5628 = vpop.f32.mrf.mxu0
      %v5629 = vadd.f32 %v5516, %v5628
      %5630 = vmatmul.f32.gmra.mxu0 %v4331
      %v5631 = vpop.f32.mrf.mxu0
      %v5632 = vadd.f32 %v5519, %v5631
      %5633 = vmatmul.f32.gmra.mxu0 %v4379
      %v5634 = vpop.f32.mrf.mxu0
      %v5635 = vadd.f32 %v5522, %v5634
      %5636 = vmatmul.f32.gmra.mxu0 %v4427
      %v5637 = vpop.f32.mrf.mxu0
      %v5638 = vadd.f32 %v5525, %v5637
      %5639 = vdwg.mxu0
      %5640 = vmatpush.msra.mxu0 %v4558
      %5641 = vmatpush.msra.mxu0 %v4556
      %5642 = vmatpush.msra.mxu0 %v4554
      %5643 = vmatpush.msra.mxu0 %v4552
      %5644 = vmatpush.msra.mxu0 %v4550
      %5645 = vmatpush.msra.mxu0 %v4548
      %5646 = vmatpush.msra.mxu0 %v4546
      %5647 = vmatpush.msra.mxu0 %v4544
      %5648 = vmatpush.msra.mxu0 %v4542
      %5649 = vmatpush.msra.mxu0 %v4540
      %5650 = vmatpush.msra.mxu0 %v4538
      %5651 = vmatpush.msra.mxu0 %v4536
      %5652 = vmatpush.msra.mxu0 %v4534
      %5653 = vmatpush.msra.mxu0 %v4532
      %5654 = vmatpush.msra.mxu0 %v4530
      %5655 = vmatpush.msra.mxu0 %v4528
      %5656 = vmatmul.f32.gmra.mxu0 %v4242
      %v5657 = vpop.f32.mrf.mxu0
      %v5658 = vadd.f32 %v5545, %v5657
      %5659 = vmatmul.f32.gmra.mxu0 %v4290
      %v5660 = vpop.f32.mrf.mxu0
      %v5661 = vadd.f32 %v5548, %v5660
      %5662 = vmatmul.f32.gmra.mxu0 %v4338
      %v5663 = vpop.f32.mrf.mxu0
      %v5664 = vadd.f32 %v5551, %v5663
      %5665 = vmatmul.f32.gmra.mxu0 %v4386
      %v5666 = vpop.f32.mrf.mxu0
      %v5667 = vadd.f32 %v5554, %v5666
      %5668 = vmatmul.f32.gmra.mxu0 %v4248
      %v5669 = vpop.f32.mrf.mxu0
      %v5670 = vadd.f32 %v5557, %v5669
      %5671 = vmatmul.f32.gmra.mxu0 %v4296
      %v5672 = vpop.f32.mrf.mxu0
      %v5673 = vadd.f32 %v5560, %v5672
      %5674 = vmatmul.f32.gmra.mxu0 %v4344
      %v5675 = vpop.f32.mrf.mxu0
      %v5676 = vadd.f32 %v5563, %v5675
      %5677 = vmatmul.f32.gmra.mxu0 %v4392
      %v5678 = vpop.f32.mrf.mxu0
      %v5679 = vadd.f32 %v5566, %v5678
      %5680 = vmatmul.f32.gmra.mxu0 %v4254
      %v5681 = vpop.f32.mrf.mxu0
      %v5682 = vadd.f32 %v5569, %v5681
      %5683 = vmatmul.f32.gmra.mxu0 %v4302
      %v5684 = vpop.f32.mrf.mxu0
      %v5685 = vadd.f32 %v5572, %v5684
      %5686 = vmatmul.f32.gmra.mxu0 %v4350
      %v5687 = vpop.f32.mrf.mxu0
      %v5688 = vadd.f32 %v5575, %v5687
      %5689 = vmatmul.f32.gmra.mxu0 %v4398
      %v5690 = vpop.f32.mrf.mxu0
      %v5691 = vadd.f32 %v5578, %v5690
      %5692 = vmatmul.f32.gmra.mxu0 %v4260
      %v5693 = vpop.f32.mrf.mxu0
      %v5694 = vadd.f32 %v5581, %v5693
      %5695 = vmatmul.f32.gmra.mxu0 %v4308
      %v5696 = vpop.f32.mrf.mxu0
      %v5697 = vadd.f32 %v5584, %v5696
      %5698 = vmatmul.f32.gmra.mxu0 %v4356
      %v5699 = vpop.f32.mrf.mxu0
      %v5700 = vadd.f32 %v5587, %v5699
      %5701 = vmatmul.f32.gmra.mxu0 %v4404
      %v5702 = vpop.f32.mrf.mxu0
      %v5703 = vadd.f32 %v5590, %v5702
      %5704 = vmatmul.f32.gmra.mxu0 %v4266
      %v5705 = vpop.f32.mrf.mxu0
      %v5706 = vadd.f32 %v5593, %v5705
      %5707 = vmatmul.f32.gmra.mxu0 %v4314
      %v5708 = vpop.f32.mrf.mxu0
      %v5709 = vadd.f32 %v5596, %v5708
      %5710 = vmatmul.f32.gmra.mxu0 %v4362
      %v5711 = vpop.f32.mrf.mxu0
      %v5712 = vadd.f32 %v5599, %v5711
      %5713 = vmatmul.f32.gmra.mxu0 %v4410
      %v5714 = vpop.f32.mrf.mxu0
      %v5715 = vadd.f32 %v5602, %v5714
      %5716 = vmatmul.f32.gmra.mxu0 %v4272
      %v5717 = vpop.f32.mrf.mxu0
      %v5718 = vadd.f32 %v5605, %v5717
      %5719 = vmatmul.f32.gmra.mxu0 %v4320
      %v5720 = vpop.f32.mrf.mxu0
      %v5721 = vadd.f32 %v5608, %v5720
      %5722 = vmatmul.f32.gmra.mxu0 %v4368
      %v5723 = vpop.f32.mrf.mxu0
      %v5724 = vadd.f32 %v5611, %v5723
      %5725 = vmatmul.f32.gmra.mxu0 %v4416
      %v5726 = vpop.f32.mrf.mxu0
      %v5727 = vadd.f32 %v5614, %v5726
      %5728 = vmatmul.f32.gmra.mxu0 %v4278
      %v5729 = vpop.f32.mrf.mxu0
      %v5730 = vadd.f32 %v5617, %v5729
      %5731 = vmatmul.f32.gmra.mxu0 %v4326
      %v5732 = vpop.f32.mrf.mxu0
      %v5733 = vadd.f32 %v5620, %v5732
      %5734 = vmatmul.f32.gmra.mxu0 %v4374
      %v5735 = vpop.f32.mrf.mxu0
      %v5736 = vadd.f32 %v5623, %v5735
      %5737 = vmatmul.f32.gmra.mxu0 %v4422
      %v5738 = vpop.f32.mrf.mxu0
      %v5739 = vadd.f32 %v5626, %v5738
      %5740 = vmatmul.f32.gmra.mxu0 %v4284
      %v5741 = vpop.f32.mrf.mxu0
      %v5742 = vadd.f32 %v5629, %v5741
      %5743 = vmatmul.f32.gmra.mxu0 %v4332
      %v5744 = vpop.f32.mrf.mxu0
      %v5745 = vadd.f32 %v5632, %v5744
      %5746 = vmatmul.f32.gmra.mxu0 %v4380
      %v5747 = vpop.f32.mrf.mxu0
      %v5748 = vadd.f32 %v5635, %v5747
      %5749 = vmatmul.f32.gmra.mxu0 %v4428
      %v5750 = vpop.f32.mrf.mxu0
      %v5751 = vadd.f32 %v5638, %v5750
      %5752 = vdwg.mxu0
      %5753 = vmatpush.msra.mxu0 %v4590
      %5754 = vmatpush.msra.mxu0 %v4588
      %5755 = vmatpush.msra.mxu0 %v4586
      %5756 = vmatpush.msra.mxu0 %v4584
      %5757 = vmatpush.msra.mxu0 %v4582
      %5758 = vmatpush.msra.mxu0 %v4580
      %5759 = vmatpush.msra.mxu0 %v4578
      %5760 = vmatpush.msra.mxu0 %v4576
      %5761 = vmatpush.msra.mxu0 %v4574
      %5762 = vmatpush.msra.mxu0 %v4572
      %5763 = vmatpush.msra.mxu0 %v4570
      %5764 = vmatpush.msra.mxu0 %v4568
      %5765 = vmatpush.msra.mxu0 %v4566
      %5766 = vmatpush.msra.mxu0 %v4564
      %5767 = vmatpush.msra.mxu0 %v4562
      %5768 = vmatpush.msra.mxu0 %v4560
      %5769 = vmatmul.f32.gmra.mxu0 %v4243
      %v5770 = vpop.f32.mrf.mxu0
      %v5771 = vadd.f32 %v5658, %v5770
      %5772 = vmatmul.f32.gmra.mxu0 %v4291
      %v5773 = vpop.f32.mrf.mxu0
      %v5774 = vadd.f32 %v5661, %v5773
      %5775 = vmatmul.f32.gmra.mxu0 %v4339
      %v5776 = vpop.f32.mrf.mxu0
      %v5777 = vadd.f32 %v5664, %v5776
      %5778 = vmatmul.f32.gmra.mxu0 %v4387
      %v5779 = vpop.f32.mrf.mxu0
      %v5780 = vadd.f32 %v5667, %v5779
      %5781 = vmatmul.f32.gmra.mxu0 %v4249
      %v5782 = vpop.f32.mrf.mxu0
      %v5783 = vadd.f32 %v5670, %v5782
      %5784 = vmatmul.f32.gmra.mxu0 %v4297
      %v5785 = vpop.f32.mrf.mxu0
      %v5786 = vadd.f32 %v5673, %v5785
      %5787 = vmatmul.f32.gmra.mxu0 %v4345
      %v5788 = vpop.f32.mrf.mxu0
      %v5789 = vadd.f32 %v5676, %v5788
      %5790 = vmatmul.f32.gmra.mxu0 %v4393
      %v5791 = vpop.f32.mrf.mxu0
      %v5792 = vadd.f32 %v5679, %v5791
      %5793 = vmatmul.f32.gmra.mxu0 %v4255
      %v5794 = vpop.f32.mrf.mxu0
      %v5795 = vadd.f32 %v5682, %v5794
      %5796 = vmatmul.f32.gmra.mxu0 %v4303
      %v5797 = vpop.f32.mrf.mxu0
      %v5798 = vadd.f32 %v5685, %v5797
      %5799 = vmatmul.f32.gmra.mxu0 %v4351
      %v5800 = vpop.f32.mrf.mxu0
      %v5801 = vadd.f32 %v5688, %v5800
      %5802 = vmatmul.f32.gmra.mxu0 %v4399
      %v5803 = vpop.f32.mrf.mxu0
      %v5804 = vadd.f32 %v5691, %v5803
      %5805 = vmatmul.f32.gmra.mxu0 %v4261
      %v5806 = vpop.f32.mrf.mxu0
      %v5807 = vadd.f32 %v5694, %v5806
      %5808 = vmatmul.f32.gmra.mxu0 %v4309
      %v5809 = vpop.f32.mrf.mxu0
      %v5810 = vadd.f32 %v5697, %v5809
      %5811 = vmatmul.f32.gmra.mxu0 %v4357
      %v5812 = vpop.f32.mrf.mxu0
      %v5813 = vadd.f32 %v5700, %v5812
      %5814 = vmatmul.f32.gmra.mxu0 %v4405
      %v5815 = vpop.f32.mrf.mxu0
      %v5816 = vadd.f32 %v5703, %v5815
      %5817 = vmatmul.f32.gmra.mxu0 %v4267
      %v5818 = vpop.f32.mrf.mxu0
      %v5819 = vadd.f32 %v5706, %v5818
      %5820 = vmatmul.f32.gmra.mxu0 %v4315
      %v5821 = vpop.f32.mrf.mxu0
      %v5822 = vadd.f32 %v5709, %v5821
      %5823 = vmatmul.f32.gmra.mxu0 %v4363
      %v5824 = vpop.f32.mrf.mxu0
      %v5825 = vadd.f32 %v5712, %v5824
      %5826 = vmatmul.f32.gmra.mxu0 %v4411
      %v5827 = vpop.f32.mrf.mxu0
      %v5828 = vadd.f32 %v5715, %v5827
      %5829 = vmatmul.f32.gmra.mxu0 %v4273
      %v5830 = vpop.f32.mrf.mxu0
      %v5831 = vadd.f32 %v5718, %v5830
      %5832 = vmatmul.f32.gmra.mxu0 %v4321
      %v5833 = vpop.f32.mrf.mxu0
      %v5834 = vadd.f32 %v5721, %v5833
      %5835 = vmatmul.f32.gmra.mxu0 %v4369
      %v5836 = vpop.f32.mrf.mxu0
      %v5837 = vadd.f32 %v5724, %v5836
      %5838 = vmatmul.f32.gmra.mxu0 %v4417
      %v5839 = vpop.f32.mrf.mxu0
      %v5840 = vadd.f32 %v5727, %v5839
      %5841 = vmatmul.f32.gmra.mxu0 %v4279
      %v5842 = vpop.f32.mrf.mxu0
      %v5843 = vadd.f32 %v5730, %v5842
      %5844 = vmatmul.f32.gmra.mxu0 %v4327
      %v5845 = vpop.f32.mrf.mxu0
      %v5846 = vadd.f32 %v5733, %v5845
      %5847 = vmatmul.f32.gmra.mxu0 %v4375
      %v5848 = vpop.f32.mrf.mxu0
      %v5849 = vadd.f32 %v5736, %v5848
      %5850 = vmatmul.f32.gmra.mxu0 %v4423
      %v5851 = vpop.f32.mrf.mxu0
      %v5852 = vadd.f32 %v5739, %v5851
      %5853 = vmatmul.f32.gmra.mxu0 %v4285
      %v5854 = vpop.f32.mrf.mxu0
      %v5855 = vadd.f32 %v5742, %v5854
      %5856 = vmatmul.f32.gmra.mxu0 %v4333
      %v5857 = vpop.f32.mrf.mxu0
      %v5858 = vadd.f32 %v5745, %v5857
      %5859 = vmatmul.f32.gmra.mxu0 %v4381
      %v5860 = vpop.f32.mrf.mxu0
      %v5861 = vadd.f32 %v5748, %v5860
      %5862 = vmatmul.f32.gmra.mxu0 %v4429
      %v5863 = vpop.f32.mrf.mxu0
      %v5864 = vadd.f32 %v5751, %v5863
      %5865 = vdwg.mxu0
      %5866 = vmatpush.msra.mxu0 %v4622
      %5867 = vmatpush.msra.mxu0 %v4620
      %5868 = vmatpush.msra.mxu0 %v4618
      %5869 = vmatpush.msra.mxu0 %v4616
      %5870 = vmatpush.msra.mxu0 %v4614
      %5871 = vmatpush.msra.mxu0 %v4612
      %5872 = vmatpush.msra.mxu0 %v4610
      %5873 = vmatpush.msra.mxu0 %v4608
      %5874 = vmatpush.msra.mxu0 %v4606
      %5875 = vmatpush.msra.mxu0 %v4604
      %5876 = vmatpush.msra.mxu0 %v4602
      %5877 = vmatpush.msra.mxu0 %v4600
      %5878 = vmatpush.msra.mxu0 %v4598
      %5879 = vmatpush.msra.mxu0 %v4596
      %5880 = vmatpush.msra.mxu0 %v4594
      %5881 = vmatpush.msra.mxu0 %v4592
      %5882 = vmatmul.f32.gmra.mxu0 %v4244
      %v5883 = vpop.f32.mrf.mxu0
      %v5884 = vadd.f32 %v5771, %v5883
      %5885 = vmatmul.f32.gmra.mxu0 %v4292
      %v5886 = vpop.f32.mrf.mxu0
      %v5887 = vadd.f32 %v5774, %v5886
      %5888 = vmatmul.f32.gmra.mxu0 %v4340
      %v5889 = vpop.f32.mrf.mxu0
      %v5890 = vadd.f32 %v5777, %v5889
      %5891 = vmatmul.f32.gmra.mxu0 %v4388
      %v5892 = vpop.f32.mrf.mxu0
      %v5893 = vadd.f32 %v5780, %v5892
      %5894 = vmatmul.f32.gmra.mxu0 %v4250
      %v5895 = vpop.f32.mrf.mxu0
      %v5896 = vadd.f32 %v5783, %v5895
      %5897 = vmatmul.f32.gmra.mxu0 %v4298
      %v5898 = vpop.f32.mrf.mxu0
      %v5899 = vadd.f32 %v5786, %v5898
      %5900 = vmatmul.f32.gmra.mxu0 %v4346
      %v5901 = vpop.f32.mrf.mxu0
      %v5902 = vadd.f32 %v5789, %v5901
      %5903 = vmatmul.f32.gmra.mxu0 %v4394
      %v5904 = vpop.f32.mrf.mxu0
      %v5905 = vadd.f32 %v5792, %v5904
      %5906 = vmatmul.f32.gmra.mxu0 %v4256
      %v5907 = vpop.f32.mrf.mxu0
      %v5908 = vadd.f32 %v5795, %v5907
      %5909 = vmatmul.f32.gmra.mxu0 %v4304
      %v5910 = vpop.f32.mrf.mxu0
      %v5911 = vadd.f32 %v5798, %v5910
      %5912 = vmatmul.f32.gmra.mxu0 %v4352
      %v5913 = vpop.f32.mrf.mxu0
      %v5914 = vadd.f32 %v5801, %v5913
      %5915 = vmatmul.f32.gmra.mxu0 %v4400
      %v5916 = vpop.f32.mrf.mxu0
      %v5917 = vadd.f32 %v5804, %v5916
      %5918 = vmatmul.f32.gmra.mxu0 %v4262
      %v5919 = vpop.f32.mrf.mxu0
      %v5920 = vadd.f32 %v5807, %v5919
      %5921 = vmatmul.f32.gmra.mxu0 %v4310
      %v5922 = vpop.f32.mrf.mxu0
      %v5923 = vadd.f32 %v5810, %v5922
      %5924 = vmatmul.f32.gmra.mxu0 %v4358
      %v5925 = vpop.f32.mrf.mxu0
      %v5926 = vadd.f32 %v5813, %v5925
      %5927 = vmatmul.f32.gmra.mxu0 %v4406
      %v5928 = vpop.f32.mrf.mxu0
      %v5929 = vadd.f32 %v5816, %v5928
      %5930 = vmatmul.f32.gmra.mxu0 %v4268
      %v5931 = vpop.f32.mrf.mxu0
      %v5932 = vadd.f32 %v5819, %v5931
      %5933 = vmatmul.f32.gmra.mxu0 %v4316
      %v5934 = vpop.f32.mrf.mxu0
      %v5935 = vadd.f32 %v5822, %v5934
      %5936 = vmatmul.f32.gmra.mxu0 %v4364
      %v5937 = vpop.f32.mrf.mxu0
      %v5938 = vadd.f32 %v5825, %v5937
      %5939 = vmatmul.f32.gmra.mxu0 %v4412
      %v5940 = vpop.f32.mrf.mxu0
      %v5941 = vadd.f32 %v5828, %v5940
      %5942 = vmatmul.f32.gmra.mxu0 %v4274
      %v5943 = vpop.f32.mrf.mxu0
      %v5944 = vadd.f32 %v5831, %v5943
      %5945 = vmatmul.f32.gmra.mxu0 %v4322
      %v5946 = vpop.f32.mrf.mxu0
      %v5947 = vadd.f32 %v5834, %v5946
      %5948 = vmatmul.f32.gmra.mxu0 %v4370
      %v5949 = vpop.f32.mrf.mxu0
      %v5950 = vadd.f32 %v5837, %v5949
      %5951 = vmatmul.f32.gmra.mxu0 %v4418
      %v5952 = vpop.f32.mrf.mxu0
      %v5953 = vadd.f32 %v5840, %v5952
      %5954 = vmatmul.f32.gmra.mxu0 %v4280
      %v5955 = vpop.f32.mrf.mxu0
      %v5956 = vadd.f32 %v5843, %v5955
      %5957 = vmatmul.f32.gmra.mxu0 %v4328
      %v5958 = vpop.f32.mrf.mxu0
      %v5959 = vadd.f32 %v5846, %v5958
      %5960 = vmatmul.f32.gmra.mxu0 %v4376
      %v5961 = vpop.f32.mrf.mxu0
      %v5962 = vadd.f32 %v5849, %v5961
      %5963 = vmatmul.f32.gmra.mxu0 %v4424
      %v5964 = vpop.f32.mrf.mxu0
      %v5965 = vadd.f32 %v5852, %v5964
      %5966 = vmatmul.f32.gmra.mxu0 %v4286
      %v5967 = vpop.f32.mrf.mxu0
      %v5968 = vadd.f32 %v5855, %v5967
      %5969 = vmatmul.f32.gmra.mxu0 %v4334
      %v5970 = vpop.f32.mrf.mxu0
      %v5971 = vadd.f32 %v5858, %v5970
      %5972 = vmatmul.f32.gmra.mxu0 %v4382
      %v5973 = vpop.f32.mrf.mxu0
      %v5974 = vadd.f32 %v5861, %v5973
      %5975 = vmatmul.f32.gmra.mxu0 %v4430
      %v5976 = vpop.f32.mrf.mxu0
      %v5977 = vadd.f32 %v5864, %v5976
      %5978 = vdwg.mxu0
      %v5979 = vld [vmem:[%s4] sm:$0xff]
      %v5980 = vld [vmem:[%s4 + $0x8] sm:$0xff]
      %v5981 = vld [vmem:[%s4 + $0x10] sm:$0xff]
      %v5982 = vld [vmem:[%s4 + $0x18] sm:$0xff]
      %v5983 = vld [vmem:[%s4 + $0x20] sm:$0xff]
      %v5984 = vld [vmem:[%s4 + $0x28] sm:$0xff]
      %v5985 = vld [vmem:[%s4 + $0x30] sm:$0xff]
      %v5986 = vld [vmem:[%s4 + $0x38] sm:$0xff]
      %v5987 = vld [vmem:[%s4 + $0x40] sm:$0xff]
      %v5988 = vld [vmem:[%s4 + $0x48] sm:$0xff]
      %v5989 = vld [vmem:[%s4 + $0x50] sm:$0xff]
      %v5990 = vld [vmem:[%s4 + $0x58] sm:$0xff]
      %v5991 = vld [vmem:[%s4 + $0x60] sm:$0xff]
      %v5992 = vld [vmem:[%s4 + $0x68] sm:$0xff]
      %v5993 = vld [vmem:[%s4 + $0x70] sm:$0xff]
      %v5994 = vld [vmem:[%s4 + $0x78] sm:$0xff]
      %v5995 = vld [vmem:[%s5] sm:$0xff]
      %v5996 = vld [vmem:[%s5 + $0x8] sm:$0xff]
      %v5997 = vld [vmem:[%s5 + $0x10] sm:$0xff]
      %v5998 = vld [vmem:[%s5 + $0x18] sm:$0xff]
      %v5999 = vld [vmem:[%s6] sm:$0xff]
      %v6000 = vld [vmem:[%s6 + $0x8] sm:$0xff]
      %v6001 = vld [vmem:[%s6 + $0x10] sm:$0xff]
      %v6002 = vld [vmem:[%s6 + $0x18] sm:$0xff]
      %v6003 = vld [vmem:[%s6 + $0x20] sm:$0xff]
      %v6004 = vld [vmem:[%s6 + $0x28] sm:$0xff]
      %v6005 = vld [vmem:[%s6 + $0x30] sm:$0xff]
      %v6006 = vld [vmem:[%s6 + $0x38] sm:$0xff]
      %v6007 = vld [vmem:[%s6 + $0x40] sm:$0xff]
      %v6008 = vld [vmem:[%s6 + $0x48] sm:$0xff]
      %v6009 = vld [vmem:[%s6 + $0x50] sm:$0xff]
      %v6010 = vld [vmem:[%s6 + $0x58] sm:$0xff]
      %v6011 = vld [vmem:[%s6 + $0x60] sm:$0xff]
      %v6012 = vld [vmem:[%s6 + $0x68] sm:$0xff]
      %v6013 = vld [vmem:[%s6 + $0x70] sm:$0xff]
      %v6014 = vld [vmem:[%s6 + $0x78] sm:$0xff]
      %6023 = vrot.lane.b32.xlu0 %v5206, 127
      %v6024 = vpop.permute.xlu0 %6023
      %6025 = vrot.lane.b32.xlu0 %v5884, 127
      %v6026 = vpop.permute.xlu0 %6025
      %6027 = vrot.lane.b32.xlu0 %v5209, 127
      %v6028 = vpop.permute.xlu0 %6027
      %6029 = vrot.lane.b32.xlu0 %v5887, 127
      %v6030 = vpop.permute.xlu0 %6029
      %6031 = vrot.lane.b32.xlu0 %v5212, 127
      %v6032 = vpop.permute.xlu0 %6031
      %6033 = vrot.lane.b32.xlu0 %v5890, 127
      %v6034 = vpop.permute.xlu0 %6033
      %6035 = vrot.lane.b32.xlu0 %v5215, 127
      %v6036 = vpop.permute.xlu0 %6035
      %6037 = vrot.lane.b32.xlu0 %v5893, 127
      %v6038 = vpop.permute.xlu0 %6037
      %vm6039 = vcmask 1039360
      %v6040 = vsel %vm6039, %v6024, %v6026
      %v6041 = vsel %vm6039, %v6028, %v6030
      %v6042 = vsel %vm6039, %v6032, %v6034
      %v6043 = vsel %vm6039, %v6036, %v6038
      %6052 = vrot.lane.b32.xlu0 %v5206, 126
      %v6053 = vpop.permute.xlu0 %6052
      %6054 = vrot.lane.b32.xlu0 %v5884, 126
      %v6055 = vpop.permute.xlu0 %6054
      %6056 = vrot.lane.b32.xlu0 %v5209, 126
      %v6057 = vpop.permute.xlu0 %6056
      %6058 = vrot.lane.b32.xlu0 %v5887, 126
      %v6059 = vpop.permute.xlu0 %6058
      %6060 = vrot.lane.b32.xlu0 %v5212, 126
      %v6061 = vpop.permute.xlu0 %6060
      %6062 = vrot.lane.b32.xlu0 %v5890, 126
      %v6063 = vpop.permute.xlu0 %6062
      %6064 = vrot.lane.b32.xlu0 %v5215, 126
      %v6065 = vpop.permute.xlu0 %6064
      %6066 = vrot.lane.b32.xlu0 %v5893, 126
      %v6067 = vpop.permute.xlu0 %6066
      %vm6068 = vcmask 1031168
      %v6069 = vsel %vm6068, %v6053, %v6055
      %v6070 = vsel %vm6068, %v6057, %v6059
      %v6071 = vsel %vm6068, %v6061, %v6063
      %v6072 = vsel %vm6068, %v6065, %v6067
      %6081 = vrot.lane.b32.xlu0 %v5206, 125
      %v6082 = vpop.permute.xlu0 %6081
      %6083 = vrot.lane.b32.xlu0 %v5884, 125
      %v6084 = vpop.permute.xlu0 %6083
      %6085 = vrot.lane.b32.xlu0 %v5209, 125
      %v6086 = vpop.permute.xlu0 %6085
      %6087 = vrot.lane.b32.xlu0 %v5887, 125
      %v6088 = vpop.permute.xlu0 %6087
      %6089 = vrot.lane.b32.xlu0 %v5212, 125
      %v6090 = vpop.permute.xlu0 %6089
      %6091 = vrot.lane.b32.xlu0 %v5890, 125
      %v6092 = vpop.permute.xlu0 %6091
      %6093 = vrot.lane.b32.xlu0 %v5215, 125
      %v6094 = vpop.permute.xlu0 %6093
      %6095 = vrot.lane.b32.xlu0 %v5893, 125
      %v6096 = vpop.permute.xlu0 %6095
      %vm6097 = vcmask 1022976
      %v6098 = vsel %vm6097, %v6082, %v6084
      %v6099 = vsel %vm6097, %v6086, %v6088
      %v6100 = vsel %vm6097, %v6090, %v6092
      %v6101 = vsel %vm6097, %v6094, %v6096
      %6110 = vrot.lane.b32.xlu0 %v5206, 124
      %v6111 = vpop.permute.xlu0 %6110
      %6112 = vrot.lane.b32.xlu0 %v5884, 124
      %v6113 = vpop.permute.xlu0 %6112
      %6114 = vrot.lane.b32.xlu0 %v5209, 124
      %v6115 = vpop.permute.xlu0 %6114
      %6116 = vrot.lane.b32.xlu0 %v5887, 124
      %v6117 = vpop.permute.xlu0 %6116
      %6118 = vrot.lane.b32.xlu0 %v5212, 124
      %v6119 = vpop.permute.xlu0 %6118
      %6120 = vrot.lane.b32.xlu0 %v5890, 124
      %v6121 = vpop.permute.xlu0 %6120
      %6122 = vrot.lane.b32.xlu0 %v5215, 124
      %v6123 = vpop.permute.xlu0 %6122
      %6124 = vrot.lane.b32.xlu0 %v5893, 124
      %v6125 = vpop.permute.xlu0 %6124
      %vm6126 = vcmask 1014784
      %v6127 = vsel %vm6126, %v6111, %v6113
      %v6128 = vsel %vm6126, %v6115, %v6117
      %v6129 = vsel %vm6126, %v6119, %v6121
      %v6130 = vsel %vm6126, %v6123, %v6125
      %6139 = vrot.lane.b32.xlu0 %v5206, 123
      %v6140 = vpop.permute.xlu0 %6139
      %6141 = vrot.lane.b32.xlu0 %v5884, 123
      %v6142 = vpop.permute.xlu0 %6141
      %6143 = vrot.lane.b32.xlu0 %v5209, 123
      %v6144 = vpop.permute.xlu0 %6143
      %6145 = vrot.lane.b32.xlu0 %v5887, 123
      %v6146 = vpop.permute.xlu0 %6145
      %6147 = vrot.lane.b32.xlu0 %v5212, 123
      %v6148 = vpop.permute.xlu0 %6147
      %6149 = vrot.lane.b32.xlu0 %v5890, 123
      %v6150 = vpop.permute.xlu0 %6149
      %6151 = vrot.lane.b32.xlu0 %v5215, 123
      %v6152 = vpop.permute.xlu0 %6151
      %6153 = vrot.lane.b32.xlu0 %v5893, 123
      %v6154 = vpop.permute.xlu0 %6153
      %vm6155 = vcmask 1006592
      %v6156 = vsel %vm6155, %v6140, %v6142
      %v6157 = vsel %vm6155, %v6144, %v6146
      %v6158 = vsel %vm6155, %v6148, %v6150
      %v6159 = vsel %vm6155, %v6152, %v6154
      %6168 = vrot.lane.b32.xlu0 %v5206, 122
      %v6169 = vpop.permute.xlu0 %6168
      %6170 = vrot.lane.b32.xlu0 %v5884, 122
      %v6171 = vpop.permute.xlu0 %6170
      %6172 = vrot.lane.b32.xlu0 %v5209, 122
      %v6173 = vpop.permute.xlu0 %6172
      %6174 = vrot.lane.b32.xlu0 %v5887, 122
      %v6175 = vpop.permute.xlu0 %6174
      %6176 = vrot.lane.b32.xlu0 %v5212, 122
      %v6177 = vpop.permute.xlu0 %6176
      %6178 = vrot.lane.b32.xlu0 %v5890, 122
      %v6179 = vpop.permute.xlu0 %6178
      %6180 = vrot.lane.b32.xlu0 %v5215, 122
      %v6181 = vpop.permute.xlu0 %6180
      %6182 = vrot.lane.b32.xlu0 %v5893, 122
      %v6183 = vpop.permute.xlu0 %6182
      %vm6184 = vcmask 998400
      %v6185 = vsel %vm6184, %v6169, %v6171
      %v6186 = vsel %vm6184, %v6173, %v6175
      %v6187 = vsel %vm6184, %v6177, %v6179
      %v6188 = vsel %vm6184, %v6181, %v6183
      %6197 = vrot.lane.b32.xlu0 %v5206, 121
      %v6198 = vpop.permute.xlu0 %6197
      %6199 = vrot.lane.b32.xlu0 %v5884, 121
      %v6200 = vpop.permute.xlu0 %6199
      %6201 = vrot.lane.b32.xlu0 %v5209, 121
      %v6202 = vpop.permute.xlu0 %6201
      %6203 = vrot.lane.b32.xlu0 %v5887, 121
      %v6204 = vpop.permute.xlu0 %6203
      %6205 = vrot.lane.b32.xlu0 %v5212, 121
      %v6206 = vpop.permute.xlu0 %6205
      %6207 = vrot.lane.b32.xlu0 %v5890, 121
      %v6208 = vpop.permute.xlu0 %6207
      %6209 = vrot.lane.b32.xlu0 %v5215, 121
      %v6210 = vpop.permute.xlu0 %6209
      %6211 = vrot.lane.b32.xlu0 %v5893, 121
      %v6212 = vpop.permute.xlu0 %6211
      %vm6213 = vcmask 990208
      %v6214 = vsel %vm6213, %v6198, %v6200
      %v6215 = vsel %vm6213, %v6202, %v6204
      %v6216 = vsel %vm6213, %v6206, %v6208
      %v6217 = vsel %vm6213, %v6210, %v6212
      %6226 = vrot.lane.b32.xlu0 %v5206, 120
      %v6227 = vpop.permute.xlu0 %6226
      %6228 = vrot.lane.b32.xlu0 %v5884, 120
      %v6229 = vpop.permute.xlu0 %6228
      %6230 = vrot.lane.b32.xlu0 %v5209, 120
      %v6231 = vpop.permute.xlu0 %6230
      %6232 = vrot.lane.b32.xlu0 %v5887, 120
      %v6233 = vpop.permute.xlu0 %6232
      %6234 = vrot.lane.b32.xlu0 %v5212, 120
      %v6235 = vpop.permute.xlu0 %6234
      %6236 = vrot.lane.b32.xlu0 %v5890, 120
      %v6237 = vpop.permute.xlu0 %6236
      %6238 = vrot.lane.b32.xlu0 %v5215, 120
      %v6239 = vpop.permute.xlu0 %6238
      %6240 = vrot.lane.b32.xlu0 %v5893, 120
      %v6241 = vpop.permute.xlu0 %6240
      %vm6242 = vcmask 982016
      %v6243 = vsel %vm6242, %v6227, %v6229
      %v6244 = vsel %vm6242, %v6231, %v6233
      %v6245 = vsel %vm6242, %v6235, %v6237
      %v6246 = vsel %vm6242, %v6239, %v6241
      %6255 = vrot.lane.b32.xlu0 %v5206, 119
      %v6256 = vpop.permute.xlu0 %6255
      %6257 = vrot.lane.b32.xlu0 %v5884, 119
      %v6258 = vpop.permute.xlu0 %6257
      %6259 = vrot.lane.b32.xlu0 %v5209, 119
      %v6260 = vpop.permute.xlu0 %6259
      %6261 = vrot.lane.b32.xlu0 %v5887, 119
      %v6262 = vpop.permute.xlu0 %6261
      %6263 = vrot.lane.b32.xlu0 %v5212, 119
      %v6264 = vpop.permute.xlu0 %6263
      %6265 = vrot.lane.b32.xlu0 %v5890, 119
      %v6266 = vpop.permute.xlu0 %6265
      %6267 = vrot.lane.b32.xlu0 %v5215, 119
      %v6268 = vpop.permute.xlu0 %6267
      %6269 = vrot.lane.b32.xlu0 %v5893, 119
      %v6270 = vpop.permute.xlu0 %6269
      %vm6271 = vcmask 973824
      %v6272 = vsel %vm6271, %v6256, %v6258
      %v6273 = vsel %vm6271, %v6260, %v6262
      %v6274 = vsel %vm6271, %v6264, %v6266
      %v6275 = vsel %vm6271, %v6268, %v6270
      %6284 = vrot.lane.b32.xlu0 %v5206, 118
      %v6285 = vpop.permute.xlu0 %6284
      %6286 = vrot.lane.b32.xlu0 %v5884, 118
      %v6287 = vpop.permute.xlu0 %6286
      %6288 = vrot.lane.b32.xlu0 %v5209, 118
      %v6289 = vpop.permute.xlu0 %6288
      %6290 = vrot.lane.b32.xlu0 %v5887, 118
      %v6291 = vpop.permute.xlu0 %6290
      %6292 = vrot.lane.b32.xlu0 %v5212, 118
      %v6293 = vpop.permute.xlu0 %6292
      %6294 = vrot.lane.b32.xlu0 %v5890, 118
      %v6295 = vpop.permute.xlu0 %6294
      %6296 = vrot.lane.b32.xlu0 %v5215, 118
      %v6297 = vpop.permute.xlu0 %6296
      %6298 = vrot.lane.b32.xlu0 %v5893, 118
      %v6299 = vpop.permute.xlu0 %6298
      %vm6300 = vcmask 965632
      %v6301 = vsel %vm6300, %v6285, %v6287
      %v6302 = vsel %vm6300, %v6289, %v6291
      %v6303 = vsel %vm6300, %v6293, %v6295
      %v6304 = vsel %vm6300, %v6297, %v6299
      %6313 = vrot.lane.b32.xlu0 %v5206, 117
      %v6314 = vpop.permute.xlu0 %6313
      %6315 = vrot.lane.b32.xlu0 %v5884, 117
      %v6316 = vpop.permute.xlu0 %6315
      %6317 = vrot.lane.b32.xlu0 %v5209, 117
      %v6318 = vpop.permute.xlu0 %6317
      %6319 = vrot.lane.b32.xlu0 %v5887, 117
      %v6320 = vpop.permute.xlu0 %6319
      %6321 = vrot.lane.b32.xlu0 %v5212, 117
      %v6322 = vpop.permute.xlu0 %6321
      %6323 = vrot.lane.b32.xlu0 %v5890, 117
      %v6324 = vpop.permute.xlu0 %6323
      %6325 = vrot.lane.b32.xlu0 %v5215, 117
      %v6326 = vpop.permute.xlu0 %6325
      %6327 = vrot.lane.b32.xlu0 %v5893, 117
      %v6328 = vpop.permute.xlu0 %6327
      %vm6329 = vcmask 957440
      %v6330 = vsel %vm6329, %v6314, %v6316
      %v6331 = vsel %vm6329, %v6318, %v6320
      %v6332 = vsel %vm6329, %v6322, %v6324
      %v6333 = vsel %vm6329, %v6326, %v6328
      %6342 = vrot.lane.b32.xlu0 %v5206, 116
      %v6343 = vpop.permute.xlu0 %6342
      %6344 = vrot.lane.b32.xlu0 %v5884, 116
      %v6345 = vpop.permute.xlu0 %6344
      %6346 = vrot.lane.b32.xlu0 %v5209, 116
      %v6347 = vpop.permute.xlu0 %6346
      %6348 = vrot.lane.b32.xlu0 %v5887, 116
      %v6349 = vpop.permute.xlu0 %6348
      %6350 = vrot.lane.b32.xlu0 %v5212, 116
      %v6351 = vpop.permute.xlu0 %6350
      %6352 = vrot.lane.b32.xlu0 %v5890, 116
      %v6353 = vpop.permute.xlu0 %6352
      %6354 = vrot.lane.b32.xlu0 %v5215, 116
      %v6355 = vpop.permute.xlu0 %6354
      %6356 = vrot.lane.b32.xlu0 %v5893, 116
      %v6357 = vpop.permute.xlu0 %6356
      %vm6358 = vcmask 949248
      %v6359 = vsel %vm6358, %v6343, %v6345
      %v6360 = vsel %vm6358, %v6347, %v6349
      %v6361 = vsel %vm6358, %v6351, %v6353
      %v6362 = vsel %vm6358, %v6355, %v6357
      %6371 = vrot.lane.b32.xlu0 %v5206, 115
      %v6372 = vpop.permute.xlu0 %6371
      %6373 = vrot.lane.b32.xlu0 %v5884, 115
      %v6374 = vpop.permute.xlu0 %6373
      %6375 = vrot.lane.b32.xlu0 %v5209, 115
      %v6376 = vpop.permute.xlu0 %6375
      %6377 = vrot.lane.b32.xlu0 %v5887, 115
      %v6378 = vpop.permute.xlu0 %6377
      %6379 = vrot.lane.b32.xlu0 %v5212, 115
      %v6380 = vpop.permute.xlu0 %6379
      %6381 = vrot.lane.b32.xlu0 %v5890, 115
      %v6382 = vpop.permute.xlu0 %6381
      %6383 = vrot.lane.b32.xlu0 %v5215, 115
      %v6384 = vpop.permute.xlu0 %6383
      %6385 = vrot.lane.b32.xlu0 %v5893, 115
      %v6386 = vpop.permute.xlu0 %6385
      %vm6387 = vcmask 941056
      %v6388 = vsel %vm6387, %v6372, %v6374
      %v6389 = vsel %vm6387, %v6376, %v6378
      %v6390 = vsel %vm6387, %v6380, %v6382
      %v6391 = vsel %vm6387, %v6384, %v6386
      %6400 = vrot.lane.b32.xlu0 %v5206, 114
      %v6401 = vpop.permute.xlu0 %6400
      %6402 = vrot.lane.b32.xlu0 %v5884, 114
      %v6403 = vpop.permute.xlu0 %6402
      %6404 = vrot.lane.b32.xlu0 %v5209, 114
      %v6405 = vpop.permute.xlu0 %6404
      %6406 = vrot.lane.b32.xlu0 %v5887, 114
      %v6407 = vpop.permute.xlu0 %6406
      %6408 = vrot.lane.b32.xlu0 %v5212, 114
      %v6409 = vpop.permute.xlu0 %6408
      %6410 = vrot.lane.b32.xlu0 %v5890, 114
      %v6411 = vpop.permute.xlu0 %6410
      %6412 = vrot.lane.b32.xlu0 %v5215, 114
      %v6413 = vpop.permute.xlu0 %6412
      %6414 = vrot.lane.b32.xlu0 %v5893, 114
      %v6415 = vpop.permute.xlu0 %6414
      %vm6416 = vcmask 932864
      %v6417 = vsel %vm6416, %v6401, %v6403
      %v6418 = vsel %vm6416, %v6405, %v6407
      %v6419 = vsel %vm6416, %v6409, %v6411
      %v6420 = vsel %vm6416, %v6413, %v6415
      %6430 = vset.pattern.permute.xlu0 0
      %6431 = vperm.xlu0 %6430, %v5995
      %v6432 = vpop.permute.xlu0 %6431
      %6435 = vset.pattern.permute.xlu0 0
      %6436 = vperm.xlu0 %6435, %v5996
      %v6437 = vpop.permute.xlu0 %6436
      %6440 = vset.pattern.permute.xlu0 0
      %6441 = vperm.xlu0 %6440, %v5997
      %v6442 = vpop.permute.xlu0 %6441
      %6445 = vset.pattern.permute.xlu0 0
      %6446 = vperm.xlu0 %6445, %v5998
      %v6447 = vpop.permute.xlu0 %6446
      %vm6449 = vcmask 785408
      %v6451 = vsel %vm6449, %v5982, 0
      %v6454 = vsel %vm6449, %v5986, 0
      %v6457 = vsel %vm6449, %v5990, 0
      %v6460 = vsel %vm6449, %v5994, 0
      %6462 = vmatpush.msra.mxu0 %v6101
      %6463 = vmatpush.msra.mxu0 %v6100
      %6464 = vmatpush.msra.mxu0 %v6099
      %6465 = vmatpush.msra.mxu0 %v6098
      %6466 = vmatpush.msra.mxu0 %v6072
      %6467 = vmatpush.msra.mxu0 %v6071
      %6468 = vmatpush.msra.mxu0 %v6070
      %6469 = vmatpush.msra.mxu0 %v6069
      %6470 = vmatpush.msra.mxu0 %v6043
      %6471 = vmatpush.msra.mxu0 %v6042
      %6472 = vmatpush.msra.mxu0 %v6041
      %6473 = vmatpush.msra.mxu0 %v6040
      %6474 = vmatpush.msra.mxu0 %v5215
      %6475 = vmatpush.msra.mxu0 %v5212
      %6476 = vmatpush.msra.mxu0 %v5209
      %6477 = vmatpush.msra.mxu0 %v5206
      %6478 = vmatmul.f32.gmra.mxu0 %v5979
      %v6479 = vpop.f32.mrf.mxu0
      %v6480 = vadd.f32 %v6432, %v6479
      %6481 = vmatmul.f32.gmra.mxu0 %v5983
      %v6482 = vpop.f32.mrf.mxu0
      %v6483 = vadd.f32 %v6437, %v6482
      %6484 = vmatmul.f32.gmra.mxu0 %v5987
      %v6485 = vpop.f32.mrf.mxu0
      %v6486 = vadd.f32 %v6442, %v6485
      %6487 = vmatmul.f32.gmra.mxu0 %v5991
      %v6488 = vpop.f32.mrf.mxu0
      %v6489 = vadd.f32 %v6447, %v6488
      %6490 = vdwg.mxu0
      %6491 = vmatpush.msra.mxu0 %v6217
      %6492 = vmatpush.msra.mxu0 %v6216
      %6493 = vmatpush.msra.mxu0 %v6215
      %6494 = vmatpush.msra.mxu0 %v6214
      %6495 = vmatpush.msra.mxu0 %v6188
      %6496 = vmatpush.msra.mxu0 %v6187
      %6497 = vmatpush.msra.mxu0 %v6186
      %6498 = vmatpush.msra.mxu0 %v6185
      %6499 = vmatpush.msra.mxu0 %v6159
      %6500 = vmatpush.msra.mxu0 %v6158
      %6501 = vmatpush.msra.mxu0 %v6157
      %6502 = vmatpush.msra.mxu0 %v6156
      %6503 = vmatpush.msra.mxu0 %v6130
      %6504 = vmatpush.msra.mxu0 %v6129
      %6505 = vmatpush.msra.mxu0 %v6128
      %6506 = vmatpush.msra.mxu0 %v6127
      %6507 = vmatmul.f32.gmra.mxu0 %v5980
      %v6508 = vpop.f32.mrf.mxu0
      %v6509 = vadd.f32 %v6480, %v6508
      %6510 = vmatmul.f32.gmra.mxu0 %v5984
      %v6511 = vpop.f32.mrf.mxu0
      %v6512 = vadd.f32 %v6483, %v6511
      %6513 = vmatmul.f32.gmra.mxu0 %v5988
      %v6514 = vpop.f32.mrf.mxu0
      %v6515 = vadd.f32 %v6486, %v6514
      %6516 = vmatmul.f32.gmra.mxu0 %v5992
      %v6517 = vpop.f32.mrf.mxu0
      %v6518 = vadd.f32 %v6489, %v6517
      %6519 = vdwg.mxu0
      %6520 = vmatpush.msra.mxu0 %v6333
      %6521 = vmatpush.msra.mxu0 %v6332
      %6522 = vmatpush.msra.mxu0 %v6331
      %6523 = vmatpush.msra.mxu0 %v6330
      %6524 = vmatpush.msra.mxu0 %v6304
      %6525 = vmatpush.msra.mxu0 %v6303
      %6526 = vmatpush.msra.mxu0 %v6302
      %6527 = vmatpush.msra.mxu0 %v6301
      %6528 = vmatpush.msra.mxu0 %v6275
      %6529 = vmatpush.msra.mxu0 %v6274
      %6530 = vmatpush.msra.mxu0 %v6273
      %6531 = vmatpush.msra.mxu0 %v6272
      %6532 = vmatpush.msra.mxu0 %v6246
      %6533 = vmatpush.msra.mxu0 %v6245
      %6534 = vmatpush.msra.mxu0 %v6244
      %6535 = vmatpush.msra.mxu0 %v6243
      %6536 = vmatmul.f32.gmra.mxu0 %v5981
      %v6537 = vpop.f32.mrf.mxu0
      %v6538 = vadd.f32 %v6509, %v6537
      %6539 = vmatmul.f32.gmra.mxu0 %v5985
      %v6540 = vpop.f32.mrf.mxu0
      %v6541 = vadd.f32 %v6512, %v6540
      %6542 = vmatmul.f32.gmra.mxu0 %v5989
      %v6543 = vpop.f32.mrf.mxu0
      %v6544 = vadd.f32 %v6515, %v6543
      %6545 = vmatmul.f32.gmra.mxu0 %v5993
      %v6546 = vpop.f32.mrf.mxu0
      %v6547 = vadd.f32 %v6518, %v6546
      %6548 = vdwg.mxu0
      %6549 = vmatpush.msra.mxu0 0.0
      %6550 = vmatpush.msra.mxu0 0.0
      %6551 = vmatpush.msra.mxu0 0.0
      %6552 = vmatpush.msra.mxu0 0.0
      %6553 = vmatpush.msra.mxu0 %v6420
      %6554 = vmatpush.msra.mxu0 %v6419
      %6555 = vmatpush.msra.mxu0 %v6418
      %6556 = vmatpush.msra.mxu0 %v6417
      %6557 = vmatpush.msra.mxu0 %v6391
      %6558 = vmatpush.msra.mxu0 %v6390
      %6559 = vmatpush.msra.mxu0 %v6389
      %6560 = vmatpush.msra.mxu0 %v6388
      %6561 = vmatpush.msra.mxu0 %v6362
      %6562 = vmatpush.msra.mxu0 %v6361
      %6563 = vmatpush.msra.mxu0 %v6360
      %6564 = vmatpush.msra.mxu0 %v6359
      %6565 = vmatmul.f32.gmra.mxu0 %v6451
      %v6566 = vpop.f32.mrf.mxu0
      %v6567 = vadd.f32 %v6538, %v6566
      %6568 = vmatmul.f32.gmra.mxu0 %v6454
      %v6569 = vpop.f32.mrf.mxu0
      %v6570 = vadd.f32 %v6541, %v6569
      %6571 = vmatmul.f32.gmra.mxu0 %v6457
      %v6572 = vpop.f32.mrf.mxu0
      %v6573 = vadd.f32 %v6544, %v6572
      %6574 = vmatmul.f32.gmra.mxu0 %v6460
      %v6575 = vpop.f32.mrf.mxu0
      %v6576 = vadd.f32 %v6547, %v6575
      %6577 = vdwg.mxu0
      %6578 = vmatpush.msra.mxu0 %v6096
      %6579 = vmatpush.msra.mxu0 %v6092
      %6580 = vmatpush.msra.mxu0 %v6088
      %6581 = vmatpush.msra.mxu0 %v6084
      %6582 = vmatpush.msra.mxu0 %v6067
      %6583 = vmatpush.msra.mxu0 %v6063
      %6584 = vmatpush.msra.mxu0 %v6059
      %6585 = vmatpush.msra.mxu0 %v6055
      %6586 = vmatpush.msra.mxu0 %v6038
      %6587 = vmatpush.msra.mxu0 %v6034
      %6588 = vmatpush.msra.mxu0 %v6030
      %6589 = vmatpush.msra.mxu0 %v6026
      %6590 = vmatpush.msra.mxu0 %v5893
      %6591 = vmatpush.msra.mxu0 %v5890
      %6592 = vmatpush.msra.mxu0 %v5887
      %6593 = vmatpush.msra.mxu0 %v5884
      %6594 = vmatmul.f32.gmra.mxu0 %v5979
      %v6595 = vpop.f32.mrf.mxu0
      %v6596 = vadd.f32 %v6432, %v6595
      %6597 = vmatmul.f32.gmra.mxu0 %v5983
      %v6598 = vpop.f32.mrf.mxu0
      %v6599 = vadd.f32 %v6437, %v6598
      %6600 = vmatmul.f32.gmra.mxu0 %v5987
      %v6601 = vpop.f32.mrf.mxu0
      %v6602 = vadd.f32 %v6442, %v6601
      %6603 = vmatmul.f32.gmra.mxu0 %v5991
      %v6604 = vpop.f32.mrf.mxu0
      %v6605 = vadd.f32 %v6447, %v6604
      %6606 = vdwg.mxu0
      %6607 = vmatpush.msra.mxu0 %v6212
      %6608 = vmatpush.msra.mxu0 %v6208
      %6609 = vmatpush.msra.mxu0 %v6204
      %6610 = vmatpush.msra.mxu0 %v6200
      %6611 = vmatpush.msra.mxu0 %v6183
      %6612 = vmatpush.msra.mxu0 %v6179
      %6613 = vmatpush.msra.mxu0 %v6175
      %6614 = vmatpush.msra.mxu0 %v6171
      %6615 = vmatpush.msra.mxu0 %v6154
      %6616 = vmatpush.msra.mxu0 %v6150
      %6617 = vmatpush.msra.mxu0 %v6146
      %6618 = vmatpush.msra.mxu0 %v6142
      %6619 = vmatpush.msra.mxu0 %v6125
      %6620 = vmatpush.msra.mxu0 %v6121
      %6621 = vmatpush.msra.mxu0 %v6117
      %6622 = vmatpush.msra.mxu0 %v6113
      %6623 = vmatmul.f32.gmra.mxu0 %v5980
      %v6624 = vpop.f32.mrf.mxu0
      %v6625 = vadd.f32 %v6596, %v6624
      %6626 = vmatmul.f32.gmra.mxu0 %v5984
      %v6627 = vpop.f32.mrf.mxu0
      %v6628 = vadd.f32 %v6599, %v6627
      %6629 = vmatmul.f32.gmra.mxu0 %v5988
      %v6630 = vpop.f32.mrf.mxu0
      %v6631 = vadd.f32 %v6602, %v6630
      %6632 = vmatmul.f32.gmra.mxu0 %v5992
      %v6633 = vpop.f32.mrf.mxu0
      %v6634 = vadd.f32 %v6605, %v6633
      %6635 = vdwg.mxu0
      %6636 = vmatpush.msra.mxu0 %v6328
      %6637 = vmatpush.msra.mxu0 %v6324
      %6638 = vmatpush.msra.mxu0 %v6320
      %6639 = vmatpush.msra.mxu0 %v6316
      %6640 = vmatpush.msra.mxu0 %v6299
      %6641 = vmatpush.msra.mxu0 %v6295
      %6642 = vmatpush.msra.mxu0 %v6291
      %6643 = vmatpush.msra.mxu0 %v6287
      %6644 = vmatpush.msra.mxu0 %v6270
      %6645 = vmatpush.msra.mxu0 %v6266
      %6646 = vmatpush.msra.mxu0 %v6262
      %6647 = vmatpush.msra.mxu0 %v6258
      %6648 = vmatpush.msra.mxu0 %v6241
      %6649 = vmatpush.msra.mxu0 %v6237
      %6650 = vmatpush.msra.mxu0 %v6233
      %6651 = vmatpush.msra.mxu0 %v6229
      %6652 = vmatmul.f32.gmra.mxu0 %v5981
      %v6653 = vpop.f32.mrf.mxu0
      %v6654 = vadd.f32 %v6625, %v6653
      %6655 = vmatmul.f32.gmra.mxu0 %v5985
      %v6656 = vpop.f32.mrf.mxu0
      %v6657 = vadd.f32 %v6628, %v6656
      %6658 = vmatmul.f32.gmra.mxu0 %v5989
      %v6659 = vpop.f32.mrf.mxu0
      %v6660 = vadd.f32 %v6631, %v6659
      %6661 = vmatmul.f32.gmra.mxu0 %v5993
      %v6662 = vpop.f32.mrf.mxu0
      %v6663 = vadd.f32 %v6634, %v6662
      %6664 = vdwg.mxu0
      %6665 = vmatpush.msra.mxu0 0.0
      %6666 = vmatpush.msra.mxu0 0.0
      %6667 = vmatpush.msra.mxu0 0.0
      %6668 = vmatpush.msra.mxu0 0.0
      %6669 = vmatpush.msra.mxu0 %v6415
      %6670 = vmatpush.msra.mxu0 %v6411
      %6671 = vmatpush.msra.mxu0 %v6407
      %6672 = vmatpush.msra.mxu0 %v6403
      %6673 = vmatpush.msra.mxu0 %v6386
      %6674 = vmatpush.msra.mxu0 %v6382
      %6675 = vmatpush.msra.mxu0 %v6378
      %6676 = vmatpush.msra.mxu0 %v6374
      %6677 = vmatpush.msra.mxu0 %v6357
      %6678 = vmatpush.msra.mxu0 %v6353
      %6679 = vmatpush.msra.mxu0 %v6349
      %6680 = vmatpush.msra.mxu0 %v6345
      %6681 = vmatmul.f32.gmra.mxu0 %v6451
      %v6682 = vpop.f32.mrf.mxu0
      %v6683 = vadd.f32 %v6654, %v6682
      %6684 = vmatmul.f32.gmra.mxu0 %v6454
      %v6685 = vpop.f32.mrf.mxu0
      %v6686 = vadd.f32 %v6657, %v6685
      %6687 = vmatmul.f32.gmra.mxu0 %v6457
      %v6688 = vpop.f32.mrf.mxu0
      %v6689 = vadd.f32 %v6660, %v6688
      %6690 = vmatmul.f32.gmra.mxu0 %v6460
      %v6691 = vpop.f32.mrf.mxu0
      %v6692 = vadd.f32 %v6663, %v6691
      %6693 = vdwg.mxu0
      %vm6694 = vcmp.gt.f32.partialorder %v6567, 0.0
      %vm6695 = vcmp.gt.f32.partialorder %v6683, 0.0
      %vm6696 = vcmp.gt.f32.partialorder %v6570, 0.0
      %vm6697 = vcmp.gt.f32.partialorder %v6686, 0.0
      %vm6698 = vcmp.gt.f32.partialorder %v6573, 0.0
      %vm6699 = vcmp.gt.f32.partialorder %v6689, 0.0
      %vm6700 = vcmp.gt.f32.partialorder %v6576, 0.0
      %vm6701 = vcmp.gt.f32.partialorder %v6692, 0.0
      %v6702 = vmin.f32 %v6567, 0.0
      %v6703 = vmin.f32 %v6683, 0.0
      %v6704 = vmin.f32 %v6570, 0.0
      %v6705 = vmin.f32 %v6686, 0.0
      %v6706 = vmin.f32 %v6573, 0.0
      %v6707 = vmin.f32 %v6689, 0.0
      %v6708 = vmin.f32 %v6576, 0.0
      %v6709 = vmin.f32 %v6692, 0.0
      %v6710 = vmul.f32 %v6702, 1.442695
      %v6711 = vpow.pop %v6710
      %v6712 = vmul.f32 %v6703, 1.442695
      %v6713 = vpow.pop %v6712
      %v6714 = vmul.f32 %v6704, 1.442695
      %v6715 = vpow.pop %v6714
      %v6716 = vmul.f32 %v6705, 1.442695
      %v6717 = vpow.pop %v6716
      %v6718 = vmul.f32 %v6706, 1.442695
      %v6719 = vpow.pop %v6718
      %v6720 = vmul.f32 %v6707, 1.442695
      %v6721 = vpow.pop %v6720
      %v6722 = vmul.f32 %v6708, 1.442695
      %v6723 = vpow.pop %v6722
      %v6724 = vmul.f32 %v6709, 1.442695
      %v6725 = vpow.pop %v6724
      %v6726 = vsub.f32 %v6711, 1.0
      %v6727 = vsub.f32 %v6713, 1.0
      %v6728 = vsub.f32 %v6715, 1.0
      %v6729 = vsub.f32 %v6717, 1.0
      %v6730 = vsub.f32 %v6719, 1.0
      %v6731 = vsub.f32 %v6721, 1.0
      %v6732 = vsub.f32 %v6723, 1.0
      %v6733 = vsub.f32 %v6725, 1.0
      %v6734 = vsel %vm6694, %v6567, %v6726
      %v6735 = vsel %vm6695, %v6683, %v6727
      %v6736 = vsel %vm6696, %v6570, %v6728
      %v6737 = vsel %vm6697, %v6686, %v6729
      %v6738 = vsel %vm6698, %v6573, %v6730
      %v6739 = vsel %vm6699, %v6689, %v6731
      %v6740 = vsel %vm6700, %v6576, %v6732
      %v6741 = vsel %vm6701, %v6692, %v6733
      %v6742 = vmul.f32 %v5999, %v6734
      %v6743 = vmul.f32 %v6000, %v6735
      %v6744 = vmul.f32 %v6001, %v6736
      %v6745 = vmul.f32 %v6002, %v6737
      %v6746 = vmul.f32 %v6003, %v6738
      %v6747 = vmul.f32 %v6004, %v6739
      %v6748 = vmul.f32 %v6005, %v6740
      %v6749 = vmul.f32 %v6006, %v6741
      %v6750 = vmul.f32 %v6007, %v6734
      %v6751 = vmul.f32 %v6008, %v6735
      %v6752 = vmul.f32 %v6009, %v6736
      %v6753 = vmul.f32 %v6010, %v6737
      %v6754 = vmul.f32 %v6011, %v6738
      %v6755 = vmul.f32 %v6012, %v6739
      %v6756 = vmul.f32 %v6013, %v6740
      %v6757 = vmul.f32 %v6014, %v6741
      %vm6758 = vcmask 482304
      %v6759 = vsel %vm6758, %v6743, 0.0
      %v6760 = vadd.f32 %v6742, %v6759
      %6761 = vadd.xlane.f32.xlu0 %v6760
      %v6762 = vpop.xlane.xlu0 %6761
      %v6763 = vsel %vm6758, %v6745, 0.0
      %v6764 = vadd.f32 %v6744, %v6763
      %6765 = vadd.xlane.f32.xlu0 %v6764
      %v6766 = vpop.xlane.xlu0 %6765
      %v6767 = vsel %vm6758, %v6747, 0.0
      %v6768 = vadd.f32 %v6746, %v6767
      %6769 = vadd.xlane.f32.xlu0 %v6768
      %v6770 = vpop.xlane.xlu0 %6769
      %v6771 = vsel %vm6758, %v6749, 0.0
      %v6772 = vadd.f32 %v6748, %v6771
      %6773 = vadd.xlane.f32.xlu0 %v6772
      %v6774 = vpop.xlane.xlu0 %6773
      %v6775 = vsel %vm6758, %v6751, 0.0
      %v6776 = vadd.f32 %v6750, %v6775
      %6777 = vadd.xlane.f32.xlu0 %v6776
      %v6778 = vpop.xlane.xlu0 %6777
      %v6779 = vsel %vm6758, %v6753, 0.0
      %v6780 = vadd.f32 %v6752, %v6779
      %6781 = vadd.xlane.f32.xlu0 %v6780
      %v6782 = vpop.xlane.xlu0 %6781
      %v6783 = vsel %vm6758, %v6755, 0.0
      %v6784 = vadd.f32 %v6754, %v6783
      %6785 = vadd.xlane.f32.xlu0 %v6784
      %v6786 = vpop.xlane.xlu0 %6785
      %v6787 = vsel %vm6758, %v6757, 0.0
      %v6788 = vadd.f32 %v6756, %v6787
      %6789 = vadd.xlane.f32.xlu0 %v6788
      %v6790 = vpop.xlane.xlu0 %6789
      %v6799 = vlaneseq
      %v6800 = vand.u32 %v6799, 127
      %v6801 = vperm.slane %v6762, %v6800
      %v6802 = vadd.s32 %v6800, 4294967288
      %v6803 = vperm.slane %v6766, %v6802
      %vm6804 = vcmask 130112
      %v6805 = vsel %vm6804, %v6803, %v6801
      %v6806 = vadd.s32 %v6800, 4294967280
      %v6807 = vperm.slane %v6770, %v6806
      %vm6808 = vcmask 195712
      %v6809 = vsel %vm6808, %v6807, %v6805
      %v6810 = vadd.s32 %v6800, 4294967272
      %v6811 = vperm.slane %v6774, %v6810
      %vm6812 = vcmask 261312
      %v6813 = vsel %vm6812, %v6811, %v6809
      %v6814 = vperm.slane %v6778, %v6800
      %v6815 = vperm.slane %v6782, %v6802
      %v6816 = vsel %vm6804, %v6815, %v6814
      %v6817 = vperm.slane %v6786, %v6806
      %v6818 = vsel %vm6808, %v6817, %v6816
      %v6819 = vperm.slane %v6790, %v6810
      %v6820 = vsel %vm6812, %v6819, %v6818
      %vm6821 = vcmask 1041409
      %v6822 = vsel %vm6821, %v6820, %v6813
      %vm6824 = vcmask 254976
      %v6825 = vsel %vm6824, %v6822, 0.0
      %6826 = vadd.xlane.f32.xlu0 %v6825
      %v6827 = vpop.xlane.xlu0 %6826
      %6836 = vrot.lane.b32.xlu0 %v5218, 127
      %v6837 = vpop.permute.xlu0 %6836
      %6838 = vrot.lane.b32.xlu0 %v5896, 127
      %v6839 = vpop.permute.xlu0 %6838
      %6840 = vrot.lane.b32.xlu0 %v5221, 127
      %v6841 = vpop.permute.xlu0 %6840
      %6842 = vrot.lane.b32.xlu0 %v5899, 127
      %v6843 = vpop.permute.xlu0 %6842
      %6844 = vrot.lane.b32.xlu0 %v5224, 127
      %v6845 = vpop.permute.xlu0 %6844
      %6846 = vrot.lane.b32.xlu0 %v5902, 127
      %v6847 = vpop.permute.xlu0 %6846
      %6848 = vrot.lane.b32.xlu0 %v5227, 127
      %v6849 = vpop.permute.xlu0 %6848
      %6850 = vrot.lane.b32.xlu0 %v5905, 127
      %v6851 = vpop.permute.xlu0 %6850
      %v6852 = vsel %vm6039, %v6837, %v6839
      %v6853 = vsel %vm6039, %v6841, %v6843
      %v6854 = vsel %vm6039, %v6845, %v6847
      %v6855 = vsel %vm6039, %v6849, %v6851
      %6864 = vrot.lane.b32.xlu0 %v5218, 126
      %v6865 = vpop.permute.xlu0 %6864
      %6866 = vrot.lane.b32.xlu0 %v5896, 126
      %v6867 = vpop.permute.xlu0 %6866
      %6868 = vrot.lane.b32.xlu0 %v5221, 126
      %v6869 = vpop.permute.xlu0 %6868
      %6870 = vrot.lane.b32.xlu0 %v5899, 126
      %v6871 = vpop.permute.xlu0 %6870
      %6872 = vrot.lane.b32.xlu0 %v5224, 126
      %v6873 = vpop.permute.xlu0 %6872
      %6874 = vrot.lane.b32.xlu0 %v5902, 126
      %v6875 = vpop.permute.xlu0 %6874
      %6876 = vrot.lane.b32.xlu0 %v5227, 126
      %v6877 = vpop.permute.xlu0 %6876
      %6878 = vrot.lane.b32.xlu0 %v5905, 126
      %v6879 = vpop.permute.xlu0 %6878
      %v6880 = vsel %vm6068, %v6865, %v6867
      %v6881 = vsel %vm6068, %v6869, %v6871
      %v6882 = vsel %vm6068, %v6873, %v6875
      %v6883 = vsel %vm6068, %v6877, %v6879
      %6892 = vrot.lane.b32.xlu0 %v5218, 125
      %v6893 = vpop.permute.xlu0 %6892
      %6894 = vrot.lane.b32.xlu0 %v5896, 125
      %v6895 = vpop.permute.xlu0 %6894
      %6896 = vrot.lane.b32.xlu0 %v5221, 125
      %v6897 = vpop.permute.xlu0 %6896
      %6898 = vrot.lane.b32.xlu0 %v5899, 125
      %v6899 = vpop.permute.xlu0 %6898
      %6900 = vrot.lane.b32.xlu0 %v5224, 125
      %v6901 = vpop.permute.xlu0 %6900
      %6902 = vrot.lane.b32.xlu0 %v5902, 125
      %v6903 = vpop.permute.xlu0 %6902
      %6904 = vrot.lane.b32.xlu0 %v5227, 125
      %v6905 = vpop.permute.xlu0 %6904
      %6906 = vrot.lane.b32.xlu0 %v5905, 125
      %v6907 = vpop.permute.xlu0 %6906
      %v6908 = vsel %vm6097, %v6893, %v6895
      %v6909 = vsel %vm6097, %v6897, %v6899
      %v6910 = vsel %vm6097, %v6901, %v6903
      %v6911 = vsel %vm6097, %v6905, %v6907
      %6920 = vrot.lane.b32.xlu0 %v5218, 124
      %v6921 = vpop.permute.xlu0 %6920
      %6922 = vrot.lane.b32.xlu0 %v5896, 124
      %v6923 = vpop.permute.xlu0 %6922
      %6924 = vrot.lane.b32.xlu0 %v5221, 124
      %v6925 = vpop.permute.xlu0 %6924
      %6926 = vrot.lane.b32.xlu0 %v5899, 124
      %v6927 = vpop.permute.xlu0 %6926
      %6928 = vrot.lane.b32.xlu0 %v5224, 124
      %v6929 = vpop.permute.xlu0 %6928
      %6930 = vrot.lane.b32.xlu0 %v5902, 124
      %v6931 = vpop.permute.xlu0 %6930
      %6932 = vrot.lane.b32.xlu0 %v5227, 124
      %v6933 = vpop.permute.xlu0 %6932
      %6934 = vrot.lane.b32.xlu0 %v5905, 124
      %v6935 = vpop.permute.xlu0 %6934
      %v6936 = vsel %vm6126, %v6921, %v6923
      %v6937 = vsel %vm6126, %v6925, %v6927
      %v6938 = vsel %vm6126, %v6929, %v6931
      %v6939 = vsel %vm6126, %v6933, %v6935
      %6948 = vrot.lane.b32.xlu0 %v5218, 123
      %v6949 = vpop.permute.xlu0 %6948
      %6950 = vrot.lane.b32.xlu0 %v5896, 123
      %v6951 = vpop.permute.xlu0 %6950
      %6952 = vrot.lane.b32.xlu0 %v5221, 123
      %v6953 = vpop.permute.xlu0 %6952
      %6954 = vrot.lane.b32.xlu0 %v5899, 123
      %v6955 = vpop.permute.xlu0 %6954
      %6956 = vrot.lane.b32.xlu0 %v5224, 123
      %v6957 = vpop.permute.xlu0 %6956
      %6958 = vrot.lane.b32.xlu0 %v5902, 123
      %v6959 = vpop.permute.xlu0 %6958
      %6960 = vrot.lane.b32.xlu0 %v5227, 123
      %v6961 = vpop.permute.xlu0 %6960
      %6962 = vrot.lane.b32.xlu0 %v5905, 123
      %v6963 = vpop.permute.xlu0 %6962
      %v6964 = vsel %vm6155, %v6949, %v6951
      %v6965 = vsel %vm6155, %v6953, %v6955
      %v6966 = vsel %vm6155, %v6957, %v6959
      %v6967 = vsel %vm6155, %v6961, %v6963
      %6976 = vrot.lane.b32.xlu0 %v5218, 122
      %v6977 = vpop.permute.xlu0 %6976
      %6978 = vrot.lane.b32.xlu0 %v5896, 122
      %v6979 = vpop.permute.xlu0 %6978
      %6980 = vrot.lane.b32.xlu0 %v5221, 122
      %v6981 = vpop.permute.xlu0 %6980
      %6982 = vrot.lane.b32.xlu0 %v5899, 122
      %v6983 = vpop.permute.xlu0 %6982
      %6984 = vrot.lane.b32.xlu0 %v5224, 122
      %v6985 = vpop.permute.xlu0 %6984
      %6986 = vrot.lane.b32.xlu0 %v5902, 122
      %v6987 = vpop.permute.xlu0 %6986
      %6988 = vrot.lane.b32.xlu0 %v5227, 122
      %v6989 = vpop.permute.xlu0 %6988
      %6990 = vrot.lane.b32.xlu0 %v5905, 122
      %v6991 = vpop.permute.xlu0 %6990
      %v6992 = vsel %vm6184, %v6977, %v6979
      %v6993 = vsel %vm6184, %v6981, %v6983
      %v6994 = vsel %vm6184, %v6985, %v6987
      %v6995 = vsel %vm6184, %v6989, %v6991
      %7004 = vrot.lane.b32.xlu0 %v5218, 121
      %v7005 = vpop.permute.xlu0 %7004
      %7006 = vrot.lane.b32.xlu0 %v5896, 121
      %v7007 = vpop.permute.xlu0 %7006
      %7008 = vrot.lane.b32.xlu0 %v5221, 121
      %v7009 = vpop.permute.xlu0 %7008
      %7010 = vrot.lane.b32.xlu0 %v5899, 121
      %v7011 = vpop.permute.xlu0 %7010
      %7012 = vrot.lane.b32.xlu0 %v5224, 121
      %v7013 = vpop.permute.xlu0 %7012
      %7014 = vrot.lane.b32.xlu0 %v5902, 121
      %v7015 = vpop.permute.xlu0 %7014
      %7016 = vrot.lane.b32.xlu0 %v5227, 121
      %v7017 = vpop.permute.xlu0 %7016
      %7018 = vrot.lane.b32.xlu0 %v5905, 121
      %v7019 = vpop.permute.xlu0 %7018
      %v7020 = vsel %vm6213, %v7005, %v7007
      %v7021 = vsel %vm6213, %v7009, %v7011
      %v7022 = vsel %vm6213, %v7013, %v7015
      %v7023 = vsel %vm6213, %v7017, %v7019
      %7032 = vrot.lane.b32.xlu0 %v5218, 120
      %v7033 = vpop.permute.xlu0 %7032
      %7034 = vrot.lane.b32.xlu0 %v5896, 120
      %v7035 = vpop.permute.xlu0 %7034
      %7036 = vrot.lane.b32.xlu0 %v5221, 120
      %v7037 = vpop.permute.xlu0 %7036
      %7038 = vrot.lane.b32.xlu0 %v5899, 120
      %v7039 = vpop.permute.xlu0 %7038
      %7040 = vrot.lane.b32.xlu0 %v5224, 120
      %v7041 = vpop.permute.xlu0 %7040
      %7042 = vrot.lane.b32.xlu0 %v5902, 120
      %v7043 = vpop.permute.xlu0 %7042
      %7044 = vrot.lane.b32.xlu0 %v5227, 120
      %v7045 = vpop.permute.xlu0 %7044
      %7046 = vrot.lane.b32.xlu0 %v5905, 120
      %v7047 = vpop.permute.xlu0 %7046
      %v7048 = vsel %vm6242, %v7033, %v7035
      %v7049 = vsel %vm6242, %v7037, %v7039
      %v7050 = vsel %vm6242, %v7041, %v7043
      %v7051 = vsel %vm6242, %v7045, %v7047
      %7060 = vrot.lane.b32.xlu0 %v5218, 119
      %v7061 = vpop.permute.xlu0 %7060
      %7062 = vrot.lane.b32.xlu0 %v5896, 119
      %v7063 = vpop.permute.xlu0 %7062
      %7064 = vrot.lane.b32.xlu0 %v5221, 119
      %v7065 = vpop.permute.xlu0 %7064
      %7066 = vrot.lane.b32.xlu0 %v5899, 119
      %v7067 = vpop.permute.xlu0 %7066
      %7068 = vrot.lane.b32.xlu0 %v5224, 119
      %v7069 = vpop.permute.xlu0 %7068
      %7070 = vrot.lane.b32.xlu0 %v5902, 119
      %v7071 = vpop.permute.xlu0 %7070
      %7072 = vrot.lane.b32.xlu0 %v5227, 119
      %v7073 = vpop.permute.xlu0 %7072
      %7074 = vrot.lane.b32.xlu0 %v5905, 119
      %v7075 = vpop.permute.xlu0 %7074
      %v7076 = vsel %vm6271, %v7061, %v7063
      %v7077 = vsel %vm6271, %v7065, %v7067
      %v7078 = vsel %vm6271, %v7069, %v7071
      %v7079 = vsel %vm6271, %v7073, %v7075
      %7088 = vrot.lane.b32.xlu0 %v5218, 118
      %v7089 = vpop.permute.xlu0 %7088
      %7090 = vrot.lane.b32.xlu0 %v5896, 118
      %v7091 = vpop.permute.xlu0 %7090
      %7092 = vrot.lane.b32.xlu0 %v5221, 118
      %v7093 = vpop.permute.xlu0 %7092
      %7094 = vrot.lane.b32.xlu0 %v5899, 118
      %v7095 = vpop.permute.xlu0 %7094
      %7096 = vrot.lane.b32.xlu0 %v5224, 118
      %v7097 = vpop.permute.xlu0 %7096
      %7098 = vrot.lane.b32.xlu0 %v5902, 118
      %v7099 = vpop.permute.xlu0 %7098
      %7100 = vrot.lane.b32.xlu0 %v5227, 118
      %v7101 = vpop.permute.xlu0 %7100
      %7102 = vrot.lane.b32.xlu0 %v5905, 118
      %v7103 = vpop.permute.xlu0 %7102
      %v7104 = vsel %vm6300, %v7089, %v7091
      %v7105 = vsel %vm6300, %v7093, %v7095
      %v7106 = vsel %vm6300, %v7097, %v7099
      %v7107 = vsel %vm6300, %v7101, %v7103
      %7116 = vrot.lane.b32.xlu0 %v5218, 117
      %v7117 = vpop.permute.xlu0 %7116
      %7118 = vrot.lane.b32.xlu0 %v5896, 117
      %v7119 = vpop.permute.xlu0 %7118
      %7120 = vrot.lane.b32.xlu0 %v5221, 117
      %v7121 = vpop.permute.xlu0 %7120
      %7122 = vrot.lane.b32.xlu0 %v5899, 117
      %v7123 = vpop.permute.xlu0 %7122
      %7124 = vrot.lane.b32.xlu0 %v5224, 117
      %v7125 = vpop.permute.xlu0 %7124
      %7126 = vrot.lane.b32.xlu0 %v5902, 117
      %v7127 = vpop.permute.xlu0 %7126
      %7128 = vrot.lane.b32.xlu0 %v5227, 117
      %v7129 = vpop.permute.xlu0 %7128
      %7130 = vrot.lane.b32.xlu0 %v5905, 117
      %v7131 = vpop.permute.xlu0 %7130
      %v7132 = vsel %vm6329, %v7117, %v7119
      %v7133 = vsel %vm6329, %v7121, %v7123
      %v7134 = vsel %vm6329, %v7125, %v7127
      %v7135 = vsel %vm6329, %v7129, %v7131
      %7144 = vrot.lane.b32.xlu0 %v5218, 116
      %v7145 = vpop.permute.xlu0 %7144
      %7146 = vrot.lane.b32.xlu0 %v5896, 116
      %v7147 = vpop.permute.xlu0 %7146
      %7148 = vrot.lane.b32.xlu0 %v5221, 116
      %v7149 = vpop.permute.xlu0 %7148
      %7150 = vrot.lane.b32.xlu0 %v5899, 116
      %v7151 = vpop.permute.xlu0 %7150
      %7152 = vrot.lane.b32.xlu0 %v5224, 116
      %v7153 = vpop.permute.xlu0 %7152
      %7154 = vrot.lane.b32.xlu0 %v5902, 116
      %v7155 = vpop.permute.xlu0 %7154
      %7156 = vrot.lane.b32.xlu0 %v5227, 116
      %v7157 = vpop.permute.xlu0 %7156
      %7158 = vrot.lane.b32.xlu0 %v5905, 116
      %v7159 = vpop.permute.xlu0 %7158
      %v7160 = vsel %vm6358, %v7145, %v7147
      %v7161 = vsel %vm6358, %v7149, %v7151
      %v7162 = vsel %vm6358, %v7153, %v7155
      %v7163 = vsel %vm6358, %v7157, %v7159
      %7172 = vrot.lane.b32.xlu0 %v5218, 115
      %v7173 = vpop.permute.xlu0 %7172
      %7174 = vrot.lane.b32.xlu0 %v5896, 115
      %v7175 = vpop.permute.xlu0 %7174
      %7176 = vrot.lane.b32.xlu0 %v5221, 115
      %v7177 = vpop.permute.xlu0 %7176
      %7178 = vrot.lane.b32.xlu0 %v5899, 115
      %v7179 = vpop.permute.xlu0 %7178
      %7180 = vrot.lane.b32.xlu0 %v5224, 115
      %v7181 = vpop.permute.xlu0 %7180
      %7182 = vrot.lane.b32.xlu0 %v5902, 115
      %v7183 = vpop.permute.xlu0 %7182
      %7184 = vrot.lane.b32.xlu0 %v5227, 115
      %v7185 = vpop.permute.xlu0 %7184
      %7186 = vrot.lane.b32.xlu0 %v5905, 115
      %v7187 = vpop.permute.xlu0 %7186
      %v7188 = vsel %vm6387, %v7173, %v7175
      %v7189 = vsel %vm6387, %v7177, %v7179
      %v7190 = vsel %vm6387, %v7181, %v7183
      %v7191 = vsel %vm6387, %v7185, %v7187
      %7200 = vrot.lane.b32.xlu0 %v5218, 114
      %v7201 = vpop.permute.xlu0 %7200
      %7202 = vrot.lane.b32.xlu0 %v5896, 114
      %v7203 = vpop.permute.xlu0 %7202
      %7204 = vrot.lane.b32.xlu0 %v5221, 114
      %v7205 = vpop.permute.xlu0 %7204
      %7206 = vrot.lane.b32.xlu0 %v5899, 114
      %v7207 = vpop.permute.xlu0 %7206
      %7208 = vrot.lane.b32.xlu0 %v5224, 114
      %v7209 = vpop.permute.xlu0 %7208
      %7210 = vrot.lane.b32.xlu0 %v5902, 114
      %v7211 = vpop.permute.xlu0 %7210
      %7212 = vrot.lane.b32.xlu0 %v5227, 114
      %v7213 = vpop.permute.xlu0 %7212
      %7214 = vrot.lane.b32.xlu0 %v5905, 114
      %v7215 = vpop.permute.xlu0 %7214
      %v7216 = vsel %vm6416, %v7201, %v7203
      %v7217 = vsel %vm6416, %v7205, %v7207
      %v7218 = vsel %vm6416, %v7209, %v7211
      %v7219 = vsel %vm6416, %v7213, %v7215
      %7228 = vmatpush.msra.mxu0 %v6911
      %7229 = vmatpush.msra.mxu0 %v6910
      %7230 = vmatpush.msra.mxu0 %v6909
      %7231 = vmatpush.msra.mxu0 %v6908
      %7232 = vmatpush.msra.mxu0 %v6883
      %7233 = vmatpush.msra.mxu0 %v6882
      %7234 = vmatpush.msra.mxu0 %v6881
      %7235 = vmatpush.msra.mxu0 %v6880
      %7236 = vmatpush.msra.mxu0 %v6855
      %7237 = vmatpush.msra.mxu0 %v6854
      %7238 = vmatpush.msra.mxu0 %v6853
      %7239 = vmatpush.msra.mxu0 %v6852
      %7240 = vmatpush.msra.mxu0 %v5227
      %7241 = vmatpush.msra.mxu0 %v5224
      %7242 = vmatpush.msra.mxu0 %v5221
      %7243 = vmatpush.msra.mxu0 %v5218
      %7244 = vmatmul.f32.gmra.mxu0 %v5979
      %v7245 = vpop.f32.mrf.mxu0
      %v7246 = vadd.f32 %v6432, %v7245
      %7247 = vmatmul.f32.gmra.mxu0 %v5983
      %v7248 = vpop.f32.mrf.mxu0
      %v7249 = vadd.f32 %v6437, %v7248
      %7250 = vmatmul.f32.gmra.mxu0 %v5987
      %v7251 = vpop.f32.mrf.mxu0
      %v7252 = vadd.f32 %v6442, %v7251
      %7253 = vmatmul.f32.gmra.mxu0 %v5991
      %v7254 = vpop.f32.mrf.mxu0
      %v7255 = vadd.f32 %v6447, %v7254
      %7256 = vdwg.mxu0
      %7257 = vmatpush.msra.mxu0 %v7023
      %7258 = vmatpush.msra.mxu0 %v7022
      %7259 = vmatpush.msra.mxu0 %v7021
      %7260 = vmatpush.msra.mxu0 %v7020
      %7261 = vmatpush.msra.mxu0 %v6995
      %7262 = vmatpush.msra.mxu0 %v6994
      %7263 = vmatpush.msra.mxu0 %v6993
      %7264 = vmatpush.msra.mxu0 %v6992
      %7265 = vmatpush.msra.mxu0 %v6967
      %7266 = vmatpush.msra.mxu0 %v6966
      %7267 = vmatpush.msra.mxu0 %v6965
      %7268 = vmatpush.msra.mxu0 %v6964
      %7269 = vmatpush.msra.mxu0 %v6939
      %7270 = vmatpush.msra.mxu0 %v6938
      %7271 = vmatpush.msra.mxu0 %v6937
      %7272 = vmatpush.msra.mxu0 %v6936
      %7273 = vmatmul.f32.gmra.mxu0 %v5980
      %v7274 = vpop.f32.mrf.mxu0
      %v7275 = vadd.f32 %v7246, %v7274
      %7276 = vmatmul.f32.gmra.mxu0 %v5984
      %v7277 = vpop.f32.mrf.mxu0
      %v7278 = vadd.f32 %v7249, %v7277
      %7279 = vmatmul.f32.gmra.mxu0 %v5988
      %v7280 = vpop.f32.mrf.mxu0
      %v7281 = vadd.f32 %v7252, %v7280
      %7282 = vmatmul.f32.gmra.mxu0 %v5992
      %v7283 = vpop.f32.mrf.mxu0
      %v7284 = vadd.f32 %v7255, %v7283
      %7285 = vdwg.mxu0
      %7286 = vmatpush.msra.mxu0 %v7135
      %7287 = vmatpush.msra.mxu0 %v7134
      %7288 = vmatpush.msra.mxu0 %v7133
      %7289 = vmatpush.msra.mxu0 %v7132
      %7290 = vmatpush.msra.mxu0 %v7107
      %7291 = vmatpush.msra.mxu0 %v7106
      %7292 = vmatpush.msra.mxu0 %v7105
      %7293 = vmatpush.msra.mxu0 %v7104
      %7294 = vmatpush.msra.mxu0 %v7079
      %7295 = vmatpush.msra.mxu0 %v7078
      %7296 = vmatpush.msra.mxu0 %v7077
      %7297 = vmatpush.msra.mxu0 %v7076
      %7298 = vmatpush.msra.mxu0 %v7051
      %7299 = vmatpush.msra.mxu0 %v7050
      %7300 = vmatpush.msra.mxu0 %v7049
      %7301 = vmatpush.msra.mxu0 %v7048
      %7302 = vmatmul.f32.gmra.mxu0 %v5981
      %v7303 = vpop.f32.mrf.mxu0
      %v7304 = vadd.f32 %v7275, %v7303
      %7305 = vmatmul.f32.gmra.mxu0 %v5985
      %v7306 = vpop.f32.mrf.mxu0
      %v7307 = vadd.f32 %v7278, %v7306
      %7308 = vmatmul.f32.gmra.mxu0 %v5989
      %v7309 = vpop.f32.mrf.mxu0
      %v7310 = vadd.f32 %v7281, %v7309
      %7311 = vmatmul.f32.gmra.mxu0 %v5993
      %v7312 = vpop.f32.mrf.mxu0
      %v7313 = vadd.f32 %v7284, %v7312
      %7314 = vdwg.mxu0
      %7315 = vmatpush.msra.mxu0 0.0
      %7316 = vmatpush.msra.mxu0 0.0
      %7317 = vmatpush.msra.mxu0 0.0
      %7318 = vmatpush.msra.mxu0 0.0
      %7319 = vmatpush.msra.mxu0 %v7219
      %7320 = vmatpush.msra.mxu0 %v7218
      %7321 = vmatpush.msra.mxu0 %v7217
      %7322 = vmatpush.msra.mxu0 %v7216
      %7323 = vmatpush.msra.mxu0 %v7191
      %7324 = vmatpush.msra.mxu0 %v7190
      %7325 = vmatpush.msra.mxu0 %v7189
      %7326 = vmatpush.msra.mxu0 %v7188
      %7327 = vmatpush.msra.mxu0 %v7163
      %7328 = vmatpush.msra.mxu0 %v7162
      %7329 = vmatpush.msra.mxu0 %v7161
      %7330 = vmatpush.msra.mxu0 %v7160
      %7331 = vmatmul.f32.gmra.mxu0 %v6451
      %v7332 = vpop.f32.mrf.mxu0
      %v7333 = vadd.f32 %v7304, %v7332
      %7334 = vmatmul.f32.gmra.mxu0 %v6454
      %v7335 = vpop.f32.mrf.mxu0
      %v7336 = vadd.f32 %v7307, %v7335
      %7337 = vmatmul.f32.gmra.mxu0 %v6457
      %v7338 = vpop.f32.mrf.mxu0
      %v7339 = vadd.f32 %v7310, %v7338
      %7340 = vmatmul.f32.gmra.mxu0 %v6460
      %v7341 = vpop.f32.mrf.mxu0
      %v7342 = vadd.f32 %v7313, %v7341
      %7343 = vdwg.mxu0
      %7344 = vmatpush.msra.mxu0 %v6907
      %7345 = vmatpush.msra.mxu0 %v6903
      %7346 = vmatpush.msra.mxu0 %v6899
      %7347 = vmatpush.msra.mxu0 %v6895
      %7348 = vmatpush.msra.mxu0 %v6879
      %7349 = vmatpush.msra.mxu0 %v6875
      %7350 = vmatpush.msra.mxu0 %v6871
      %7351 = vmatpush.msra.mxu0 %v6867
      %7352 = vmatpush.msra.mxu0 %v6851
      %7353 = vmatpush.msra.mxu0 %v6847
      %7354 = vmatpush.msra.mxu0 %v6843
      %7355 = vmatpush.msra.mxu0 %v6839
      %7356 = vmatpush.msra.mxu0 %v5905
      %7357 = vmatpush.msra.mxu0 %v5902
      %7358 = vmatpush.msra.mxu0 %v5899
      %7359 = vmatpush.msra.mxu0 %v5896
      %7360 = vmatmul.f32.gmra.mxu0 %v5979
      %v7361 = vpop.f32.mrf.mxu0
      %v7362 = vadd.f32 %v6432, %v7361
      %7363 = vmatmul.f32.gmra.mxu0 %v5983
      %v7364 = vpop.f32.mrf.mxu0
      %v7365 = vadd.f32 %v6437, %v7364
      %7366 = vmatmul.f32.gmra.mxu0 %v5987
      %v7367 = vpop.f32.mrf.mxu0
      %v7368 = vadd.f32 %v6442, %v7367
      %7369 = vmatmul.f32.gmra.mxu0 %v5991
      %v7370 = vpop.f32.mrf.mxu0
      %v7371 = vadd.f32 %v6447, %v7370
      %7372 = vdwg.mxu0
      %7373 = vmatpush.msra.mxu0 %v7019
      %7374 = vmatpush.msra.mxu0 %v7015
      %7375 = vmatpush.msra.mxu0 %v7011
      %7376 = vmatpush.msra.mxu0 %v7007
      %7377 = vmatpush.msra.mxu0 %v6991
      %7378 = vmatpush.msra.mxu0 %v6987
      %7379 = vmatpush.msra.mxu0 %v6983
      %7380 = vmatpush.msra.mxu0 %v6979
      %7381 = vmatpush.msra.mxu0 %v6963
      %7382 = vmatpush.msra.mxu0 %v6959
      %7383 = vmatpush.msra.mxu0 %v6955
      %7384 = vmatpush.msra.mxu0 %v6951
      %7385 = vmatpush.msra.mxu0 %v6935
      %7386 = vmatpush.msra.mxu0 %v6931
      %7387 = vmatpush.msra.mxu0 %v6927
      %7388 = vmatpush.msra.mxu0 %v6923
      %7389 = vmatmul.f32.gmra.mxu0 %v5980
      %v7390 = vpop.f32.mrf.mxu0
      %v7391 = vadd.f32 %v7362, %v7390
      %7392 = vmatmul.f32.gmra.mxu0 %v5984
      %v7393 = vpop.f32.mrf.mxu0
      %v7394 = vadd.f32 %v7365, %v7393
      %7395 = vmatmul.f32.gmra.mxu0 %v5988
      %v7396 = vpop.f32.mrf.mxu0
      %v7397 = vadd.f32 %v7368, %v7396
      %7398 = vmatmul.f32.gmra.mxu0 %v5992
      %v7399 = vpop.f32.mrf.mxu0
      %v7400 = vadd.f32 %v7371, %v7399
      %7401 = vdwg.mxu0
      %7402 = vmatpush.msra.mxu0 %v7131
      %7403 = vmatpush.msra.mxu0 %v7127
      %7404 = vmatpush.msra.mxu0 %v7123
      %7405 = vmatpush.msra.mxu0 %v7119
      %7406 = vmatpush.msra.mxu0 %v7103
      %7407 = vmatpush.msra.mxu0 %v7099
      %7408 = vmatpush.msra.mxu0 %v7095
      %7409 = vmatpush.msra.mxu0 %v7091
      %7410 = vmatpush.msra.mxu0 %v7075
      %7411 = vmatpush.msra.mxu0 %v7071
      %7412 = vmatpush.msra.mxu0 %v7067
      %7413 = vmatpush.msra.mxu0 %v7063
      %7414 = vmatpush.msra.mxu0 %v7047
      %7415 = vmatpush.msra.mxu0 %v7043
      %7416 = vmatpush.msra.mxu0 %v7039
      %7417 = vmatpush.msra.mxu0 %v7035
      %7418 = vmatmul.f32.gmra.mxu0 %v5981
      %v7419 = vpop.f32.mrf.mxu0
      %v7420 = vadd.f32 %v7391, %v7419
      %7421 = vmatmul.f32.gmra.mxu0 %v5985
      %v7422 = vpop.f32.mrf.mxu0
      %v7423 = vadd.f32 %v7394, %v7422
      %7424 = vmatmul.f32.gmra.mxu0 %v5989
      %v7425 = vpop.f32.mrf.mxu0
      %v7426 = vadd.f32 %v7397, %v7425
      %7427 = vmatmul.f32.gmra.mxu0 %v5993
      %v7428 = vpop.f32.mrf.mxu0
      %v7429 = vadd.f32 %v7400, %v7428
      %7430 = vdwg.mxu0
      %7431 = vmatpush.msra.mxu0 0.0
      %7432 = vmatpush.msra.mxu0 0.0
      %7433 = vmatpush.msra.mxu0 0.0
      %7434 = vmatpush.msra.mxu0 0.0
      %7435 = vmatpush.msra.mxu0 %v7215
      %7436 = vmatpush.msra.mxu0 %v7211
      %7437 = vmatpush.msra.mxu0 %v7207
      %7438 = vmatpush.msra.mxu0 %v7203
      %7439 = vmatpush.msra.mxu0 %v7187
      %7440 = vmatpush.msra.mxu0 %v7183
      %7441 = vmatpush.msra.mxu0 %v7179
      %7442 = vmatpush.msra.mxu0 %v7175
      %7443 = vmatpush.msra.mxu0 %v7159
      %7444 = vmatpush.msra.mxu0 %v7155
      %7445 = vmatpush.msra.mxu0 %v7151
      %7446 = vmatpush.msra.mxu0 %v7147
      %7447 = vmatmul.f32.gmra.mxu0 %v6451
      %v7448 = vpop.f32.mrf.mxu0
      %v7449 = vadd.f32 %v7420, %v7448
      %7450 = vmatmul.f32.gmra.mxu0 %v6454
      %v7451 = vpop.f32.mrf.mxu0
      %v7452 = vadd.f32 %v7423, %v7451
      %7453 = vmatmul.f32.gmra.mxu0 %v6457
      %v7454 = vpop.f32.mrf.mxu0
      %v7455 = vadd.f32 %v7426, %v7454
      %7456 = vmatmul.f32.gmra.mxu0 %v6460
      %v7457 = vpop.f32.mrf.mxu0
      %v7458 = vadd.f32 %v7429, %v7457
      %7459 = vdwg.mxu0
      %vm7460 = vcmp.gt.f32.partialorder %v7333, 0.0
      %vm7461 = vcmp.gt.f32.partialorder %v7449, 0.0
      %vm7462 = vcmp.gt.f32.partialorder %v7336, 0.0
      %vm7463 = vcmp.gt.f32.partialorder %v7452, 0.0
      %vm7464 = vcmp.gt.f32.partialorder %v7339, 0.0
      %vm7465 = vcmp.gt.f32.partialorder %v7455, 0.0
      %vm7466 = vcmp.gt.f32.partialorder %v7342, 0.0
      %vm7467 = vcmp.gt.f32.partialorder %v7458, 0.0
      %v7468 = vmin.f32 %v7333, 0.0
      %v7469 = vmin.f32 %v7449, 0.0
      %v7470 = vmin.f32 %v7336, 0.0
      %v7471 = vmin.f32 %v7452, 0.0
      %v7472 = vmin.f32 %v7339, 0.0
      %v7473 = vmin.f32 %v7455, 0.0
      %v7474 = vmin.f32 %v7342, 0.0
      %v7475 = vmin.f32 %v7458, 0.0
      %v7476 = vmul.f32 %v7468, 1.442695
      %v7477 = vpow.pop %v7476
      %v7478 = vmul.f32 %v7469, 1.442695
      %v7479 = vpow.pop %v7478
      %v7480 = vmul.f32 %v7470, 1.442695
      %v7481 = vpow.pop %v7480
      %v7482 = vmul.f32 %v7471, 1.442695
      %v7483 = vpow.pop %v7482
      %v7484 = vmul.f32 %v7472, 1.442695
      %v7485 = vpow.pop %v7484
      %v7486 = vmul.f32 %v7473, 1.442695
      %v7487 = vpow.pop %v7486
      %v7488 = vmul.f32 %v7474, 1.442695
      %v7489 = vpow.pop %v7488
      %v7490 = vmul.f32 %v7475, 1.442695
      %v7491 = vpow.pop %v7490
      %v7492 = vsub.f32 %v7477, 1.0
      %v7493 = vsub.f32 %v7479, 1.0
      %v7494 = vsub.f32 %v7481, 1.0
      %v7495 = vsub.f32 %v7483, 1.0
      %v7496 = vsub.f32 %v7485, 1.0
      %v7497 = vsub.f32 %v7487, 1.0
      %v7498 = vsub.f32 %v7489, 1.0
      %v7499 = vsub.f32 %v7491, 1.0
      %v7500 = vsel %vm7460, %v7333, %v7492
      %v7501 = vsel %vm7461, %v7449, %v7493
      %v7502 = vsel %vm7462, %v7336, %v7494
      %v7503 = vsel %vm7463, %v7452, %v7495
      %v7504 = vsel %vm7464, %v7339, %v7496
      %v7505 = vsel %vm7465, %v7455, %v7497
      %v7506 = vsel %vm7466, %v7342, %v7498
      %v7507 = vsel %vm7467, %v7458, %v7499
      %v7508 = vmul.f32 %v5999, %v7500
      %v7509 = vmul.f32 %v6000, %v7501
      %v7510 = vmul.f32 %v6001, %v7502
      %v7511 = vmul.f32 %v6002, %v7503
      %v7512 = vmul.f32 %v6003, %v7504
      %v7513 = vmul.f32 %v6004, %v7505
      %v7514 = vmul.f32 %v6005, %v7506
      %v7515 = vmul.f32 %v6006, %v7507
      %v7516 = vmul.f32 %v6007, %v7500
      %v7517 = vmul.f32 %v6008, %v7501
      %v7518 = vmul.f32 %v6009, %v7502
      %v7519 = vmul.f32 %v6010, %v7503
      %v7520 = vmul.f32 %v6011, %v7504
      %v7521 = vmul.f32 %v6012, %v7505
      %v7522 = vmul.f32 %v6013, %v7506
      %v7523 = vmul.f32 %v6014, %v7507
      %v7524 = vsel %vm6758, %v7509, 0.0
      %v7525 = vadd.f32 %v7508, %v7524
      %7526 = vadd.xlane.f32.xlu0 %v7525
      %v7527 = vpop.xlane.xlu0 %7526
      %v7528 = vsel %vm6758, %v7511, 0.0
      %v7529 = vadd.f32 %v7510, %v7528
      %7530 = vadd.xlane.f32.xlu0 %v7529
      %v7531 = vpop.xlane.xlu0 %7530
      %v7532 = vsel %vm6758, %v7513, 0.0
      %v7533 = vadd.f32 %v7512, %v7532
      %7534 = vadd.xlane.f32.xlu0 %v7533
      %v7535 = vpop.xlane.xlu0 %7534
      %v7536 = vsel %vm6758, %v7515, 0.0
      %v7537 = vadd.f32 %v7514, %v7536
      %7538 = vadd.xlane.f32.xlu0 %v7537
      %v7539 = vpop.xlane.xlu0 %7538
      %v7540 = vsel %vm6758, %v7517, 0.0
      %v7541 = vadd.f32 %v7516, %v7540
      %7542 = vadd.xlane.f32.xlu0 %v7541
      %v7543 = vpop.xlane.xlu0 %7542
      %v7544 = vsel %vm6758, %v7519, 0.0
      %v7545 = vadd.f32 %v7518, %v7544
      %7546 = vadd.xlane.f32.xlu0 %v7545
      %v7547 = vpop.xlane.xlu0 %7546
      %v7548 = vsel %vm6758, %v7521, 0.0
      %v7549 = vadd.f32 %v7520, %v7548
      %7550 = vadd.xlane.f32.xlu0 %v7549
      %v7551 = vpop.xlane.xlu0 %7550
      %v7552 = vsel %vm6758, %v7523, 0.0
      %v7553 = vadd.f32 %v7522, %v7552
      %7554 = vadd.xlane.f32.xlu0 %v7553
      %v7555 = vpop.xlane.xlu0 %7554
      %v7564 = vperm.slane %v7527, %v6800
      %v7565 = vperm.slane %v7531, %v6802
      %v7566 = vsel %vm6804, %v7565, %v7564
      %v7567 = vperm.slane %v7535, %v6806
      %v7568 = vsel %vm6808, %v7567, %v7566
      %v7569 = vperm.slane %v7539, %v6810
      %v7570 = vsel %vm6812, %v7569, %v7568
      %v7571 = vperm.slane %v7543, %v6800
      %v7572 = vperm.slane %v7547, %v6802
      %v7573 = vsel %vm6804, %v7572, %v7571
      %v7574 = vperm.slane %v7551, %v6806
      %v7575 = vsel %vm6808, %v7574, %v7573
      %v7576 = vperm.slane %v7555, %v6810
      %v7577 = vsel %vm6812, %v7576, %v7575
      %v7578 = vsel %vm6821, %v7577, %v7570
      %v7580 = vsel %vm6824, %v7578, 0.0
      %7581 = vadd.xlane.f32.xlu0 %v7580
      %v7582 = vpop.xlane.xlu0 %7581
      %7591 = vrot.lane.b32.xlu0 %v5230, 127
      %v7592 = vpop.permute.xlu0 %7591
      %7593 = vrot.lane.b32.xlu0 %v5908, 127
      %v7594 = vpop.permute.xlu0 %7593
      %7595 = vrot.lane.b32.xlu0 %v5233, 127
      %v7596 = vpop.permute.xlu0 %7595
      %7597 = vrot.lane.b32.xlu0 %v5911, 127
      %v7598 = vpop.permute.xlu0 %7597
      %7599 = vrot.lane.b32.xlu0 %v5236, 127
      %v7600 = vpop.permute.xlu0 %7599
      %7601 = vrot.lane.b32.xlu0 %v5914, 127
      %v7602 = vpop.permute.xlu0 %7601
      %7603 = vrot.lane.b32.xlu0 %v5239, 127
      %v7604 = vpop.permute.xlu0 %7603
      %7605 = vrot.lane.b32.xlu0 %v5917, 127
      %v7606 = vpop.permute.xlu0 %7605
      %v7607 = vsel %vm6039, %v7592, %v7594
      %v7608 = vsel %vm6039, %v7596, %v7598
      %v7609 = vsel %vm6039, %v7600, %v7602
      %v7610 = vsel %vm6039, %v7604, %v7606
      %7619 = vrot.lane.b32.xlu0 %v5230, 126
      %v7620 = vpop.permute.xlu0 %7619
      %7621 = vrot.lane.b32.xlu0 %v5908, 126
      %v7622 = vpop.permute.xlu0 %7621
      %7623 = vrot.lane.b32.xlu0 %v5233, 126
      %v7624 = vpop.permute.xlu0 %7623
      %7625 = vrot.lane.b32.xlu0 %v5911, 126
      %v7626 = vpop.permute.xlu0 %7625
      %7627 = vrot.lane.b32.xlu0 %v5236, 126
      %v7628 = vpop.permute.xlu0 %7627
      %7629 = vrot.lane.b32.xlu0 %v5914, 126
      %v7630 = vpop.permute.xlu0 %7629
      %7631 = vrot.lane.b32.xlu0 %v5239, 126
      %v7632 = vpop.permute.xlu0 %7631
      %7633 = vrot.lane.b32.xlu0 %v5917, 126
      %v7634 = vpop.permute.xlu0 %7633
      %v7635 = vsel %vm6068, %v7620, %v7622
      %v7636 = vsel %vm6068, %v7624, %v7626
      %v7637 = vsel %vm6068, %v7628, %v7630
      %v7638 = vsel %vm6068, %v7632, %v7634
      %7647 = vrot.lane.b32.xlu0 %v5230, 125
      %v7648 = vpop.permute.xlu0 %7647
      %7649 = vrot.lane.b32.xlu0 %v5908, 125
      %v7650 = vpop.permute.xlu0 %7649
      %7651 = vrot.lane.b32.xlu0 %v5233, 125
      %v7652 = vpop.permute.xlu0 %7651
      %7653 = vrot.lane.b32.xlu0 %v5911, 125
      %v7654 = vpop.permute.xlu0 %7653
      %7655 = vrot.lane.b32.xlu0 %v5236, 125
      %v7656 = vpop.permute.xlu0 %7655
      %7657 = vrot.lane.b32.xlu0 %v5914, 125
      %v7658 = vpop.permute.xlu0 %7657
      %7659 = vrot.lane.b32.xlu0 %v5239, 125
      %v7660 = vpop.permute.xlu0 %7659
      %7661 = vrot.lane.b32.xlu0 %v5917, 125
      %v7662 = vpop.permute.xlu0 %7661
      %v7663 = vsel %vm6097, %v7648, %v7650
      %v7664 = vsel %vm6097, %v7652, %v7654
      %v7665 = vsel %vm6097, %v7656, %v7658
      %v7666 = vsel %vm6097, %v7660, %v7662
      %7675 = vrot.lane.b32.xlu0 %v5230, 124
      %v7676 = vpop.permute.xlu0 %7675
      %7677 = vrot.lane.b32.xlu0 %v5908, 124
      %v7678 = vpop.permute.xlu0 %7677
      %7679 = vrot.lane.b32.xlu0 %v5233, 124
      %v7680 = vpop.permute.xlu0 %7679
      %7681 = vrot.lane.b32.xlu0 %v5911, 124
      %v7682 = vpop.permute.xlu0 %7681
      %7683 = vrot.lane.b32.xlu0 %v5236, 124
      %v7684 = vpop.permute.xlu0 %7683
      %7685 = vrot.lane.b32.xlu0 %v5914, 124
      %v7686 = vpop.permute.xlu0 %7685
      %7687 = vrot.lane.b32.xlu0 %v5239, 124
      %v7688 = vpop.permute.xlu0 %7687
      %7689 = vrot.lane.b32.xlu0 %v5917, 124
      %v7690 = vpop.permute.xlu0 %7689
      %v7691 = vsel %vm6126, %v7676, %v7678
      %v7692 = vsel %vm6126, %v7680, %v7682
      %v7693 = vsel %vm6126, %v7684, %v7686
      %v7694 = vsel %vm6126, %v7688, %v7690
      %7703 = vrot.lane.b32.xlu0 %v5230, 123
      %v7704 = vpop.permute.xlu0 %7703
      %7705 = vrot.lane.b32.xlu0 %v5908, 123
      %v7706 = vpop.permute.xlu0 %7705
      %7707 = vrot.lane.b32.xlu0 %v5233, 123
      %v7708 = vpop.permute.xlu0 %7707
      %7709 = vrot.lane.b32.xlu0 %v5911, 123
      %v7710 = vpop.permute.xlu0 %7709
      %7711 = vrot.lane.b32.xlu0 %v5236, 123
      %v7712 = vpop.permute.xlu0 %7711
      %7713 = vrot.lane.b32.xlu0 %v5914, 123
      %v7714 = vpop.permute.xlu0 %7713
      %7715 = vrot.lane.b32.xlu0 %v5239, 123
      %v7716 = vpop.permute.xlu0 %7715
      %7717 = vrot.lane.b32.xlu0 %v5917, 123
      %v7718 = vpop.permute.xlu0 %7717
      %v7719 = vsel %vm6155, %v7704, %v7706
      %v7720 = vsel %vm6155, %v7708, %v7710
      %v7721 = vsel %vm6155, %v7712, %v7714
      %v7722 = vsel %vm6155, %v7716, %v7718
      %7731 = vrot.lane.b32.xlu0 %v5230, 122
      %v7732 = vpop.permute.xlu0 %7731
      %7733 = vrot.lane.b32.xlu0 %v5908, 122
      %v7734 = vpop.permute.xlu0 %7733
      %7735 = vrot.lane.b32.xlu0 %v5233, 122
      %v7736 = vpop.permute.xlu0 %7735
      %7737 = vrot.lane.b32.xlu0 %v5911, 122
      %v7738 = vpop.permute.xlu0 %7737
      %7739 = vrot.lane.b32.xlu0 %v5236, 122
      %v7740 = vpop.permute.xlu0 %7739
      %7741 = vrot.lane.b32.xlu0 %v5914, 122
      %v7742 = vpop.permute.xlu0 %7741
      %7743 = vrot.lane.b32.xlu0 %v5239, 122
      %v7744 = vpop.permute.xlu0 %7743
      %7745 = vrot.lane.b32.xlu0 %v5917, 122
      %v7746 = vpop.permute.xlu0 %7745
      %v7747 = vsel %vm6184, %v7732, %v7734
      %v7748 = vsel %vm6184, %v7736, %v7738
      %v7749 = vsel %vm6184, %v7740, %v7742
      %v7750 = vsel %vm6184, %v7744, %v7746
      %7759 = vrot.lane.b32.xlu0 %v5230, 121
      %v7760 = vpop.permute.xlu0 %7759
      %7761 = vrot.lane.b32.xlu0 %v5908, 121
      %v7762 = vpop.permute.xlu0 %7761
      %7763 = vrot.lane.b32.xlu0 %v5233, 121
      %v7764 = vpop.permute.xlu0 %7763
      %7765 = vrot.lane.b32.xlu0 %v5911, 121
      %v7766 = vpop.permute.xlu0 %7765
      %7767 = vrot.lane.b32.xlu0 %v5236, 121
      %v7768 = vpop.permute.xlu0 %7767
      %7769 = vrot.lane.b32.xlu0 %v5914, 121
      %v7770 = vpop.permute.xlu0 %7769
      %7771 = vrot.lane.b32.xlu0 %v5239, 121
      %v7772 = vpop.permute.xlu0 %7771
      %7773 = vrot.lane.b32.xlu0 %v5917, 121
      %v7774 = vpop.permute.xlu0 %7773
      %v7775 = vsel %vm6213, %v7760, %v7762
      %v7776 = vsel %vm6213, %v7764, %v7766
      %v7777 = vsel %vm6213, %v7768, %v7770
      %v7778 = vsel %vm6213, %v7772, %v7774
      %7787 = vrot.lane.b32.xlu0 %v5230, 120
      %v7788 = vpop.permute.xlu0 %7787
      %7789 = vrot.lane.b32.xlu0 %v5908, 120
      %v7790 = vpop.permute.xlu0 %7789
      %7791 = vrot.lane.b32.xlu0 %v5233, 120
      %v7792 = vpop.permute.xlu0 %7791
      %7793 = vrot.lane.b32.xlu0 %v5911, 120
      %v7794 = vpop.permute.xlu0 %7793
      %7795 = vrot.lane.b32.xlu0 %v5236, 120
      %v7796 = vpop.permute.xlu0 %7795
      %7797 = vrot.lane.b32.xlu0 %v5914, 120
      %v7798 = vpop.permute.xlu0 %7797
      %7799 = vrot.lane.b32.xlu0 %v5239, 120
      %v7800 = vpop.permute.xlu0 %7799
      %7801 = vrot.lane.b32.xlu0 %v5917, 120
      %v7802 = vpop.permute.xlu0 %7801
      %v7803 = vsel %vm6242, %v7788, %v7790
      %v7804 = vsel %vm6242, %v7792, %v7794
      %v7805 = vsel %vm6242, %v7796, %v7798
      %v7806 = vsel %vm6242, %v7800, %v7802
      %7815 = vrot.lane.b32.xlu0 %v5230, 119
      %v7816 = vpop.permute.xlu0 %7815
      %7817 = vrot.lane.b32.xlu0 %v5908, 119
      %v7818 = vpop.permute.xlu0 %7817
      %7819 = vrot.lane.b32.xlu0 %v5233, 119
      %v7820 = vpop.permute.xlu0 %7819
      %7821 = vrot.lane.b32.xlu0 %v5911, 119
      %v7822 = vpop.permute.xlu0 %7821
      %7823 = vrot.lane.b32.xlu0 %v5236, 119
      %v7824 = vpop.permute.xlu0 %7823
      %7825 = vrot.lane.b32.xlu0 %v5914, 119
      %v7826 = vpop.permute.xlu0 %7825
      %7827 = vrot.lane.b32.xlu0 %v5239, 119
      %v7828 = vpop.permute.xlu0 %7827
      %7829 = vrot.lane.b32.xlu0 %v5917, 119
      %v7830 = vpop.permute.xlu0 %7829
      %v7831 = vsel %vm6271, %v7816, %v7818
      %v7832 = vsel %vm6271, %v7820, %v7822
      %v7833 = vsel %vm6271, %v7824, %v7826
      %v7834 = vsel %vm6271, %v7828, %v7830
      %7843 = vrot.lane.b32.xlu0 %v5230, 118
      %v7844 = vpop.permute.xlu0 %7843
      %7845 = vrot.lane.b32.xlu0 %v5908, 118
      %v7846 = vpop.permute.xlu0 %7845
      %7847 = vrot.lane.b32.xlu0 %v5233, 118
      %v7848 = vpop.permute.xlu0 %7847
      %7849 = vrot.lane.b32.xlu0 %v5911, 118
      %v7850 = vpop.permute.xlu0 %7849
      %7851 = vrot.lane.b32.xlu0 %v5236, 118
      %v7852 = vpop.permute.xlu0 %7851
      %7853 = vrot.lane.b32.xlu0 %v5914, 118
      %v7854 = vpop.permute.xlu0 %7853
      %7855 = vrot.lane.b32.xlu0 %v5239, 118
      %v7856 = vpop.permute.xlu0 %7855
      %7857 = vrot.lane.b32.xlu0 %v5917, 118
      %v7858 = vpop.permute.xlu0 %7857
      %v7859 = vsel %vm6300, %v7844, %v7846
      %v7860 = vsel %vm6300, %v7848, %v7850
      %v7861 = vsel %vm6300, %v7852, %v7854
      %v7862 = vsel %vm6300, %v7856, %v7858
      %7871 = vrot.lane.b32.xlu0 %v5230, 117
      %v7872 = vpop.permute.xlu0 %7871
      %7873 = vrot.lane.b32.xlu0 %v5908, 117
      %v7874 = vpop.permute.xlu0 %7873
      %7875 = vrot.lane.b32.xlu0 %v5233, 117
      %v7876 = vpop.permute.xlu0 %7875
      %7877 = vrot.lane.b32.xlu0 %v5911, 117
      %v7878 = vpop.permute.xlu0 %7877
      %7879 = vrot.lane.b32.xlu0 %v5236, 117
      %v7880 = vpop.permute.xlu0 %7879
      %7881 = vrot.lane.b32.xlu0 %v5914, 117
      %v7882 = vpop.permute.xlu0 %7881
      %7883 = vrot.lane.b32.xlu0 %v5239, 117
      %v7884 = vpop.permute.xlu0 %7883
      %7885 = vrot.lane.b32.xlu0 %v5917, 117
      %v7886 = vpop.permute.xlu0 %7885
      %v7887 = vsel %vm6329, %v7872, %v7874
      %v7888 = vsel %vm6329, %v7876, %v7878
      %v7889 = vsel %vm6329, %v7880, %v7882
      %v7890 = vsel %vm6329, %v7884, %v7886
      %7899 = vrot.lane.b32.xlu0 %v5230, 116
      %v7900 = vpop.permute.xlu0 %7899
      %7901 = vrot.lane.b32.xlu0 %v5908, 116
      %v7902 = vpop.permute.xlu0 %7901
      %7903 = vrot.lane.b32.xlu0 %v5233, 116
      %v7904 = vpop.permute.xlu0 %7903
      %7905 = vrot.lane.b32.xlu0 %v5911, 116
      %v7906 = vpop.permute.xlu0 %7905
      %7907 = vrot.lane.b32.xlu0 %v5236, 116
      %v7908 = vpop.permute.xlu0 %7907
      %7909 = vrot.lane.b32.xlu0 %v5914, 116
      %v7910 = vpop.permute.xlu0 %7909
      %7911 = vrot.lane.b32.xlu0 %v5239, 116
      %v7912 = vpop.permute.xlu0 %7911
      %7913 = vrot.lane.b32.xlu0 %v5917, 116
      %v7914 = vpop.permute.xlu0 %7913
      %v7915 = vsel %vm6358, %v7900, %v7902
      %v7916 = vsel %vm6358, %v7904, %v7906
      %v7917 = vsel %vm6358, %v7908, %v7910
      %v7918 = vsel %vm6358, %v7912, %v7914
      %7927 = vrot.lane.b32.xlu0 %v5230, 115
      %v7928 = vpop.permute.xlu0 %7927
      %7929 = vrot.lane.b32.xlu0 %v5908, 115
      %v7930 = vpop.permute.xlu0 %7929
      %7931 = vrot.lane.b32.xlu0 %v5233, 115
      %v7932 = vpop.permute.xlu0 %7931
      %7933 = vrot.lane.b32.xlu0 %v5911, 115
      %v7934 = vpop.permute.xlu0 %7933
      %7935 = vrot.lane.b32.xlu0 %v5236, 115
      %v7936 = vpop.permute.xlu0 %7935
      %7937 = vrot.lane.b32.xlu0 %v5914, 115
      %v7938 = vpop.permute.xlu0 %7937
      %7939 = vrot.lane.b32.xlu0 %v5239, 115
      %v7940 = vpop.permute.xlu0 %7939
      %7941 = vrot.lane.b32.xlu0 %v5917, 115
      %v7942 = vpop.permute.xlu0 %7941
      %v7943 = vsel %vm6387, %v7928, %v7930
      %v7944 = vsel %vm6387, %v7932, %v7934
      %v7945 = vsel %vm6387, %v7936, %v7938
      %v7946 = vsel %vm6387, %v7940, %v7942
      %7955 = vrot.lane.b32.xlu0 %v5230, 114
      %v7956 = vpop.permute.xlu0 %7955
      %7957 = vrot.lane.b32.xlu0 %v5908, 114
      %v7958 = vpop.permute.xlu0 %7957
      %7959 = vrot.lane.b32.xlu0 %v5233, 114
      %v7960 = vpop.permute.xlu0 %7959
      %7961 = vrot.lane.b32.xlu0 %v5911, 114
      %v7962 = vpop.permute.xlu0 %7961
      %7963 = vrot.lane.b32.xlu0 %v5236, 114
      %v7964 = vpop.permute.xlu0 %7963
      %7965 = vrot.lane.b32.xlu0 %v5914, 114
      %v7966 = vpop.permute.xlu0 %7965
      %7967 = vrot.lane.b32.xlu0 %v5239, 114
      %v7968 = vpop.permute.xlu0 %7967
      %7969 = vrot.lane.b32.xlu0 %v5917, 114
      %v7970 = vpop.permute.xlu0 %7969
      %v7971 = vsel %vm6416, %v7956, %v7958
      %v7972 = vsel %vm6416, %v7960, %v7962
      %v7973 = vsel %vm6416, %v7964, %v7966
      %v7974 = vsel %vm6416, %v7968, %v7970
      %7983 = vmatpush.msra.mxu0 %v7666
      %7984 = vmatpush.msra.mxu0 %v7665
      %7985 = vmatpush.msra.mxu0 %v7664
      %7986 = vmatpush.msra.mxu0 %v7663
      %7987 = vmatpush.msra.mxu0 %v7638
      %7988 = vmatpush.msra.mxu0 %v7637
      %7989 = vmatpush.msra.mxu0 %v7636
      %7990 = vmatpush.msra.mxu0 %v7635
      %7991 = vmatpush.msra.mxu0 %v7610
      %7992 = vmatpush.msra.mxu0 %v7609
      %7993 = vmatpush.msra.mxu0 %v7608
      %7994 = vmatpush.msra.mxu0 %v7607
      %7995 = vmatpush.msra.mxu0 %v5239
      %7996 = vmatpush.msra.mxu0 %v5236
      %7997 = vmatpush.msra.mxu0 %v5233
      %7998 = vmatpush.msra.mxu0 %v5230
      %7999 = vmatmul.f32.gmra.mxu0 %v5979
      %v8000 = vpop.f32.mrf.mxu0
      %v8001 = vadd.f32 %v6432, %v8000
      %8002 = vmatmul.f32.gmra.mxu0 %v5983
      %v8003 = vpop.f32.mrf.mxu0
      %v8004 = vadd.f32 %v6437, %v8003
      %8005 = vmatmul.f32.gmra.mxu0 %v5987
      %v8006 = vpop.f32.mrf.mxu0
      %v8007 = vadd.f32 %v6442, %v8006
      %8008 = vmatmul.f32.gmra.mxu0 %v5991
      %v8009 = vpop.f32.mrf.mxu0
      %v8010 = vadd.f32 %v6447, %v8009
      %8011 = vdwg.mxu0
      %8012 = vmatpush.msra.mxu0 %v7778
      %8013 = vmatpush.msra.mxu0 %v7777
      %8014 = vmatpush.msra.mxu0 %v7776
      %8015 = vmatpush.msra.mxu0 %v7775
      %8016 = vmatpush.msra.mxu0 %v7750
      %8017 = vmatpush.msra.mxu0 %v7749
      %8018 = vmatpush.msra.mxu0 %v7748
      %8019 = vmatpush.msra.mxu0 %v7747
      %8020 = vmatpush.msra.mxu0 %v7722
      %8021 = vmatpush.msra.mxu0 %v7721
      %8022 = vmatpush.msra.mxu0 %v7720
      %8023 = vmatpush.msra.mxu0 %v7719
      %8024 = vmatpush.msra.mxu0 %v7694
      %8025 = vmatpush.msra.mxu0 %v7693
      %8026 = vmatpush.msra.mxu0 %v7692
      %8027 = vmatpush.msra.mxu0 %v7691
      %8028 = vmatmul.f32.gmra.mxu0 %v5980
      %v8029 = vpop.f32.mrf.mxu0
      %v8030 = vadd.f32 %v8001, %v8029
      %8031 = vmatmul.f32.gmra.mxu0 %v5984
      %v8032 = vpop.f32.mrf.mxu0
      %v8033 = vadd.f32 %v8004, %v8032
      %8034 = vmatmul.f32.gmra.mxu0 %v5988
      %v8035 = vpop.f32.mrf.mxu0
      %v8036 = vadd.f32 %v8007, %v8035
      %8037 = vmatmul.f32.gmra.mxu0 %v5992
      %v8038 = vpop.f32.mrf.mxu0
      %v8039 = vadd.f32 %v8010, %v8038
      %8040 = vdwg.mxu0
      %8041 = vmatpush.msra.mxu0 %v7890
      %8042 = vmatpush.msra.mxu0 %v7889
      %8043 = vmatpush.msra.mxu0 %v7888
      %8044 = vmatpush.msra.mxu0 %v7887
      %8045 = vmatpush.msra.mxu0 %v7862
      %8046 = vmatpush.msra.mxu0 %v7861
      %8047 = vmatpush.msra.mxu0 %v7860
      %8048 = vmatpush.msra.mxu0 %v7859
      %8049 = vmatpush.msra.mxu0 %v7834
      %8050 = vmatpush.msra.mxu0 %v7833
      %8051 = vmatpush.msra.mxu0 %v7832
      %8052 = vmatpush.msra.mxu0 %v7831
      %8053 = vmatpush.msra.mxu0 %v7806
      %8054 = vmatpush.msra.mxu0 %v7805
      %8055 = vmatpush.msra.mxu0 %v7804
      %8056 = vmatpush.msra.mxu0 %v7803
      %8057 = vmatmul.f32.gmra.mxu0 %v5981
      %v8058 = vpop.f32.mrf.mxu0
      %v8059 = vadd.f32 %v8030, %v8058
      %8060 = vmatmul.f32.gmra.mxu0 %v5985
      %v8061 = vpop.f32.mrf.mxu0
      %v8062 = vadd.f32 %v8033, %v8061
      %8063 = vmatmul.f32.gmra.mxu0 %v5989
      %v8064 = vpop.f32.mrf.mxu0
      %v8065 = vadd.f32 %v8036, %v8064
      %8066 = vmatmul.f32.gmra.mxu0 %v5993
      %v8067 = vpop.f32.mrf.mxu0
      %v8068 = vadd.f32 %v8039, %v8067
      %8069 = vdwg.mxu0
      %8070 = vmatpush.msra.mxu0 0.0
      %8071 = vmatpush.msra.mxu0 0.0
      %8072 = vmatpush.msra.mxu0 0.0
      %8073 = vmatpush.msra.mxu0 0.0
      %8074 = vmatpush.msra.mxu0 %v7974
      %8075 = vmatpush.msra.mxu0 %v7973
      %8076 = vmatpush.msra.mxu0 %v7972
      %8077 = vmatpush.msra.mxu0 %v7971
      %8078 = vmatpush.msra.mxu0 %v7946
      %8079 = vmatpush.msra.mxu0 %v7945
      %8080 = vmatpush.msra.mxu0 %v7944
      %8081 = vmatpush.msra.mxu0 %v7943
      %8082 = vmatpush.msra.mxu0 %v7918
      %8083 = vmatpush.msra.mxu0 %v7917
      %8084 = vmatpush.msra.mxu0 %v7916
      %8085 = vmatpush.msra.mxu0 %v7915
      %8086 = vmatmul.f32.gmra.mxu0 %v6451
      %v8087 = vpop.f32.mrf.mxu0
      %v8088 = vadd.f32 %v8059, %v8087
      %8089 = vmatmul.f32.gmra.mxu0 %v6454
      %v8090 = vpop.f32.mrf.mxu0
      %v8091 = vadd.f32 %v8062, %v8090
      %8092 = vmatmul.f32.gmra.mxu0 %v6457
      %v8093 = vpop.f32.mrf.mxu0
      %v8094 = vadd.f32 %v8065, %v8093
      %8095 = vmatmul.f32.gmra.mxu0 %v6460
      %v8096 = vpop.f32.mrf.mxu0
      %v8097 = vadd.f32 %v8068, %v8096
      %8098 = vdwg.mxu0
      %8099 = vmatpush.msra.mxu0 %v7662
      %8100 = vmatpush.msra.mxu0 %v7658
      %8101 = vmatpush.msra.mxu0 %v7654
      %8102 = vmatpush.msra.mxu0 %v7650
      %8103 = vmatpush.msra.mxu0 %v7634
      %8104 = vmatpush.msra.mxu0 %v7630
      %8105 = vmatpush.msra.mxu0 %v7626
      %8106 = vmatpush.msra.mxu0 %v7622
      %8107 = vmatpush.msra.mxu0 %v7606
      %8108 = vmatpush.msra.mxu0 %v7602
      %8109 = vmatpush.msra.mxu0 %v7598
      %8110 = vmatpush.msra.mxu0 %v7594
      %8111 = vmatpush.msra.mxu0 %v5917
      %8112 = vmatpush.msra.mxu0 %v5914
      %8113 = vmatpush.msra.mxu0 %v5911
      %8114 = vmatpush.msra.mxu0 %v5908
      %8115 = vmatmul.f32.gmra.mxu0 %v5979
      %v8116 = vpop.f32.mrf.mxu0
      %v8117 = vadd.f32 %v6432, %v8116
      %8118 = vmatmul.f32.gmra.mxu0 %v5983
      %v8119 = vpop.f32.mrf.mxu0
      %v8120 = vadd.f32 %v6437, %v8119
      %8121 = vmatmul.f32.gmra.mxu0 %v5987
      %v8122 = vpop.f32.mrf.mxu0
      %v8123 = vadd.f32 %v6442, %v8122
      %8124 = vmatmul.f32.gmra.mxu0 %v5991
      %v8125 = vpop.f32.mrf.mxu0
      %v8126 = vadd.f32 %v6447, %v8125
      %8127 = vdwg.mxu0
      %8128 = vmatpush.msra.mxu0 %v7774
      %8129 = vmatpush.msra.mxu0 %v7770
      %8130 = vmatpush.msra.mxu0 %v7766
      %8131 = vmatpush.msra.mxu0 %v7762
      %8132 = vmatpush.msra.mxu0 %v7746
      %8133 = vmatpush.msra.mxu0 %v7742
      %8134 = vmatpush.msra.mxu0 %v7738
      %8135 = vmatpush.msra.mxu0 %v7734
      %8136 = vmatpush.msra.mxu0 %v7718
      %8137 = vmatpush.msra.mxu0 %v7714
      %8138 = vmatpush.msra.mxu0 %v7710
      %8139 = vmatpush.msra.mxu0 %v7706
      %8140 = vmatpush.msra.mxu0 %v7690
      %8141 = vmatpush.msra.mxu0 %v7686
      %8142 = vmatpush.msra.mxu0 %v7682
      %8143 = vmatpush.msra.mxu0 %v7678
      %8144 = vmatmul.f32.gmra.mxu0 %v5980
      %v8145 = vpop.f32.mrf.mxu0
      %v8146 = vadd.f32 %v8117, %v8145
      %8147 = vmatmul.f32.gmra.mxu0 %v5984
      %v8148 = vpop.f32.mrf.mxu0
      %v8149 = vadd.f32 %v8120, %v8148
      %8150 = vmatmul.f32.gmra.mxu0 %v5988
      %v8151 = vpop.f32.mrf.mxu0
      %v8152 = vadd.f32 %v8123, %v8151
      %8153 = vmatmul.f32.gmra.mxu0 %v5992
      %v8154 = vpop.f32.mrf.mxu0
      %v8155 = vadd.f32 %v8126, %v8154
      %8156 = vdwg.mxu0
      %8157 = vmatpush.msra.mxu0 %v7886
      %8158 = vmatpush.msra.mxu0 %v7882
      %8159 = vmatpush.msra.mxu0 %v7878
      %8160 = vmatpush.msra.mxu0 %v7874
      %8161 = vmatpush.msra.mxu0 %v7858
      %8162 = vmatpush.msra.mxu0 %v7854
      %8163 = vmatpush.msra.mxu0 %v7850
      %8164 = vmatpush.msra.mxu0 %v7846
      %8165 = vmatpush.msra.mxu0 %v7830
      %8166 = vmatpush.msra.mxu0 %v7826
      %8167 = vmatpush.msra.mxu0 %v7822
      %8168 = vmatpush.msra.mxu0 %v7818
      %8169 = vmatpush.msra.mxu0 %v7802
      %8170 = vmatpush.msra.mxu0 %v7798
      %8171 = vmatpush.msra.mxu0 %v7794
      %8172 = vmatpush.msra.mxu0 %v7790
      %8173 = vmatmul.f32.gmra.mxu0 %v5981
      %v8174 = vpop.f32.mrf.mxu0
      %v8175 = vadd.f32 %v8146, %v8174
      %8176 = vmatmul.f32.gmra.mxu0 %v5985
      %v8177 = vpop.f32.mrf.mxu0
      %v8178 = vadd.f32 %v8149, %v8177
      %8179 = vmatmul.f32.gmra.mxu0 %v5989
      %v8180 = vpop.f32.mrf.mxu0
      %v8181 = vadd.f32 %v8152, %v8180
      %8182 = vmatmul.f32.gmra.mxu0 %v5993
      %v8183 = vpop.f32.mrf.mxu0
      %v8184 = vadd.f32 %v8155, %v8183
      %8185 = vdwg.mxu0
      %8186 = vmatpush.msra.mxu0 0.0
      %8187 = vmatpush.msra.mxu0 0.0
      %8188 = vmatpush.msra.mxu0 0.0
      %8189 = vmatpush.msra.mxu0 0.0
      %8190 = vmatpush.msra.mxu0 %v7970
      %8191 = vmatpush.msra.mxu0 %v7966
      %8192 = vmatpush.msra.mxu0 %v7962
      %8193 = vmatpush.msra.mxu0 %v7958
      %8194 = vmatpush.msra.mxu0 %v7942
      %8195 = vmatpush.msra.mxu0 %v7938
      %8196 = vmatpush.msra.mxu0 %v7934
      %8197 = vmatpush.msra.mxu0 %v7930
      %8198 = vmatpush.msra.mxu0 %v7914
      %8199 = vmatpush.msra.mxu0 %v7910
      %8200 = vmatpush.msra.mxu0 %v7906
      %8201 = vmatpush.msra.mxu0 %v7902
      %8202 = vmatmul.f32.gmra.mxu0 %v6451
      %v8203 = vpop.f32.mrf.mxu0
      %v8204 = vadd.f32 %v8175, %v8203
      %8205 = vmatmul.f32.gmra.mxu0 %v6454
      %v8206 = vpop.f32.mrf.mxu0
      %v8207 = vadd.f32 %v8178, %v8206
      %8208 = vmatmul.f32.gmra.mxu0 %v6457
      %v8209 = vpop.f32.mrf.mxu0
      %v8210 = vadd.f32 %v8181, %v8209
      %8211 = vmatmul.f32.gmra.mxu0 %v6460
      %v8212 = vpop.f32.mrf.mxu0
      %v8213 = vadd.f32 %v8184, %v8212
      %8214 = vdwg.mxu0
      %vm8215 = vcmp.gt.f32.partialorder %v8088, 0.0
      %vm8216 = vcmp.gt.f32.partialorder %v8204, 0.0
      %vm8217 = vcmp.gt.f32.partialorder %v8091, 0.0
      %vm8218 = vcmp.gt.f32.partialorder %v8207, 0.0
      %vm8219 = vcmp.gt.f32.partialorder %v8094, 0.0
      %vm8220 = vcmp.gt.f32.partialorder %v8210, 0.0
      %vm8221 = vcmp.gt.f32.partialorder %v8097, 0.0
      %vm8222 = vcmp.gt.f32.partialorder %v8213, 0.0
      %v8223 = vmin.f32 %v8088, 0.0
      %v8224 = vmin.f32 %v8204, 0.0
      %v8225 = vmin.f32 %v8091, 0.0
      %v8226 = vmin.f32 %v8207, 0.0
      %v8227 = vmin.f32 %v8094, 0.0
      %v8228 = vmin.f32 %v8210, 0.0
      %v8229 = vmin.f32 %v8097, 0.0
      %v8230 = vmin.f32 %v8213, 0.0
      %v8231 = vmul.f32 %v8223, 1.442695
      %v8232 = vpow.pop %v8231
      %v8233 = vmul.f32 %v8224, 1.442695
      %v8234 = vpow.pop %v8233
      %v8235 = vmul.f32 %v8225, 1.442695
      %v8236 = vpow.pop %v8235
      %v8237 = vmul.f32 %v8226, 1.442695
      %v8238 = vpow.pop %v8237
      %v8239 = vmul.f32 %v8227, 1.442695
      %v8240 = vpow.pop %v8239
      %v8241 = vmul.f32 %v8228, 1.442695
      %v8242 = vpow.pop %v8241
      %v8243 = vmul.f32 %v8229, 1.442695
      %v8244 = vpow.pop %v8243
      %v8245 = vmul.f32 %v8230, 1.442695
      %v8246 = vpow.pop %v8245
      %v8247 = vsub.f32 %v8232, 1.0
      %v8248 = vsub.f32 %v8234, 1.0
      %v8249 = vsub.f32 %v8236, 1.0
      %v8250 = vsub.f32 %v8238, 1.0
      %v8251 = vsub.f32 %v8240, 1.0
      %v8252 = vsub.f32 %v8242, 1.0
      %v8253 = vsub.f32 %v8244, 1.0
      %v8254 = vsub.f32 %v8246, 1.0
      %v8255 = vsel %vm8215, %v8088, %v8247
      %v8256 = vsel %vm8216, %v8204, %v8248
      %v8257 = vsel %vm8217, %v8091, %v8249
      %v8258 = vsel %vm8218, %v8207, %v8250
      %v8259 = vsel %vm8219, %v8094, %v8251
      %v8260 = vsel %vm8220, %v8210, %v8252
      %v8261 = vsel %vm8221, %v8097, %v8253
      %v8262 = vsel %vm8222, %v8213, %v8254
      %v8263 = vmul.f32 %v5999, %v8255
      %v8264 = vmul.f32 %v6000, %v8256
      %v8265 = vmul.f32 %v6001, %v8257
      %v8266 = vmul.f32 %v6002, %v8258
      %v8267 = vmul.f32 %v6003, %v8259
      %v8268 = vmul.f32 %v6004, %v8260
      %v8269 = vmul.f32 %v6005, %v8261
      %v8270 = vmul.f32 %v6006, %v8262
      %v8271 = vmul.f32 %v6007, %v8255
      %v8272 = vmul.f32 %v6008, %v8256
      %v8273 = vmul.f32 %v6009, %v8257
      %v8274 = vmul.f32 %v6010, %v8258
      %v8275 = vmul.f32 %v6011, %v8259
      %v8276 = vmul.f32 %v6012, %v8260
      %v8277 = vmul.f32 %v6013, %v8261
      %v8278 = vmul.f32 %v6014, %v8262
      %v8279 = vsel %vm6758, %v8264, 0.0
      %v8280 = vadd.f32 %v8263, %v8279
      %8281 = vadd.xlane.f32.xlu0 %v8280
      %v8282 = vpop.xlane.xlu0 %8281
      %v8283 = vsel %vm6758, %v8266, 0.0
      %v8284 = vadd.f32 %v8265, %v8283
      %8285 = vadd.xlane.f32.xlu0 %v8284
      %v8286 = vpop.xlane.xlu0 %8285
      %v8287 = vsel %vm6758, %v8268, 0.0
      %v8288 = vadd.f32 %v8267, %v8287
      %8289 = vadd.xlane.f32.xlu0 %v8288
      %v8290 = vpop.xlane.xlu0 %8289
      %v8291 = vsel %vm6758, %v8270, 0.0
      %v8292 = vadd.f32 %v8269, %v8291
      %8293 = vadd.xlane.f32.xlu0 %v8292
      %v8294 = vpop.xlane.xlu0 %8293
      %v8295 = vsel %vm6758, %v8272, 0.0
      %v8296 = vadd.f32 %v8271, %v8295
      %8297 = vadd.xlane.f32.xlu0 %v8296
      %v8298 = vpop.xlane.xlu0 %8297
      %v8299 = vsel %vm6758, %v8274, 0.0
      %v8300 = vadd.f32 %v8273, %v8299
      %8301 = vadd.xlane.f32.xlu0 %v8300
      %v8302 = vpop.xlane.xlu0 %8301
      %v8303 = vsel %vm6758, %v8276, 0.0
      %v8304 = vadd.f32 %v8275, %v8303
      %8305 = vadd.xlane.f32.xlu0 %v8304
      %v8306 = vpop.xlane.xlu0 %8305
      %v8307 = vsel %vm6758, %v8278, 0.0
      %v8308 = vadd.f32 %v8277, %v8307
      %8309 = vadd.xlane.f32.xlu0 %v8308
      %v8310 = vpop.xlane.xlu0 %8309
      %v8319 = vperm.slane %v8282, %v6800
      %v8320 = vperm.slane %v8286, %v6802
      %v8321 = vsel %vm6804, %v8320, %v8319
      %v8322 = vperm.slane %v8290, %v6806
      %v8323 = vsel %vm6808, %v8322, %v8321
      %v8324 = vperm.slane %v8294, %v6810
      %v8325 = vsel %vm6812, %v8324, %v8323
      %v8326 = vperm.slane %v8298, %v6800
      %v8327 = vperm.slane %v8302, %v6802
      %v8328 = vsel %vm6804, %v8327, %v8326
      %v8329 = vperm.slane %v8306, %v6806
      %v8330 = vsel %vm6808, %v8329, %v8328
      %v8331 = vperm.slane %v8310, %v6810
      %v8332 = vsel %vm6812, %v8331, %v8330
      %v8333 = vsel %vm6821, %v8332, %v8325
      %v8335 = vsel %vm6824, %v8333, 0.0
      %8336 = vadd.xlane.f32.xlu0 %v8335
      %v8337 = vpop.xlane.xlu0 %8336
      %8346 = vrot.lane.b32.xlu0 %v5242, 127
      %v8347 = vpop.permute.xlu0 %8346
      %8348 = vrot.lane.b32.xlu0 %v5920, 127
      %v8349 = vpop.permute.xlu0 %8348
      %8350 = vrot.lane.b32.xlu0 %v5245, 127
      %v8351 = vpop.permute.xlu0 %8350
      %8352 = vrot.lane.b32.xlu0 %v5923, 127
      %v8353 = vpop.permute.xlu0 %8352
      %8354 = vrot.lane.b32.xlu0 %v5248, 127
      %v8355 = vpop.permute.xlu0 %8354
      %8356 = vrot.lane.b32.xlu0 %v5926, 127
      %v8357 = vpop.permute.xlu0 %8356
      %8358 = vrot.lane.b32.xlu0 %v5251, 127
      %v8359 = vpop.permute.xlu0 %8358
      %8360 = vrot.lane.b32.xlu0 %v5929, 127
      %v8361 = vpop.permute.xlu0 %8360
      %v8362 = vsel %vm6039, %v8347, %v8349
      %v8363 = vsel %vm6039, %v8351, %v8353
      %v8364 = vsel %vm6039, %v8355, %v8357
      %v8365 = vsel %vm6039, %v8359, %v8361
      %8374 = vrot.lane.b32.xlu0 %v5242, 126
      %v8375 = vpop.permute.xlu0 %8374
      %8376 = vrot.lane.b32.xlu0 %v5920, 126
      %v8377 = vpop.permute.xlu0 %8376
      %8378 = vrot.lane.b32.xlu0 %v5245, 126
      %v8379 = vpop.permute.xlu0 %8378
      %8380 = vrot.lane.b32.xlu0 %v5923, 126
      %v8381 = vpop.permute.xlu0 %8380
      %8382 = vrot.lane.b32.xlu0 %v5248, 126
      %v8383 = vpop.permute.xlu0 %8382
      %8384 = vrot.lane.b32.xlu0 %v5926, 126
      %v8385 = vpop.permute.xlu0 %8384
      %8386 = vrot.lane.b32.xlu0 %v5251, 126
      %v8387 = vpop.permute.xlu0 %8386
      %8388 = vrot.lane.b32.xlu0 %v5929, 126
      %v8389 = vpop.permute.xlu0 %8388
      %v8390 = vsel %vm6068, %v8375, %v8377
      %v8391 = vsel %vm6068, %v8379, %v8381
      %v8392 = vsel %vm6068, %v8383, %v8385
      %v8393 = vsel %vm6068, %v8387, %v8389
      %8402 = vrot.lane.b32.xlu0 %v5242, 125
      %v8403 = vpop.permute.xlu0 %8402
      %8404 = vrot.lane.b32.xlu0 %v5920, 125
      %v8405 = vpop.permute.xlu0 %8404
      %8406 = vrot.lane.b32.xlu0 %v5245, 125
      %v8407 = vpop.permute.xlu0 %8406
      %8408 = vrot.lane.b32.xlu0 %v5923, 125
      %v8409 = vpop.permute.xlu0 %8408
      %8410 = vrot.lane.b32.xlu0 %v5248, 125
      %v8411 = vpop.permute.xlu0 %8410
      %8412 = vrot.lane.b32.xlu0 %v5926, 125
      %v8413 = vpop.permute.xlu0 %8412
      %8414 = vrot.lane.b32.xlu0 %v5251, 125
      %v8415 = vpop.permute.xlu0 %8414
      %8416 = vrot.lane.b32.xlu0 %v5929, 125
      %v8417 = vpop.permute.xlu0 %8416
      %v8418 = vsel %vm6097, %v8403, %v8405
      %v8419 = vsel %vm6097, %v8407, %v8409
      %v8420 = vsel %vm6097, %v8411, %v8413
      %v8421 = vsel %vm6097, %v8415, %v8417
      %8430 = vrot.lane.b32.xlu0 %v5242, 124
      %v8431 = vpop.permute.xlu0 %8430
      %8432 = vrot.lane.b32.xlu0 %v5920, 124
      %v8433 = vpop.permute.xlu0 %8432
      %8434 = vrot.lane.b32.xlu0 %v5245, 124
      %v8435 = vpop.permute.xlu0 %8434
      %8436 = vrot.lane.b32.xlu0 %v5923, 124
      %v8437 = vpop.permute.xlu0 %8436
      %8438 = vrot.lane.b32.xlu0 %v5248, 124
      %v8439 = vpop.permute.xlu0 %8438
      %8440 = vrot.lane.b32.xlu0 %v5926, 124
      %v8441 = vpop.permute.xlu0 %8440
      %8442 = vrot.lane.b32.xlu0 %v5251, 124
      %v8443 = vpop.permute.xlu0 %8442
      %8444 = vrot.lane.b32.xlu0 %v5929, 124
      %v8445 = vpop.permute.xlu0 %8444
      %v8446 = vsel %vm6126, %v8431, %v8433
      %v8447 = vsel %vm6126, %v8435, %v8437
      %v8448 = vsel %vm6126, %v8439, %v8441
      %v8449 = vsel %vm6126, %v8443, %v8445
      %8458 = vrot.lane.b32.xlu0 %v5242, 123
      %v8459 = vpop.permute.xlu0 %8458
      %8460 = vrot.lane.b32.xlu0 %v5920, 123
      %v8461 = vpop.permute.xlu0 %8460
      %8462 = vrot.lane.b32.xlu0 %v5245, 123
      %v8463 = vpop.permute.xlu0 %8462
      %8464 = vrot.lane.b32.xlu0 %v5923, 123
      %v8465 = vpop.permute.xlu0 %8464
      %8466 = vrot.lane.b32.xlu0 %v5248, 123
      %v8467 = vpop.permute.xlu0 %8466
      %8468 = vrot.lane.b32.xlu0 %v5926, 123
      %v8469 = vpop.permute.xlu0 %8468
      %8470 = vrot.lane.b32.xlu0 %v5251, 123
      %v8471 = vpop.permute.xlu0 %8470
      %8472 = vrot.lane.b32.xlu0 %v5929, 123
      %v8473 = vpop.permute.xlu0 %8472
      %v8474 = vsel %vm6155, %v8459, %v8461
      %v8475 = vsel %vm6155, %v8463, %v8465
      %v8476 = vsel %vm6155, %v8467, %v8469
      %v8477 = vsel %vm6155, %v8471, %v8473
      %8486 = vrot.lane.b32.xlu0 %v5242, 122
      %v8487 = vpop.permute.xlu0 %8486
      %8488 = vrot.lane.b32.xlu0 %v5920, 122
      %v8489 = vpop.permute.xlu0 %8488
      %8490 = vrot.lane.b32.xlu0 %v5245, 122
      %v8491 = vpop.permute.xlu0 %8490
      %8492 = vrot.lane.b32.xlu0 %v5923, 122
      %v8493 = vpop.permute.xlu0 %8492
      %8494 = vrot.lane.b32.xlu0 %v5248, 122
      %v8495 = vpop.permute.xlu0 %8494
      %8496 = vrot.lane.b32.xlu0 %v5926, 122
      %v8497 = vpop.permute.xlu0 %8496
      %8498 = vrot.lane.b32.xlu0 %v5251, 122
      %v8499 = vpop.permute.xlu0 %8498
      %8500 = vrot.lane.b32.xlu0 %v5929, 122
      %v8501 = vpop.permute.xlu0 %8500
      %v8502 = vsel %vm6184, %v8487, %v8489
      %v8503 = vsel %vm6184, %v8491, %v8493
      %v8504 = vsel %vm6184, %v8495, %v8497
      %v8505 = vsel %vm6184, %v8499, %v8501
      %8514 = vrot.lane.b32.xlu0 %v5242, 121
      %v8515 = vpop.permute.xlu0 %8514
      %8516 = vrot.lane.b32.xlu0 %v5920, 121
      %v8517 = vpop.permute.xlu0 %8516
      %8518 = vrot.lane.b32.xlu0 %v5245, 121
      %v8519 = vpop.permute.xlu0 %8518
      %8520 = vrot.lane.b32.xlu0 %v5923, 121
      %v8521 = vpop.permute.xlu0 %8520
      %8522 = vrot.lane.b32.xlu0 %v5248, 121
      %v8523 = vpop.permute.xlu0 %8522
      %8524 = vrot.lane.b32.xlu0 %v5926, 121
      %v8525 = vpop.permute.xlu0 %8524
      %8526 = vrot.lane.b32.xlu0 %v5251, 121
      %v8527 = vpop.permute.xlu0 %8526
      %8528 = vrot.lane.b32.xlu0 %v5929, 121
      %v8529 = vpop.permute.xlu0 %8528
      %v8530 = vsel %vm6213, %v8515, %v8517
      %v8531 = vsel %vm6213, %v8519, %v8521
      %v8532 = vsel %vm6213, %v8523, %v8525
      %v8533 = vsel %vm6213, %v8527, %v8529
      %8542 = vrot.lane.b32.xlu0 %v5242, 120
      %v8543 = vpop.permute.xlu0 %8542
      %8544 = vrot.lane.b32.xlu0 %v5920, 120
      %v8545 = vpop.permute.xlu0 %8544
      %8546 = vrot.lane.b32.xlu0 %v5245, 120
      %v8547 = vpop.permute.xlu0 %8546
      %8548 = vrot.lane.b32.xlu0 %v5923, 120
      %v8549 = vpop.permute.xlu0 %8548
      %8550 = vrot.lane.b32.xlu0 %v5248, 120
      %v8551 = vpop.permute.xlu0 %8550
      %8552 = vrot.lane.b32.xlu0 %v5926, 120
      %v8553 = vpop.permute.xlu0 %8552
      %8554 = vrot.lane.b32.xlu0 %v5251, 120
      %v8555 = vpop.permute.xlu0 %8554
      %8556 = vrot.lane.b32.xlu0 %v5929, 120
      %v8557 = vpop.permute.xlu0 %8556
      %v8558 = vsel %vm6242, %v8543, %v8545
      %v8559 = vsel %vm6242, %v8547, %v8549
      %v8560 = vsel %vm6242, %v8551, %v8553
      %v8561 = vsel %vm6242, %v8555, %v8557
      %8570 = vrot.lane.b32.xlu0 %v5242, 119
      %v8571 = vpop.permute.xlu0 %8570
      %8572 = vrot.lane.b32.xlu0 %v5920, 119
      %v8573 = vpop.permute.xlu0 %8572
      %8574 = vrot.lane.b32.xlu0 %v5245, 119
      %v8575 = vpop.permute.xlu0 %8574
      %8576 = vrot.lane.b32.xlu0 %v5923, 119
      %v8577 = vpop.permute.xlu0 %8576
      %8578 = vrot.lane.b32.xlu0 %v5248, 119
      %v8579 = vpop.permute.xlu0 %8578
      %8580 = vrot.lane.b32.xlu0 %v5926, 119
      %v8581 = vpop.permute.xlu0 %8580
      %8582 = vrot.lane.b32.xlu0 %v5251, 119
      %v8583 = vpop.permute.xlu0 %8582
      %8584 = vrot.lane.b32.xlu0 %v5929, 119
      %v8585 = vpop.permute.xlu0 %8584
      %v8586 = vsel %vm6271, %v8571, %v8573
      %v8587 = vsel %vm6271, %v8575, %v8577
      %v8588 = vsel %vm6271, %v8579, %v8581
      %v8589 = vsel %vm6271, %v8583, %v8585
      %8598 = vrot.lane.b32.xlu0 %v5242, 118
      %v8599 = vpop.permute.xlu0 %8598
      %8600 = vrot.lane.b32.xlu0 %v5920, 118
      %v8601 = vpop.permute.xlu0 %8600
      %8602 = vrot.lane.b32.xlu0 %v5245, 118
      %v8603 = vpop.permute.xlu0 %8602
      %8604 = vrot.lane.b32.xlu0 %v5923, 118
      %v8605 = vpop.permute.xlu0 %8604
      %8606 = vrot.lane.b32.xlu0 %v5248, 118
      %v8607 = vpop.permute.xlu0 %8606
      %8608 = vrot.lane.b32.xlu0 %v5926, 118
      %v8609 = vpop.permute.xlu0 %8608
      %8610 = vrot.lane.b32.xlu0 %v5251, 118
      %v8611 = vpop.permute.xlu0 %8610
      %8612 = vrot.lane.b32.xlu0 %v5929, 118
      %v8613 = vpop.permute.xlu0 %8612
      %v8614 = vsel %vm6300, %v8599, %v8601
      %v8615 = vsel %vm6300, %v8603, %v8605
      %v8616 = vsel %vm6300, %v8607, %v8609
      %v8617 = vsel %vm6300, %v8611, %v8613
      %8626 = vrot.lane.b32.xlu0 %v5242, 117
      %v8627 = vpop.permute.xlu0 %8626
      %8628 = vrot.lane.b32.xlu0 %v5920, 117
      %v8629 = vpop.permute.xlu0 %8628
      %8630 = vrot.lane.b32.xlu0 %v5245, 117
      %v8631 = vpop.permute.xlu0 %8630
      %8632 = vrot.lane.b32.xlu0 %v5923, 117
      %v8633 = vpop.permute.xlu0 %8632
      %8634 = vrot.lane.b32.xlu0 %v5248, 117
      %v8635 = vpop.permute.xlu0 %8634
      %8636 = vrot.lane.b32.xlu0 %v5926, 117
      %v8637 = vpop.permute.xlu0 %8636
      %8638 = vrot.lane.b32.xlu0 %v5251, 117
      %v8639 = vpop.permute.xlu0 %8638
      %8640 = vrot.lane.b32.xlu0 %v5929, 117
      %v8641 = vpop.permute.xlu0 %8640
      %v8642 = vsel %vm6329, %v8627, %v8629
      %v8643 = vsel %vm6329, %v8631, %v8633
      %v8644 = vsel %vm6329, %v8635, %v8637
      %v8645 = vsel %vm6329, %v8639, %v8641
      %8654 = vrot.lane.b32.xlu0 %v5242, 116
      %v8655 = vpop.permute.xlu0 %8654
      %8656 = vrot.lane.b32.xlu0 %v5920, 116
      %v8657 = vpop.permute.xlu0 %8656
      %8658 = vrot.lane.b32.xlu0 %v5245, 116
      %v8659 = vpop.permute.xlu0 %8658
      %8660 = vrot.lane.b32.xlu0 %v5923, 116
      %v8661 = vpop.permute.xlu0 %8660
      %8662 = vrot.lane.b32.xlu0 %v5248, 116
      %v8663 = vpop.permute.xlu0 %8662
      %8664 = vrot.lane.b32.xlu0 %v5926, 116
      %v8665 = vpop.permute.xlu0 %8664
      %8666 = vrot.lane.b32.xlu0 %v5251, 116
      %v8667 = vpop.permute.xlu0 %8666
      %8668 = vrot.lane.b32.xlu0 %v5929, 116
      %v8669 = vpop.permute.xlu0 %8668
      %v8670 = vsel %vm6358, %v8655, %v8657
      %v8671 = vsel %vm6358, %v8659, %v8661
      %v8672 = vsel %vm6358, %v8663, %v8665
      %v8673 = vsel %vm6358, %v8667, %v8669
      %8682 = vrot.lane.b32.xlu0 %v5242, 115
      %v8683 = vpop.permute.xlu0 %8682
      %8684 = vrot.lane.b32.xlu0 %v5920, 115
      %v8685 = vpop.permute.xlu0 %8684
      %8686 = vrot.lane.b32.xlu0 %v5245, 115
      %v8687 = vpop.permute.xlu0 %8686
      %8688 = vrot.lane.b32.xlu0 %v5923, 115
      %v8689 = vpop.permute.xlu0 %8688
      %8690 = vrot.lane.b32.xlu0 %v5248, 115
      %v8691 = vpop.permute.xlu0 %8690
      %8692 = vrot.lane.b32.xlu0 %v5926, 115
      %v8693 = vpop.permute.xlu0 %8692
      %8694 = vrot.lane.b32.xlu0 %v5251, 115
      %v8695 = vpop.permute.xlu0 %8694
      %8696 = vrot.lane.b32.xlu0 %v5929, 115
      %v8697 = vpop.permute.xlu0 %8696
      %v8698 = vsel %vm6387, %v8683, %v8685
      %v8699 = vsel %vm6387, %v8687, %v8689
      %v8700 = vsel %vm6387, %v8691, %v8693
      %v8701 = vsel %vm6387, %v8695, %v8697
      %8710 = vrot.lane.b32.xlu0 %v5242, 114
      %v8711 = vpop.permute.xlu0 %8710
      %8712 = vrot.lane.b32.xlu0 %v5920, 114
      %v8713 = vpop.permute.xlu0 %8712
      %8714 = vrot.lane.b32.xlu0 %v5245, 114
      %v8715 = vpop.permute.xlu0 %8714
      %8716 = vrot.lane.b32.xlu0 %v5923, 114
      %v8717 = vpop.permute.xlu0 %8716
      %8718 = vrot.lane.b32.xlu0 %v5248, 114
      %v8719 = vpop.permute.xlu0 %8718
      %8720 = vrot.lane.b32.xlu0 %v5926, 114
      %v8721 = vpop.permute.xlu0 %8720
      %8722 = vrot.lane.b32.xlu0 %v5251, 114
      %v8723 = vpop.permute.xlu0 %8722
      %8724 = vrot.lane.b32.xlu0 %v5929, 114
      %v8725 = vpop.permute.xlu0 %8724
      %v8726 = vsel %vm6416, %v8711, %v8713
      %v8727 = vsel %vm6416, %v8715, %v8717
      %v8728 = vsel %vm6416, %v8719, %v8721
      %v8729 = vsel %vm6416, %v8723, %v8725
      %8738 = vmatpush.msra.mxu0 %v8421
      %8739 = vmatpush.msra.mxu0 %v8420
      %8740 = vmatpush.msra.mxu0 %v8419
      %8741 = vmatpush.msra.mxu0 %v8418
      %8742 = vmatpush.msra.mxu0 %v8393
      %8743 = vmatpush.msra.mxu0 %v8392
      %8744 = vmatpush.msra.mxu0 %v8391
      %8745 = vmatpush.msra.mxu0 %v8390
      %8746 = vmatpush.msra.mxu0 %v8365
      %8747 = vmatpush.msra.mxu0 %v8364
      %8748 = vmatpush.msra.mxu0 %v8363
      %8749 = vmatpush.msra.mxu0 %v8362
      %8750 = vmatpush.msra.mxu0 %v5251
      %8751 = vmatpush.msra.mxu0 %v5248
      %8752 = vmatpush.msra.mxu0 %v5245
      %8753 = vmatpush.msra.mxu0 %v5242
      %8754 = vmatmul.f32.gmra.mxu0 %v5979
      %v8755 = vpop.f32.mrf.mxu0
      %v8756 = vadd.f32 %v6432, %v8755
      %8757 = vmatmul.f32.gmra.mxu0 %v5983
      %v8758 = vpop.f32.mrf.mxu0
      %v8759 = vadd.f32 %v6437, %v8758
      %8760 = vmatmul.f32.gmra.mxu0 %v5987
      %v8761 = vpop.f32.mrf.mxu0
      %v8762 = vadd.f32 %v6442, %v8761
      %8763 = vmatmul.f32.gmra.mxu0 %v5991
      %v8764 = vpop.f32.mrf.mxu0
      %v8765 = vadd.f32 %v6447, %v8764
      %8766 = vdwg.mxu0
      %8767 = vmatpush.msra.mxu0 %v8533
      %8768 = vmatpush.msra.mxu0 %v8532
      %8769 = vmatpush.msra.mxu0 %v8531
      %8770 = vmatpush.msra.mxu0 %v8530
      %8771 = vmatpush.msra.mxu0 %v8505
      %8772 = vmatpush.msra.mxu0 %v8504
      %8773 = vmatpush.msra.mxu0 %v8503
      %8774 = vmatpush.msra.mxu0 %v8502
      %8775 = vmatpush.msra.mxu0 %v8477
      %8776 = vmatpush.msra.mxu0 %v8476
      %8777 = vmatpush.msra.mxu0 %v8475
      %8778 = vmatpush.msra.mxu0 %v8474
      %8779 = vmatpush.msra.mxu0 %v8449
      %8780 = vmatpush.msra.mxu0 %v8448
      %8781 = vmatpush.msra.mxu0 %v8447
      %8782 = vmatpush.msra.mxu0 %v8446
      %8783 = vmatmul.f32.gmra.mxu0 %v5980
      %v8784 = vpop.f32.mrf.mxu0
      %v8785 = vadd.f32 %v8756, %v8784
      %8786 = vmatmul.f32.gmra.mxu0 %v5984
      %v8787 = vpop.f32.mrf.mxu0
      %v8788 = vadd.f32 %v8759, %v8787
      %8789 = vmatmul.f32.gmra.mxu0 %v5988
      %v8790 = vpop.f32.mrf.mxu0
      %v8791 = vadd.f32 %v8762, %v8790
      %8792 = vmatmul.f32.gmra.mxu0 %v5992
      %v8793 = vpop.f32.mrf.mxu0
      %v8794 = vadd.f32 %v8765, %v8793
      %8795 = vdwg.mxu0
      %8796 = vmatpush.msra.mxu0 %v8645
      %8797 = vmatpush.msra.mxu0 %v8644
      %8798 = vmatpush.msra.mxu0 %v8643
      %8799 = vmatpush.msra.mxu0 %v8642
      %8800 = vmatpush.msra.mxu0 %v8617
      %8801 = vmatpush.msra.mxu0 %v8616
      %8802 = vmatpush.msra.mxu0 %v8615
      %8803 = vmatpush.msra.mxu0 %v8614
      %8804 = vmatpush.msra.mxu0 %v8589
      %8805 = vmatpush.msra.mxu0 %v8588
      %8806 = vmatpush.msra.mxu0 %v8587
      %8807 = vmatpush.msra.mxu0 %v8586
      %8808 = vmatpush.msra.mxu0 %v8561
      %8809 = vmatpush.msra.mxu0 %v8560
      %8810 = vmatpush.msra.mxu0 %v8559
      %8811 = vmatpush.msra.mxu0 %v8558
      %8812 = vmatmul.f32.gmra.mxu0 %v5981
      %v8813 = vpop.f32.mrf.mxu0
      %v8814 = vadd.f32 %v8785, %v8813
      %8815 = vmatmul.f32.gmra.mxu0 %v5985
      %v8816 = vpop.f32.mrf.mxu0
      %v8817 = vadd.f32 %v8788, %v8816
      %8818 = vmatmul.f32.gmra.mxu0 %v5989
      %v8819 = vpop.f32.mrf.mxu0
      %v8820 = vadd.f32 %v8791, %v8819
      %8821 = vmatmul.f32.gmra.mxu0 %v5993
      %v8822 = vpop.f32.mrf.mxu0
      %v8823 = vadd.f32 %v8794, %v8822
      %8824 = vdwg.mxu0
      %8825 = vmatpush.msra.mxu0 0.0
      %8826 = vmatpush.msra.mxu0 0.0
      %8827 = vmatpush.msra.mxu0 0.0
      %8828 = vmatpush.msra.mxu0 0.0
      %8829 = vmatpush.msra.mxu0 %v8729
      %8830 = vmatpush.msra.mxu0 %v8728
      %8831 = vmatpush.msra.mxu0 %v8727
      %8832 = vmatpush.msra.mxu0 %v8726
      %8833 = vmatpush.msra.mxu0 %v8701
      %8834 = vmatpush.msra.mxu0 %v8700
      %8835 = vmatpush.msra.mxu0 %v8699
      %8836 = vmatpush.msra.mxu0 %v8698
      %8837 = vmatpush.msra.mxu0 %v8673
      %8838 = vmatpush.msra.mxu0 %v8672
      %8839 = vmatpush.msra.mxu0 %v8671
      %8840 = vmatpush.msra.mxu0 %v8670
      %8841 = vmatmul.f32.gmra.mxu0 %v6451
      %v8842 = vpop.f32.mrf.mxu0
      %v8843 = vadd.f32 %v8814, %v8842
      %8844 = vmatmul.f32.gmra.mxu0 %v6454
      %v8845 = vpop.f32.mrf.mxu0
      %v8846 = vadd.f32 %v8817, %v8845
      %8847 = vmatmul.f32.gmra.mxu0 %v6457
      %v8848 = vpop.f32.mrf.mxu0
      %v8849 = vadd.f32 %v8820, %v8848
      %8850 = vmatmul.f32.gmra.mxu0 %v6460
      %v8851 = vpop.f32.mrf.mxu0
      %v8852 = vadd.f32 %v8823, %v8851
      %8853 = vdwg.mxu0
      %8854 = vmatpush.msra.mxu0 %v8417
      %8855 = vmatpush.msra.mxu0 %v8413
      %8856 = vmatpush.msra.mxu0 %v8409
      %8857 = vmatpush.msra.mxu0 %v8405
      %8858 = vmatpush.msra.mxu0 %v8389
      %8859 = vmatpush.msra.mxu0 %v8385
      %8860 = vmatpush.msra.mxu0 %v8381
      %8861 = vmatpush.msra.mxu0 %v8377
      %8862 = vmatpush.msra.mxu0 %v8361
      %8863 = vmatpush.msra.mxu0 %v8357
      %8864 = vmatpush.msra.mxu0 %v8353
      %8865 = vmatpush.msra.mxu0 %v8349
      %8866 = vmatpush.msra.mxu0 %v5929
      %8867 = vmatpush.msra.mxu0 %v5926
      %8868 = vmatpush.msra.mxu0 %v5923
      %8869 = vmatpush.msra.mxu0 %v5920
      %8870 = vmatmul.f32.gmra.mxu0 %v5979
      %v8871 = vpop.f32.mrf.mxu0
      %v8872 = vadd.f32 %v6432, %v8871
      %8873 = vmatmul.f32.gmra.mxu0 %v5983
      %v8874 = vpop.f32.mrf.mxu0
      %v8875 = vadd.f32 %v6437, %v8874
      %8876 = vmatmul.f32.gmra.mxu0 %v5987
      %v8877 = vpop.f32.mrf.mxu0
      %v8878 = vadd.f32 %v6442, %v8877
      %8879 = vmatmul.f32.gmra.mxu0 %v5991
      %v8880 = vpop.f32.mrf.mxu0
      %v8881 = vadd.f32 %v6447, %v8880
      %8882 = vdwg.mxu0
      %8883 = vmatpush.msra.mxu0 %v8529
      %8884 = vmatpush.msra.mxu0 %v8525
      %8885 = vmatpush.msra.mxu0 %v8521
      %8886 = vmatpush.msra.mxu0 %v8517
      %8887 = vmatpush.msra.mxu0 %v8501
      %8888 = vmatpush.msra.mxu0 %v8497
      %8889 = vmatpush.msra.mxu0 %v8493
      %8890 = vmatpush.msra.mxu0 %v8489
      %8891 = vmatpush.msra.mxu0 %v8473
      %8892 = vmatpush.msra.mxu0 %v8469
      %8893 = vmatpush.msra.mxu0 %v8465
      %8894 = vmatpush.msra.mxu0 %v8461
      %8895 = vmatpush.msra.mxu0 %v8445
      %8896 = vmatpush.msra.mxu0 %v8441
      %8897 = vmatpush.msra.mxu0 %v8437
      %8898 = vmatpush.msra.mxu0 %v8433
      %8899 = vmatmul.f32.gmra.mxu0 %v5980
      %v8900 = vpop.f32.mrf.mxu0
      %v8901 = vadd.f32 %v8872, %v8900
      %8902 = vmatmul.f32.gmra.mxu0 %v5984
      %v8903 = vpop.f32.mrf.mxu0
      %v8904 = vadd.f32 %v8875, %v8903
      %8905 = vmatmul.f32.gmra.mxu0 %v5988
      %v8906 = vpop.f32.mrf.mxu0
      %v8907 = vadd.f32 %v8878, %v8906
      %8908 = vmatmul.f32.gmra.mxu0 %v5992
      %v8909 = vpop.f32.mrf.mxu0
      %v8910 = vadd.f32 %v8881, %v8909
      %8911 = vdwg.mxu0
      %8912 = vmatpush.msra.mxu0 %v8641
      %8913 = vmatpush.msra.mxu0 %v8637
      %8914 = vmatpush.msra.mxu0 %v8633
      %8915 = vmatpush.msra.mxu0 %v8629
      %8916 = vmatpush.msra.mxu0 %v8613
      %8917 = vmatpush.msra.mxu0 %v8609
      %8918 = vmatpush.msra.mxu0 %v8605
      %8919 = vmatpush.msra.mxu0 %v8601
      %8920 = vmatpush.msra.mxu0 %v8585
      %8921 = vmatpush.msra.mxu0 %v8581
      %8922 = vmatpush.msra.mxu0 %v8577
      %8923 = vmatpush.msra.mxu0 %v8573
      %8924 = vmatpush.msra.mxu0 %v8557
      %8925 = vmatpush.msra.mxu0 %v8553
      %8926 = vmatpush.msra.mxu0 %v8549
      %8927 = vmatpush.msra.mxu0 %v8545
      %8928 = vmatmul.f32.gmra.mxu0 %v5981
      %v8929 = vpop.f32.mrf.mxu0
      %v8930 = vadd.f32 %v8901, %v8929
      %8931 = vmatmul.f32.gmra.mxu0 %v5985
      %v8932 = vpop.f32.mrf.mxu0
      %v8933 = vadd.f32 %v8904, %v8932
      %8934 = vmatmul.f32.gmra.mxu0 %v5989
      %v8935 = vpop.f32.mrf.mxu0
      %v8936 = vadd.f32 %v8907, %v8935
      %8937 = vmatmul.f32.gmra.mxu0 %v5993
      %v8938 = vpop.f32.mrf.mxu0
      %v8939 = vadd.f32 %v8910, %v8938
      %8940 = vdwg.mxu0
      %8941 = vmatpush.msra.mxu0 0.0
      %8942 = vmatpush.msra.mxu0 0.0
      %8943 = vmatpush.msra.mxu0 0.0
      %8944 = vmatpush.msra.mxu0 0.0
      %8945 = vmatpush.msra.mxu0 %v8725
      %8946 = vmatpush.msra.mxu0 %v8721
      %8947 = vmatpush.msra.mxu0 %v8717
      %8948 = vmatpush.msra.mxu0 %v8713
      %8949 = vmatpush.msra.mxu0 %v8697
      %8950 = vmatpush.msra.mxu0 %v8693
      %8951 = vmatpush.msra.mxu0 %v8689
      %8952 = vmatpush.msra.mxu0 %v8685
      %8953 = vmatpush.msra.mxu0 %v8669
      %8954 = vmatpush.msra.mxu0 %v8665
      %8955 = vmatpush.msra.mxu0 %v8661
      %8956 = vmatpush.msra.mxu0 %v8657
      %8957 = vmatmul.f32.gmra.mxu0 %v6451
      %v8958 = vpop.f32.mrf.mxu0
      %v8959 = vadd.f32 %v8930, %v8958
      %8960 = vmatmul.f32.gmra.mxu0 %v6454
      %v8961 = vpop.f32.mrf.mxu0
      %v8962 = vadd.f32 %v8933, %v8961
      %8963 = vmatmul.f32.gmra.mxu0 %v6457
      %v8964 = vpop.f32.mrf.mxu0
      %v8965 = vadd.f32 %v8936, %v8964
      %8966 = vmatmul.f32.gmra.mxu0 %v6460
      %v8967 = vpop.f32.mrf.mxu0
      %v8968 = vadd.f32 %v8939, %v8967
      %8969 = vdwg.mxu0
      %vm8970 = vcmp.gt.f32.partialorder %v8843, 0.0
      %vm8971 = vcmp.gt.f32.partialorder %v8959, 0.0
      %vm8972 = vcmp.gt.f32.partialorder %v8846, 0.0
      %vm8973 = vcmp.gt.f32.partialorder %v8962, 0.0
      %vm8974 = vcmp.gt.f32.partialorder %v8849, 0.0
      %vm8975 = vcmp.gt.f32.partialorder %v8965, 0.0
      %vm8976 = vcmp.gt.f32.partialorder %v8852, 0.0
      %vm8977 = vcmp.gt.f32.partialorder %v8968, 0.0
      %v8978 = vmin.f32 %v8843, 0.0
      %v8979 = vmin.f32 %v8959, 0.0
      %v8980 = vmin.f32 %v8846, 0.0
      %v8981 = vmin.f32 %v8962, 0.0
      %v8982 = vmin.f32 %v8849, 0.0
      %v8983 = vmin.f32 %v8965, 0.0
      %v8984 = vmin.f32 %v8852, 0.0
      %v8985 = vmin.f32 %v8968, 0.0
      %v8986 = vmul.f32 %v8978, 1.442695
      %v8987 = vpow.pop %v8986
      %v8988 = vmul.f32 %v8979, 1.442695
      %v8989 = vpow.pop %v8988
      %v8990 = vmul.f32 %v8980, 1.442695
      %v8991 = vpow.pop %v8990
      %v8992 = vmul.f32 %v8981, 1.442695
      %v8993 = vpow.pop %v8992
      %v8994 = vmul.f32 %v8982, 1.442695
      %v8995 = vpow.pop %v8994
      %v8996 = vmul.f32 %v8983, 1.442695
      %v8997 = vpow.pop %v8996
      %v8998 = vmul.f32 %v8984, 1.442695
      %v8999 = vpow.pop %v8998
      %v9000 = vmul.f32 %v8985, 1.442695
      %v9001 = vpow.pop %v9000
      %v9002 = vsub.f32 %v8987, 1.0
      %v9003 = vsub.f32 %v8989, 1.0
      %v9004 = vsub.f32 %v8991, 1.0
      %v9005 = vsub.f32 %v8993, 1.0
      %v9006 = vsub.f32 %v8995, 1.0
      %v9007 = vsub.f32 %v8997, 1.0
      %v9008 = vsub.f32 %v8999, 1.0
      %v9009 = vsub.f32 %v9001, 1.0
      %v9010 = vsel %vm8970, %v8843, %v9002
      %v9011 = vsel %vm8971, %v8959, %v9003
      %v9012 = vsel %vm8972, %v8846, %v9004
      %v9013 = vsel %vm8973, %v8962, %v9005
      %v9014 = vsel %vm8974, %v8849, %v9006
      %v9015 = vsel %vm8975, %v8965, %v9007
      %v9016 = vsel %vm8976, %v8852, %v9008
      %v9017 = vsel %vm8977, %v8968, %v9009
      %v9018 = vmul.f32 %v5999, %v9010
      %v9019 = vmul.f32 %v6000, %v9011
      %v9020 = vmul.f32 %v6001, %v9012
      %v9021 = vmul.f32 %v6002, %v9013
      %v9022 = vmul.f32 %v6003, %v9014
      %v9023 = vmul.f32 %v6004, %v9015
      %v9024 = vmul.f32 %v6005, %v9016
      %v9025 = vmul.f32 %v6006, %v9017
      %v9026 = vmul.f32 %v6007, %v9010
      %v9027 = vmul.f32 %v6008, %v9011
      %v9028 = vmul.f32 %v6009, %v9012
      %v9029 = vmul.f32 %v6010, %v9013
      %v9030 = vmul.f32 %v6011, %v9014
      %v9031 = vmul.f32 %v6012, %v9015
      %v9032 = vmul.f32 %v6013, %v9016
      %v9033 = vmul.f32 %v6014, %v9017
      %v9034 = vsel %vm6758, %v9019, 0.0
      %v9035 = vadd.f32 %v9018, %v9034
      %9036 = vadd.xlane.f32.xlu0 %v9035
      %v9037 = vpop.xlane.xlu0 %9036
      %v9038 = vsel %vm6758, %v9021, 0.0
      %v9039 = vadd.f32 %v9020, %v9038
      %9040 = vadd.xlane.f32.xlu0 %v9039
      %v9041 = vpop.xlane.xlu0 %9040
      %v9042 = vsel %vm6758, %v9023, 0.0
      %v9043 = vadd.f32 %v9022, %v9042
      %9044 = vadd.xlane.f32.xlu0 %v9043
      %v9045 = vpop.xlane.xlu0 %9044
      %v9046 = vsel %vm6758, %v9025, 0.0
      %v9047 = vadd.f32 %v9024, %v9046
      %9048 = vadd.xlane.f32.xlu0 %v9047
      %v9049 = vpop.xlane.xlu0 %9048
      %v9050 = vsel %vm6758, %v9027, 0.0
      %v9051 = vadd.f32 %v9026, %v9050
      %9052 = vadd.xlane.f32.xlu0 %v9051
      %v9053 = vpop.xlane.xlu0 %9052
      %v9054 = vsel %vm6758, %v9029, 0.0
      %v9055 = vadd.f32 %v9028, %v9054
      %9056 = vadd.xlane.f32.xlu0 %v9055
      %v9057 = vpop.xlane.xlu0 %9056
      %v9058 = vsel %vm6758, %v9031, 0.0
      %v9059 = vadd.f32 %v9030, %v9058
      %9060 = vadd.xlane.f32.xlu0 %v9059
      %v9061 = vpop.xlane.xlu0 %9060
      %v9062 = vsel %vm6758, %v9033, 0.0
      %v9063 = vadd.f32 %v9032, %v9062
      %9064 = vadd.xlane.f32.xlu0 %v9063
      %v9065 = vpop.xlane.xlu0 %9064
      %v9074 = vperm.slane %v9037, %v6800
      %v9075 = vperm.slane %v9041, %v6802
      %v9076 = vsel %vm6804, %v9075, %v9074
      %v9077 = vperm.slane %v9045, %v6806
      %v9078 = vsel %vm6808, %v9077, %v9076
      %v9079 = vperm.slane %v9049, %v6810
      %v9080 = vsel %vm6812, %v9079, %v9078
      %v9081 = vperm.slane %v9053, %v6800
      %v9082 = vperm.slane %v9057, %v6802
      %v9083 = vsel %vm6804, %v9082, %v9081
      %v9084 = vperm.slane %v9061, %v6806
      %v9085 = vsel %vm6808, %v9084, %v9083
      %v9086 = vperm.slane %v9065, %v6810
      %v9087 = vsel %vm6812, %v9086, %v9085
      %v9088 = vsel %vm6821, %v9087, %v9080
      %v9090 = vsel %vm6824, %v9088, 0.0
      %9091 = vadd.xlane.f32.xlu0 %v9090
      %v9092 = vpop.xlane.xlu0 %9091
      %9101 = vrot.lane.b32.xlu0 %v5254, 127
      %v9102 = vpop.permute.xlu0 %9101
      %9103 = vrot.lane.b32.xlu0 %v5932, 127
      %v9104 = vpop.permute.xlu0 %9103
      %9105 = vrot.lane.b32.xlu0 %v5257, 127
      %v9106 = vpop.permute.xlu0 %9105
      %9107 = vrot.lane.b32.xlu0 %v5935, 127
      %v9108 = vpop.permute.xlu0 %9107
      %9109 = vrot.lane.b32.xlu0 %v5260, 127
      %v9110 = vpop.permute.xlu0 %9109
      %9111 = vrot.lane.b32.xlu0 %v5938, 127
      %v9112 = vpop.permute.xlu0 %9111
      %9113 = vrot.lane.b32.xlu0 %v5263, 127
      %v9114 = vpop.permute.xlu0 %9113
      %9115 = vrot.lane.b32.xlu0 %v5941, 127
      %v9116 = vpop.permute.xlu0 %9115
      %v9117 = vsel %vm6039, %v9102, %v9104
      %v9118 = vsel %vm6039, %v9106, %v9108
      %v9119 = vsel %vm6039, %v9110, %v9112
      %v9120 = vsel %vm6039, %v9114, %v9116
      %9129 = vrot.lane.b32.xlu0 %v5254, 126
      %v9130 = vpop.permute.xlu0 %9129
      %9131 = vrot.lane.b32.xlu0 %v5932, 126
      %v9132 = vpop.permute.xlu0 %9131
      %9133 = vrot.lane.b32.xlu0 %v5257, 126
      %v9134 = vpop.permute.xlu0 %9133
      %9135 = vrot.lane.b32.xlu0 %v5935, 126
      %v9136 = vpop.permute.xlu0 %9135
      %9137 = vrot.lane.b32.xlu0 %v5260, 126
      %v9138 = vpop.permute.xlu0 %9137
      %9139 = vrot.lane.b32.xlu0 %v5938, 126
      %v9140 = vpop.permute.xlu0 %9139
      %9141 = vrot.lane.b32.xlu0 %v5263, 126
      %v9142 = vpop.permute.xlu0 %9141
      %9143 = vrot.lane.b32.xlu0 %v5941, 126
      %v9144 = vpop.permute.xlu0 %9143
      %v9145 = vsel %vm6068, %v9130, %v9132
      %v9146 = vsel %vm6068, %v9134, %v9136
      %v9147 = vsel %vm6068, %v9138, %v9140
      %v9148 = vsel %vm6068, %v9142, %v9144
      %9157 = vrot.lane.b32.xlu0 %v5254, 125
      %v9158 = vpop.permute.xlu0 %9157
      %9159 = vrot.lane.b32.xlu0 %v5932, 125
      %v9160 = vpop.permute.xlu0 %9159
      %9161 = vrot.lane.b32.xlu0 %v5257, 125
      %v9162 = vpop.permute.xlu0 %9161
      %9163 = vrot.lane.b32.xlu0 %v5935, 125
      %v9164 = vpop.permute.xlu0 %9163
      %9165 = vrot.lane.b32.xlu0 %v5260, 125
      %v9166 = vpop.permute.xlu0 %9165
      %9167 = vrot.lane.b32.xlu0 %v5938, 125
      %v9168 = vpop.permute.xlu0 %9167
      %9169 = vrot.lane.b32.xlu0 %v5263, 125
      %v9170 = vpop.permute.xlu0 %9169
      %9171 = vrot.lane.b32.xlu0 %v5941, 125
      %v9172 = vpop.permute.xlu0 %9171
      %v9173 = vsel %vm6097, %v9158, %v9160
      %v9174 = vsel %vm6097, %v9162, %v9164
      %v9175 = vsel %vm6097, %v9166, %v9168
      %v9176 = vsel %vm6097, %v9170, %v9172
      %9185 = vrot.lane.b32.xlu0 %v5254, 124
      %v9186 = vpop.permute.xlu0 %9185
      %9187 = vrot.lane.b32.xlu0 %v5932, 124
      %v9188 = vpop.permute.xlu0 %9187
      %9189 = vrot.lane.b32.xlu0 %v5257, 124
      %v9190 = vpop.permute.xlu0 %9189
      %9191 = vrot.lane.b32.xlu0 %v5935, 124
      %v9192 = vpop.permute.xlu0 %9191
      %9193 = vrot.lane.b32.xlu0 %v5260, 124
      %v9194 = vpop.permute.xlu0 %9193
      %9195 = vrot.lane.b32.xlu0 %v5938, 124
      %v9196 = vpop.permute.xlu0 %9195
      %9197 = vrot.lane.b32.xlu0 %v5263, 124
      %v9198 = vpop.permute.xlu0 %9197
      %9199 = vrot.lane.b32.xlu0 %v5941, 124
      %v9200 = vpop.permute.xlu0 %9199
      %v9201 = vsel %vm6126, %v9186, %v9188
      %v9202 = vsel %vm6126, %v9190, %v9192
      %v9203 = vsel %vm6126, %v9194, %v9196
      %v9204 = vsel %vm6126, %v9198, %v9200
      %9213 = vrot.lane.b32.xlu0 %v5254, 123
      %v9214 = vpop.permute.xlu0 %9213
      %9215 = vrot.lane.b32.xlu0 %v5932, 123
      %v9216 = vpop.permute.xlu0 %9215
      %9217 = vrot.lane.b32.xlu0 %v5257, 123
      %v9218 = vpop.permute.xlu0 %9217
      %9219 = vrot.lane.b32.xlu0 %v5935, 123
      %v9220 = vpop.permute.xlu0 %9219
      %9221 = vrot.lane.b32.xlu0 %v5260, 123
      %v9222 = vpop.permute.xlu0 %9221
      %9223 = vrot.lane.b32.xlu0 %v5938, 123
      %v9224 = vpop.permute.xlu0 %9223
      %9225 = vrot.lane.b32.xlu0 %v5263, 123
      %v9226 = vpop.permute.xlu0 %9225
      %9227 = vrot.lane.b32.xlu0 %v5941, 123
      %v9228 = vpop.permute.xlu0 %9227
      %v9229 = vsel %vm6155, %v9214, %v9216
      %v9230 = vsel %vm6155, %v9218, %v9220
      %v9231 = vsel %vm6155, %v9222, %v9224
      %v9232 = vsel %vm6155, %v9226, %v9228
      %9241 = vrot.lane.b32.xlu0 %v5254, 122
      %v9242 = vpop.permute.xlu0 %9241
      %9243 = vrot.lane.b32.xlu0 %v5932, 122
      %v9244 = vpop.permute.xlu0 %9243
      %9245 = vrot.lane.b32.xlu0 %v5257, 122
      %v9246 = vpop.permute.xlu0 %9245
      %9247 = vrot.lane.b32.xlu0 %v5935, 122
      %v9248 = vpop.permute.xlu0 %9247
      %9249 = vrot.lane.b32.xlu0 %v5260, 122
      %v9250 = vpop.permute.xlu0 %9249
      %9251 = vrot.lane.b32.xlu0 %v5938, 122
      %v9252 = vpop.permute.xlu0 %9251
      %9253 = vrot.lane.b32.xlu0 %v5263, 122
      %v9254 = vpop.permute.xlu0 %9253
      %9255 = vrot.lane.b32.xlu0 %v5941, 122
      %v9256 = vpop.permute.xlu0 %9255
      %v9257 = vsel %vm6184, %v9242, %v9244
      %v9258 = vsel %vm6184, %v9246, %v9248
      %v9259 = vsel %vm6184, %v9250, %v9252
      %v9260 = vsel %vm6184, %v9254, %v9256
      %9269 = vrot.lane.b32.xlu0 %v5254, 121
      %v9270 = vpop.permute.xlu0 %9269
      %9271 = vrot.lane.b32.xlu0 %v5932, 121
      %v9272 = vpop.permute.xlu0 %9271
      %9273 = vrot.lane.b32.xlu0 %v5257, 121
      %v9274 = vpop.permute.xlu0 %9273
      %9275 = vrot.lane.b32.xlu0 %v5935, 121
      %v9276 = vpop.permute.xlu0 %9275
      %9277 = vrot.lane.b32.xlu0 %v5260, 121
      %v9278 = vpop.permute.xlu0 %9277
      %9279 = vrot.lane.b32.xlu0 %v5938, 121
      %v9280 = vpop.permute.xlu0 %9279
      %9281 = vrot.lane.b32.xlu0 %v5263, 121
      %v9282 = vpop.permute.xlu0 %9281
      %9283 = vrot.lane.b32.xlu0 %v5941, 121
      %v9284 = vpop.permute.xlu0 %9283
      %v9285 = vsel %vm6213, %v9270, %v9272
      %v9286 = vsel %vm6213, %v9274, %v9276
      %v9287 = vsel %vm6213, %v9278, %v9280
      %v9288 = vsel %vm6213, %v9282, %v9284
      %9297 = vrot.lane.b32.xlu0 %v5254, 120
      %v9298 = vpop.permute.xlu0 %9297
      %9299 = vrot.lane.b32.xlu0 %v5932, 120
      %v9300 = vpop.permute.xlu0 %9299
      %9301 = vrot.lane.b32.xlu0 %v5257, 120
      %v9302 = vpop.permute.xlu0 %9301
      %9303 = vrot.lane.b32.xlu0 %v5935, 120
      %v9304 = vpop.permute.xlu0 %9303
      %9305 = vrot.lane.b32.xlu0 %v5260, 120
      %v9306 = vpop.permute.xlu0 %9305
      %9307 = vrot.lane.b32.xlu0 %v5938, 120
      %v9308 = vpop.permute.xlu0 %9307
      %9309 = vrot.lane.b32.xlu0 %v5263, 120
      %v9310 = vpop.permute.xlu0 %9309
      %9311 = vrot.lane.b32.xlu0 %v5941, 120
      %v9312 = vpop.permute.xlu0 %9311
      %v9313 = vsel %vm6242, %v9298, %v9300
      %v9314 = vsel %vm6242, %v9302, %v9304
      %v9315 = vsel %vm6242, %v9306, %v9308
      %v9316 = vsel %vm6242, %v9310, %v9312
      %9325 = vrot.lane.b32.xlu0 %v5254, 119
      %v9326 = vpop.permute.xlu0 %9325
      %9327 = vrot.lane.b32.xlu0 %v5932, 119
      %v9328 = vpop.permute.xlu0 %9327
      %9329 = vrot.lane.b32.xlu0 %v5257, 119
      %v9330 = vpop.permute.xlu0 %9329
      %9331 = vrot.lane.b32.xlu0 %v5935, 119
      %v9332 = vpop.permute.xlu0 %9331
      %9333 = vrot.lane.b32.xlu0 %v5260, 119
      %v9334 = vpop.permute.xlu0 %9333
      %9335 = vrot.lane.b32.xlu0 %v5938, 119
      %v9336 = vpop.permute.xlu0 %9335
      %9337 = vrot.lane.b32.xlu0 %v5263, 119
      %v9338 = vpop.permute.xlu0 %9337
      %9339 = vrot.lane.b32.xlu0 %v5941, 119
      %v9340 = vpop.permute.xlu0 %9339
      %v9341 = vsel %vm6271, %v9326, %v9328
      %v9342 = vsel %vm6271, %v9330, %v9332
      %v9343 = vsel %vm6271, %v9334, %v9336
      %v9344 = vsel %vm6271, %v9338, %v9340
      %9353 = vrot.lane.b32.xlu0 %v5254, 118
      %v9354 = vpop.permute.xlu0 %9353
      %9355 = vrot.lane.b32.xlu0 %v5932, 118
      %v9356 = vpop.permute.xlu0 %9355
      %9357 = vrot.lane.b32.xlu0 %v5257, 118
      %v9358 = vpop.permute.xlu0 %9357
      %9359 = vrot.lane.b32.xlu0 %v5935, 118
      %v9360 = vpop.permute.xlu0 %9359
      %9361 = vrot.lane.b32.xlu0 %v5260, 118
      %v9362 = vpop.permute.xlu0 %9361
      %9363 = vrot.lane.b32.xlu0 %v5938, 118
      %v9364 = vpop.permute.xlu0 %9363
      %9365 = vrot.lane.b32.xlu0 %v5263, 118
      %v9366 = vpop.permute.xlu0 %9365
      %9367 = vrot.lane.b32.xlu0 %v5941, 118
      %v9368 = vpop.permute.xlu0 %9367
      %v9369 = vsel %vm6300, %v9354, %v9356
      %v9370 = vsel %vm6300, %v9358, %v9360
      %v9371 = vsel %vm6300, %v9362, %v9364
      %v9372 = vsel %vm6300, %v9366, %v9368
      %9381 = vrot.lane.b32.xlu0 %v5254, 117
      %v9382 = vpop.permute.xlu0 %9381
      %9383 = vrot.lane.b32.xlu0 %v5932, 117
      %v9384 = vpop.permute.xlu0 %9383
      %9385 = vrot.lane.b32.xlu0 %v5257, 117
      %v9386 = vpop.permute.xlu0 %9385
      %9387 = vrot.lane.b32.xlu0 %v5935, 117
      %v9388 = vpop.permute.xlu0 %9387
      %9389 = vrot.lane.b32.xlu0 %v5260, 117
      %v9390 = vpop.permute.xlu0 %9389
      %9391 = vrot.lane.b32.xlu0 %v5938, 117
      %v9392 = vpop.permute.xlu0 %9391
      %9393 = vrot.lane.b32.xlu0 %v5263, 117
      %v9394 = vpop.permute.xlu0 %9393
      %9395 = vrot.lane.b32.xlu0 %v5941, 117
      %v9396 = vpop.permute.xlu0 %9395
      %v9397 = vsel %vm6329, %v9382, %v9384
      %v9398 = vsel %vm6329, %v9386, %v9388
      %v9399 = vsel %vm6329, %v9390, %v9392
      %v9400 = vsel %vm6329, %v9394, %v9396
      %9409 = vrot.lane.b32.xlu0 %v5254, 116
      %v9410 = vpop.permute.xlu0 %9409
      %9411 = vrot.lane.b32.xlu0 %v5932, 116
      %v9412 = vpop.permute.xlu0 %9411
      %9413 = vrot.lane.b32.xlu0 %v5257, 116
      %v9414 = vpop.permute.xlu0 %9413
      %9415 = vrot.lane.b32.xlu0 %v5935, 116
      %v9416 = vpop.permute.xlu0 %9415
      %9417 = vrot.lane.b32.xlu0 %v5260, 116
      %v9418 = vpop.permute.xlu0 %9417
      %9419 = vrot.lane.b32.xlu0 %v5938, 116
      %v9420 = vpop.permute.xlu0 %9419
      %9421 = vrot.lane.b32.xlu0 %v5263, 116
      %v9422 = vpop.permute.xlu0 %9421
      %9423 = vrot.lane.b32.xlu0 %v5941, 116
      %v9424 = vpop.permute.xlu0 %9423
      %v9425 = vsel %vm6358, %v9410, %v9412
      %v9426 = vsel %vm6358, %v9414, %v9416
      %v9427 = vsel %vm6358, %v9418, %v9420
      %v9428 = vsel %vm6358, %v9422, %v9424
      %9437 = vrot.lane.b32.xlu0 %v5254, 115
      %v9438 = vpop.permute.xlu0 %9437
      %9439 = vrot.lane.b32.xlu0 %v5932, 115
      %v9440 = vpop.permute.xlu0 %9439
      %9441 = vrot.lane.b32.xlu0 %v5257, 115
      %v9442 = vpop.permute.xlu0 %9441
      %9443 = vrot.lane.b32.xlu0 %v5935, 115
      %v9444 = vpop.permute.xlu0 %9443
      %9445 = vrot.lane.b32.xlu0 %v5260, 115
      %v9446 = vpop.permute.xlu0 %9445
      %9447 = vrot.lane.b32.xlu0 %v5938, 115
      %v9448 = vpop.permute.xlu0 %9447
      %9449 = vrot.lane.b32.xlu0 %v5263, 115
      %v9450 = vpop.permute.xlu0 %9449
      %9451 = vrot.lane.b32.xlu0 %v5941, 115
      %v9452 = vpop.permute.xlu0 %9451
      %v9453 = vsel %vm6387, %v9438, %v9440
      %v9454 = vsel %vm6387, %v9442, %v9444
      %v9455 = vsel %vm6387, %v9446, %v9448
      %v9456 = vsel %vm6387, %v9450, %v9452
      %9465 = vrot.lane.b32.xlu0 %v5254, 114
      %v9466 = vpop.permute.xlu0 %9465
      %9467 = vrot.lane.b32.xlu0 %v5932, 114
      %v9468 = vpop.permute.xlu0 %9467
      %9469 = vrot.lane.b32.xlu0 %v5257, 114
      %v9470 = vpop.permute.xlu0 %9469
      %9471 = vrot.lane.b32.xlu0 %v5935, 114
      %v9472 = vpop.permute.xlu0 %9471
      %9473 = vrot.lane.b32.xlu0 %v5260, 114
      %v9474 = vpop.permute.xlu0 %9473
      %9475 = vrot.lane.b32.xlu0 %v5938, 114
      %v9476 = vpop.permute.xlu0 %9475
      %9477 = vrot.lane.b32.xlu0 %v5263, 114
      %v9478 = vpop.permute.xlu0 %9477
      %9479 = vrot.lane.b32.xlu0 %v5941, 114
      %v9480 = vpop.permute.xlu0 %9479
      %v9481 = vsel %vm6416, %v9466, %v9468
      %v9482 = vsel %vm6416, %v9470, %v9472
      %v9483 = vsel %vm6416, %v9474, %v9476
      %v9484 = vsel %vm6416, %v9478, %v9480
      %9493 = vmatpush.msra.mxu0 %v9176
      %9494 = vmatpush.msra.mxu0 %v9175
      %9495 = vmatpush.msra.mxu0 %v9174
      %9496 = vmatpush.msra.mxu0 %v9173
      %9497 = vmatpush.msra.mxu0 %v9148
      %9498 = vmatpush.msra.mxu0 %v9147
      %9499 = vmatpush.msra.mxu0 %v9146
      %9500 = vmatpush.msra.mxu0 %v9145
      %9501 = vmatpush.msra.mxu0 %v9120
      %9502 = vmatpush.msra.mxu0 %v9119
      %9503 = vmatpush.msra.mxu0 %v9118
      %9504 = vmatpush.msra.mxu0 %v9117
      %9505 = vmatpush.msra.mxu0 %v5263
      %9506 = vmatpush.msra.mxu0 %v5260
      %9507 = vmatpush.msra.mxu0 %v5257
      %9508 = vmatpush.msra.mxu0 %v5254
      %9509 = vmatmul.f32.gmra.mxu0 %v5979
      %v9510 = vpop.f32.mrf.mxu0
      %v9511 = vadd.f32 %v6432, %v9510
      %9512 = vmatmul.f32.gmra.mxu0 %v5983
      %v9513 = vpop.f32.mrf.mxu0
      %v9514 = vadd.f32 %v6437, %v9513
      %9515 = vmatmul.f32.gmra.mxu0 %v5987
      %v9516 = vpop.f32.mrf.mxu0
      %v9517 = vadd.f32 %v6442, %v9516
      %9518 = vmatmul.f32.gmra.mxu0 %v5991
      %v9519 = vpop.f32.mrf.mxu0
      %v9520 = vadd.f32 %v6447, %v9519
      %9521 = vdwg.mxu0
      %9522 = vmatpush.msra.mxu0 %v9288
      %9523 = vmatpush.msra.mxu0 %v9287
      %9524 = vmatpush.msra.mxu0 %v9286
      %9525 = vmatpush.msra.mxu0 %v9285
      %9526 = vmatpush.msra.mxu0 %v9260
      %9527 = vmatpush.msra.mxu0 %v9259
      %9528 = vmatpush.msra.mxu0 %v9258
      %9529 = vmatpush.msra.mxu0 %v9257
      %9530 = vmatpush.msra.mxu0 %v9232
      %9531 = vmatpush.msra.mxu0 %v9231
      %9532 = vmatpush.msra.mxu0 %v9230
      %9533 = vmatpush.msra.mxu0 %v9229
      %9534 = vmatpush.msra.mxu0 %v9204
      %9535 = vmatpush.msra.mxu0 %v9203
      %9536 = vmatpush.msra.mxu0 %v9202
      %9537 = vmatpush.msra.mxu0 %v9201
      %9538 = vmatmul.f32.gmra.mxu0 %v5980
      %v9539 = vpop.f32.mrf.mxu0
      %v9540 = vadd.f32 %v9511, %v9539
      %9541 = vmatmul.f32.gmra.mxu0 %v5984
      %v9542 = vpop.f32.mrf.mxu0
      %v9543 = vadd.f32 %v9514, %v9542
      %9544 = vmatmul.f32.gmra.mxu0 %v5988
      %v9545 = vpop.f32.mrf.mxu0
      %v9546 = vadd.f32 %v9517, %v9545
      %9547 = vmatmul.f32.gmra.mxu0 %v5992
      %v9548 = vpop.f32.mrf.mxu0
      %v9549 = vadd.f32 %v9520, %v9548
      %9550 = vdwg.mxu0
      %9551 = vmatpush.msra.mxu0 %v9400
      %9552 = vmatpush.msra.mxu0 %v9399
      %9553 = vmatpush.msra.mxu0 %v9398
      %9554 = vmatpush.msra.mxu0 %v9397
      %9555 = vmatpush.msra.mxu0 %v9372
      %9556 = vmatpush.msra.mxu0 %v9371
      %9557 = vmatpush.msra.mxu0 %v9370
      %9558 = vmatpush.msra.mxu0 %v9369
      %9559 = vmatpush.msra.mxu0 %v9344
      %9560 = vmatpush.msra.mxu0 %v9343
      %9561 = vmatpush.msra.mxu0 %v9342
      %9562 = vmatpush.msra.mxu0 %v9341
      %9563 = vmatpush.msra.mxu0 %v9316
      %9564 = vmatpush.msra.mxu0 %v9315
      %9565 = vmatpush.msra.mxu0 %v9314
      %9566 = vmatpush.msra.mxu0 %v9313
      %9567 = vmatmul.f32.gmra.mxu0 %v5981
      %v9568 = vpop.f32.mrf.mxu0
      %v9569 = vadd.f32 %v9540, %v9568
      %9570 = vmatmul.f32.gmra.mxu0 %v5985
      %v9571 = vpop.f32.mrf.mxu0
      %v9572 = vadd.f32 %v9543, %v9571
      %9573 = vmatmul.f32.gmra.mxu0 %v5989
      %v9574 = vpop.f32.mrf.mxu0
      %v9575 = vadd.f32 %v9546, %v9574
      %9576 = vmatmul.f32.gmra.mxu0 %v5993
      %v9577 = vpop.f32.mrf.mxu0
      %v9578 = vadd.f32 %v9549, %v9577
      %9579 = vdwg.mxu0
      %9580 = vmatpush.msra.mxu0 0.0
      %9581 = vmatpush.msra.mxu0 0.0
      %9582 = vmatpush.msra.mxu0 0.0
      %9583 = vmatpush.msra.mxu0 0.0
      %9584 = vmatpush.msra.mxu0 %v9484
      %9585 = vmatpush.msra.mxu0 %v9483
      %9586 = vmatpush.msra.mxu0 %v9482
      %9587 = vmatpush.msra.mxu0 %v9481
      %9588 = vmatpush.msra.mxu0 %v9456
      %9589 = vmatpush.msra.mxu0 %v9455
      %9590 = vmatpush.msra.mxu0 %v9454
      %9591 = vmatpush.msra.mxu0 %v9453
      %9592 = vmatpush.msra.mxu0 %v9428
      %9593 = vmatpush.msra.mxu0 %v9427
      %9594 = vmatpush.msra.mxu0 %v9426
      %9595 = vmatpush.msra.mxu0 %v9425
      %9596 = vmatmul.f32.gmra.mxu0 %v6451
      %v9597 = vpop.f32.mrf.mxu0
      %v9598 = vadd.f32 %v9569, %v9597
      %9599 = vmatmul.f32.gmra.mxu0 %v6454
      %v9600 = vpop.f32.mrf.mxu0
      %v9601 = vadd.f32 %v9572, %v9600
      %9602 = vmatmul.f32.gmra.mxu0 %v6457
      %v9603 = vpop.f32.mrf.mxu0
      %v9604 = vadd.f32 %v9575, %v9603
      %9605 = vmatmul.f32.gmra.mxu0 %v6460
      %v9606 = vpop.f32.mrf.mxu0
      %v9607 = vadd.f32 %v9578, %v9606
      %9608 = vdwg.mxu0
      %9609 = vmatpush.msra.mxu0 %v9172
      %9610 = vmatpush.msra.mxu0 %v9168
      %9611 = vmatpush.msra.mxu0 %v9164
      %9612 = vmatpush.msra.mxu0 %v9160
      %9613 = vmatpush.msra.mxu0 %v9144
      %9614 = vmatpush.msra.mxu0 %v9140
      %9615 = vmatpush.msra.mxu0 %v9136
      %9616 = vmatpush.msra.mxu0 %v9132
      %9617 = vmatpush.msra.mxu0 %v9116
      %9618 = vmatpush.msra.mxu0 %v9112
      %9619 = vmatpush.msra.mxu0 %v9108
      %9620 = vmatpush.msra.mxu0 %v9104
      %9621 = vmatpush.msra.mxu0 %v5941
      %9622 = vmatpush.msra.mxu0 %v5938
      %9623 = vmatpush.msra.mxu0 %v5935
      %9624 = vmatpush.msra.mxu0 %v5932
      %9625 = vmatmul.f32.gmra.mxu0 %v5979
      %v9626 = vpop.f32.mrf.mxu0
      %v9627 = vadd.f32 %v6432, %v9626
      %9628 = vmatmul.f32.gmra.mxu0 %v5983
      %v9629 = vpop.f32.mrf.mxu0
      %v9630 = vadd.f32 %v6437, %v9629
      %9631 = vmatmul.f32.gmra.mxu0 %v5987
      %v9632 = vpop.f32.mrf.mxu0
      %v9633 = vadd.f32 %v6442, %v9632
      %9634 = vmatmul.f32.gmra.mxu0 %v5991
      %v9635 = vpop.f32.mrf.mxu0
      %v9636 = vadd.f32 %v6447, %v9635
      %9637 = vdwg.mxu0
      %9638 = vmatpush.msra.mxu0 %v9284
      %9639 = vmatpush.msra.mxu0 %v9280
      %9640 = vmatpush.msra.mxu0 %v9276
      %9641 = vmatpush.msra.mxu0 %v9272
      %9642 = vmatpush.msra.mxu0 %v9256
      %9643 = vmatpush.msra.mxu0 %v9252
      %9644 = vmatpush.msra.mxu0 %v9248
      %9645 = vmatpush.msra.mxu0 %v9244
      %9646 = vmatpush.msra.mxu0 %v9228
      %9647 = vmatpush.msra.mxu0 %v9224
      %9648 = vmatpush.msra.mxu0 %v9220
      %9649 = vmatpush.msra.mxu0 %v9216
      %9650 = vmatpush.msra.mxu0 %v9200
      %9651 = vmatpush.msra.mxu0 %v9196
      %9652 = vmatpush.msra.mxu0 %v9192
      %9653 = vmatpush.msra.mxu0 %v9188
      %9654 = vmatmul.f32.gmra.mxu0 %v5980
      %v9655 = vpop.f32.mrf.mxu0
      %v9656 = vadd.f32 %v9627, %v9655
      %9657 = vmatmul.f32.gmra.mxu0 %v5984
      %v9658 = vpop.f32.mrf.mxu0
      %v9659 = vadd.f32 %v9630, %v9658
      %9660 = vmatmul.f32.gmra.mxu0 %v5988
      %v9661 = vpop.f32.mrf.mxu0
      %v9662 = vadd.f32 %v9633, %v9661
      %9663 = vmatmul.f32.gmra.mxu0 %v5992
      %v9664 = vpop.f32.mrf.mxu0
      %v9665 = vadd.f32 %v9636, %v9664
      %9666 = vdwg.mxu0
      %9667 = vmatpush.msra.mxu0 %v9396
      %9668 = vmatpush.msra.mxu0 %v9392
      %9669 = vmatpush.msra.mxu0 %v9388
      %9670 = vmatpush.msra.mxu0 %v9384
      %9671 = vmatpush.msra.mxu0 %v9368
      %9672 = vmatpush.msra.mxu0 %v9364
      %9673 = vmatpush.msra.mxu0 %v9360
      %9674 = vmatpush.msra.mxu0 %v9356
      %9675 = vmatpush.msra.mxu0 %v9340
      %9676 = vmatpush.msra.mxu0 %v9336
      %9677 = vmatpush.msra.mxu0 %v9332
      %9678 = vmatpush.msra.mxu0 %v9328
      %9679 = vmatpush.msra.mxu0 %v9312
      %9680 = vmatpush.msra.mxu0 %v9308
      %9681 = vmatpush.msra.mxu0 %v9304
      %9682 = vmatpush.msra.mxu0 %v9300
      %9683 = vmatmul.f32.gmra.mxu0 %v5981
      %v9684 = vpop.f32.mrf.mxu0
      %v9685 = vadd.f32 %v9656, %v9684
      %9686 = vmatmul.f32.gmra.mxu0 %v5985
      %v9687 = vpop.f32.mrf.mxu0
      %v9688 = vadd.f32 %v9659, %v9687
      %9689 = vmatmul.f32.gmra.mxu0 %v5989
      %v9690 = vpop.f32.mrf.mxu0
      %v9691 = vadd.f32 %v9662, %v9690
      %9692 = vmatmul.f32.gmra.mxu0 %v5993
      %v9693 = vpop.f32.mrf.mxu0
      %v9694 = vadd.f32 %v9665, %v9693
      %9695 = vdwg.mxu0
      %9696 = vmatpush.msra.mxu0 0.0
      %9697 = vmatpush.msra.mxu0 0.0
      %9698 = vmatpush.msra.mxu0 0.0
      %9699 = vmatpush.msra.mxu0 0.0
      %9700 = vmatpush.msra.mxu0 %v9480
      %9701 = vmatpush.msra.mxu0 %v9476
      %9702 = vmatpush.msra.mxu0 %v9472
      %9703 = vmatpush.msra.mxu0 %v9468
      %9704 = vmatpush.msra.mxu0 %v9452
      %9705 = vmatpush.msra.mxu0 %v9448
      %9706 = vmatpush.msra.mxu0 %v9444
      %9707 = vmatpush.msra.mxu0 %v9440
      %9708 = vmatpush.msra.mxu0 %v9424
      %9709 = vmatpush.msra.mxu0 %v9420
      %9710 = vmatpush.msra.mxu0 %v9416
      %9711 = vmatpush.msra.mxu0 %v9412
      %9712 = vmatmul.f32.gmra.mxu0 %v6451
      %v9713 = vpop.f32.mrf.mxu0
      %v9714 = vadd.f32 %v9685, %v9713
      %9715 = vmatmul.f32.gmra.mxu0 %v6454
      %v9716 = vpop.f32.mrf.mxu0
      %v9717 = vadd.f32 %v9688, %v9716
      %9718 = vmatmul.f32.gmra.mxu0 %v6457
      %v9719 = vpop.f32.mrf.mxu0
      %v9720 = vadd.f32 %v9691, %v9719
      %9721 = vmatmul.f32.gmra.mxu0 %v6460
      %v9722 = vpop.f32.mrf.mxu0
      %v9723 = vadd.f32 %v9694, %v9722
      %9724 = vdwg.mxu0
      %vm9725 = vcmp.gt.f32.partialorder %v9598, 0.0
      %vm9726 = vcmp.gt.f32.partialorder %v9714, 0.0
      %vm9727 = vcmp.gt.f32.partialorder %v9601, 0.0
      %vm9728 = vcmp.gt.f32.partialorder %v9717, 0.0
      %vm9729 = vcmp.gt.f32.partialorder %v9604, 0.0
      %vm9730 = vcmp.gt.f32.partialorder %v9720, 0.0
      %vm9731 = vcmp.gt.f32.partialorder %v9607, 0.0
      %vm9732 = vcmp.gt.f32.partialorder %v9723, 0.0
      %v9733 = vmin.f32 %v9598, 0.0
      %v9734 = vmin.f32 %v9714, 0.0
      %v9735 = vmin.f32 %v9601, 0.0
      %v9736 = vmin.f32 %v9717, 0.0
      %v9737 = vmin.f32 %v9604, 0.0
      %v9738 = vmin.f32 %v9720, 0.0
      %v9739 = vmin.f32 %v9607, 0.0
      %v9740 = vmin.f32 %v9723, 0.0
      %v9741 = vmul.f32 %v9733, 1.442695
      %v9742 = vpow.pop %v9741
      %v9743 = vmul.f32 %v9734, 1.442695
      %v9744 = vpow.pop %v9743
      %v9745 = vmul.f32 %v9735, 1.442695
      %v9746 = vpow.pop %v9745
      %v9747 = vmul.f32 %v9736, 1.442695
      %v9748 = vpow.pop %v9747
      %v9749 = vmul.f32 %v9737, 1.442695
      %v9750 = vpow.pop %v9749
      %v9751 = vmul.f32 %v9738, 1.442695
      %v9752 = vpow.pop %v9751
      %v9753 = vmul.f32 %v9739, 1.442695
      %v9754 = vpow.pop %v9753
      %v9755 = vmul.f32 %v9740, 1.442695
      %v9756 = vpow.pop %v9755
      %v9757 = vsub.f32 %v9742, 1.0
      %v9758 = vsub.f32 %v9744, 1.0
      %v9759 = vsub.f32 %v9746, 1.0
      %v9760 = vsub.f32 %v9748, 1.0
      %v9761 = vsub.f32 %v9750, 1.0
      %v9762 = vsub.f32 %v9752, 1.0
      %v9763 = vsub.f32 %v9754, 1.0
      %v9764 = vsub.f32 %v9756, 1.0
      %v9765 = vsel %vm9725, %v9598, %v9757
      %v9766 = vsel %vm9726, %v9714, %v9758
      %v9767 = vsel %vm9727, %v9601, %v9759
      %v9768 = vsel %vm9728, %v9717, %v9760
      %v9769 = vsel %vm9729, %v9604, %v9761
      %v9770 = vsel %vm9730, %v9720, %v9762
      %v9771 = vsel %vm9731, %v9607, %v9763
      %v9772 = vsel %vm9732, %v9723, %v9764
      %v9773 = vmul.f32 %v5999, %v9765
      %v9774 = vmul.f32 %v6000, %v9766
      %v9775 = vmul.f32 %v6001, %v9767
      %v9776 = vmul.f32 %v6002, %v9768
      %v9777 = vmul.f32 %v6003, %v9769
      %v9778 = vmul.f32 %v6004, %v9770
      %v9779 = vmul.f32 %v6005, %v9771
      %v9780 = vmul.f32 %v6006, %v9772
      %v9781 = vmul.f32 %v6007, %v9765
      %v9782 = vmul.f32 %v6008, %v9766
      %v9783 = vmul.f32 %v6009, %v9767
      %v9784 = vmul.f32 %v6010, %v9768
      %v9785 = vmul.f32 %v6011, %v9769
      %v9786 = vmul.f32 %v6012, %v9770
      %v9787 = vmul.f32 %v6013, %v9771
      %v9788 = vmul.f32 %v6014, %v9772
      %v9789 = vsel %vm6758, %v9774, 0.0
      %v9790 = vadd.f32 %v9773, %v9789
      %9791 = vadd.xlane.f32.xlu0 %v9790
      %v9792 = vpop.xlane.xlu0 %9791
      %v9793 = vsel %vm6758, %v9776, 0.0
      %v9794 = vadd.f32 %v9775, %v9793
      %9795 = vadd.xlane.f32.xlu0 %v9794
      %v9796 = vpop.xlane.xlu0 %9795
      %v9797 = vsel %vm6758, %v9778, 0.0
      %v9798 = vadd.f32 %v9777, %v9797
      %9799 = vadd.xlane.f32.xlu0 %v9798
      %v9800 = vpop.xlane.xlu0 %9799
      %v9801 = vsel %vm6758, %v9780, 0.0
      %v9802 = vadd.f32 %v9779, %v9801
      %9803 = vadd.xlane.f32.xlu0 %v9802
      %v9804 = vpop.xlane.xlu0 %9803
      %v9805 = vsel %vm6758, %v9782, 0.0
      %v9806 = vadd.f32 %v9781, %v9805
      %9807 = vadd.xlane.f32.xlu0 %v9806
      %v9808 = vpop.xlane.xlu0 %9807
      %v9809 = vsel %vm6758, %v9784, 0.0
      %v9810 = vadd.f32 %v9783, %v9809
      %9811 = vadd.xlane.f32.xlu0 %v9810
      %v9812 = vpop.xlane.xlu0 %9811
      %v9813 = vsel %vm6758, %v9786, 0.0
      %v9814 = vadd.f32 %v9785, %v9813
      %9815 = vadd.xlane.f32.xlu0 %v9814
      %v9816 = vpop.xlane.xlu0 %9815
      %v9817 = vsel %vm6758, %v9788, 0.0
      %v9818 = vadd.f32 %v9787, %v9817
      %9819 = vadd.xlane.f32.xlu0 %v9818
      %v9820 = vpop.xlane.xlu0 %9819
      %v9829 = vperm.slane %v9792, %v6800
      %v9830 = vperm.slane %v9796, %v6802
      %v9831 = vsel %vm6804, %v9830, %v9829
      %v9832 = vperm.slane %v9800, %v6806
      %v9833 = vsel %vm6808, %v9832, %v9831
      %v9834 = vperm.slane %v9804, %v6810
      %v9835 = vsel %vm6812, %v9834, %v9833
      %v9836 = vperm.slane %v9808, %v6800
      %v9837 = vperm.slane %v9812, %v6802
      %v9838 = vsel %vm6804, %v9837, %v9836
      %v9839 = vperm.slane %v9816, %v6806
      %v9840 = vsel %vm6808, %v9839, %v9838
      %v9841 = vperm.slane %v9820, %v6810
      %v9842 = vsel %vm6812, %v9841, %v9840
      %v9843 = vsel %vm6821, %v9842, %v9835
      %v9845 = vsel %vm6824, %v9843, 0.0
      %9846 = vadd.xlane.f32.xlu0 %v9845
      %v9847 = vpop.xlane.xlu0 %9846
      %9856 = vrot.lane.b32.xlu0 %v5266, 127
      %v9857 = vpop.permute.xlu0 %9856
      %9858 = vrot.lane.b32.xlu0 %v5944, 127
      %v9859 = vpop.permute.xlu0 %9858
      %9860 = vrot.lane.b32.xlu0 %v5269, 127
      %v9861 = vpop.permute.xlu0 %9860
      %9862 = vrot.lane.b32.xlu0 %v5947, 127
      %v9863 = vpop.permute.xlu0 %9862
      %9864 = vrot.lane.b32.xlu0 %v5272, 127
      %v9865 = vpop.permute.xlu0 %9864
      %9866 = vrot.lane.b32.xlu0 %v5950, 127
      %v9867 = vpop.permute.xlu0 %9866
      %9868 = vrot.lane.b32.xlu0 %v5275, 127
      %v9869 = vpop.permute.xlu0 %9868
      %9870 = vrot.lane.b32.xlu0 %v5953, 127
      %v9871 = vpop.permute.xlu0 %9870
      %v9872 = vsel %vm6039, %v9857, %v9859
      %v9873 = vsel %vm6039, %v9861, %v9863
      %v9874 = vsel %vm6039, %v9865, %v9867
      %v9875 = vsel %vm6039, %v9869, %v9871
      %9884 = vrot.lane.b32.xlu0 %v5266, 126
      %v9885 = vpop.permute.xlu0 %9884
      %9886 = vrot.lane.b32.xlu0 %v5944, 126
      %v9887 = vpop.permute.xlu0 %9886
      %9888 = vrot.lane.b32.xlu0 %v5269, 126
      %v9889 = vpop.permute.xlu0 %9888
      %9890 = vrot.lane.b32.xlu0 %v5947, 126
      %v9891 = vpop.permute.xlu0 %9890
      %9892 = vrot.lane.b32.xlu0 %v5272, 126
      %v9893 = vpop.permute.xlu0 %9892
      %9894 = vrot.lane.b32.xlu0 %v5950, 126
      %v9895 = vpop.permute.xlu0 %9894
      %9896 = vrot.lane.b32.xlu0 %v5275, 126
      %v9897 = vpop.permute.xlu0 %9896
      %9898 = vrot.lane.b32.xlu0 %v5953, 126
      %v9899 = vpop.permute.xlu0 %9898
      %v9900 = vsel %vm6068, %v9885, %v9887
      %v9901 = vsel %vm6068, %v9889, %v9891
      %v9902 = vsel %vm6068, %v9893, %v9895
      %v9903 = vsel %vm6068, %v9897, %v9899
      %9912 = vrot.lane.b32.xlu0 %v5266, 125
      %v9913 = vpop.permute.xlu0 %9912
      %9914 = vrot.lane.b32.xlu0 %v5944, 125
      %v9915 = vpop.permute.xlu0 %9914
      %9916 = vrot.lane.b32.xlu0 %v5269, 125
      %v9917 = vpop.permute.xlu0 %9916
      %9918 = vrot.lane.b32.xlu0 %v5947, 125
      %v9919 = vpop.permute.xlu0 %9918
      %9920 = vrot.lane.b32.xlu0 %v5272, 125
      %v9921 = vpop.permute.xlu0 %9920
      %9922 = vrot.lane.b32.xlu0 %v5950, 125
      %v9923 = vpop.permute.xlu0 %9922
      %9924 = vrot.lane.b32.xlu0 %v5275, 125
      %v9925 = vpop.permute.xlu0 %9924
      %9926 = vrot.lane.b32.xlu0 %v5953, 125
      %v9927 = vpop.permute.xlu0 %9926
      %v9928 = vsel %vm6097, %v9913, %v9915
      %v9929 = vsel %vm6097, %v9917, %v9919
      %v9930 = vsel %vm6097, %v9921, %v9923
      %v9931 = vsel %vm6097, %v9925, %v9927
      %9940 = vrot.lane.b32.xlu0 %v5266, 124
      %v9941 = vpop.permute.xlu0 %9940
      %9942 = vrot.lane.b32.xlu0 %v5944, 124
      %v9943 = vpop.permute.xlu0 %9942
      %9944 = vrot.lane.b32.xlu0 %v5269, 124
      %v9945 = vpop.permute.xlu0 %9944
      %9946 = vrot.lane.b32.xlu0 %v5947, 124
      %v9947 = vpop.permute.xlu0 %9946
      %9948 = vrot.lane.b32.xlu0 %v5272, 124
      %v9949 = vpop.permute.xlu0 %9948
      %9950 = vrot.lane.b32.xlu0 %v5950, 124
      %v9951 = vpop.permute.xlu0 %9950
      %9952 = vrot.lane.b32.xlu0 %v5275, 124
      %v9953 = vpop.permute.xlu0 %9952
      %9954 = vrot.lane.b32.xlu0 %v5953, 124
      %v9955 = vpop.permute.xlu0 %9954
      %v9956 = vsel %vm6126, %v9941, %v9943
      %v9957 = vsel %vm6126, %v9945, %v9947
      %v9958 = vsel %vm6126, %v9949, %v9951
      %v9959 = vsel %vm6126, %v9953, %v9955
      %9968 = vrot.lane.b32.xlu0 %v5266, 123
      %v9969 = vpop.permute.xlu0 %9968
      %9970 = vrot.lane.b32.xlu0 %v5944, 123
      %v9971 = vpop.permute.xlu0 %9970
      %9972 = vrot.lane.b32.xlu0 %v5269, 123
      %v9973 = vpop.permute.xlu0 %9972
      %9974 = vrot.lane.b32.xlu0 %v5947, 123
      %v9975 = vpop.permute.xlu0 %9974
      %9976 = vrot.lane.b32.xlu0 %v5272, 123
      %v9977 = vpop.permute.xlu0 %9976
      %9978 = vrot.lane.b32.xlu0 %v5950, 123
      %v9979 = vpop.permute.xlu0 %9978
      %9980 = vrot.lane.b32.xlu0 %v5275, 123
      %v9981 = vpop.permute.xlu0 %9980
      %9982 = vrot.lane.b32.xlu0 %v5953, 123
      %v9983 = vpop.permute.xlu0 %9982
      %v9984 = vsel %vm6155, %v9969, %v9971
      %v9985 = vsel %vm6155, %v9973, %v9975
      %v9986 = vsel %vm6155, %v9977, %v9979
      %v9987 = vsel %vm6155, %v9981, %v9983
      %9996 = vrot.lane.b32.xlu0 %v5266, 122
      %v9997 = vpop.permute.xlu0 %9996
      %9998 = vrot.lane.b32.xlu0 %v5944, 122
      %v9999 = vpop.permute.xlu0 %9998
      %10000 = vrot.lane.b32.xlu0 %v5269, 122
      %v10001 = vpop.permute.xlu0 %10000
      %10002 = vrot.lane.b32.xlu0 %v5947, 122
      %v10003 = vpop.permute.xlu0 %10002
      %10004 = vrot.lane.b32.xlu0 %v5272, 122
      %v10005 = vpop.permute.xlu0 %10004
      %10006 = vrot.lane.b32.xlu0 %v5950, 122
      %v10007 = vpop.permute.xlu0 %10006
      %10008 = vrot.lane.b32.xlu0 %v5275, 122
      %v10009 = vpop.permute.xlu0 %10008
      %10010 = vrot.lane.b32.xlu0 %v5953, 122
      %v10011 = vpop.permute.xlu0 %10010
      %v10012 = vsel %vm6184, %v9997, %v9999
      %v10013 = vsel %vm6184, %v10001, %v10003
      %v10014 = vsel %vm6184, %v10005, %v10007
      %v10015 = vsel %vm6184, %v10009, %v10011
      %10024 = vrot.lane.b32.xlu0 %v5266, 121
      %v10025 = vpop.permute.xlu0 %10024
      %10026 = vrot.lane.b32.xlu0 %v5944, 121
      %v10027 = vpop.permute.xlu0 %10026
      %10028 = vrot.lane.b32.xlu0 %v5269, 121
      %v10029 = vpop.permute.xlu0 %10028
      %10030 = vrot.lane.b32.xlu0 %v5947, 121
      %v10031 = vpop.permute.xlu0 %10030
      %10032 = vrot.lane.b32.xlu0 %v5272, 121
      %v10033 = vpop.permute.xlu0 %10032
      %10034 = vrot.lane.b32.xlu0 %v5950, 121
      %v10035 = vpop.permute.xlu0 %10034
      %10036 = vrot.lane.b32.xlu0 %v5275, 121
      %v10037 = vpop.permute.xlu0 %10036
      %10038 = vrot.lane.b32.xlu0 %v5953, 121
      %v10039 = vpop.permute.xlu0 %10038
      %v10040 = vsel %vm6213, %v10025, %v10027
      %v10041 = vsel %vm6213, %v10029, %v10031
      %v10042 = vsel %vm6213, %v10033, %v10035
      %v10043 = vsel %vm6213, %v10037, %v10039
      %10052 = vrot.lane.b32.xlu0 %v5266, 120
      %v10053 = vpop.permute.xlu0 %10052
      %10054 = vrot.lane.b32.xlu0 %v5944, 120
      %v10055 = vpop.permute.xlu0 %10054
      %10056 = vrot.lane.b32.xlu0 %v5269, 120
      %v10057 = vpop.permute.xlu0 %10056
      %10058 = vrot.lane.b32.xlu0 %v5947, 120
      %v10059 = vpop.permute.xlu0 %10058
      %10060 = vrot.lane.b32.xlu0 %v5272, 120
      %v10061 = vpop.permute.xlu0 %10060
      %10062 = vrot.lane.b32.xlu0 %v5950, 120
      %v10063 = vpop.permute.xlu0 %10062
      %10064 = vrot.lane.b32.xlu0 %v5275, 120
      %v10065 = vpop.permute.xlu0 %10064
      %10066 = vrot.lane.b32.xlu0 %v5953, 120
      %v10067 = vpop.permute.xlu0 %10066
      %v10068 = vsel %vm6242, %v10053, %v10055
      %v10069 = vsel %vm6242, %v10057, %v10059
      %v10070 = vsel %vm6242, %v10061, %v10063
      %v10071 = vsel %vm6242, %v10065, %v10067
      %10080 = vrot.lane.b32.xlu0 %v5266, 119
      %v10081 = vpop.permute.xlu0 %10080
      %10082 = vrot.lane.b32.xlu0 %v5944, 119
      %v10083 = vpop.permute.xlu0 %10082
      %10084 = vrot.lane.b32.xlu0 %v5269, 119
      %v10085 = vpop.permute.xlu0 %10084
      %10086 = vrot.lane.b32.xlu0 %v5947, 119
      %v10087 = vpop.permute.xlu0 %10086
      %10088 = vrot.lane.b32.xlu0 %v5272, 119
      %v10089 = vpop.permute.xlu0 %10088
      %10090 = vrot.lane.b32.xlu0 %v5950, 119
      %v10091 = vpop.permute.xlu0 %10090
      %10092 = vrot.lane.b32.xlu0 %v5275, 119
      %v10093 = vpop.permute.xlu0 %10092
      %10094 = vrot.lane.b32.xlu0 %v5953, 119
      %v10095 = vpop.permute.xlu0 %10094
      %v10096 = vsel %vm6271, %v10081, %v10083
      %v10097 = vsel %vm6271, %v10085, %v10087
      %v10098 = vsel %vm6271, %v10089, %v10091
      %v10099 = vsel %vm6271, %v10093, %v10095
      %10108 = vrot.lane.b32.xlu0 %v5266, 118
      %v10109 = vpop.permute.xlu0 %10108
      %10110 = vrot.lane.b32.xlu0 %v5944, 118
      %v10111 = vpop.permute.xlu0 %10110
      %10112 = vrot.lane.b32.xlu0 %v5269, 118
      %v10113 = vpop.permute.xlu0 %10112
      %10114 = vrot.lane.b32.xlu0 %v5947, 118
      %v10115 = vpop.permute.xlu0 %10114
      %10116 = vrot.lane.b32.xlu0 %v5272, 118
      %v10117 = vpop.permute.xlu0 %10116
      %10118 = vrot.lane.b32.xlu0 %v5950, 118
      %v10119 = vpop.permute.xlu0 %10118
      %10120 = vrot.lane.b32.xlu0 %v5275, 118
      %v10121 = vpop.permute.xlu0 %10120
      %10122 = vrot.lane.b32.xlu0 %v5953, 118
      %v10123 = vpop.permute.xlu0 %10122
      %v10124 = vsel %vm6300, %v10109, %v10111
      %v10125 = vsel %vm6300, %v10113, %v10115
      %v10126 = vsel %vm6300, %v10117, %v10119
      %v10127 = vsel %vm6300, %v10121, %v10123
      %10136 = vrot.lane.b32.xlu0 %v5266, 117
      %v10137 = vpop.permute.xlu0 %10136
      %10138 = vrot.lane.b32.xlu0 %v5944, 117
      %v10139 = vpop.permute.xlu0 %10138
      %10140 = vrot.lane.b32.xlu0 %v5269, 117
      %v10141 = vpop.permute.xlu0 %10140
      %10142 = vrot.lane.b32.xlu0 %v5947, 117
      %v10143 = vpop.permute.xlu0 %10142
      %10144 = vrot.lane.b32.xlu0 %v5272, 117
      %v10145 = vpop.permute.xlu0 %10144
      %10146 = vrot.lane.b32.xlu0 %v5950, 117
      %v10147 = vpop.permute.xlu0 %10146
      %10148 = vrot.lane.b32.xlu0 %v5275, 117
      %v10149 = vpop.permute.xlu0 %10148
      %10150 = vrot.lane.b32.xlu0 %v5953, 117
      %v10151 = vpop.permute.xlu0 %10150
      %v10152 = vsel %vm6329, %v10137, %v10139
      %v10153 = vsel %vm6329, %v10141, %v10143
      %v10154 = vsel %vm6329, %v10145, %v10147
      %v10155 = vsel %vm6329, %v10149, %v10151
      %10164 = vrot.lane.b32.xlu0 %v5266, 116
      %v10165 = vpop.permute.xlu0 %10164
      %10166 = vrot.lane.b32.xlu0 %v5944, 116
      %v10167 = vpop.permute.xlu0 %10166
      %10168 = vrot.lane.b32.xlu0 %v5269, 116
      %v10169 = vpop.permute.xlu0 %10168
      %10170 = vrot.lane.b32.xlu0 %v5947, 116
      %v10171 = vpop.permute.xlu0 %10170
      %10172 = vrot.lane.b32.xlu0 %v5272, 116
      %v10173 = vpop.permute.xlu0 %10172
      %10174 = vrot.lane.b32.xlu0 %v5950, 116
      %v10175 = vpop.permute.xlu0 %10174
      %10176 = vrot.lane.b32.xlu0 %v5275, 116
      %v10177 = vpop.permute.xlu0 %10176
      %10178 = vrot.lane.b32.xlu0 %v5953, 116
      %v10179 = vpop.permute.xlu0 %10178
      %v10180 = vsel %vm6358, %v10165, %v10167
      %v10181 = vsel %vm6358, %v10169, %v10171
      %v10182 = vsel %vm6358, %v10173, %v10175
      %v10183 = vsel %vm6358, %v10177, %v10179
      %10192 = vrot.lane.b32.xlu0 %v5266, 115
      %v10193 = vpop.permute.xlu0 %10192
      %10194 = vrot.lane.b32.xlu0 %v5944, 115
      %v10195 = vpop.permute.xlu0 %10194
      %10196 = vrot.lane.b32.xlu0 %v5269, 115
      %v10197 = vpop.permute.xlu0 %10196
      %10198 = vrot.lane.b32.xlu0 %v5947, 115
      %v10199 = vpop.permute.xlu0 %10198
      %10200 = vrot.lane.b32.xlu0 %v5272, 115
      %v10201 = vpop.permute.xlu0 %10200
      %10202 = vrot.lane.b32.xlu0 %v5950, 115
      %v10203 = vpop.permute.xlu0 %10202
      %10204 = vrot.lane.b32.xlu0 %v5275, 115
      %v10205 = vpop.permute.xlu0 %10204
      %10206 = vrot.lane.b32.xlu0 %v5953, 115
      %v10207 = vpop.permute.xlu0 %10206
      %v10208 = vsel %vm6387, %v10193, %v10195
      %v10209 = vsel %vm6387, %v10197, %v10199
      %v10210 = vsel %vm6387, %v10201, %v10203
      %v10211 = vsel %vm6387, %v10205, %v10207
      %10220 = vrot.lane.b32.xlu0 %v5266, 114
      %v10221 = vpop.permute.xlu0 %10220
      %10222 = vrot.lane.b32.xlu0 %v5944, 114
      %v10223 = vpop.permute.xlu0 %10222
      %10224 = vrot.lane.b32.xlu0 %v5269, 114
      %v10225 = vpop.permute.xlu0 %10224
      %10226 = vrot.lane.b32.xlu0 %v5947, 114
      %v10227 = vpop.permute.xlu0 %10226
      %10228 = vrot.lane.b32.xlu0 %v5272, 114
      %v10229 = vpop.permute.xlu0 %10228
      %10230 = vrot.lane.b32.xlu0 %v5950, 114
      %v10231 = vpop.permute.xlu0 %10230
      %10232 = vrot.lane.b32.xlu0 %v5275, 114
      %v10233 = vpop.permute.xlu0 %10232
      %10234 = vrot.lane.b32.xlu0 %v5953, 114
      %v10235 = vpop.permute.xlu0 %10234
      %v10236 = vsel %vm6416, %v10221, %v10223
      %v10237 = vsel %vm6416, %v10225, %v10227
      %v10238 = vsel %vm6416, %v10229, %v10231
      %v10239 = vsel %vm6416, %v10233, %v10235
      %10248 = vmatpush.msra.mxu0 %v9931
      %10249 = vmatpush.msra.mxu0 %v9930
      %10250 = vmatpush.msra.mxu0 %v9929
      %10251 = vmatpush.msra.mxu0 %v9928
      %10252 = vmatpush.msra.mxu0 %v9903
      %10253 = vmatpush.msra.mxu0 %v9902
      %10254 = vmatpush.msra.mxu0 %v9901
      %10255 = vmatpush.msra.mxu0 %v9900
      %10256 = vmatpush.msra.mxu0 %v9875
      %10257 = vmatpush.msra.mxu0 %v9874
      %10258 = vmatpush.msra.mxu0 %v9873
      %10259 = vmatpush.msra.mxu0 %v9872
      %10260 = vmatpush.msra.mxu0 %v5275
      %10261 = vmatpush.msra.mxu0 %v5272
      %10262 = vmatpush.msra.mxu0 %v5269
      %10263 = vmatpush.msra.mxu0 %v5266
      %10264 = vmatmul.f32.gmra.mxu0 %v5979
      %v10265 = vpop.f32.mrf.mxu0
      %v10266 = vadd.f32 %v6432, %v10265
      %10267 = vmatmul.f32.gmra.mxu0 %v5983
      %v10268 = vpop.f32.mrf.mxu0
      %v10269 = vadd.f32 %v6437, %v10268
      %10270 = vmatmul.f32.gmra.mxu0 %v5987
      %v10271 = vpop.f32.mrf.mxu0
      %v10272 = vadd.f32 %v6442, %v10271
      %10273 = vmatmul.f32.gmra.mxu0 %v5991
      %v10274 = vpop.f32.mrf.mxu0
      %v10275 = vadd.f32 %v6447, %v10274
      %10276 = vdwg.mxu0
      %10277 = vmatpush.msra.mxu0 %v10043
      %10278 = vmatpush.msra.mxu0 %v10042
      %10279 = vmatpush.msra.mxu0 %v10041
      %10280 = vmatpush.msra.mxu0 %v10040
      %10281 = vmatpush.msra.mxu0 %v10015
      %10282 = vmatpush.msra.mxu0 %v10014
      %10283 = vmatpush.msra.mxu0 %v10013
      %10284 = vmatpush.msra.mxu0 %v10012
      %10285 = vmatpush.msra.mxu0 %v9987
      %10286 = vmatpush.msra.mxu0 %v9986
      %10287 = vmatpush.msra.mxu0 %v9985
      %10288 = vmatpush.msra.mxu0 %v9984
      %10289 = vmatpush.msra.mxu0 %v9959
      %10290 = vmatpush.msra.mxu0 %v9958
      %10291 = vmatpush.msra.mxu0 %v9957
      %10292 = vmatpush.msra.mxu0 %v9956
      %10293 = vmatmul.f32.gmra.mxu0 %v5980
      %v10294 = vpop.f32.mrf.mxu0
      %v10295 = vadd.f32 %v10266, %v10294
      %10296 = vmatmul.f32.gmra.mxu0 %v5984
      %v10297 = vpop.f32.mrf.mxu0
      %v10298 = vadd.f32 %v10269, %v10297
      %10299 = vmatmul.f32.gmra.mxu0 %v5988
      %v10300 = vpop.f32.mrf.mxu0
      %v10301 = vadd.f32 %v10272, %v10300
      %10302 = vmatmul.f32.gmra.mxu0 %v5992
      %v10303 = vpop.f32.mrf.mxu0
      %v10304 = vadd.f32 %v10275, %v10303
      %10305 = vdwg.mxu0
      %10306 = vmatpush.msra.mxu0 %v10155
      %10307 = vmatpush.msra.mxu0 %v10154
      %10308 = vmatpush.msra.mxu0 %v10153
      %10309 = vmatpush.msra.mxu0 %v10152
      %10310 = vmatpush.msra.mxu0 %v10127
      %10311 = vmatpush.msra.mxu0 %v10126
      %10312 = vmatpush.msra.mxu0 %v10125
      %10313 = vmatpush.msra.mxu0 %v10124
      %10314 = vmatpush.msra.mxu0 %v10099
      %10315 = vmatpush.msra.mxu0 %v10098
      %10316 = vmatpush.msra.mxu0 %v10097
      %10317 = vmatpush.msra.mxu0 %v10096
      %10318 = vmatpush.msra.mxu0 %v10071
      %10319 = vmatpush.msra.mxu0 %v10070
      %10320 = vmatpush.msra.mxu0 %v10069
      %10321 = vmatpush.msra.mxu0 %v10068
      %10322 = vmatmul.f32.gmra.mxu0 %v5981
      %v10323 = vpop.f32.mrf.mxu0
      %v10324 = vadd.f32 %v10295, %v10323
      %10325 = vmatmul.f32.gmra.mxu0 %v5985
      %v10326 = vpop.f32.mrf.mxu0
      %v10327 = vadd.f32 %v10298, %v10326
      %10328 = vmatmul.f32.gmra.mxu0 %v5989
      %v10329 = vpop.f32.mrf.mxu0
      %v10330 = vadd.f32 %v10301, %v10329
      %10331 = vmatmul.f32.gmra.mxu0 %v5993
      %v10332 = vpop.f32.mrf.mxu0
      %v10333 = vadd.f32 %v10304, %v10332
      %10334 = vdwg.mxu0
      %10335 = vmatpush.msra.mxu0 0.0
      %10336 = vmatpush.msra.mxu0 0.0
      %10337 = vmatpush.msra.mxu0 0.0
      %10338 = vmatpush.msra.mxu0 0.0
      %10339 = vmatpush.msra.mxu0 %v10239
      %10340 = vmatpush.msra.mxu0 %v10238
      %10341 = vmatpush.msra.mxu0 %v10237
      %10342 = vmatpush.msra.mxu0 %v10236
      %10343 = vmatpush.msra.mxu0 %v10211
      %10344 = vmatpush.msra.mxu0 %v10210
      %10345 = vmatpush.msra.mxu0 %v10209
      %10346 = vmatpush.msra.mxu0 %v10208
      %10347 = vmatpush.msra.mxu0 %v10183
      %10348 = vmatpush.msra.mxu0 %v10182
      %10349 = vmatpush.msra.mxu0 %v10181
      %10350 = vmatpush.msra.mxu0 %v10180
      %10351 = vmatmul.f32.gmra.mxu0 %v6451
      %v10352 = vpop.f32.mrf.mxu0
      %v10353 = vadd.f32 %v10324, %v10352
      %10354 = vmatmul.f32.gmra.mxu0 %v6454
      %v10355 = vpop.f32.mrf.mxu0
      %v10356 = vadd.f32 %v10327, %v10355
      %10357 = vmatmul.f32.gmra.mxu0 %v6457
      %v10358 = vpop.f32.mrf.mxu0
      %v10359 = vadd.f32 %v10330, %v10358
      %10360 = vmatmul.f32.gmra.mxu0 %v6460
      %v10361 = vpop.f32.mrf.mxu0
      %v10362 = vadd.f32 %v10333, %v10361
      %10363 = vdwg.mxu0
      %10364 = vmatpush.msra.mxu0 %v9927
      %10365 = vmatpush.msra.mxu0 %v9923
      %10366 = vmatpush.msra.mxu0 %v9919
      %10367 = vmatpush.msra.mxu0 %v9915
      %10368 = vmatpush.msra.mxu0 %v9899
      %10369 = vmatpush.msra.mxu0 %v9895
      %10370 = vmatpush.msra.mxu0 %v9891
      %10371 = vmatpush.msra.mxu0 %v9887
      %10372 = vmatpush.msra.mxu0 %v9871
      %10373 = vmatpush.msra.mxu0 %v9867
      %10374 = vmatpush.msra.mxu0 %v9863
      %10375 = vmatpush.msra.mxu0 %v9859
      %10376 = vmatpush.msra.mxu0 %v5953
      %10377 = vmatpush.msra.mxu0 %v5950
      %10378 = vmatpush.msra.mxu0 %v5947
      %10379 = vmatpush.msra.mxu0 %v5944
      %10380 = vmatmul.f32.gmra.mxu0 %v5979
      %v10381 = vpop.f32.mrf.mxu0
      %v10382 = vadd.f32 %v6432, %v10381
      %10383 = vmatmul.f32.gmra.mxu0 %v5983
      %v10384 = vpop.f32.mrf.mxu0
      %v10385 = vadd.f32 %v6437, %v10384
      %10386 = vmatmul.f32.gmra.mxu0 %v5987
      %v10387 = vpop.f32.mrf.mxu0
      %v10388 = vadd.f32 %v6442, %v10387
      %10389 = vmatmul.f32.gmra.mxu0 %v5991
      %v10390 = vpop.f32.mrf.mxu0
      %v10391 = vadd.f32 %v6447, %v10390
      %10392 = vdwg.mxu0
      %10393 = vmatpush.msra.mxu0 %v10039
      %10394 = vmatpush.msra.mxu0 %v10035
      %10395 = vmatpush.msra.mxu0 %v10031
      %10396 = vmatpush.msra.mxu0 %v10027
      %10397 = vmatpush.msra.mxu0 %v10011
      %10398 = vmatpush.msra.mxu0 %v10007
      %10399 = vmatpush.msra.mxu0 %v10003
      %10400 = vmatpush.msra.mxu0 %v9999
      %10401 = vmatpush.msra.mxu0 %v9983
      %10402 = vmatpush.msra.mxu0 %v9979
      %10403 = vmatpush.msra.mxu0 %v9975
      %10404 = vmatpush.msra.mxu0 %v9971
      %10405 = vmatpush.msra.mxu0 %v9955
      %10406 = vmatpush.msra.mxu0 %v9951
      %10407 = vmatpush.msra.mxu0 %v9947
      %10408 = vmatpush.msra.mxu0 %v9943
      %10409 = vmatmul.f32.gmra.mxu0 %v5980
      %v10410 = vpop.f32.mrf.mxu0
      %v10411 = vadd.f32 %v10382, %v10410
      %10412 = vmatmul.f32.gmra.mxu0 %v5984
      %v10413 = vpop.f32.mrf.mxu0
      %v10414 = vadd.f32 %v10385, %v10413
      %10415 = vmatmul.f32.gmra.mxu0 %v5988
      %v10416 = vpop.f32.mrf.mxu0
      %v10417 = vadd.f32 %v10388, %v10416
      %10418 = vmatmul.f32.gmra.mxu0 %v5992
      %v10419 = vpop.f32.mrf.mxu0
      %v10420 = vadd.f32 %v10391, %v10419
      %10421 = vdwg.mxu0
      %10422 = vmatpush.msra.mxu0 %v10151
      %10423 = vmatpush.msra.mxu0 %v10147
      %10424 = vmatpush.msra.mxu0 %v10143
      %10425 = vmatpush.msra.mxu0 %v10139
      %10426 = vmatpush.msra.mxu0 %v10123
      %10427 = vmatpush.msra.mxu0 %v10119
      %10428 = vmatpush.msra.mxu0 %v10115
      %10429 = vmatpush.msra.mxu0 %v10111
      %10430 = vmatpush.msra.mxu0 %v10095
      %10431 = vmatpush.msra.mxu0 %v10091
      %10432 = vmatpush.msra.mxu0 %v10087
      %10433 = vmatpush.msra.mxu0 %v10083
      %10434 = vmatpush.msra.mxu0 %v10067
      %10435 = vmatpush.msra.mxu0 %v10063
      %10436 = vmatpush.msra.mxu0 %v10059
      %10437 = vmatpush.msra.mxu0 %v10055
      %10438 = vmatmul.f32.gmra.mxu0 %v5981
      %v10439 = vpop.f32.mrf.mxu0
      %v10440 = vadd.f32 %v10411, %v10439
      %10441 = vmatmul.f32.gmra.mxu0 %v5985
      %v10442 = vpop.f32.mrf.mxu0
      %v10443 = vadd.f32 %v10414, %v10442
      %10444 = vmatmul.f32.gmra.mxu0 %v5989
      %v10445 = vpop.f32.mrf.mxu0
      %v10446 = vadd.f32 %v10417, %v10445
      %10447 = vmatmul.f32.gmra.mxu0 %v5993
      %v10448 = vpop.f32.mrf.mxu0
      %v10449 = vadd.f32 %v10420, %v10448
      %10450 = vdwg.mxu0
      %10451 = vmatpush.msra.mxu0 0.0
      %10452 = vmatpush.msra.mxu0 0.0
      %10453 = vmatpush.msra.mxu0 0.0
      %10454 = vmatpush.msra.mxu0 0.0
      %10455 = vmatpush.msra.mxu0 %v10235
      %10456 = vmatpush.msra.mxu0 %v10231
      %10457 = vmatpush.msra.mxu0 %v10227
      %10458 = vmatpush.msra.mxu0 %v10223
      %10459 = vmatpush.msra.mxu0 %v10207
      %10460 = vmatpush.msra.mxu0 %v10203
      %10461 = vmatpush.msra.mxu0 %v10199
      %10462 = vmatpush.msra.mxu0 %v10195
      %10463 = vmatpush.msra.mxu0 %v10179
      %10464 = vmatpush.msra.mxu0 %v10175
      %10465 = vmatpush.msra.mxu0 %v10171
      %10466 = vmatpush.msra.mxu0 %v10167
      %10467 = vmatmul.f32.gmra.mxu0 %v6451
      %v10468 = vpop.f32.mrf.mxu0
      %v10469 = vadd.f32 %v10440, %v10468
      %10470 = vmatmul.f32.gmra.mxu0 %v6454
      %v10471 = vpop.f32.mrf.mxu0
      %v10472 = vadd.f32 %v10443, %v10471
      %10473 = vmatmul.f32.gmra.mxu0 %v6457
      %v10474 = vpop.f32.mrf.mxu0
      %v10475 = vadd.f32 %v10446, %v10474
      %10476 = vmatmul.f32.gmra.mxu0 %v6460
      %v10477 = vpop.f32.mrf.mxu0
      %v10478 = vadd.f32 %v10449, %v10477
      %10479 = vdwg.mxu0
      %vm10480 = vcmp.gt.f32.partialorder %v10353, 0.0
      %vm10481 = vcmp.gt.f32.partialorder %v10469, 0.0
      %vm10482 = vcmp.gt.f32.partialorder %v10356, 0.0
      %vm10483 = vcmp.gt.f32.partialorder %v10472, 0.0
      %vm10484 = vcmp.gt.f32.partialorder %v10359, 0.0
      %vm10485 = vcmp.gt.f32.partialorder %v10475, 0.0
      %vm10486 = vcmp.gt.f32.partialorder %v10362, 0.0
      %vm10487 = vcmp.gt.f32.partialorder %v10478, 0.0
      %v10488 = vmin.f32 %v10353, 0.0
      %v10489 = vmin.f32 %v10469, 0.0
      %v10490 = vmin.f32 %v10356, 0.0
      %v10491 = vmin.f32 %v10472, 0.0
      %v10492 = vmin.f32 %v10359, 0.0
      %v10493 = vmin.f32 %v10475, 0.0
      %v10494 = vmin.f32 %v10362, 0.0
      %v10495 = vmin.f32 %v10478, 0.0
      %v10496 = vmul.f32 %v10488, 1.442695
      %v10497 = vpow.pop %v10496
      %v10498 = vmul.f32 %v10489, 1.442695
      %v10499 = vpow.pop %v10498
      %v10500 = vmul.f32 %v10490, 1.442695
      %v10501 = vpow.pop %v10500
      %v10502 = vmul.f32 %v10491, 1.442695
      %v10503 = vpow.pop %v10502
      %v10504 = vmul.f32 %v10492, 1.442695
      %v10505 = vpow.pop %v10504
      %v10506 = vmul.f32 %v10493, 1.442695
      %v10507 = vpow.pop %v10506
      %v10508 = vmul.f32 %v10494, 1.442695
      %v10509 = vpow.pop %v10508
      %v10510 = vmul.f32 %v10495, 1.442695
      %v10511 = vpow.pop %v10510
      %v10512 = vsub.f32 %v10497, 1.0
      %v10513 = vsub.f32 %v10499, 1.0
      %v10514 = vsub.f32 %v10501, 1.0
      %v10515 = vsub.f32 %v10503, 1.0
      %v10516 = vsub.f32 %v10505, 1.0
      %v10517 = vsub.f32 %v10507, 1.0
      %v10518 = vsub.f32 %v10509, 1.0
      %v10519 = vsub.f32 %v10511, 1.0
      %v10520 = vsel %vm10480, %v10353, %v10512
      %v10521 = vsel %vm10481, %v10469, %v10513
      %v10522 = vsel %vm10482, %v10356, %v10514
      %v10523 = vsel %vm10483, %v10472, %v10515
      %v10524 = vsel %vm10484, %v10359, %v10516
      %v10525 = vsel %vm10485, %v10475, %v10517
      %v10526 = vsel %vm10486, %v10362, %v10518
      %v10527 = vsel %vm10487, %v10478, %v10519
      %v10528 = vmul.f32 %v5999, %v10520
      %v10529 = vmul.f32 %v6000, %v10521
      %v10530 = vmul.f32 %v6001, %v10522
      %v10531 = vmul.f32 %v6002, %v10523
      %v10532 = vmul.f32 %v6003, %v10524
      %v10533 = vmul.f32 %v6004, %v10525
      %v10534 = vmul.f32 %v6005, %v10526
      %v10535 = vmul.f32 %v6006, %v10527
      %v10536 = vmul.f32 %v6007, %v10520
      %v10537 = vmul.f32 %v6008, %v10521
      %v10538 = vmul.f32 %v6009, %v10522
      %v10539 = vmul.f32 %v6010, %v10523
      %v10540 = vmul.f32 %v6011, %v10524
      %v10541 = vmul.f32 %v6012, %v10525
      %v10542 = vmul.f32 %v6013, %v10526
      %v10543 = vmul.f32 %v6014, %v10527
      %v10544 = vsel %vm6758, %v10529, 0.0
      %v10545 = vadd.f32 %v10528, %v10544
      %10546 = vadd.xlane.f32.xlu0 %v10545
      %v10547 = vpop.xlane.xlu0 %10546
      %v10548 = vsel %vm6758, %v10531, 0.0
      %v10549 = vadd.f32 %v10530, %v10548
      %10550 = vadd.xlane.f32.xlu0 %v10549
      %v10551 = vpop.xlane.xlu0 %10550
      %v10552 = vsel %vm6758, %v10533, 0.0
      %v10553 = vadd.f32 %v10532, %v10552
      %10554 = vadd.xlane.f32.xlu0 %v10553
      %v10555 = vpop.xlane.xlu0 %10554
      %v10556 = vsel %vm6758, %v10535, 0.0
      %v10557 = vadd.f32 %v10534, %v10556
      %10558 = vadd.xlane.f32.xlu0 %v10557
      %v10559 = vpop.xlane.xlu0 %10558
      %v10560 = vsel %vm6758, %v10537, 0.0
      %v10561 = vadd.f32 %v10536, %v10560
      %10562 = vadd.xlane.f32.xlu0 %v10561
      %v10563 = vpop.xlane.xlu0 %10562
      %v10564 = vsel %vm6758, %v10539, 0.0
      %v10565 = vadd.f32 %v10538, %v10564
      %10566 = vadd.xlane.f32.xlu0 %v10565
      %v10567 = vpop.xlane.xlu0 %10566
      %v10568 = vsel %vm6758, %v10541, 0.0
      %v10569 = vadd.f32 %v10540, %v10568
      %10570 = vadd.xlane.f32.xlu0 %v10569
      %v10571 = vpop.xlane.xlu0 %10570
      %v10572 = vsel %vm6758, %v10543, 0.0
      %v10573 = vadd.f32 %v10542, %v10572
      %10574 = vadd.xlane.f32.xlu0 %v10573
      %v10575 = vpop.xlane.xlu0 %10574
      %v10584 = vperm.slane %v10547, %v6800
      %v10585 = vperm.slane %v10551, %v6802
      %v10586 = vsel %vm6804, %v10585, %v10584
      %v10587 = vperm.slane %v10555, %v6806
      %v10588 = vsel %vm6808, %v10587, %v10586
      %v10589 = vperm.slane %v10559, %v6810
      %v10590 = vsel %vm6812, %v10589, %v10588
      %v10591 = vperm.slane %v10563, %v6800
      %v10592 = vperm.slane %v10567, %v6802
      %v10593 = vsel %vm6804, %v10592, %v10591
      %v10594 = vperm.slane %v10571, %v6806
      %v10595 = vsel %vm6808, %v10594, %v10593
      %v10596 = vperm.slane %v10575, %v6810
      %v10597 = vsel %vm6812, %v10596, %v10595
      %v10598 = vsel %vm6821, %v10597, %v10590
      %v10600 = vsel %vm6824, %v10598, 0.0
      %10601 = vadd.xlane.f32.xlu0 %v10600
      %v10602 = vpop.xlane.xlu0 %10601
      %10611 = vrot.lane.b32.xlu0 %v5278, 127
      %v10612 = vpop.permute.xlu0 %10611
      %10613 = vrot.lane.b32.xlu0 %v5956, 127
      %v10614 = vpop.permute.xlu0 %10613
      %10615 = vrot.lane.b32.xlu0 %v5281, 127
      %v10616 = vpop.permute.xlu0 %10615
      %10617 = vrot.lane.b32.xlu0 %v5959, 127
      %v10618 = vpop.permute.xlu0 %10617
      %10619 = vrot.lane.b32.xlu0 %v5284, 127
      %v10620 = vpop.permute.xlu0 %10619
      %10621 = vrot.lane.b32.xlu0 %v5962, 127
      %v10622 = vpop.permute.xlu0 %10621
      %10623 = vrot.lane.b32.xlu0 %v5287, 127
      %v10624 = vpop.permute.xlu0 %10623
      %10625 = vrot.lane.b32.xlu0 %v5965, 127
      %v10626 = vpop.permute.xlu0 %10625
      %v10627 = vsel %vm6039, %v10612, %v10614
      %v10628 = vsel %vm6039, %v10616, %v10618
      %v10629 = vsel %vm6039, %v10620, %v10622
      %v10630 = vsel %vm6039, %v10624, %v10626
      %10639 = vrot.lane.b32.xlu0 %v5278, 126
      %v10640 = vpop.permute.xlu0 %10639
      %10641 = vrot.lane.b32.xlu0 %v5956, 126
      %v10642 = vpop.permute.xlu0 %10641
      %10643 = vrot.lane.b32.xlu0 %v5281, 126
      %v10644 = vpop.permute.xlu0 %10643
      %10645 = vrot.lane.b32.xlu0 %v5959, 126
      %v10646 = vpop.permute.xlu0 %10645
      %10647 = vrot.lane.b32.xlu0 %v5284, 126
      %v10648 = vpop.permute.xlu0 %10647
      %10649 = vrot.lane.b32.xlu0 %v5962, 126
      %v10650 = vpop.permute.xlu0 %10649
      %10651 = vrot.lane.b32.xlu0 %v5287, 126
      %v10652 = vpop.permute.xlu0 %10651
      %10653 = vrot.lane.b32.xlu0 %v5965, 126
      %v10654 = vpop.permute.xlu0 %10653
      %v10655 = vsel %vm6068, %v10640, %v10642
      %v10656 = vsel %vm6068, %v10644, %v10646
      %v10657 = vsel %vm6068, %v10648, %v10650
      %v10658 = vsel %vm6068, %v10652, %v10654
      %10667 = vrot.lane.b32.xlu0 %v5278, 125
      %v10668 = vpop.permute.xlu0 %10667
      %10669 = vrot.lane.b32.xlu0 %v5956, 125
      %v10670 = vpop.permute.xlu0 %10669
      %10671 = vrot.lane.b32.xlu0 %v5281, 125
      %v10672 = vpop.permute.xlu0 %10671
      %10673 = vrot.lane.b32.xlu0 %v5959, 125
      %v10674 = vpop.permute.xlu0 %10673
      %10675 = vrot.lane.b32.xlu0 %v5284, 125
      %v10676 = vpop.permute.xlu0 %10675
      %10677 = vrot.lane.b32.xlu0 %v5962, 125
      %v10678 = vpop.permute.xlu0 %10677
      %10679 = vrot.lane.b32.xlu0 %v5287, 125
      %v10680 = vpop.permute.xlu0 %10679
      %10681 = vrot.lane.b32.xlu0 %v5965, 125
      %v10682 = vpop.permute.xlu0 %10681
      %v10683 = vsel %vm6097, %v10668, %v10670
      %v10684 = vsel %vm6097, %v10672, %v10674
      %v10685 = vsel %vm6097, %v10676, %v10678
      %v10686 = vsel %vm6097, %v10680, %v10682
      %10695 = vrot.lane.b32.xlu0 %v5278, 124
      %v10696 = vpop.permute.xlu0 %10695
      %10697 = vrot.lane.b32.xlu0 %v5956, 124
      %v10698 = vpop.permute.xlu0 %10697
      %10699 = vrot.lane.b32.xlu0 %v5281, 124
      %v10700 = vpop.permute.xlu0 %10699
      %10701 = vrot.lane.b32.xlu0 %v5959, 124
      %v10702 = vpop.permute.xlu0 %10701
      %10703 = vrot.lane.b32.xlu0 %v5284, 124
      %v10704 = vpop.permute.xlu0 %10703
      %10705 = vrot.lane.b32.xlu0 %v5962, 124
      %v10706 = vpop.permute.xlu0 %10705
      %10707 = vrot.lane.b32.xlu0 %v5287, 124
      %v10708 = vpop.permute.xlu0 %10707
      %10709 = vrot.lane.b32.xlu0 %v5965, 124
      %v10710 = vpop.permute.xlu0 %10709
      %v10711 = vsel %vm6126, %v10696, %v10698
      %v10712 = vsel %vm6126, %v10700, %v10702
      %v10713 = vsel %vm6126, %v10704, %v10706
      %v10714 = vsel %vm6126, %v10708, %v10710
      %10723 = vrot.lane.b32.xlu0 %v5278, 123
      %v10724 = vpop.permute.xlu0 %10723
      %10725 = vrot.lane.b32.xlu0 %v5956, 123
      %v10726 = vpop.permute.xlu0 %10725
      %10727 = vrot.lane.b32.xlu0 %v5281, 123
      %v10728 = vpop.permute.xlu0 %10727
      %10729 = vrot.lane.b32.xlu0 %v5959, 123
      %v10730 = vpop.permute.xlu0 %10729
      %10731 = vrot.lane.b32.xlu0 %v5284, 123
      %v10732 = vpop.permute.xlu0 %10731
      %10733 = vrot.lane.b32.xlu0 %v5962, 123
      %v10734 = vpop.permute.xlu0 %10733
      %10735 = vrot.lane.b32.xlu0 %v5287, 123
      %v10736 = vpop.permute.xlu0 %10735
      %10737 = vrot.lane.b32.xlu0 %v5965, 123
      %v10738 = vpop.permute.xlu0 %10737
      %v10739 = vsel %vm6155, %v10724, %v10726
      %v10740 = vsel %vm6155, %v10728, %v10730
      %v10741 = vsel %vm6155, %v10732, %v10734
      %v10742 = vsel %vm6155, %v10736, %v10738
      %10751 = vrot.lane.b32.xlu0 %v5278, 122
      %v10752 = vpop.permute.xlu0 %10751
      %10753 = vrot.lane.b32.xlu0 %v5956, 122
      %v10754 = vpop.permute.xlu0 %10753
      %10755 = vrot.lane.b32.xlu0 %v5281, 122
      %v10756 = vpop.permute.xlu0 %10755
      %10757 = vrot.lane.b32.xlu0 %v5959, 122
      %v10758 = vpop.permute.xlu0 %10757
      %10759 = vrot.lane.b32.xlu0 %v5284, 122
      %v10760 = vpop.permute.xlu0 %10759
      %10761 = vrot.lane.b32.xlu0 %v5962, 122
      %v10762 = vpop.permute.xlu0 %10761
      %10763 = vrot.lane.b32.xlu0 %v5287, 122
      %v10764 = vpop.permute.xlu0 %10763
      %10765 = vrot.lane.b32.xlu0 %v5965, 122
      %v10766 = vpop.permute.xlu0 %10765
      %v10767 = vsel %vm6184, %v10752, %v10754
      %v10768 = vsel %vm6184, %v10756, %v10758
      %v10769 = vsel %vm6184, %v10760, %v10762
      %v10770 = vsel %vm6184, %v10764, %v10766
      %10779 = vrot.lane.b32.xlu0 %v5278, 121
      %v10780 = vpop.permute.xlu0 %10779
      %10781 = vrot.lane.b32.xlu0 %v5956, 121
      %v10782 = vpop.permute.xlu0 %10781
      %10783 = vrot.lane.b32.xlu0 %v5281, 121
      %v10784 = vpop.permute.xlu0 %10783
      %10785 = vrot.lane.b32.xlu0 %v5959, 121
      %v10786 = vpop.permute.xlu0 %10785
      %10787 = vrot.lane.b32.xlu0 %v5284, 121
      %v10788 = vpop.permute.xlu0 %10787
      %10789 = vrot.lane.b32.xlu0 %v5962, 121
      %v10790 = vpop.permute.xlu0 %10789
      %10791 = vrot.lane.b32.xlu0 %v5287, 121
      %v10792 = vpop.permute.xlu0 %10791
      %10793 = vrot.lane.b32.xlu0 %v5965, 121
      %v10794 = vpop.permute.xlu0 %10793
      %v10795 = vsel %vm6213, %v10780, %v10782
      %v10796 = vsel %vm6213, %v10784, %v10786
      %v10797 = vsel %vm6213, %v10788, %v10790
      %v10798 = vsel %vm6213, %v10792, %v10794
      %10807 = vrot.lane.b32.xlu0 %v5278, 120
      %v10808 = vpop.permute.xlu0 %10807
      %10809 = vrot.lane.b32.xlu0 %v5956, 120
      %v10810 = vpop.permute.xlu0 %10809
      %10811 = vrot.lane.b32.xlu0 %v5281, 120
      %v10812 = vpop.permute.xlu0 %10811
      %10813 = vrot.lane.b32.xlu0 %v5959, 120
      %v10814 = vpop.permute.xlu0 %10813
      %10815 = vrot.lane.b32.xlu0 %v5284, 120
      %v10816 = vpop.permute.xlu0 %10815
      %10817 = vrot.lane.b32.xlu0 %v5962, 120
      %v10818 = vpop.permute.xlu0 %10817
      %10819 = vrot.lane.b32.xlu0 %v5287, 120
      %v10820 = vpop.permute.xlu0 %10819
      %10821 = vrot.lane.b32.xlu0 %v5965, 120
      %v10822 = vpop.permute.xlu0 %10821
      %v10823 = vsel %vm6242, %v10808, %v10810
      %v10824 = vsel %vm6242, %v10812, %v10814
      %v10825 = vsel %vm6242, %v10816, %v10818
      %v10826 = vsel %vm6242, %v10820, %v10822
      %10835 = vrot.lane.b32.xlu0 %v5278, 119
      %v10836 = vpop.permute.xlu0 %10835
      %10837 = vrot.lane.b32.xlu0 %v5956, 119
      %v10838 = vpop.permute.xlu0 %10837
      %10839 = vrot.lane.b32.xlu0 %v5281, 119
      %v10840 = vpop.permute.xlu0 %10839
      %10841 = vrot.lane.b32.xlu0 %v5959, 119
      %v10842 = vpop.permute.xlu0 %10841
      %10843 = vrot.lane.b32.xlu0 %v5284, 119
      %v10844 = vpop.permute.xlu0 %10843
      %10845 = vrot.lane.b32.xlu0 %v5962, 119
      %v10846 = vpop.permute.xlu0 %10845
      %10847 = vrot.lane.b32.xlu0 %v5287, 119
      %v10848 = vpop.permute.xlu0 %10847
      %10849 = vrot.lane.b32.xlu0 %v5965, 119
      %v10850 = vpop.permute.xlu0 %10849
      %v10851 = vsel %vm6271, %v10836, %v10838
      %v10852 = vsel %vm6271, %v10840, %v10842
      %v10853 = vsel %vm6271, %v10844, %v10846
      %v10854 = vsel %vm6271, %v10848, %v10850
      %10863 = vrot.lane.b32.xlu0 %v5278, 118
      %v10864 = vpop.permute.xlu0 %10863
      %10865 = vrot.lane.b32.xlu0 %v5956, 118
      %v10866 = vpop.permute.xlu0 %10865
      %10867 = vrot.lane.b32.xlu0 %v5281, 118
      %v10868 = vpop.permute.xlu0 %10867
      %10869 = vrot.lane.b32.xlu0 %v5959, 118
      %v10870 = vpop.permute.xlu0 %10869
      %10871 = vrot.lane.b32.xlu0 %v5284, 118
      %v10872 = vpop.permute.xlu0 %10871
      %10873 = vrot.lane.b32.xlu0 %v5962, 118
      %v10874 = vpop.permute.xlu0 %10873
      %10875 = vrot.lane.b32.xlu0 %v5287, 118
      %v10876 = vpop.permute.xlu0 %10875
      %10877 = vrot.lane.b32.xlu0 %v5965, 118
      %v10878 = vpop.permute.xlu0 %10877
      %v10879 = vsel %vm6300, %v10864, %v10866
      %v10880 = vsel %vm6300, %v10868, %v10870
      %v10881 = vsel %vm6300, %v10872, %v10874
      %v10882 = vsel %vm6300, %v10876, %v10878
      %10891 = vrot.lane.b32.xlu0 %v5278, 117
      %v10892 = vpop.permute.xlu0 %10891
      %10893 = vrot.lane.b32.xlu0 %v5956, 117
      %v10894 = vpop.permute.xlu0 %10893
      %10895 = vrot.lane.b32.xlu0 %v5281, 117
      %v10896 = vpop.permute.xlu0 %10895
      %10897 = vrot.lane.b32.xlu0 %v5959, 117
      %v10898 = vpop.permute.xlu0 %10897
      %10899 = vrot.lane.b32.xlu0 %v5284, 117
      %v10900 = vpop.permute.xlu0 %10899
      %10901 = vrot.lane.b32.xlu0 %v5962, 117
      %v10902 = vpop.permute.xlu0 %10901
      %10903 = vrot.lane.b32.xlu0 %v5287, 117
      %v10904 = vpop.permute.xlu0 %10903
      %10905 = vrot.lane.b32.xlu0 %v5965, 117
      %v10906 = vpop.permute.xlu0 %10905
      %v10907 = vsel %vm6329, %v10892, %v10894
      %v10908 = vsel %vm6329, %v10896, %v10898
      %v10909 = vsel %vm6329, %v10900, %v10902
      %v10910 = vsel %vm6329, %v10904, %v10906
      %10919 = vrot.lane.b32.xlu0 %v5278, 116
      %v10920 = vpop.permute.xlu0 %10919
      %10921 = vrot.lane.b32.xlu0 %v5956, 116
      %v10922 = vpop.permute.xlu0 %10921
      %10923 = vrot.lane.b32.xlu0 %v5281, 116
      %v10924 = vpop.permute.xlu0 %10923
      %10925 = vrot.lane.b32.xlu0 %v5959, 116
      %v10926 = vpop.permute.xlu0 %10925
      %10927 = vrot.lane.b32.xlu0 %v5284, 116
      %v10928 = vpop.permute.xlu0 %10927
      %10929 = vrot.lane.b32.xlu0 %v5962, 116
      %v10930 = vpop.permute.xlu0 %10929
      %10931 = vrot.lane.b32.xlu0 %v5287, 116
      %v10932 = vpop.permute.xlu0 %10931
      %10933 = vrot.lane.b32.xlu0 %v5965, 116
      %v10934 = vpop.permute.xlu0 %10933
      %v10935 = vsel %vm6358, %v10920, %v10922
      %v10936 = vsel %vm6358, %v10924, %v10926
      %v10937 = vsel %vm6358, %v10928, %v10930
      %v10938 = vsel %vm6358, %v10932, %v10934
      %10947 = vrot.lane.b32.xlu0 %v5278, 115
      %v10948 = vpop.permute.xlu0 %10947
      %10949 = vrot.lane.b32.xlu0 %v5956, 115
      %v10950 = vpop.permute.xlu0 %10949
      %10951 = vrot.lane.b32.xlu0 %v5281, 115
      %v10952 = vpop.permute.xlu0 %10951
      %10953 = vrot.lane.b32.xlu0 %v5959, 115
      %v10954 = vpop.permute.xlu0 %10953
      %10955 = vrot.lane.b32.xlu0 %v5284, 115
      %v10956 = vpop.permute.xlu0 %10955
      %10957 = vrot.lane.b32.xlu0 %v5962, 115
      %v10958 = vpop.permute.xlu0 %10957
      %10959 = vrot.lane.b32.xlu0 %v5287, 115
      %v10960 = vpop.permute.xlu0 %10959
      %10961 = vrot.lane.b32.xlu0 %v5965, 115
      %v10962 = vpop.permute.xlu0 %10961
      %v10963 = vsel %vm6387, %v10948, %v10950
      %v10964 = vsel %vm6387, %v10952, %v10954
      %v10965 = vsel %vm6387, %v10956, %v10958
      %v10966 = vsel %vm6387, %v10960, %v10962
      %10975 = vrot.lane.b32.xlu0 %v5278, 114
      %v10976 = vpop.permute.xlu0 %10975
      %10977 = vrot.lane.b32.xlu0 %v5956, 114
      %v10978 = vpop.permute.xlu0 %10977
      %10979 = vrot.lane.b32.xlu0 %v5281, 114
      %v10980 = vpop.permute.xlu0 %10979
      %10981 = vrot.lane.b32.xlu0 %v5959, 114
      %v10982 = vpop.permute.xlu0 %10981
      %10983 = vrot.lane.b32.xlu0 %v5284, 114
      %v10984 = vpop.permute.xlu0 %10983
      %10985 = vrot.lane.b32.xlu0 %v5962, 114
      %v10986 = vpop.permute.xlu0 %10985
      %10987 = vrot.lane.b32.xlu0 %v5287, 114
      %v10988 = vpop.permute.xlu0 %10987
      %10989 = vrot.lane.b32.xlu0 %v5965, 114
      %v10990 = vpop.permute.xlu0 %10989
      %v10991 = vsel %vm6416, %v10976, %v10978
      %v10992 = vsel %vm6416, %v10980, %v10982
      %v10993 = vsel %vm6416, %v10984, %v10986
      %v10994 = vsel %vm6416, %v10988, %v10990
      %11003 = vmatpush.msra.mxu0 %v10686
      %11004 = vmatpush.msra.mxu0 %v10685
      %11005 = vmatpush.msra.mxu0 %v10684
      %11006 = vmatpush.msra.mxu0 %v10683
      %11007 = vmatpush.msra.mxu0 %v10658
      %11008 = vmatpush.msra.mxu0 %v10657
      %11009 = vmatpush.msra.mxu0 %v10656
      %11010 = vmatpush.msra.mxu0 %v10655
      %11011 = vmatpush.msra.mxu0 %v10630
      %11012 = vmatpush.msra.mxu0 %v10629
      %11013 = vmatpush.msra.mxu0 %v10628
      %11014 = vmatpush.msra.mxu0 %v10627
      %11015 = vmatpush.msra.mxu0 %v5287
      %11016 = vmatpush.msra.mxu0 %v5284
      %11017 = vmatpush.msra.mxu0 %v5281
      %11018 = vmatpush.msra.mxu0 %v5278
      %11019 = vmatmul.f32.gmra.mxu0 %v5979
      %v11020 = vpop.f32.mrf.mxu0
      %v11021 = vadd.f32 %v6432, %v11020
      %11022 = vmatmul.f32.gmra.mxu0 %v5983
      %v11023 = vpop.f32.mrf.mxu0
      %v11024 = vadd.f32 %v6437, %v11023
      %11025 = vmatmul.f32.gmra.mxu0 %v5987
      %v11026 = vpop.f32.mrf.mxu0
      %v11027 = vadd.f32 %v6442, %v11026
      %11028 = vmatmul.f32.gmra.mxu0 %v5991
      %v11029 = vpop.f32.mrf.mxu0
      %v11030 = vadd.f32 %v6447, %v11029
      %11031 = vdwg.mxu0
      %11032 = vmatpush.msra.mxu0 %v10798
      %11033 = vmatpush.msra.mxu0 %v10797
      %11034 = vmatpush.msra.mxu0 %v10796
      %11035 = vmatpush.msra.mxu0 %v10795
      %11036 = vmatpush.msra.mxu0 %v10770
      %11037 = vmatpush.msra.mxu0 %v10769
      %11038 = vmatpush.msra.mxu0 %v10768
      %11039 = vmatpush.msra.mxu0 %v10767
      %11040 = vmatpush.msra.mxu0 %v10742
      %11041 = vmatpush.msra.mxu0 %v10741
      %11042 = vmatpush.msra.mxu0 %v10740
      %11043 = vmatpush.msra.mxu0 %v10739
      %11044 = vmatpush.msra.mxu0 %v10714
      %11045 = vmatpush.msra.mxu0 %v10713
      %11046 = vmatpush.msra.mxu0 %v10712
      %11047 = vmatpush.msra.mxu0 %v10711
      %11048 = vmatmul.f32.gmra.mxu0 %v5980
      %v11049 = vpop.f32.mrf.mxu0
      %v11050 = vadd.f32 %v11021, %v11049
      %11051 = vmatmul.f32.gmra.mxu0 %v5984
      %v11052 = vpop.f32.mrf.mxu0
      %v11053 = vadd.f32 %v11024, %v11052
      %11054 = vmatmul.f32.gmra.mxu0 %v5988
      %v11055 = vpop.f32.mrf.mxu0
      %v11056 = vadd.f32 %v11027, %v11055
      %11057 = vmatmul.f32.gmra.mxu0 %v5992
      %v11058 = vpop.f32.mrf.mxu0
      %v11059 = vadd.f32 %v11030, %v11058
      %11060 = vdwg.mxu0
      %11061 = vmatpush.msra.mxu0 %v10910
      %11062 = vmatpush.msra.mxu0 %v10909
      %11063 = vmatpush.msra.mxu0 %v10908
      %11064 = vmatpush.msra.mxu0 %v10907
      %11065 = vmatpush.msra.mxu0 %v10882
      %11066 = vmatpush.msra.mxu0 %v10881
      %11067 = vmatpush.msra.mxu0 %v10880
      %11068 = vmatpush.msra.mxu0 %v10879
      %11069 = vmatpush.msra.mxu0 %v10854
      %11070 = vmatpush.msra.mxu0 %v10853
      %11071 = vmatpush.msra.mxu0 %v10852
      %11072 = vmatpush.msra.mxu0 %v10851
      %11073 = vmatpush.msra.mxu0 %v10826
      %11074 = vmatpush.msra.mxu0 %v10825
      %11075 = vmatpush.msra.mxu0 %v10824
      %11076 = vmatpush.msra.mxu0 %v10823
      %11077 = vmatmul.f32.gmra.mxu0 %v5981
      %v11078 = vpop.f32.mrf.mxu0
      %v11079 = vadd.f32 %v11050, %v11078
      %11080 = vmatmul.f32.gmra.mxu0 %v5985
      %v11081 = vpop.f32.mrf.mxu0
      %v11082 = vadd.f32 %v11053, %v11081
      %11083 = vmatmul.f32.gmra.mxu0 %v5989
      %v11084 = vpop.f32.mrf.mxu0
      %v11085 = vadd.f32 %v11056, %v11084
      %11086 = vmatmul.f32.gmra.mxu0 %v5993
      %v11087 = vpop.f32.mrf.mxu0
      %v11088 = vadd.f32 %v11059, %v11087
      %11089 = vdwg.mxu0
      %11090 = vmatpush.msra.mxu0 0.0
      %11091 = vmatpush.msra.mxu0 0.0
      %11092 = vmatpush.msra.mxu0 0.0
      %11093 = vmatpush.msra.mxu0 0.0
      %11094 = vmatpush.msra.mxu0 %v10994
      %11095 = vmatpush.msra.mxu0 %v10993
      %11096 = vmatpush.msra.mxu0 %v10992
      %11097 = vmatpush.msra.mxu0 %v10991
      %11098 = vmatpush.msra.mxu0 %v10966
      %11099 = vmatpush.msra.mxu0 %v10965
      %11100 = vmatpush.msra.mxu0 %v10964
      %11101 = vmatpush.msra.mxu0 %v10963
      %11102 = vmatpush.msra.mxu0 %v10938
      %11103 = vmatpush.msra.mxu0 %v10937
      %11104 = vmatpush.msra.mxu0 %v10936
      %11105 = vmatpush.msra.mxu0 %v10935
      %11106 = vmatmul.f32.gmra.mxu0 %v6451
      %v11107 = vpop.f32.mrf.mxu0
      %v11108 = vadd.f32 %v11079, %v11107
      %11109 = vmatmul.f32.gmra.mxu0 %v6454
      %v11110 = vpop.f32.mrf.mxu0
      %v11111 = vadd.f32 %v11082, %v11110
      %11112 = vmatmul.f32.gmra.mxu0 %v6457
      %v11113 = vpop.f32.mrf.mxu0
      %v11114 = vadd.f32 %v11085, %v11113
      %11115 = vmatmul.f32.gmra.mxu0 %v6460
      %v11116 = vpop.f32.mrf.mxu0
      %v11117 = vadd.f32 %v11088, %v11116
      %11118 = vdwg.mxu0
      %11119 = vmatpush.msra.mxu0 %v10682
      %11120 = vmatpush.msra.mxu0 %v10678
      %11121 = vmatpush.msra.mxu0 %v10674
      %11122 = vmatpush.msra.mxu0 %v10670
      %11123 = vmatpush.msra.mxu0 %v10654
      %11124 = vmatpush.msra.mxu0 %v10650
      %11125 = vmatpush.msra.mxu0 %v10646
      %11126 = vmatpush.msra.mxu0 %v10642
      %11127 = vmatpush.msra.mxu0 %v10626
      %11128 = vmatpush.msra.mxu0 %v10622
      %11129 = vmatpush.msra.mxu0 %v10618
      %11130 = vmatpush.msra.mxu0 %v10614
      %11131 = vmatpush.msra.mxu0 %v5965
      %11132 = vmatpush.msra.mxu0 %v5962
      %11133 = vmatpush.msra.mxu0 %v5959
      %11134 = vmatpush.msra.mxu0 %v5956
      %11135 = vmatmul.f32.gmra.mxu0 %v5979
      %v11136 = vpop.f32.mrf.mxu0
      %v11137 = vadd.f32 %v6432, %v11136
      %11138 = vmatmul.f32.gmra.mxu0 %v5983
      %v11139 = vpop.f32.mrf.mxu0
      %v11140 = vadd.f32 %v6437, %v11139
      %11141 = vmatmul.f32.gmra.mxu0 %v5987
      %v11142 = vpop.f32.mrf.mxu0
      %v11143 = vadd.f32 %v6442, %v11142
      %11144 = vmatmul.f32.gmra.mxu0 %v5991
      %v11145 = vpop.f32.mrf.mxu0
      %v11146 = vadd.f32 %v6447, %v11145
      %11147 = vdwg.mxu0
      %11148 = vmatpush.msra.mxu0 %v10794
      %11149 = vmatpush.msra.mxu0 %v10790
      %11150 = vmatpush.msra.mxu0 %v10786
      %11151 = vmatpush.msra.mxu0 %v10782
      %11152 = vmatpush.msra.mxu0 %v10766
      %11153 = vmatpush.msra.mxu0 %v10762
      %11154 = vmatpush.msra.mxu0 %v10758
      %11155 = vmatpush.msra.mxu0 %v10754
      %11156 = vmatpush.msra.mxu0 %v10738
      %11157 = vmatpush.msra.mxu0 %v10734
      %11158 = vmatpush.msra.mxu0 %v10730
      %11159 = vmatpush.msra.mxu0 %v10726
      %11160 = vmatpush.msra.mxu0 %v10710
      %11161 = vmatpush.msra.mxu0 %v10706
      %11162 = vmatpush.msra.mxu0 %v10702
      %11163 = vmatpush.msra.mxu0 %v10698
      %11164 = vmatmul.f32.gmra.mxu0 %v5980
      %v11165 = vpop.f32.mrf.mxu0
      %v11166 = vadd.f32 %v11137, %v11165
      %11167 = vmatmul.f32.gmra.mxu0 %v5984
      %v11168 = vpop.f32.mrf.mxu0
      %v11169 = vadd.f32 %v11140, %v11168
      %11170 = vmatmul.f32.gmra.mxu0 %v5988
      %v11171 = vpop.f32.mrf.mxu0
      %v11172 = vadd.f32 %v11143, %v11171
      %11173 = vmatmul.f32.gmra.mxu0 %v5992
      %v11174 = vpop.f32.mrf.mxu0
      %v11175 = vadd.f32 %v11146, %v11174
      %11176 = vdwg.mxu0
      %11177 = vmatpush.msra.mxu0 %v10906
      %11178 = vmatpush.msra.mxu0 %v10902
      %11179 = vmatpush.msra.mxu0 %v10898
      %11180 = vmatpush.msra.mxu0 %v10894
      %11181 = vmatpush.msra.mxu0 %v10878
      %11182 = vmatpush.msra.mxu0 %v10874
      %11183 = vmatpush.msra.mxu0 %v10870
      %11184 = vmatpush.msra.mxu0 %v10866
      %11185 = vmatpush.msra.mxu0 %v10850
      %11186 = vmatpush.msra.mxu0 %v10846
      %11187 = vmatpush.msra.mxu0 %v10842
      %11188 = vmatpush.msra.mxu0 %v10838
      %11189 = vmatpush.msra.mxu0 %v10822
      %11190 = vmatpush.msra.mxu0 %v10818
      %11191 = vmatpush.msra.mxu0 %v10814
      %11192 = vmatpush.msra.mxu0 %v10810
      %11193 = vmatmul.f32.gmra.mxu0 %v5981
      %v11194 = vpop.f32.mrf.mxu0
      %v11195 = vadd.f32 %v11166, %v11194
      %11196 = vmatmul.f32.gmra.mxu0 %v5985
      %v11197 = vpop.f32.mrf.mxu0
      %v11198 = vadd.f32 %v11169, %v11197
      %11199 = vmatmul.f32.gmra.mxu0 %v5989
      %v11200 = vpop.f32.mrf.mxu0
      %v11201 = vadd.f32 %v11172, %v11200
      %11202 = vmatmul.f32.gmra.mxu0 %v5993
      %v11203 = vpop.f32.mrf.mxu0
      %v11204 = vadd.f32 %v11175, %v11203
      %11205 = vdwg.mxu0
      %11206 = vmatpush.msra.mxu0 0.0
      %11207 = vmatpush.msra.mxu0 0.0
      %11208 = vmatpush.msra.mxu0 0.0
      %11209 = vmatpush.msra.mxu0 0.0
      %11210 = vmatpush.msra.mxu0 %v10990
      %11211 = vmatpush.msra.mxu0 %v10986
      %11212 = vmatpush.msra.mxu0 %v10982
      %11213 = vmatpush.msra.mxu0 %v10978
      %11214 = vmatpush.msra.mxu0 %v10962
      %11215 = vmatpush.msra.mxu0 %v10958
      %11216 = vmatpush.msra.mxu0 %v10954
      %11217 = vmatpush.msra.mxu0 %v10950
      %11218 = vmatpush.msra.mxu0 %v10934
      %11219 = vmatpush.msra.mxu0 %v10930
      %11220 = vmatpush.msra.mxu0 %v10926
      %11221 = vmatpush.msra.mxu0 %v10922
      %11222 = vmatmul.f32.gmra.mxu0 %v6451
      %v11223 = vpop.f32.mrf.mxu0
      %v11224 = vadd.f32 %v11195, %v11223
      %11225 = vmatmul.f32.gmra.mxu0 %v6454
      %v11226 = vpop.f32.mrf.mxu0
      %v11227 = vadd.f32 %v11198, %v11226
      %11228 = vmatmul.f32.gmra.mxu0 %v6457
      %v11229 = vpop.f32.mrf.mxu0
      %v11230 = vadd.f32 %v11201, %v11229
      %11231 = vmatmul.f32.gmra.mxu0 %v6460
      %v11232 = vpop.f32.mrf.mxu0
      %v11233 = vadd.f32 %v11204, %v11232
      %11234 = vdwg.mxu0
      %vm11235 = vcmp.gt.f32.partialorder %v11108, 0.0
      %vm11236 = vcmp.gt.f32.partialorder %v11224, 0.0
      %vm11237 = vcmp.gt.f32.partialorder %v11111, 0.0
      %vm11238 = vcmp.gt.f32.partialorder %v11227, 0.0
      %vm11239 = vcmp.gt.f32.partialorder %v11114, 0.0
      %vm11240 = vcmp.gt.f32.partialorder %v11230, 0.0
      %vm11241 = vcmp.gt.f32.partialorder %v11117, 0.0
      %vm11242 = vcmp.gt.f32.partialorder %v11233, 0.0
      %v11243 = vmin.f32 %v11108, 0.0
      %v11244 = vmin.f32 %v11224, 0.0
      %v11245 = vmin.f32 %v11111, 0.0
      %v11246 = vmin.f32 %v11227, 0.0
      %v11247 = vmin.f32 %v11114, 0.0
      %v11248 = vmin.f32 %v11230, 0.0
      %v11249 = vmin.f32 %v11117, 0.0
      %v11250 = vmin.f32 %v11233, 0.0
      %v11251 = vmul.f32 %v11243, 1.442695
      %v11252 = vpow.pop %v11251
      %v11253 = vmul.f32 %v11244, 1.442695
      %v11254 = vpow.pop %v11253
      %v11255 = vmul.f32 %v11245, 1.442695
      %v11256 = vpow.pop %v11255
      %v11257 = vmul.f32 %v11246, 1.442695
      %v11258 = vpow.pop %v11257
      %v11259 = vmul.f32 %v11247, 1.442695
      %v11260 = vpow.pop %v11259
      %v11261 = vmul.f32 %v11248, 1.442695
      %v11262 = vpow.pop %v11261
      %v11263 = vmul.f32 %v11249, 1.442695
      %v11264 = vpow.pop %v11263
      %v11265 = vmul.f32 %v11250, 1.442695
      %v11266 = vpow.pop %v11265
      %v11267 = vsub.f32 %v11252, 1.0
      %v11268 = vsub.f32 %v11254, 1.0
      %v11269 = vsub.f32 %v11256, 1.0
      %v11270 = vsub.f32 %v11258, 1.0
      %v11271 = vsub.f32 %v11260, 1.0
      %v11272 = vsub.f32 %v11262, 1.0
      %v11273 = vsub.f32 %v11264, 1.0
      %v11274 = vsub.f32 %v11266, 1.0
      %v11275 = vsel %vm11235, %v11108, %v11267
      %v11276 = vsel %vm11236, %v11224, %v11268
      %v11277 = vsel %vm11237, %v11111, %v11269
      %v11278 = vsel %vm11238, %v11227, %v11270
      %v11279 = vsel %vm11239, %v11114, %v11271
      %v11280 = vsel %vm11240, %v11230, %v11272
      %v11281 = vsel %vm11241, %v11117, %v11273
      %v11282 = vsel %vm11242, %v11233, %v11274
      %v11283 = vmul.f32 %v5999, %v11275
      %v11284 = vmul.f32 %v6000, %v11276
      %v11285 = vmul.f32 %v6001, %v11277
      %v11286 = vmul.f32 %v6002, %v11278
      %v11287 = vmul.f32 %v6003, %v11279
      %v11288 = vmul.f32 %v6004, %v11280
      %v11289 = vmul.f32 %v6005, %v11281
      %v11290 = vmul.f32 %v6006, %v11282
      %v11291 = vmul.f32 %v6007, %v11275
      %v11292 = vmul.f32 %v6008, %v11276
      %v11293 = vmul.f32 %v6009, %v11277
      %v11294 = vmul.f32 %v6010, %v11278
      %v11295 = vmul.f32 %v6011, %v11279
      %v11296 = vmul.f32 %v6012, %v11280
      %v11297 = vmul.f32 %v6013, %v11281
      %v11298 = vmul.f32 %v6014, %v11282
      %v11299 = vsel %vm6758, %v11284, 0.0
      %v11300 = vadd.f32 %v11283, %v11299
      %11301 = vadd.xlane.f32.xlu0 %v11300
      %v11302 = vpop.xlane.xlu0 %11301
      %v11303 = vsel %vm6758, %v11286, 0.0
      %v11304 = vadd.f32 %v11285, %v11303
      %11305 = vadd.xlane.f32.xlu0 %v11304
      %v11306 = vpop.xlane.xlu0 %11305
      %v11307 = vsel %vm6758, %v11288, 0.0
      %v11308 = vadd.f32 %v11287, %v11307
      %11309 = vadd.xlane.f32.xlu0 %v11308
      %v11310 = vpop.xlane.xlu0 %11309
      %v11311 = vsel %vm6758, %v11290, 0.0
      %v11312 = vadd.f32 %v11289, %v11311
      %11313 = vadd.xlane.f32.xlu0 %v11312
      %v11314 = vpop.xlane.xlu0 %11313
      %v11315 = vsel %vm6758, %v11292, 0.0
      %v11316 = vadd.f32 %v11291, %v11315
      %11317 = vadd.xlane.f32.xlu0 %v11316
      %v11318 = vpop.xlane.xlu0 %11317
      %v11319 = vsel %vm6758, %v11294, 0.0
      %v11320 = vadd.f32 %v11293, %v11319
      %11321 = vadd.xlane.f32.xlu0 %v11320
      %v11322 = vpop.xlane.xlu0 %11321
      %v11323 = vsel %vm6758, %v11296, 0.0
      %v11324 = vadd.f32 %v11295, %v11323
      %11325 = vadd.xlane.f32.xlu0 %v11324
      %v11326 = vpop.xlane.xlu0 %11325
      %v11327 = vsel %vm6758, %v11298, 0.0
      %v11328 = vadd.f32 %v11297, %v11327
      %11329 = vadd.xlane.f32.xlu0 %v11328
      %v11330 = vpop.xlane.xlu0 %11329
      %v11339 = vperm.slane %v11302, %v6800
      %v11340 = vperm.slane %v11306, %v6802
      %v11341 = vsel %vm6804, %v11340, %v11339
      %v11342 = vperm.slane %v11310, %v6806
      %v11343 = vsel %vm6808, %v11342, %v11341
      %v11344 = vperm.slane %v11314, %v6810
      %v11345 = vsel %vm6812, %v11344, %v11343
      %v11346 = vperm.slane %v11318, %v6800
      %v11347 = vperm.slane %v11322, %v6802
      %v11348 = vsel %vm6804, %v11347, %v11346
      %v11349 = vperm.slane %v11326, %v6806
      %v11350 = vsel %vm6808, %v11349, %v11348
      %v11351 = vperm.slane %v11330, %v6810
      %v11352 = vsel %vm6812, %v11351, %v11350
      %v11353 = vsel %vm6821, %v11352, %v11345
      %v11355 = vsel %vm6824, %v11353, 0.0
      %11356 = vadd.xlane.f32.xlu0 %v11355
      %v11357 = vpop.xlane.xlu0 %11356
      %11366 = vrot.lane.b32.xlu0 %v5290, 127
      %v11367 = vpop.permute.xlu0 %11366
      %11368 = vrot.lane.b32.xlu0 %v5968, 127
      %v11369 = vpop.permute.xlu0 %11368
      %11370 = vrot.lane.b32.xlu0 %v5293, 127
      %v11371 = vpop.permute.xlu0 %11370
      %11372 = vrot.lane.b32.xlu0 %v5971, 127
      %v11373 = vpop.permute.xlu0 %11372
      %11374 = vrot.lane.b32.xlu0 %v5296, 127
      %v11375 = vpop.permute.xlu0 %11374
      %11376 = vrot.lane.b32.xlu0 %v5974, 127
      %v11377 = vpop.permute.xlu0 %11376
      %11378 = vrot.lane.b32.xlu0 %v5299, 127
      %v11379 = vpop.permute.xlu0 %11378
      %11380 = vrot.lane.b32.xlu0 %v5977, 127
      %v11381 = vpop.permute.xlu0 %11380
      %v11382 = vsel %vm6039, %v11367, %v11369
      %v11383 = vsel %vm6039, %v11371, %v11373
      %v11384 = vsel %vm6039, %v11375, %v11377
      %v11385 = vsel %vm6039, %v11379, %v11381
      %11394 = vrot.lane.b32.xlu0 %v5290, 126
      %v11395 = vpop.permute.xlu0 %11394
      %11396 = vrot.lane.b32.xlu0 %v5968, 126
      %v11397 = vpop.permute.xlu0 %11396
      %11398 = vrot.lane.b32.xlu0 %v5293, 126
      %v11399 = vpop.permute.xlu0 %11398
      %11400 = vrot.lane.b32.xlu0 %v5971, 126
      %v11401 = vpop.permute.xlu0 %11400
      %11402 = vrot.lane.b32.xlu0 %v5296, 126
      %v11403 = vpop.permute.xlu0 %11402
      %11404 = vrot.lane.b32.xlu0 %v5974, 126
      %v11405 = vpop.permute.xlu0 %11404
      %11406 = vrot.lane.b32.xlu0 %v5299, 126
      %v11407 = vpop.permute.xlu0 %11406
      %11408 = vrot.lane.b32.xlu0 %v5977, 126
      %v11409 = vpop.permute.xlu0 %11408
      %v11410 = vsel %vm6068, %v11395, %v11397
      %v11411 = vsel %vm6068, %v11399, %v11401
      %v11412 = vsel %vm6068, %v11403, %v11405
      %v11413 = vsel %vm6068, %v11407, %v11409
      %11422 = vrot.lane.b32.xlu0 %v5290, 125
      %v11423 = vpop.permute.xlu0 %11422
      %11424 = vrot.lane.b32.xlu0 %v5968, 125
      %v11425 = vpop.permute.xlu0 %11424
      %11426 = vrot.lane.b32.xlu0 %v5293, 125
      %v11427 = vpop.permute.xlu0 %11426
      %11428 = vrot.lane.b32.xlu0 %v5971, 125
      %v11429 = vpop.permute.xlu0 %11428
      %11430 = vrot.lane.b32.xlu0 %v5296, 125
      %v11431 = vpop.permute.xlu0 %11430
      %11432 = vrot.lane.b32.xlu0 %v5974, 125
      %v11433 = vpop.permute.xlu0 %11432
      %11434 = vrot.lane.b32.xlu0 %v5299, 125
      %v11435 = vpop.permute.xlu0 %11434
      %11436 = vrot.lane.b32.xlu0 %v5977, 125
      %v11437 = vpop.permute.xlu0 %11436
      %v11438 = vsel %vm6097, %v11423, %v11425
      %v11439 = vsel %vm6097, %v11427, %v11429
      %v11440 = vsel %vm6097, %v11431, %v11433
      %v11441 = vsel %vm6097, %v11435, %v11437
      %11450 = vrot.lane.b32.xlu0 %v5290, 124
      %v11451 = vpop.permute.xlu0 %11450
      %11452 = vrot.lane.b32.xlu0 %v5968, 124
      %v11453 = vpop.permute.xlu0 %11452
      %11454 = vrot.lane.b32.xlu0 %v5293, 124
      %v11455 = vpop.permute.xlu0 %11454
      %11456 = vrot.lane.b32.xlu0 %v5971, 124
      %v11457 = vpop.permute.xlu0 %11456
      %11458 = vrot.lane.b32.xlu0 %v5296, 124
      %v11459 = vpop.permute.xlu0 %11458
      %11460 = vrot.lane.b32.xlu0 %v5974, 124
      %v11461 = vpop.permute.xlu0 %11460
      %11462 = vrot.lane.b32.xlu0 %v5299, 124
      %v11463 = vpop.permute.xlu0 %11462
      %11464 = vrot.lane.b32.xlu0 %v5977, 124
      %v11465 = vpop.permute.xlu0 %11464
      %v11466 = vsel %vm6126, %v11451, %v11453
      %v11467 = vsel %vm6126, %v11455, %v11457
      %v11468 = vsel %vm6126, %v11459, %v11461
      %v11469 = vsel %vm6126, %v11463, %v11465
      %11478 = vrot.lane.b32.xlu0 %v5290, 123
      %v11479 = vpop.permute.xlu0 %11478
      %11480 = vrot.lane.b32.xlu0 %v5968, 123
      %v11481 = vpop.permute.xlu0 %11480
      %11482 = vrot.lane.b32.xlu0 %v5293, 123
      %v11483 = vpop.permute.xlu0 %11482
      %11484 = vrot.lane.b32.xlu0 %v5971, 123
      %v11485 = vpop.permute.xlu0 %11484
      %11486 = vrot.lane.b32.xlu0 %v5296, 123
      %v11487 = vpop.permute.xlu0 %11486
      %11488 = vrot.lane.b32.xlu0 %v5974, 123
      %v11489 = vpop.permute.xlu0 %11488
      %11490 = vrot.lane.b32.xlu0 %v5299, 123
      %v11491 = vpop.permute.xlu0 %11490
      %11492 = vrot.lane.b32.xlu0 %v5977, 123
      %v11493 = vpop.permute.xlu0 %11492
      %v11494 = vsel %vm6155, %v11479, %v11481
      %v11495 = vsel %vm6155, %v11483, %v11485
      %v11496 = vsel %vm6155, %v11487, %v11489
      %v11497 = vsel %vm6155, %v11491, %v11493
      %11506 = vrot.lane.b32.xlu0 %v5290, 122
      %v11507 = vpop.permute.xlu0 %11506
      %11508 = vrot.lane.b32.xlu0 %v5968, 122
      %v11509 = vpop.permute.xlu0 %11508
      %11510 = vrot.lane.b32.xlu0 %v5293, 122
      %v11511 = vpop.permute.xlu0 %11510
      %11512 = vrot.lane.b32.xlu0 %v5971, 122
      %v11513 = vpop.permute.xlu0 %11512
      %11514 = vrot.lane.b32.xlu0 %v5296, 122
      %v11515 = vpop.permute.xlu0 %11514
      %11516 = vrot.lane.b32.xlu0 %v5974, 122
      %v11517 = vpop.permute.xlu0 %11516
      %11518 = vrot.lane.b32.xlu0 %v5299, 122
      %v11519 = vpop.permute.xlu0 %11518
      %11520 = vrot.lane.b32.xlu0 %v5977, 122
      %v11521 = vpop.permute.xlu0 %11520
      %v11522 = vsel %vm6184, %v11507, %v11509
      %v11523 = vsel %vm6184, %v11511, %v11513
      %v11524 = vsel %vm6184, %v11515, %v11517
      %v11525 = vsel %vm6184, %v11519, %v11521
      %11534 = vrot.lane.b32.xlu0 %v5290, 121
      %v11535 = vpop.permute.xlu0 %11534
      %11536 = vrot.lane.b32.xlu0 %v5968, 121
      %v11537 = vpop.permute.xlu0 %11536
      %11538 = vrot.lane.b32.xlu0 %v5293, 121
      %v11539 = vpop.permute.xlu0 %11538
      %11540 = vrot.lane.b32.xlu0 %v5971, 121
      %v11541 = vpop.permute.xlu0 %11540
      %11542 = vrot.lane.b32.xlu0 %v5296, 121
      %v11543 = vpop.permute.xlu0 %11542
      %11544 = vrot.lane.b32.xlu0 %v5974, 121
      %v11545 = vpop.permute.xlu0 %11544
      %11546 = vrot.lane.b32.xlu0 %v5299, 121
      %v11547 = vpop.permute.xlu0 %11546
      %11548 = vrot.lane.b32.xlu0 %v5977, 121
      %v11549 = vpop.permute.xlu0 %11548
      %v11550 = vsel %vm6213, %v11535, %v11537
      %v11551 = vsel %vm6213, %v11539, %v11541
      %v11552 = vsel %vm6213, %v11543, %v11545
      %v11553 = vsel %vm6213, %v11547, %v11549
      %11562 = vrot.lane.b32.xlu0 %v5290, 120
      %v11563 = vpop.permute.xlu0 %11562
      %11564 = vrot.lane.b32.xlu0 %v5968, 120
      %v11565 = vpop.permute.xlu0 %11564
      %11566 = vrot.lane.b32.xlu0 %v5293, 120
      %v11567 = vpop.permute.xlu0 %11566
      %11568 = vrot.lane.b32.xlu0 %v5971, 120
      %v11569 = vpop.permute.xlu0 %11568
      %11570 = vrot.lane.b32.xlu0 %v5296, 120
      %v11571 = vpop.permute.xlu0 %11570
      %11572 = vrot.lane.b32.xlu0 %v5974, 120
      %v11573 = vpop.permute.xlu0 %11572
      %11574 = vrot.lane.b32.xlu0 %v5299, 120
      %v11575 = vpop.permute.xlu0 %11574
      %11576 = vrot.lane.b32.xlu0 %v5977, 120
      %v11577 = vpop.permute.xlu0 %11576
      %v11578 = vsel %vm6242, %v11563, %v11565
      %v11579 = vsel %vm6242, %v11567, %v11569
      %v11580 = vsel %vm6242, %v11571, %v11573
      %v11581 = vsel %vm6242, %v11575, %v11577
      %11590 = vrot.lane.b32.xlu0 %v5290, 119
      %v11591 = vpop.permute.xlu0 %11590
      %11592 = vrot.lane.b32.xlu0 %v5968, 119
      %v11593 = vpop.permute.xlu0 %11592
      %11594 = vrot.lane.b32.xlu0 %v5293, 119
      %v11595 = vpop.permute.xlu0 %11594
      %11596 = vrot.lane.b32.xlu0 %v5971, 119
      %v11597 = vpop.permute.xlu0 %11596
      %11598 = vrot.lane.b32.xlu0 %v5296, 119
      %v11599 = vpop.permute.xlu0 %11598
      %11600 = vrot.lane.b32.xlu0 %v5974, 119
      %v11601 = vpop.permute.xlu0 %11600
      %11602 = vrot.lane.b32.xlu0 %v5299, 119
      %v11603 = vpop.permute.xlu0 %11602
      %11604 = vrot.lane.b32.xlu0 %v5977, 119
      %v11605 = vpop.permute.xlu0 %11604
      %v11606 = vsel %vm6271, %v11591, %v11593
      %v11607 = vsel %vm6271, %v11595, %v11597
      %v11608 = vsel %vm6271, %v11599, %v11601
      %v11609 = vsel %vm6271, %v11603, %v11605
      %11618 = vrot.lane.b32.xlu0 %v5290, 118
      %v11619 = vpop.permute.xlu0 %11618
      %11620 = vrot.lane.b32.xlu0 %v5968, 118
      %v11621 = vpop.permute.xlu0 %11620
      %11622 = vrot.lane.b32.xlu0 %v5293, 118
      %v11623 = vpop.permute.xlu0 %11622
      %11624 = vrot.lane.b32.xlu0 %v5971, 118
      %v11625 = vpop.permute.xlu0 %11624
      %11626 = vrot.lane.b32.xlu0 %v5296, 118
      %v11627 = vpop.permute.xlu0 %11626
      %11628 = vrot.lane.b32.xlu0 %v5974, 118
      %v11629 = vpop.permute.xlu0 %11628
      %11630 = vrot.lane.b32.xlu0 %v5299, 118
      %v11631 = vpop.permute.xlu0 %11630
      %11632 = vrot.lane.b32.xlu0 %v5977, 118
      %v11633 = vpop.permute.xlu0 %11632
      %v11634 = vsel %vm6300, %v11619, %v11621
      %v11635 = vsel %vm6300, %v11623, %v11625
      %v11636 = vsel %vm6300, %v11627, %v11629
      %v11637 = vsel %vm6300, %v11631, %v11633
      %11646 = vrot.lane.b32.xlu0 %v5290, 117
      %v11647 = vpop.permute.xlu0 %11646
      %11648 = vrot.lane.b32.xlu0 %v5968, 117
      %v11649 = vpop.permute.xlu0 %11648
      %11650 = vrot.lane.b32.xlu0 %v5293, 117
      %v11651 = vpop.permute.xlu0 %11650
      %11652 = vrot.lane.b32.xlu0 %v5971, 117
      %v11653 = vpop.permute.xlu0 %11652
      %11654 = vrot.lane.b32.xlu0 %v5296, 117
      %v11655 = vpop.permute.xlu0 %11654
      %11656 = vrot.lane.b32.xlu0 %v5974, 117
      %v11657 = vpop.permute.xlu0 %11656
      %11658 = vrot.lane.b32.xlu0 %v5299, 117
      %v11659 = vpop.permute.xlu0 %11658
      %11660 = vrot.lane.b32.xlu0 %v5977, 117
      %v11661 = vpop.permute.xlu0 %11660
      %v11662 = vsel %vm6329, %v11647, %v11649
      %v11663 = vsel %vm6329, %v11651, %v11653
      %v11664 = vsel %vm6329, %v11655, %v11657
      %v11665 = vsel %vm6329, %v11659, %v11661
      %11674 = vrot.lane.b32.xlu0 %v5290, 116
      %v11675 = vpop.permute.xlu0 %11674
      %11676 = vrot.lane.b32.xlu0 %v5968, 116
      %v11677 = vpop.permute.xlu0 %11676
      %11678 = vrot.lane.b32.xlu0 %v5293, 116
      %v11679 = vpop.permute.xlu0 %11678
      %11680 = vrot.lane.b32.xlu0 %v5971, 116
      %v11681 = vpop.permute.xlu0 %11680
      %11682 = vrot.lane.b32.xlu0 %v5296, 116
      %v11683 = vpop.permute.xlu0 %11682
      %11684 = vrot.lane.b32.xlu0 %v5974, 116
      %v11685 = vpop.permute.xlu0 %11684
      %11686 = vrot.lane.b32.xlu0 %v5299, 116
      %v11687 = vpop.permute.xlu0 %11686
      %11688 = vrot.lane.b32.xlu0 %v5977, 116
      %v11689 = vpop.permute.xlu0 %11688
      %v11690 = vsel %vm6358, %v11675, %v11677
      %v11691 = vsel %vm6358, %v11679, %v11681
      %v11692 = vsel %vm6358, %v11683, %v11685
      %v11693 = vsel %vm6358, %v11687, %v11689
      %11702 = vrot.lane.b32.xlu0 %v5290, 115
      %v11703 = vpop.permute.xlu0 %11702
      %11704 = vrot.lane.b32.xlu0 %v5968, 115
      %v11705 = vpop.permute.xlu0 %11704
      %11706 = vrot.lane.b32.xlu0 %v5293, 115
      %v11707 = vpop.permute.xlu0 %11706
      %11708 = vrot.lane.b32.xlu0 %v5971, 115
      %v11709 = vpop.permute.xlu0 %11708
      %11710 = vrot.lane.b32.xlu0 %v5296, 115
      %v11711 = vpop.permute.xlu0 %11710
      %11712 = vrot.lane.b32.xlu0 %v5974, 115
      %v11713 = vpop.permute.xlu0 %11712
      %11714 = vrot.lane.b32.xlu0 %v5299, 115
      %v11715 = vpop.permute.xlu0 %11714
      %11716 = vrot.lane.b32.xlu0 %v5977, 115
      %v11717 = vpop.permute.xlu0 %11716
      %v11718 = vsel %vm6387, %v11703, %v11705
      %v11719 = vsel %vm6387, %v11707, %v11709
      %v11720 = vsel %vm6387, %v11711, %v11713
      %v11721 = vsel %vm6387, %v11715, %v11717
      %11730 = vrot.lane.b32.xlu0 %v5290, 114
      %v11731 = vpop.permute.xlu0 %11730
      %11732 = vrot.lane.b32.xlu0 %v5968, 114
      %v11733 = vpop.permute.xlu0 %11732
      %11734 = vrot.lane.b32.xlu0 %v5293, 114
      %v11735 = vpop.permute.xlu0 %11734
      %11736 = vrot.lane.b32.xlu0 %v5971, 114
      %v11737 = vpop.permute.xlu0 %11736
      %11738 = vrot.lane.b32.xlu0 %v5296, 114
      %v11739 = vpop.permute.xlu0 %11738
      %11740 = vrot.lane.b32.xlu0 %v5974, 114
      %v11741 = vpop.permute.xlu0 %11740
      %11742 = vrot.lane.b32.xlu0 %v5299, 114
      %v11743 = vpop.permute.xlu0 %11742
      %11744 = vrot.lane.b32.xlu0 %v5977, 114
      %v11745 = vpop.permute.xlu0 %11744
      %v11746 = vsel %vm6416, %v11731, %v11733
      %v11747 = vsel %vm6416, %v11735, %v11737
      %v11748 = vsel %vm6416, %v11739, %v11741
      %v11749 = vsel %vm6416, %v11743, %v11745
      %11758 = vmatpush.msra.mxu0 %v11441
      %11759 = vmatpush.msra.mxu0 %v11440
      %11760 = vmatpush.msra.mxu0 %v11439
      %11761 = vmatpush.msra.mxu0 %v11438
      %11762 = vmatpush.msra.mxu0 %v11413
      %11763 = vmatpush.msra.mxu0 %v11412
      %11764 = vmatpush.msra.mxu0 %v11411
      %11765 = vmatpush.msra.mxu0 %v11410
      %11766 = vmatpush.msra.mxu0 %v11385
      %11767 = vmatpush.msra.mxu0 %v11384
      %11768 = vmatpush.msra.mxu0 %v11383
      %11769 = vmatpush.msra.mxu0 %v11382
      %11770 = vmatpush.msra.mxu0 %v5299
      %11771 = vmatpush.msra.mxu0 %v5296
      %11772 = vmatpush.msra.mxu0 %v5293
      %11773 = vmatpush.msra.mxu0 %v5290
      %11774 = vmatmul.f32.gmra.mxu0 %v5979
      %v11775 = vpop.f32.mrf.mxu0
      %v11776 = vadd.f32 %v6432, %v11775
      %11777 = vmatmul.f32.gmra.mxu0 %v5983
      %v11778 = vpop.f32.mrf.mxu0
      %v11779 = vadd.f32 %v6437, %v11778
      %11780 = vmatmul.f32.gmra.mxu0 %v5987
      %v11781 = vpop.f32.mrf.mxu0
      %v11782 = vadd.f32 %v6442, %v11781
      %11783 = vmatmul.f32.gmra.mxu0 %v5991
      %v11784 = vpop.f32.mrf.mxu0
      %v11785 = vadd.f32 %v6447, %v11784
      %11786 = vdwg.mxu0
      %11787 = vmatpush.msra.mxu0 %v11553
      %11788 = vmatpush.msra.mxu0 %v11552
      %11789 = vmatpush.msra.mxu0 %v11551
      %11790 = vmatpush.msra.mxu0 %v11550
      %11791 = vmatpush.msra.mxu0 %v11525
      %11792 = vmatpush.msra.mxu0 %v11524
      %11793 = vmatpush.msra.mxu0 %v11523
      %11794 = vmatpush.msra.mxu0 %v11522
      %11795 = vmatpush.msra.mxu0 %v11497
      %11796 = vmatpush.msra.mxu0 %v11496
      %11797 = vmatpush.msra.mxu0 %v11495
      %11798 = vmatpush.msra.mxu0 %v11494
      %11799 = vmatpush.msra.mxu0 %v11469
      %11800 = vmatpush.msra.mxu0 %v11468
      %11801 = vmatpush.msra.mxu0 %v11467
      %11802 = vmatpush.msra.mxu0 %v11466
      %11803 = vmatmul.f32.gmra.mxu0 %v5980
      %v11804 = vpop.f32.mrf.mxu0
      %v11805 = vadd.f32 %v11776, %v11804
      %11806 = vmatmul.f32.gmra.mxu0 %v5984
      %v11807 = vpop.f32.mrf.mxu0
      %v11808 = vadd.f32 %v11779, %v11807
      %11809 = vmatmul.f32.gmra.mxu0 %v5988
      %v11810 = vpop.f32.mrf.mxu0
      %v11811 = vadd.f32 %v11782, %v11810
      %11812 = vmatmul.f32.gmra.mxu0 %v5992
      %v11813 = vpop.f32.mrf.mxu0
      %v11814 = vadd.f32 %v11785, %v11813
      %11815 = vdwg.mxu0
      %11816 = vmatpush.msra.mxu0 %v11665
      %11817 = vmatpush.msra.mxu0 %v11664
      %11818 = vmatpush.msra.mxu0 %v11663
      %11819 = vmatpush.msra.mxu0 %v11662
      %11820 = vmatpush.msra.mxu0 %v11637
      %11821 = vmatpush.msra.mxu0 %v11636
      %11822 = vmatpush.msra.mxu0 %v11635
      %11823 = vmatpush.msra.mxu0 %v11634
      %11824 = vmatpush.msra.mxu0 %v11609
      %11825 = vmatpush.msra.mxu0 %v11608
      %11826 = vmatpush.msra.mxu0 %v11607
      %11827 = vmatpush.msra.mxu0 %v11606
      %11828 = vmatpush.msra.mxu0 %v11581
      %11829 = vmatpush.msra.mxu0 %v11580
      %11830 = vmatpush.msra.mxu0 %v11579
      %11831 = vmatpush.msra.mxu0 %v11578
      %11832 = vmatmul.f32.gmra.mxu0 %v5981
      %v11833 = vpop.f32.mrf.mxu0
      %v11834 = vadd.f32 %v11805, %v11833
      %11835 = vmatmul.f32.gmra.mxu0 %v5985
      %v11836 = vpop.f32.mrf.mxu0
      %v11837 = vadd.f32 %v11808, %v11836
      %11838 = vmatmul.f32.gmra.mxu0 %v5989
      %v11839 = vpop.f32.mrf.mxu0
      %v11840 = vadd.f32 %v11811, %v11839
      %11841 = vmatmul.f32.gmra.mxu0 %v5993
      %v11842 = vpop.f32.mrf.mxu0
      %v11843 = vadd.f32 %v11814, %v11842
      %11844 = vdwg.mxu0
      %11845 = vmatpush.msra.mxu0 0.0
      %11846 = vmatpush.msra.mxu0 0.0
      %11847 = vmatpush.msra.mxu0 0.0
      %11848 = vmatpush.msra.mxu0 0.0
      %11849 = vmatpush.msra.mxu0 %v11749
      %11850 = vmatpush.msra.mxu0 %v11748
      %11851 = vmatpush.msra.mxu0 %v11747
      %11852 = vmatpush.msra.mxu0 %v11746
      %11853 = vmatpush.msra.mxu0 %v11721
      %11854 = vmatpush.msra.mxu0 %v11720
      %11855 = vmatpush.msra.mxu0 %v11719
      %11856 = vmatpush.msra.mxu0 %v11718
      %11857 = vmatpush.msra.mxu0 %v11693
      %11858 = vmatpush.msra.mxu0 %v11692
      %11859 = vmatpush.msra.mxu0 %v11691
      %11860 = vmatpush.msra.mxu0 %v11690
      %11861 = vmatmul.f32.gmra.mxu0 %v6451
      %v11862 = vpop.f32.mrf.mxu0
      %v11863 = vadd.f32 %v11834, %v11862
      %11864 = vmatmul.f32.gmra.mxu0 %v6454
      %v11865 = vpop.f32.mrf.mxu0
      %v11866 = vadd.f32 %v11837, %v11865
      %11867 = vmatmul.f32.gmra.mxu0 %v6457
      %v11868 = vpop.f32.mrf.mxu0
      %v11869 = vadd.f32 %v11840, %v11868
      %11870 = vmatmul.f32.gmra.mxu0 %v6460
      %v11871 = vpop.f32.mrf.mxu0
      %v11872 = vadd.f32 %v11843, %v11871
      %11873 = vdwg.mxu0
      %11874 = vmatpush.msra.mxu0 %v11437
      %11875 = vmatpush.msra.mxu0 %v11433
      %11876 = vmatpush.msra.mxu0 %v11429
      %11877 = vmatpush.msra.mxu0 %v11425
      %11878 = vmatpush.msra.mxu0 %v11409
      %11879 = vmatpush.msra.mxu0 %v11405
      %11880 = vmatpush.msra.mxu0 %v11401
      %11881 = vmatpush.msra.mxu0 %v11397
      %11882 = vmatpush.msra.mxu0 %v11381
      %11883 = vmatpush.msra.mxu0 %v11377
      %11884 = vmatpush.msra.mxu0 %v11373
      %11885 = vmatpush.msra.mxu0 %v11369
      %11886 = vmatpush.msra.mxu0 %v5977
      %11887 = vmatpush.msra.mxu0 %v5974
      %11888 = vmatpush.msra.mxu0 %v5971
      %11889 = vmatpush.msra.mxu0 %v5968
      %11890 = vmatmul.f32.gmra.mxu0 %v5979
      %v11891 = vpop.f32.mrf.mxu0
      %v11892 = vadd.f32 %v6432, %v11891
      %11893 = vmatmul.f32.gmra.mxu0 %v5983
      %v11894 = vpop.f32.mrf.mxu0
      %v11895 = vadd.f32 %v6437, %v11894
      %11896 = vmatmul.f32.gmra.mxu0 %v5987
      %v11897 = vpop.f32.mrf.mxu0
      %v11898 = vadd.f32 %v6442, %v11897
      %11899 = vmatmul.f32.gmra.mxu0 %v5991
      %v11900 = vpop.f32.mrf.mxu0
      %v11901 = vadd.f32 %v6447, %v11900
      %11902 = vdwg.mxu0
      %11903 = vmatpush.msra.mxu0 %v11549
      %11904 = vmatpush.msra.mxu0 %v11545
      %11905 = vmatpush.msra.mxu0 %v11541
      %11906 = vmatpush.msra.mxu0 %v11537
      %11907 = vmatpush.msra.mxu0 %v11521
      %11908 = vmatpush.msra.mxu0 %v11517
      %11909 = vmatpush.msra.mxu0 %v11513
      %11910 = vmatpush.msra.mxu0 %v11509
      %11911 = vmatpush.msra.mxu0 %v11493
      %11912 = vmatpush.msra.mxu0 %v11489
      %11913 = vmatpush.msra.mxu0 %v11485
      %11914 = vmatpush.msra.mxu0 %v11481
      %11915 = vmatpush.msra.mxu0 %v11465
      %11916 = vmatpush.msra.mxu0 %v11461
      %11917 = vmatpush.msra.mxu0 %v11457
      %11918 = vmatpush.msra.mxu0 %v11453
      %11919 = vmatmul.f32.gmra.mxu0 %v5980
      %v11920 = vpop.f32.mrf.mxu0
      %v11921 = vadd.f32 %v11892, %v11920
      %11922 = vmatmul.f32.gmra.mxu0 %v5984
      %v11923 = vpop.f32.mrf.mxu0
      %v11924 = vadd.f32 %v11895, %v11923
      %11925 = vmatmul.f32.gmra.mxu0 %v5988
      %v11926 = vpop.f32.mrf.mxu0
      %v11927 = vadd.f32 %v11898, %v11926
      %11928 = vmatmul.f32.gmra.mxu0 %v5992
      %v11929 = vpop.f32.mrf.mxu0
      %v11930 = vadd.f32 %v11901, %v11929
      %11931 = vdwg.mxu0
      %11932 = vmatpush.msra.mxu0 %v11661
      %11933 = vmatpush.msra.mxu0 %v11657
      %11934 = vmatpush.msra.mxu0 %v11653
      %11935 = vmatpush.msra.mxu0 %v11649
      %11936 = vmatpush.msra.mxu0 %v11633
      %11937 = vmatpush.msra.mxu0 %v11629
      %11938 = vmatpush.msra.mxu0 %v11625
      %11939 = vmatpush.msra.mxu0 %v11621
      %11940 = vmatpush.msra.mxu0 %v11605
      %11941 = vmatpush.msra.mxu0 %v11601
      %11942 = vmatpush.msra.mxu0 %v11597
      %11943 = vmatpush.msra.mxu0 %v11593
      %11944 = vmatpush.msra.mxu0 %v11577
      %11945 = vmatpush.msra.mxu0 %v11573
      %11946 = vmatpush.msra.mxu0 %v11569
      %11947 = vmatpush.msra.mxu0 %v11565
      %11948 = vmatmul.f32.gmra.mxu0 %v5981
      %v11949 = vpop.f32.mrf.mxu0
      %v11950 = vadd.f32 %v11921, %v11949
      %11951 = vmatmul.f32.gmra.mxu0 %v5985
      %v11952 = vpop.f32.mrf.mxu0
      %v11953 = vadd.f32 %v11924, %v11952
      %11954 = vmatmul.f32.gmra.mxu0 %v5989
      %v11955 = vpop.f32.mrf.mxu0
      %v11956 = vadd.f32 %v11927, %v11955
      %11957 = vmatmul.f32.gmra.mxu0 %v5993
      %v11958 = vpop.f32.mrf.mxu0
      %v11959 = vadd.f32 %v11930, %v11958
      %11960 = vdwg.mxu0
      %11961 = vmatpush.msra.mxu0 0.0
      %11962 = vmatpush.msra.mxu0 0.0
      %11963 = vmatpush.msra.mxu0 0.0
      %11964 = vmatpush.msra.mxu0 0.0
      %11965 = vmatpush.msra.mxu0 %v11745
      %11966 = vmatpush.msra.mxu0 %v11741
      %11967 = vmatpush.msra.mxu0 %v11737
      %11968 = vmatpush.msra.mxu0 %v11733
      %11969 = vmatpush.msra.mxu0 %v11717
      %11970 = vmatpush.msra.mxu0 %v11713
      %11971 = vmatpush.msra.mxu0 %v11709
      %11972 = vmatpush.msra.mxu0 %v11705
      %11973 = vmatpush.msra.mxu0 %v11689
      %11974 = vmatpush.msra.mxu0 %v11685
      %11975 = vmatpush.msra.mxu0 %v11681
      %11976 = vmatpush.msra.mxu0 %v11677
      %11977 = vmatmul.f32.gmra.mxu0 %v6451
      %v11978 = vpop.f32.mrf.mxu0
      %v11979 = vadd.f32 %v11950, %v11978
      %11980 = vmatmul.f32.gmra.mxu0 %v6454
      %v11981 = vpop.f32.mrf.mxu0
      %v11982 = vadd.f32 %v11953, %v11981
      %11983 = vmatmul.f32.gmra.mxu0 %v6457
      %v11984 = vpop.f32.mrf.mxu0
      %v11985 = vadd.f32 %v11956, %v11984
      %11986 = vmatmul.f32.gmra.mxu0 %v6460
      %v11987 = vpop.f32.mrf.mxu0
      %v11988 = vadd.f32 %v11959, %v11987
      %11989 = vdwg.mxu0
      %vm11990 = vcmp.gt.f32.partialorder %v11863, 0.0
      %vm11991 = vcmp.gt.f32.partialorder %v11979, 0.0
      %vm11992 = vcmp.gt.f32.partialorder %v11866, 0.0
      %vm11993 = vcmp.gt.f32.partialorder %v11982, 0.0
      %vm11994 = vcmp.gt.f32.partialorder %v11869, 0.0
      %vm11995 = vcmp.gt.f32.partialorder %v11985, 0.0
      %vm11996 = vcmp.gt.f32.partialorder %v11872, 0.0
      %vm11997 = vcmp.gt.f32.partialorder %v11988, 0.0
      %v11998 = vmin.f32 %v11863, 0.0
      %v11999 = vmin.f32 %v11979, 0.0
      %v12000 = vmin.f32 %v11866, 0.0
      %v12001 = vmin.f32 %v11982, 0.0
      %v12002 = vmin.f32 %v11869, 0.0
      %v12003 = vmin.f32 %v11985, 0.0
      %v12004 = vmin.f32 %v11872, 0.0
      %v12005 = vmin.f32 %v11988, 0.0
      %v12006 = vmul.f32 %v11998, 1.442695
      %v12007 = vpow.pop %v12006
      %v12008 = vmul.f32 %v11999, 1.442695
      %v12009 = vpow.pop %v12008
      %v12010 = vmul.f32 %v12000, 1.442695
      %v12011 = vpow.pop %v12010
      %v12012 = vmul.f32 %v12001, 1.442695
      %v12013 = vpow.pop %v12012
      %v12014 = vmul.f32 %v12002, 1.442695
      %v12015 = vpow.pop %v12014
      %v12016 = vmul.f32 %v12003, 1.442695
      %v12017 = vpow.pop %v12016
      %v12018 = vmul.f32 %v12004, 1.442695
      %v12019 = vpow.pop %v12018
      %v12020 = vmul.f32 %v12005, 1.442695
      %v12021 = vpow.pop %v12020
      %v12022 = vsub.f32 %v12007, 1.0
      %v12023 = vsub.f32 %v12009, 1.0
      %v12024 = vsub.f32 %v12011, 1.0
      %v12025 = vsub.f32 %v12013, 1.0
      %v12026 = vsub.f32 %v12015, 1.0
      %v12027 = vsub.f32 %v12017, 1.0
      %v12028 = vsub.f32 %v12019, 1.0
      %v12029 = vsub.f32 %v12021, 1.0
      %v12030 = vsel %vm11990, %v11863, %v12022
      %v12031 = vsel %vm11991, %v11979, %v12023
      %v12032 = vsel %vm11992, %v11866, %v12024
      %v12033 = vsel %vm11993, %v11982, %v12025
      %v12034 = vsel %vm11994, %v11869, %v12026
      %v12035 = vsel %vm11995, %v11985, %v12027
      %v12036 = vsel %vm11996, %v11872, %v12028
      %v12037 = vsel %vm11997, %v11988, %v12029
      %v12038 = vmul.f32 %v5999, %v12030
      %v12039 = vmul.f32 %v6000, %v12031
      %v12040 = vmul.f32 %v6001, %v12032
      %v12041 = vmul.f32 %v6002, %v12033
      %v12042 = vmul.f32 %v6003, %v12034
      %v12043 = vmul.f32 %v6004, %v12035
      %v12044 = vmul.f32 %v6005, %v12036
      %v12045 = vmul.f32 %v6006, %v12037
      %v12046 = vmul.f32 %v6007, %v12030
      %v12047 = vmul.f32 %v6008, %v12031
      %v12048 = vmul.f32 %v6009, %v12032
      %v12049 = vmul.f32 %v6010, %v12033
      %v12050 = vmul.f32 %v6011, %v12034
      %v12051 = vmul.f32 %v6012, %v12035
      %v12052 = vmul.f32 %v6013, %v12036
      %v12053 = vmul.f32 %v6014, %v12037
      %v12054 = vsel %vm6758, %v12039, 0.0
      %v12055 = vadd.f32 %v12038, %v12054
      %12056 = vadd.xlane.f32.xlu0 %v12055
      %v12057 = vpop.xlane.xlu0 %12056
      %v12058 = vsel %vm6758, %v12041, 0.0
      %v12059 = vadd.f32 %v12040, %v12058
      %12060 = vadd.xlane.f32.xlu0 %v12059
      %v12061 = vpop.xlane.xlu0 %12060
      %v12062 = vsel %vm6758, %v12043, 0.0
      %v12063 = vadd.f32 %v12042, %v12062
      %12064 = vadd.xlane.f32.xlu0 %v12063
      %v12065 = vpop.xlane.xlu0 %12064
      %v12066 = vsel %vm6758, %v12045, 0.0
      %v12067 = vadd.f32 %v12044, %v12066
      %12068 = vadd.xlane.f32.xlu0 %v12067
      %v12069 = vpop.xlane.xlu0 %12068
      %v12070 = vsel %vm6758, %v12047, 0.0
      %v12071 = vadd.f32 %v12046, %v12070
      %12072 = vadd.xlane.f32.xlu0 %v12071
      %v12073 = vpop.xlane.xlu0 %12072
      %v12074 = vsel %vm6758, %v12049, 0.0
      %v12075 = vadd.f32 %v12048, %v12074
      %12076 = vadd.xlane.f32.xlu0 %v12075
      %v12077 = vpop.xlane.xlu0 %12076
      %v12078 = vsel %vm6758, %v12051, 0.0
      %v12079 = vadd.f32 %v12050, %v12078
      %12080 = vadd.xlane.f32.xlu0 %v12079
      %v12081 = vpop.xlane.xlu0 %12080
      %v12082 = vsel %vm6758, %v12053, 0.0
      %v12083 = vadd.f32 %v12052, %v12082
      %12084 = vadd.xlane.f32.xlu0 %v12083
      %v12085 = vpop.xlane.xlu0 %12084
      %v12094 = vperm.slane %v12057, %v6800
      %v12095 = vperm.slane %v12061, %v6802
      %v12096 = vsel %vm6804, %v12095, %v12094
      %v12097 = vperm.slane %v12065, %v6806
      %v12098 = vsel %vm6808, %v12097, %v12096
      %v12099 = vperm.slane %v12069, %v6810
      %v12100 = vsel %vm6812, %v12099, %v12098
      %v12101 = vperm.slane %v12073, %v6800
      %v12102 = vperm.slane %v12077, %v6802
      %v12103 = vsel %vm6804, %v12102, %v12101
      %v12104 = vperm.slane %v12081, %v6806
      %v12105 = vsel %vm6808, %v12104, %v12103
      %v12106 = vperm.slane %v12085, %v6810
      %v12107 = vsel %vm6812, %v12106, %v12105
      %v12108 = vsel %vm6821, %v12107, %v12100
      %v12110 = vsel %vm6824, %v12108, 0.0
      %12111 = vadd.xlane.f32.xlu0 %v12110
      %v12112 = vpop.xlane.xlu0 %12111
      %vm12113 = vcmask 7168
      %v12114 = vsel %vm12113, %v6827, %v7582
      %vm12115 = vcmask 15360
      %v12116 = vsel %vm12115, %v12114, %v8337
      %vm12117 = vcmask 23552
      %v12118 = vsel %vm12117, %v12116, %v9092
      %vm12119 = vcmask 31744
      %v12120 = vsel %vm12119, %v12118, %v9847
      %vm12121 = vcmask 39936
      %v12122 = vsel %vm12121, %v12120, %v10602
      %vm12123 = vcmask 48128
      %v12124 = vsel %vm12123, %v12122, %v11357
      %vm12125 = vcmask 56320
      %v12126 = vsel %vm12125, %v12124, %v12112
      %v12127 = vld [vmem:[%s7] sm:$0x3]
      %12129 = vset.pattern.permute.xlu0 0
      %12130 = vperm.xlu0 %12129, %v12127
      %v12131 = vpop.permute.xlu0 %12130
      %v12133 = vadd.f32 %v12126, %v12131
      %vm12134 = vcmask 58368
      %12135 = vst.msk [vmem:[%s303] sm:$0x3] %vm12134, %v12133
      %p12136 = scmp.lt.s32.totalorder %s19, 1
      %s12137 = scalar_select %p12136, %s19, 1
      %s12138 = smul.addr %s12137, 2
      %s12139 = scalar_lea.vmem %s8, %s12138
      // Predicated region
      $region53: #{_eegnet_forward_impl.1} parent=51 // pred_check
        %p12140 = pneg %p210
      $region54: #{_eegnet_forward_impl.1} parent=51 // pred_check_branch
        %12142 = sbr.rel (%p12140) target = $region56
      $region55: #{_eegnet_forward_impl.1} parent=51 // pred_region
        _
      $region56: #{_eegnet_forward_impl.1} parent=51 // pred_fallthru
        _
    $region52: #{_eegnet_forward_impl.1} parent=5 // pred_fallthru
      _
    %p12143 = scmp.le.s32.totalorder 2, %s14
    // Predicated region
    $region57: #{_eegnet_forward_impl.1} parent=5 // pred_check
      %p12144 = pneg %p12143
    $region58: #{_eegnet_forward_impl.1} parent=5 // pred_check_branch
      %12146 = sbr.rel (%p12144) target = $region60
    $region59: #{_eegnet_forward_impl.1} parent=5 // pred_region
      %s12147 = ssub.s32 %s14, 2
      // Predicated region
      $region61: #{_eegnet_forward_impl.1} parent=59 // pred_check
        %p12148 = pneg %p216
      $region62: #{_eegnet_forward_impl.1} parent=59 // pred_check_branch
        %12150 = sbr.rel (%p12148) target = $region64
      $region63: #{_eegnet_forward_impl.1} parent=59 // pred_region
        %p12151 = scmp.lt.s32.totalorder %s20, 1
        %s12152 = scalar_select %p12151, %s20, 1
        %s12153 = smul.addr %s12152, 2
        %s12154 = scalar_lea.vmem %s8, %s12153
      $region64: #{_eegnet_forward_impl.1} parent=59 // pred_fallthru
        _
    $region60: #{_eegnet_forward_impl.1} parent=5 // pred_fallthru
      _
  $region6: #{_eegnet_forward_impl.1} parent=0 // loop_footer
    %s18 = sadd.s32 1, %s14
  $region7: #{_eegnet_forward_impl.1} parent=0 // loop_footer_branch
    %13 = sbr.rel target = $region3
  $region8: #{_eegnet_forward_impl.1} parent=0 // loop_exit
    _

</llo_original>
